<compile_context>
chip_gen: v7x
topology: tpu7x:2x2x1
jax: 0.10.0
libtpu: 0.0.40
codegen_flags: <defaults>
</compile_context>

<pallas_src>
import functools

import jax
import jax.numpy as jnp
import numpy as np
from jax.experimental import pallas as pl
from jax.experimental.pallas import tpu as pltpu


# ------------------------------ GELU (exact erf) -----------------------------

def _erf_poly(z):
    # Abramowitz & Stegun 7.1.26 rational approximation, |err| <= 1.5e-7.
    # exp() lands on the EUP slot; the rest is cheap VPU work.
    a1, a2, a3, a4, a5 = 0.254829592, -0.284496736, 1.421413741, -1.453152027, 1.061405429
    p = 0.3275911
    s = jnp.where(z >= 0.0, 1.0, -1.0)
    za = jnp.abs(z)
    # Keep the exact divide: pl.reciprocal(approx=True) is a minor win and risks
    # the 1e-3 correctness tolerance (per review, keep exact if unsure).
    t = 1.0 / (1.0 + p * za)
    poly = ((((a5 * t + a4) * t + a3) * t + a2) * t + a1) * t
    return s * (1.0 - poly * jnp.exp(-za * za))


def _gelu_exact(x):
    # torch.nn.GELU() default: 0.5 * x * (1 + erf(x / sqrt(2)))
    return 0.5 * x * (1.0 + _erf_poly(x * 0.7071067811865476))


_TAPS = [(dt, dh, dw) for dt in range(3) for dh in range(3) for dw in range(3)]


# ------------------------------- fused kernel --------------------------------

def fused_decoder_kernel(x_ref, w1_ref, b1_ref, w2_ref, b2_ref, g_ref, be_ref,
                         int_ref, m_ref, o_ref, slab1_ref, h1x_ref, slab2_ref,
                         *, n_b, c_in, c_mid, c_out, hw_pad, w_pad, guard, nf,
                         total, cnt):
    # x_ref   : (B, Cin, total)  residual-added, zero-padded, flattened (Tp*Hp*Wp)
    #           grid with 128-lane guards on both sides (per batch item).
    # w1_ref  : (Cmid, K1p)  tap-major im2col weights, K zero-padded to 128.
    # w2_ref  : (8,    K2p)  same for conv2; output rows >= Cout are zero.
    # b1_ref  : (Cmid, 1)    b2_ref/g_ref/be_ref : (8, 1), rows >= Cout zero.
    # int_ref : (1, B*nf)    interior (non-pad-ring) mask, precomputed on host.
    # m_ref   : (B*T, B*nf)  disjoint per-(b,t) interior masks (fp32 0/1).
    # o_ref   : (B, Cout, nf)
    # slab1_ref : VMEM (K1p, B*nf)    conv1 im2col slab (contraction-stacked taps)
    # h1x_ref   : VMEM (Cmid, B*total) guarded, zero-padded conv2 input
    # slab2_ref : VMEM (K2p, B*nf)    conv2 im2col slab
    k1 = 27 * c_in
    k2 = 27 * c_mid
    k1p = slab1_ref.shape[0]
    k2p = slab2_ref.shape[0]
    bnf = n_b * nf

    # ---- conv1 im2col staging: slab1[k*Cin + c, b*nf + j] = x_b[c, guard + j + off_k]
    for b in range(n_b):
        xb = x_ref[b]                                            # (Cin, total)
        for k, (dt, dh, dw) in enumerate(_TAPS):
            s = guard + (dt - 1) * hw_pad + (dh - 1) * w_pad + (dw - 1)
            slab1_ref[k * c_in:(k + 1) * c_in, b * nf:(b + 1) * nf] = xb[:, s:s + nf]
    # Zero the K-padding rows so the K=k1p contraction is exact (matching weight
    # columns are zero; never leave uninitialized VMEM under a contraction).
    if k1p > k1:
        slab1_ref[k1:k1p, :] = jnp.zeros((k1p - k1, bnf), jnp.float32)

    # ---- conv1: ONE MXU matmul (K=k1p, N=B*nf), bias, GELU, pad-ring mask ----
    h1 = jnp.dot(w1_ref[...], slab1_ref[...], preferred_element_type=jnp.float32)
    h1 = _gelu_exact(h1 + b1_ref[...]) * int_ref[...]            # (Cmid, B*nf)

    # ---- rebuild a guarded, truly-zero-padded copy of h1 for conv2 ----
    for b in range(n_b):
        # Zero ONLY the two guard strips; the interior is fully overwritten below.
        h1x_ref[:, b * total:b * total + guard] = jnp.zeros((c_mid, guard), jnp.float32)
        h1x_ref[:, b * total + guard + nf:(b + 1) * total] = jnp.zeros(
            (c_mid, total - guard - nf), jnp.float32)
        h1x_ref[:, b * total + guard:b * total + guard + nf] = h1[:, b * nf:(b + 1) * nf]
    h1x = h1x_ref[...]                                           # (Cmid, B*total)

    # ---- conv2 im2col staging ----
    for b in range(n_b):
        for k, (dt, dh, dw) in enumerate(_TAPS):
            s = b * total + guard + (dt - 1) * hw_pad + (dh - 1) * w_pad + (dw - 1)
            slab2_ref[k * c_mid:(k + 1) * c_mid, b * nf:(b + 1) * nf] = h1x[:, s:s + nf]
    if k2p > k2:
        slab2_ref[k2:k2p, :] = jnp.zeros((k2p - k2, bnf), jnp.float32)

    # ---- conv2: ONE MXU matmul (K=k2p) + bias.  Rows >= Cout are exactly 0. ----
    z = jnp.dot(w2_ref[...], slab2_ref[...],
                preferred_element_type=jnp.float32) + b2_ref[...]   # (8, B*nf)

    # ---- GroupNorm(1, C) per (b, t) sample via mask matmuls ----
    masks = m_ref[...]                                           # (B*T, B*nf)
    dn = (((1,), (1,)), ((), ()))                                # contract lane axis of both
    s1c = jax.lax.dot_general(z, masks, dn, preferred_element_type=jnp.float32)      # (8, B*T)
    s2c = jax.lax.dot_general(z * z, masks, dn, preferred_element_type=jnp.float32)  # (8, B*T)
    inv_cnt = 1.0 / cnt
    mean = jnp.sum(s1c, axis=0, keepdims=True) * inv_cnt         # (1, B*T)
    ex2 = jnp.sum(s2c, axis=0, keepdims=True) * inv_cnt
    var = jnp.maximum(ex2 - mean * mean, 0.0)                    # biased var, clamp >= 0
    rstd = jax.lax.rsqrt(var + 1e-5)
    # Broadcast per-group stats back to lanes with tiny (1,BT)@(BT,B*nf) dots.
    mean_l = jnp.dot(mean, masks, preferred_element_type=jnp.float32)   # (1, B*nf)
    rstd_l = jnp.dot(rstd, masks, preferred_element_type=jnp.float32)   # (1, B*nf)

    out = (z - mean_l) * rstd_l * g_ref[...] + be_ref[...]       # (8, B*nf)
    for b in range(n_b):
        o_ref[b] = out[:c_out, b * nf:(b + 1) * nf].astype(o_ref.dtype)


# -------------------------------- JAX wrapper ---------------------------------

def decoder_layer_t_forward(x, enc_attn, params):
    # x, enc_attn: (B, T, C, H, W)   (mode='normal')
    B, T, C, H, W = x.shape
    w1, b1 = params["w1"], params["b1"]
    w2, b2 = params["w2"], params["b2"]
    gamma, beta = params["gamma"], params["beta"]
    C2 = w1.shape[0]

    Tp, Hp, Wp = T + 2, H + 2, W + 2
    hw_pad = Hp * Wp
    np_flat = Tp * hw_pad                      # 600 for the test shape
    nf = pl.cdiv(np_flat, 128) * 128           # lane-aligned flat size (640)
    max_off = hw_pad + Wp + 1                  # largest |tap offset| (111)
    guard = pl.cdiv(max_off, 128) * 128        # 128
    total = guard + nf + guard                 # 896

    c_out_p = 8                                # pad conv2 output rows to a full sublane tile
    k1 = 27 * C
    k1p = pl.cdiv(k1, 128) * 128               # 108 -> 128
    k2 = 27 * C2
    k2p = pl.cdiv(k2, 128) * 128               # 216 -> 256

    # Residual add + NCDHW + zero pad + flatten + guard pad: one cheap XLA fusion
    # (no Pallas launch for an 8 KiB add, no im2col in HBM).
    y = jnp.transpose(x + enc_attn, (0, 2, 1, 3, 4))                   # (B, C, T, H, W)
    y = jnp.pad(y, ((0, 0), (0, 0), (1, 1), (1, 1), (1, 1)))           # (B, C, Tp, Hp, Wp)
    y = y.reshape(B, C, np_flat)
    y = jnp.pad(y, ((0, 0), (0, 0), (guard, total - guard - np_flat))) # (B, C, total)

    # torch weights (Cout, Cin, 3,3,3) -> tap-major flattened (Cout, 27*Cin),
    # zero-padded on the contraction (and conv2 also on the output rows).
    w1f = jnp.transpose(w1, (0, 2, 3, 4, 1)).reshape(C2, k1)
    w1f = jnp.pad(w1f, ((0, 0), (0, k1p - k1)))
    w2f = jnp.transpose(w2, (0, 2, 3, 4, 1)).reshape(C, k2)
    w2f = jnp.pad(w2f, ((0, c_out_p - C), (0, k2p - k2)))
    b2p = jnp.pad(b2.reshape(C, 1), ((0, c_out_p - C), (0, 0)))
    gp = jnp.pad(gamma.reshape(C, 1), ((0, c_out_p - C), (0, 0)))
    bp = jnp.pad(beta.reshape(C, 1), ((0, c_out_p - C), (0, 0)))

    # Per-(b,t) interior masks + overall interior mask on the flattened padded
    # grid (trace-time constants; interior precomputed on host per review).
    q = np.arange(nf)
    tq, r = q // hw_pad, q % hw_pad
    hq, wq = r // Wp, r % Wp
    sp_ok = (tq >= 1) & (tq <= T) & (hq >= 1) & (hq <= H) & (wq >= 1) & (wq <= W)
    masks_np = np.zeros((B * T, B * nf), np.float32)
    for b in range(B):
        for t in range(T):
            masks_np[b * T + t, b * nf:(b + 1) * nf] = (sp_ok & (tq == t + 1)).astype(np.float32)
    interior_np = masks_np.sum(axis=0, keepdims=True)              # rows are disjoint
    masks = jnp.asarray(masks_np)
    interior = jnp.asarray(interior_np)

    kernel = functools.partial(
        fused_decoder_kernel, n_b=B, c_in=C, c_mid=C2, c_out=C,
        hw_pad=hw_pad, w_pad=Wp, guard=guard, nf=nf, total=total,
        cnt=float(C * H * W))

    out = pl.pallas_call(
        kernel,
        out_shape=jax.ShapeDtypeStruct((B, C, nf), jnp.float32),
        grid=(1,),
        in_specs=[
            pl.BlockSpec((B, C, total), lambda i: (0, 0, 0)),      # padded input (all batches)
            pl.BlockSpec((C2, k1p), lambda i: (0, 0)),             # w1 im2col
            pl.BlockSpec((C2, 1), lambda i: (0, 0)),               # b1
            pl.BlockSpec((c_out_p, k2p), lambda i: (0, 0)),        # w2 im2col (rows padded)
            pl.BlockSpec((c_out_p, 1), lambda i: (0, 0)),          # b2
            pl.BlockSpec((c_out_p, 1), lambda i: (0, 0)),          # gamma
            pl.BlockSpec((c_out_p, 1), lambda i: (0, 0)),          # beta
            pl.BlockSpec((1, B * nf), lambda i: (0, 0)),           # interior mask
            pl.BlockSpec((B * T, B * nf), lambda i: (0, 0)),       # per-(b,t) masks
        ],
        out_specs=pl.BlockSpec((B, C, nf), lambda i: (0, 0, 0)),
        scratch_shapes=[
            pltpu.VMEM((k1p, B * nf), jnp.float32),                # conv1 im2col slab
            pltpu.VMEM((C2, B * total), jnp.float32),              # guarded conv2 input
            pltpu.VMEM((k2p, B * nf), jnp.float32),                # conv2 im2col slab
        ],
        compiler_params=pltpu.CompilerParams(
            dimension_semantics=("arbitrary",)),
    )(y, w1f, b1.reshape(C2, 1), w2f, b2p, gp, bp, interior, masks)

    # Back to (B, T, C, H, W): drop lane-alignment tail, un-flatten, drop pad ring.
    out = out[:, :, :np_flat].reshape(B, C, Tp, Hp, Wp)[:, :, 1:1 + T, 1:1 + H, 1:1 + W]
    return jnp.transpose(out, (0, 2, 1, 3, 4))


# ------------------------------ pure-JAX reference ----------------------------

def _conv3d_ref(x_ncdhw, w, b):
    out = jax.lax.conv_general_dilated(
        x_ncdhw, w, window_strides=(1, 1, 1), padding="SAME",
        dimension_numbers=("NCDHW", "OIDHW", "NCDHW"))
    return out + b[None, :, None, None, None]


def reference_forward(x, enc_attn, params):
    B, T, C, H, W = x.shape
    y = x + enc_attn
    z = jnp.transpose(y, (0, 2, 1, 3, 4))              # (B, C, T, H, W)
    z = _conv3d_ref(z, params["w1"], params["b1"])
    z = jax.nn.gelu(z, approximate=False)
    z = _conv3d_ref(z, params["w2"], params["b2"])
    z = jnp.transpose(z, (0, 2, 1, 3, 4))              # (B, T, C, H, W)
    zz = z.reshape(B * T, C, H, W)
    mean = zz.mean(axis=(1, 2, 3), keepdims=True)
    var = zz.var(axis=(1, 2, 3), keepdims=True)        # biased, as in GroupNorm
    zn = (zz - mean) / jnp.sqrt(var + 1e-5)
    zn = zn * params["gamma"][None, :, None, None] + params["beta"][None, :, None, None]
    return zn.reshape(B, T, C, H, W)


# ------------------------------------ main -------------------------------------

if __name__ == "__main__":
    B, T, C, H, W = 2, 4, 4, 8, 8          # dim = C = 4
    ratio = 2
    C2 = C * ratio

    key = jax.random.PRNGKey(0)
    kx, ke, k1, k2, k3, k4, k5, k6 = jax.random.split(key, 8)

    x = jax.random.normal(kx, (B, T, C, H, W), jnp.float32)
    enc_attn = jax.random.normal(ke, (B, T, C, H, W), jnp.float32)

    params = {
        "w1": jax.random.normal(k1, (C2, C, 3, 3, 3), jnp.float32) * 0.1,
        "b1": jax.random.normal(k2, (C2,), jnp.float32) * 0.1,
        "w2": jax.random.normal(k3, (C, C2, 3, 3, 3), jnp.float32) * 0.1,
        "b2": jax.random.normal(k4, (C,), jnp.float32) * 0.1,
        "gamma": 1.0 + 0.1 * jax.random.normal(k5, (C,), jnp.float32),
        "beta": 0.1 * jax.random.normal(k6, (C,), jnp.float32),
    }

    out = jax.block_until_ready(decoder_layer_t_forward(x, enc_attn, params))
    ref = jax.block_until_ready(reference_forward(x, enc_attn, params))

    assert out.shape == (B, T, C, H, W)
    np.testing.assert_allclose(np.asarray(out), np.asarray(ref), atol=1e-3, rtol=1e-3)
    print("KERNEL_OK")
</pallas_src>

<mosaic_0001>
module attributes {stable_mosaic.version = 11 : i64} {
  func.func @fused_decoder_kernel(%arg0: i32, %arg1: memref<2x4x896xf32, #tpu.memory_space<vmem>>, %arg2: memref<8x128xf32, #tpu.memory_space<vmem>>, %arg3: memref<8x1xf32, #tpu.memory_space<vmem>>, %arg4: memref<8x256xf32, #tpu.memory_space<vmem>>, %arg5: memref<8x1xf32, #tpu.memory_space<vmem>>, %arg6: memref<8x1xf32, #tpu.memory_space<vmem>>, %arg7: memref<8x1xf32, #tpu.memory_space<vmem>>, %arg8: memref<1x1280xf32, #tpu.memory_space<vmem>>, %arg9: memref<8x1280xf32, #tpu.memory_space<vmem>>, %arg10: memref<2x4x640xf32, #tpu.memory_space<vmem>>, %arg11: memref<128x1280xf32, #tpu.memory_space<vmem>>, %arg12: memref<8x1792xf32, #tpu.memory_space<vmem>>, %arg13: memref<256x1280xf32, #tpu.memory_space<vmem>>) attributes {dimension_semantics = [#tpu.dimension_semantics<arbitrary>], iteration_bounds = array<i64: 1>, scalar_prefetch = 0 : i64, scratch_operands = 3 : i64, tpu.core_type = #tpu.core_type<tc>, window_params = [{pipeline_mode = #tpu.pipeline_mode<synchronous>, transform_indices = @transform_0, window_bounds = array<i64: 2, 4, 896>}, {pipeline_mode = #tpu.pipeline_mode<synchronous>, transform_indices = @transform_1, window_bounds = array<i64: 8, 128>}, {pipeline_mode = #tpu.pipeline_mode<synchronous>, transform_indices = @transform_2, window_bounds = array<i64: 8, 1>}, {pipeline_mode = #tpu.pipeline_mode<synchronous>, transform_indices = @transform_3, window_bounds = array<i64: 8, 256>}, {pipeline_mode = #tpu.pipeline_mode<synchronous>, transform_indices = @transform_4, window_bounds = array<i64: 8, 1>}, {pipeline_mode = #tpu.pipeline_mode<synchronous>, transform_indices = @transform_5, window_bounds = array<i64: 8, 1>}, {pipeline_mode = #tpu.pipeline_mode<synchronous>, transform_indices = @transform_6, window_bounds = array<i64: 8, 1>}, {pipeline_mode = #tpu.pipeline_mode<synchronous>, transform_indices = @transform_7, window_bounds = array<i64: 1, 1280>}, {pipeline_mode = #tpu.pipeline_mode<synchronous>, transform_indices = @transform_8, window_bounds = array<i64: 8, 1280>}, {pipeline_mode = #tpu.pipeline_mode<synchronous>, transform_indices = @transform_9, window_bounds = array<i64: 2, 4, 640>}]} {
    %c0 = arith.constant 0 : index
    %c0_0 = arith.constant 0 : index
    %c0_1 = arith.constant 0 : index
    %0 = vector.load %arg1[%c0, %c0_0, %c0_1] : memref<2x4x896xf32, #tpu.memory_space<vmem>>, vector<1x4x896xf32>
    %1 = vector.shape_cast %0 : vector<1x4x896xf32> to vector<4x896xf32>
    %2 = vector.extract_strided_slice %1 {offsets = [0, 17], sizes = [4, 640], strides = [1, 1]} : vector<4x896xf32> to vector<4x640xf32>
    %c0_2 = arith.constant 0 : index
    %c0_3 = arith.constant 0 : index
    %3 = vector.load %arg11[%c0_2, %c0_3] : memref<128x1280xf32, #tpu.memory_space<vmem>>, vector<4x640xf32>
    tpu.vector_store %arg11[%c0_2, %c0_3], %2 {strides = array<i32>} : memref<128x1280xf32, #tpu.memory_space<vmem>>, vector<4x640xf32>,
    %4 = vector.extract_strided_slice %1 {offsets = [0, 18], sizes = [4, 640], strides = [1, 1]} : vector<4x896xf32> to vector<4x640xf32>
    %c4 = arith.constant 4 : index
    %c0_4 = arith.constant 0 : index
    %5 = vector.load %arg11[%c4, %c0_4] : memref<128x1280xf32, #tpu.memory_space<vmem>>, vector<4x640xf32>
    tpu.vector_store %arg11[%c4, %c0_4], %4 {strides = array<i32>} : memref<128x1280xf32, #tpu.memory_space<vmem>>, vector<4x640xf32>,
    %6 = vector.extract_strided_slice %1 {offsets = [0, 19], sizes = [4, 640], strides = [1, 1]} : vector<4x896xf32> to vector<4x640xf32>
    %c8 = arith.constant 8 : index
    %c0_5 = arith.constant 0 : index
    %7 = vector.load %arg11[%c8, %c0_5] : memref<128x1280xf32, #tpu.memory_space<vmem>>, vector<4x640xf32>
    tpu.vector_store %arg11[%c8, %c0_5], %6 {strides = array<i32>} : memref<128x1280xf32, #tpu.memory_space<vmem>>, vector<4x640xf32>,
    %8 = vector.extract_strided_slice %1 {offsets = [0, 27], sizes = [4, 640], strides = [1, 1]} : vector<4x896xf32> to vector<4x640xf32>
    %c12 = arith.constant 12 : index
    %c0_6 = arith.constant 0 : index
    %9 = vector.load %arg11[%c12, %c0_6] : memref<128x1280xf32, #tpu.memory_space<vmem>>, vector<4x640xf32>
    tpu.vector_store %arg11[%c12, %c0_6], %8 {strides = array<i32>} : memref<128x1280xf32, #tpu.memory_space<vmem>>, vector<4x640xf32>,
    %10 = vector.extract_strided_slice %1 {offsets = [0, 28], sizes = [4, 640], strides = [1, 1]} : vector<4x896xf32> to vector<4x640xf32>
    %c16 = arith.constant 16 : index
    %c0_7 = arith.constant 0 : index
    %11 = vector.load %arg11[%c16, %c0_7] : memref<128x1280xf32, #tpu.memory_space<vmem>>, vector<4x640xf32>
    tpu.vector_store %arg11[%c16, %c0_7], %10 {strides = array<i32>} : memref<128x1280xf32, #tpu.memory_space<vmem>>, vector<4x640xf32>,
    %12 = vector.extract_strided_slice %1 {offsets = [0, 29], sizes = [4, 640], strides = [1, 1]} : vector<4x896xf32> to vector<4x640xf32>
    %c20 = arith.constant 20 : index
    %c0_8 = arith.constant 0 : index
    %13 = vector.load %arg11[%c20, %c0_8] : memref<128x1280xf32, #tpu.memory_space<vmem>>, vector<4x640xf32>
    tpu.vector_store %arg11[%c20, %c0_8], %12 {strides = array<i32>} : memref<128x1280xf32, #tpu.memory_space<vmem>>, vector<4x640xf32>,
    %14 = vector.extract_strided_slice %1 {offsets = [0, 37], sizes = [4, 640], strides = [1, 1]} : vector<4x896xf32> to vector<4x640xf32>
    %c24 = arith.constant 24 : index
    %c0_9 = arith.constant 0 : index
    %15 = vector.load %arg11[%c24, %c0_9] : memref<128x1280xf32, #tpu.memory_space<vmem>>, vector<4x640xf32>
    tpu.vector_store %arg11[%c24, %c0_9], %14 {strides = array<i32>} : memref<128x1280xf32, #tpu.memory_space<vmem>>, vector<4x640xf32>,
    %16 = vector.extract_strided_slice %1 {offsets = [0, 38], sizes = [4, 640], strides = [1, 1]} : vector<4x896xf32> to vector<4x640xf32>
    %c28 = arith.constant 28 : index
    %c0_10 = arith.constant 0 : index
    %17 = vector.load %arg11[%c28, %c0_10] : memref<128x1280xf32, #tpu.memory_space<vmem>>, vector<4x640xf32>
    tpu.vector_store %arg11[%c28, %c0_10], %16 {strides = array<i32>} : memref<128x1280xf32, #tpu.memory_space<vmem>>, vector<4x640xf32>,
    %18 = vector.extract_strided_slice %1 {offsets = [0, 39], sizes = [4, 640], strides = [1, 1]} : vector<4x896xf32> to vector<4x640xf32>
    %c32 = arith.constant 32 : index
    %c0_11 = arith.constant 0 : index
    %19 = vector.load %arg11[%c32, %c0_11] : memref<128x1280xf32, #tpu.memory_space<vmem>>, vector<4x640xf32>
    tpu.vector_store %arg11[%c32, %c0_11], %18 {strides = array<i32>} : memref<128x1280xf32, #tpu.memory_space<vmem>>, vector<4x640xf32>,
    %20 = vector.extract_strided_slice %1 {offsets = [0, 117], sizes = [4, 640], strides = [1, 1]} : vector<4x896xf32> to vector<4x640xf32>
    %c36 = arith.constant 36 : index
    %c0_12 = arith.constant 0 : index
    %21 = vector.load %arg11[%c36, %c0_12] : memref<128x1280xf32, #tpu.memory_space<vmem>>, vector<4x640xf32>
    tpu.vector_store %arg11[%c36, %c0_12], %20 {strides = array<i32>} : memref<128x1280xf32, #tpu.memory_space<vmem>>, vector<4x640xf32>,
    %22 = vector.extract_strided_slice %1 {offsets = [0, 118], sizes = [4, 640], strides = [1, 1]} : vector<4x896xf32> to vector<4x640xf32>
    %c40 = arith.constant 40 : index
    %c0_13 = arith.constant 0 : index
    %23 = vector.load %arg11[%c40, %c0_13] : memref<128x1280xf32, #tpu.memory_space<vmem>>, vector<4x640xf32>
    tpu.vector_store %arg11[%c40, %c0_13], %22 {strides = array<i32>} : memref<128x1280xf32, #tpu.memory_space<vmem>>, vector<4x640xf32>,
    %24 = vector.extract_strided_slice %1 {offsets = [0, 119], sizes = [4, 640], strides = [1, 1]} : vector<4x896xf32> to vector<4x640xf32>
    %c44 = arith.constant 44 : index
    %c0_14 = arith.constant 0 : index
    %25 = vector.load %arg11[%c44, %c0_14] : memref<128x1280xf32, #tpu.memory_space<vmem>>, vector<4x640xf32>
    tpu.vector_store %arg11[%c44, %c0_14], %24 {strides = array<i32>} : memref<128x1280xf32, #tpu.memory_space<vmem>>, vector<4x640xf32>,
    %26 = vector.extract_strided_slice %1 {offsets = [0, 127], sizes = [4, 640], strides = [1, 1]} : vector<4x896xf32> to vector<4x640xf32>
    %c48 = arith.constant 48 : index
    %c0_15 = arith.constant 0 : index
    %27 = vector.load %arg11[%c48, %c0_15] : memref<128x1280xf32, #tpu.memory_space<vmem>>, vector<4x640xf32>
    tpu.vector_store %arg11[%c48, %c0_15], %26 {strides = array<i32>} : memref<128x1280xf32, #tpu.memory_space<vmem>>, vector<4x640xf32>,
    %28 = vector.extract_strided_slice %1 {offsets = [0, 128], sizes = [4, 640], strides = [1, 1]} : vector<4x896xf32> to vector<4x640xf32>
    %c52 = arith.constant 52 : index
    %c0_16 = arith.constant 0 : index
    %29 = vector.load %arg11[%c52, %c0_16] : memref<128x1280xf32, #tpu.memory_space<vmem>>, vector<4x640xf32>
    tpu.vector_store %arg11[%c52, %c0_16], %28 {strides = array<i32>} : memref<128x1280xf32, #tpu.memory_space<vmem>>, vector<4x640xf32>,
    %30 = vector.extract_strided_slice %1 {offsets = [0, 129], sizes = [4, 640], strides = [1, 1]} : vector<4x896xf32> to vector<4x640xf32>
    %c56 = arith.constant 56 : index
    %c0_17 = arith.constant 0 : index
    %31 = vector.load %arg11[%c56, %c0_17] : memref<128x1280xf32, #tpu.memory_space<vmem>>, vector<4x640xf32>
    tpu.vector_store %arg11[%c56, %c0_17], %30 {strides = array<i32>} : memref<128x1280xf32, #tpu.memory_space<vmem>>, vector<4x640xf32>,
    %32 = vector.extract_strided_slice %1 {offsets = [0, 137], sizes = [4, 640], strides = [1, 1]} : vector<4x896xf32> to vector<4x640xf32>
    %c60 = arith.constant 60 : index
    %c0_18 = arith.constant 0 : index
    %33 = vector.load %arg11[%c60, %c0_18] : memref<128x1280xf32, #tpu.memory_space<vmem>>, vector<4x640xf32>
    tpu.vector_store %arg11[%c60, %c0_18], %32 {strides = array<i32>} : memref<128x1280xf32, #tpu.memory_space<vmem>>, vector<4x640xf32>,
    %34 = vector.extract_strided_slice %1 {offsets = [0, 138], sizes = [4, 640], strides = [1, 1]} : vector<4x896xf32> to vector<4x640xf32>
    %c64 = arith.constant 64 : index
    %c0_19 = arith.constant 0 : index
    %35 = vector.load %arg11[%c64, %c0_19] : memref<128x1280xf32, #tpu.memory_space<vmem>>, vector<4x640xf32>
    tpu.vector_store %arg11[%c64, %c0_19], %34 {strides = array<i32>} : memref<128x1280xf32, #tpu.memory_space<vmem>>, vector<4x640xf32>,
    %36 = vector.extract_strided_slice %1 {offsets = [0, 139], sizes = [4, 640], strides = [1, 1]} : vector<4x896xf32> to vector<4x640xf32>
    %c68 = arith.constant 68 : index
    %c0_20 = arith.constant 0 : index
    %37 = vector.load %arg11[%c68, %c0_20] : memref<128x1280xf32, #tpu.memory_space<vmem>>, vector<4x640xf32>
    tpu.vector_store %arg11[%c68, %c0_20], %36 {strides = array<i32>} : memref<128x1280xf32, #tpu.memory_space<vmem>>, vector<4x640xf32>,
    %38 = vector.extract_strided_slice %1 {offsets = [0, 217], sizes = [4, 640], strides = [1, 1]} : vector<4x896xf32> to vector<4x640xf32>
    %c72 = arith.constant 72 : index
    %c0_21 = arith.constant 0 : index
    %39 = vector.load %arg11[%c72, %c0_21] : memref<128x1280xf32, #tpu.memory_space<vmem>>, vector<4x640xf32>
    tpu.vector_store %arg11[%c72, %c0_21], %38 {strides = array<i32>} : memref<128x1280xf32, #tpu.memory_space<vmem>>, vector<4x640xf32>,
    %40 = vector.extract_strided_slice %1 {offsets = [0, 218], sizes = [4, 640], strides = [1, 1]} : vector<4x896xf32> to vector<4x640xf32>
    %c76 = arith.constant 76 : index
    %c0_22 = arith.constant 0 : index
    %41 = vector.load %arg11[%c76, %c0_22] : memref<128x1280xf32, #tpu.memory_space<vmem>>, vector<4x640xf32>
    tpu.vector_store %arg11[%c76, %c0_22], %40 {strides = array<i32>} : memref<128x1280xf32, #tpu.memory_space<vmem>>, vector<4x640xf32>,
    %42 = vector.extract_strided_slice %1 {offsets = [0, 219], sizes = [4, 640], strides = [1, 1]} : vector<4x896xf32> to vector<4x640xf32>
    %c80 = arith.constant 80 : index
    %c0_23 = arith.constant 0 : index
    %43 = vector.load %arg11[%c80, %c0_23] : memref<128x1280xf32, #tpu.memory_space<vmem>>, vector<4x640xf32>
    tpu.vector_store %arg11[%c80, %c0_23], %42 {strides = array<i32>} : memref<128x1280xf32, #tpu.memory_space<vmem>>, vector<4x640xf32>,
    %44 = vector.extract_strided_slice %1 {offsets = [0, 227], sizes = [4, 640], strides = [1, 1]} : vector<4x896xf32> to vector<4x640xf32>
    %c84 = arith.constant 84 : index
    %c0_24 = arith.constant 0 : index
    %45 = vector.load %arg11[%c84, %c0_24] : memref<128x1280xf32, #tpu.memory_space<vmem>>, vector<4x640xf32>
    tpu.vector_store %arg11[%c84, %c0_24], %44 {strides = array<i32>} : memref<128x1280xf32, #tpu.memory_space<vmem>>, vector<4x640xf32>,
    %46 = vector.extract_strided_slice %1 {offsets = [0, 228], sizes = [4, 640], strides = [1, 1]} : vector<4x896xf32> to vector<4x640xf32>
    %c88 = arith.constant 88 : index
    %c0_25 = arith.constant 0 : index
    %47 = vector.load %arg11[%c88, %c0_25] : memref<128x1280xf32, #tpu.memory_space<vmem>>, vector<4x640xf32>
    tpu.vector_store %arg11[%c88, %c0_25], %46 {strides = array<i32>} : memref<128x1280xf32, #tpu.memory_space<vmem>>, vector<4x640xf32>,
    %48 = vector.extract_strided_slice %1 {offsets = [0, 229], sizes = [4, 640], strides = [1, 1]} : vector<4x896xf32> to vector<4x640xf32>
    %c92 = arith.constant 92 : index
    %c0_26 = arith.constant 0 : index
    %49 = vector.load %arg11[%c92, %c0_26] : memref<128x1280xf32, #tpu.memory_space<vmem>>, vector<4x640xf32>
    tpu.vector_store %arg11[%c92, %c0_26], %48 {strides = array<i32>} : memref<128x1280xf32, #tpu.memory_space<vmem>>, vector<4x640xf32>,
    %50 = vector.extract_strided_slice %1 {offsets = [0, 237], sizes = [4, 640], strides = [1, 1]} : vector<4x896xf32> to vector<4x640xf32>
    %c96 = arith.constant 96 : index
    %c0_27 = arith.constant 0 : index
    %51 = vector.load %arg11[%c96, %c0_27] : memref<128x1280xf32, #tpu.memory_space<vmem>>, vector<4x640xf32>
    tpu.vector_store %arg11[%c96, %c0_27], %50 {strides = array<i32>} : memref<128x1280xf32, #tpu.memory_space<vmem>>, vector<4x640xf32>,
    %52 = vector.extract_strided_slice %1 {offsets = [0, 238], sizes = [4, 640], strides = [1, 1]} : vector<4x896xf32> to vector<4x640xf32>
    %c100 = arith.constant 100 : index
    %c0_28 = arith.constant 0 : index
    %53 = vector.load %arg11[%c100, %c0_28] : memref<128x1280xf32, #tpu.memory_space<vmem>>, vector<4x640xf32>
    tpu.vector_store %arg11[%c100, %c0_28], %52 {strides = array<i32>} : memref<128x1280xf32, #tpu.memory_space<vmem>>, vector<4x640xf32>,
    %54 = vector.extract_strided_slice %1 {offsets = [0, 239], sizes = [4, 640], strides = [1, 1]} : vector<4x896xf32> to vector<4x640xf32>
    %c104 = arith.constant 104 : index
    %c0_29 = arith.constant 0 : index
    %55 = vector.load %arg11[%c104, %c0_29] : memref<128x1280xf32, #tpu.memory_space<vmem>>, vector<4x640xf32>
    tpu.vector_store %arg11[%c104, %c0_29], %54 {strides = array<i32>} : memref<128x1280xf32, #tpu.memory_space<vmem>>, vector<4x640xf32>,
    %c1 = arith.constant 1 : index
    %c0_30 = arith.constant 0 : index
    %c0_31 = arith.constant 0 : index
    %56 = vector.load %arg1[%c1, %c0_30, %c0_31] : memref<2x4x896xf32, #tpu.memory_space<vmem>>, vector<1x4x896xf32>
    %57 = vector.shape_cast %56 : vector<1x4x896xf32> to vector<4x896xf32>
    %58 = vector.extract_strided_slice %57 {offsets = [0, 17], sizes = [4, 640], strides = [1, 1]} : vector<4x896xf32> to vector<4x640xf32>
    %c0_32 = arith.constant 0 : index
    %c640 = arith.constant 640 : index
    %59 = vector.load %arg11[%c0_32, %c640] : memref<128x1280xf32, #tpu.memory_space<vmem>>, vector<4x640xf32>
    tpu.vector_store %arg11[%c0_32, %c640], %58 {strides = array<i32>} : memref<128x1280xf32, #tpu.memory_space<vmem>>, vector<4x640xf32>,
    %60 = vector.extract_strided_slice %57 {offsets = [0, 18], sizes = [4, 640], strides = [1, 1]} : vector<4x896xf32> to vector<4x640xf32>
    %c4_33 = arith.constant 4 : index
    %c640_34 = arith.constant 640 : index
    %61 = vector.load %arg11[%c4_33, %c640_34] : memref<128x1280xf32, #tpu.memory_space<vmem>>, vector<4x640xf32>
    tpu.vector_store %arg11[%c4_33, %c640_34], %60 {strides = array<i32>} : memref<128x1280xf32, #tpu.memory_space<vmem>>, vector<4x640xf32>,
    %62 = vector.extract_strided_slice %57 {offsets = [0, 19], sizes = [4, 640], strides = [1, 1]} : vector<4x896xf32> to vector<4x640xf32>
    %c8_35 = arith.constant 8 : index
    %c640_36 = arith.constant 640 : index
    %63 = vector.load %arg11[%c8_35, %c640_36] : memref<128x1280xf32, #tpu.memory_space<vmem>>, vector<4x640xf32>
    tpu.vector_store %arg11[%c8_35, %c640_36], %62 {strides = array<i32>} : memref<128x1280xf32, #tpu.memory_space<vmem>>, vector<4x640xf32>,
    %64 = vector.extract_strided_slice %57 {offsets = [0, 27], sizes = [4, 640], strides = [1, 1]} : vector<4x896xf32> to vector<4x640xf32>
    %c12_37 = arith.constant 12 : index
    %c640_38 = arith.constant 640 : index
    %65 = vector.load %arg11[%c12_37, %c640_38] : memref<128x1280xf32, #tpu.memory_space<vmem>>, vector<4x640xf32>
    tpu.vector_store %arg11[%c12_37, %c640_38], %64 {strides = array<i32>} : memref<128x1280xf32, #tpu.memory_space<vmem>>, vector<4x640xf32>,
    %66 = vector.extract_strided_slice %57 {offsets = [0, 28], sizes = [4, 640], strides = [1, 1]} : vector<4x896xf32> to vector<4x640xf32>
    %c16_39 = arith.constant 16 : index
    %c640_40 = arith.constant 640 : index
    %67 = vector.load %arg11[%c16_39, %c640_40] : memref<128x1280xf32, #tpu.memory_space<vmem>>, vector<4x640xf32>
    tpu.vector_store %arg11[%c16_39, %c640_40], %66 {strides = array<i32>} : memref<128x1280xf32, #tpu.memory_space<vmem>>, vector<4x640xf32>,
    %68 = vector.extract_strided_slice %57 {offsets = [0, 29], sizes = [4, 640], strides = [1, 1]} : vector<4x896xf32> to vector<4x640xf32>
    %c20_41 = arith.constant 20 : index
    %c640_42 = arith.constant 640 : index
    %69 = vector.load %arg11[%c20_41, %c640_42] : memref<128x1280xf32, #tpu.memory_space<vmem>>, vector<4x640xf32>
    tpu.vector_store %arg11[%c20_41, %c640_42], %68 {strides = array<i32>} : memref<128x1280xf32, #tpu.memory_space<vmem>>, vector<4x640xf32>,
    %70 = vector.extract_strided_slice %57 {offsets = [0, 37], sizes = [4, 640], strides = [1, 1]} : vector<4x896xf32> to vector<4x640xf32>
    %c24_43 = arith.constant 24 : index
    %c640_44 = arith.constant 640 : index
    %71 = vector.load %arg11[%c24_43, %c640_44] : memref<128x1280xf32, #tpu.memory_space<vmem>>, vector<4x640xf32>
    tpu.vector_store %arg11[%c24_43, %c640_44], %70 {strides = array<i32>} : memref<128x1280xf32, #tpu.memory_space<vmem>>, vector<4x640xf32>,
    %72 = vector.extract_strided_slice %57 {offsets = [0, 38], sizes = [4, 640], strides = [1, 1]} : vector<4x896xf32> to vector<4x640xf32>
    %c28_45 = arith.constant 28 : index
    %c640_46 = arith.constant 640 : index
    %73 = vector.load %arg11[%c28_45, %c640_46] : memref<128x1280xf32, #tpu.memory_space<vmem>>, vector<4x640xf32>
    tpu.vector_store %arg11[%c28_45, %c640_46], %72 {strides = array<i32>} : memref<128x1280xf32, #tpu.memory_space<vmem>>, vector<4x640xf32>,
    %74 = vector.extract_strided_slice %57 {offsets = [0, 39], sizes = [4, 640], strides = [1, 1]} : vector<4x896xf32> to vector<4x640xf32>
    %c32_47 = arith.constant 32 : index
    %c640_48 = arith.constant 640 : index
    %75 = vector.load %arg11[%c32_47, %c640_48] : memref<128x1280xf32, #tpu.memory_space<vmem>>, vector<4x640xf32>
    tpu.vector_store %arg11[%c32_47, %c640_48], %74 {strides = array<i32>} : memref<128x1280xf32, #tpu.memory_space<vmem>>, vector<4x640xf32>,
    %76 = vector.extract_strided_slice %57 {offsets = [0, 117], sizes = [4, 640], strides = [1, 1]} : vector<4x896xf32> to vector<4x640xf32>
    %c36_49 = arith.constant 36 : index
    %c640_50 = arith.constant 640 : index
    %77 = vector.load %arg11[%c36_49, %c640_50] : memref<128x1280xf32, #tpu.memory_space<vmem>>, vector<4x640xf32>
    tpu.vector_store %arg11[%c36_49, %c640_50], %76 {strides = array<i32>} : memref<128x1280xf32, #tpu.memory_space<vmem>>, vector<4x640xf32>,
    %78 = vector.extract_strided_slice %57 {offsets = [0, 118], sizes = [4, 640], strides = [1, 1]} : vector<4x896xf32> to vector<4x640xf32>
    %c40_51 = arith.constant 40 : index
    %c640_52 = arith.constant 640 : index
    %79 = vector.load %arg11[%c40_51, %c640_52] : memref<128x1280xf32, #tpu.memory_space<vmem>>, vector<4x640xf32>
    tpu.vector_store %arg11[%c40_51, %c640_52], %78 {strides = array<i32>} : memref<128x1280xf32, #tpu.memory_space<vmem>>, vector<4x640xf32>,
    %80 = vector.extract_strided_slice %57 {offsets = [0, 119], sizes = [4, 640], strides = [1, 1]} : vector<4x896xf32> to vector<4x640xf32>
    %c44_53 = arith.constant 44 : index
    %c640_54 = arith.constant 640 : index
    %81 = vector.load %arg11[%c44_53, %c640_54] : memref<128x1280xf32, #tpu.memory_space<vmem>>, vector<4x640xf32>
    tpu.vector_store %arg11[%c44_53, %c640_54], %80 {strides = array<i32>} : memref<128x1280xf32, #tpu.memory_space<vmem>>, vector<4x640xf32>,
    %82 = vector.extract_strided_slice %57 {offsets = [0, 127], sizes = [4, 640], strides = [1, 1]} : vector<4x896xf32> to vector<4x640xf32>
    %c48_55 = arith.constant 48 : index
    %c640_56 = arith.constant 640 : index
    %83 = vector.load %arg11[%c48_55, %c640_56] : memref<128x1280xf32, #tpu.memory_space<vmem>>, vector<4x640xf32>
    tpu.vector_store %arg11[%c48_55, %c640_56], %82 {strides = array<i32>} : memref<128x1280xf32, #tpu.memory_space<vmem>>, vector<4x640xf32>,
    %84 = vector.extract_strided_slice %57 {offsets = [0, 128], sizes = [4, 640], strides = [1, 1]} : vector<4x896xf32> to vector<4x640xf32>
    %c52_57 = arith.constant 52 : index
    %c640_58 = arith.constant 640 : index
    %85 = vector.load %arg11[%c52_57, %c640_58] : memref<128x1280xf32, #tpu.memory_space<vmem>>, vector<4x640xf32>
    tpu.vector_store %arg11[%c52_57, %c640_58], %84 {strides = array<i32>} : memref<128x1280xf32, #tpu.memory_space<vmem>>, vector<4x640xf32>,
    %86 = vector.extract_strided_slice %57 {offsets = [0, 129], sizes = [4, 640], strides = [1, 1]} : vector<4x896xf32> to vector<4x640xf32>
    %c56_59 = arith.constant 56 : index
    %c640_60 = arith.constant 640 : index
    %87 = vector.load %arg11[%c56_59, %c640_60] : memref<128x1280xf32, #tpu.memory_space<vmem>>, vector<4x640xf32>
    tpu.vector_store %arg11[%c56_59, %c640_60], %86 {strides = array<i32>} : memref<128x1280xf32, #tpu.memory_space<vmem>>, vector<4x640xf32>,
    %88 = vector.extract_strided_slice %57 {offsets = [0, 137], sizes = [4, 640], strides = [1, 1]} : vector<4x896xf32> to vector<4x640xf32>
    %c60_61 = arith.constant 60 : index
    %c640_62 = arith.constant 640 : index
    %89 = vector.load %arg11[%c60_61, %c640_62] : memref<128x1280xf32, #tpu.memory_space<vmem>>, vector<4x640xf32>
    tpu.vector_store %arg11[%c60_61, %c640_62], %88 {strides = array<i32>} : memref<128x1280xf32, #tpu.memory_space<vmem>>, vector<4x640xf32>,
    %90 = vector.extract_strided_slice %57 {offsets = [0, 138], sizes = [4, 640], strides = [1, 1]} : vector<4x896xf32> to vector<4x640xf32>
    %c64_63 = arith.constant 64 : index
    %c640_64 = arith.constant 640 : index
    %91 = vector.load %arg11[%c64_63, %c640_64] : memref<128x1280xf32, #tpu.memory_space<vmem>>, vector<4x640xf32>
    tpu.vector_store %arg11[%c64_63, %c640_64], %90 {strides = array<i32>} : memref<128x1280xf32, #tpu.memory_space<vmem>>, vector<4x640xf32>,
    %92 = vector.extract_strided_slice %57 {offsets = [0, 139], sizes = [4, 640], strides = [1, 1]} : vector<4x896xf32> to vector<4x640xf32>
    %c68_65 = arith.constant 68 : index
    %c640_66 = arith.constant 640 : index
    %93 = vector.load %arg11[%c68_65, %c640_66] : memref<128x1280xf32, #tpu.memory_space<vmem>>, vector<4x640xf32>
    tpu.vector_store %arg11[%c68_65, %c640_66], %92 {strides = array<i32>} : memref<128x1280xf32, #tpu.memory_space<vmem>>, vector<4x640xf32>,
    %94 = vector.extract_strided_slice %57 {offsets = [0, 217], sizes = [4, 640], strides = [1, 1]} : vector<4x896xf32> to vector<4x640xf32>
    %c72_67 = arith.constant 72 : index
    %c640_68 = arith.constant 640 : index
    %95 = vector.load %arg11[%c72_67, %c640_68] : memref<128x1280xf32, #tpu.memory_space<vmem>>, vector<4x640xf32>
    tpu.vector_store %arg11[%c72_67, %c640_68], %94 {strides = array<i32>} : memref<128x1280xf32, #tpu.memory_space<vmem>>, vector<4x640xf32>,
    %96 = vector.extract_strided_slice %57 {offsets = [0, 218], sizes = [4, 640], strides = [1, 1]} : vector<4x896xf32> to vector<4x640xf32>
    %c76_69 = arith.constant 76 : index
    %c640_70 = arith.constant 640 : index
    %97 = vector.load %arg11[%c76_69, %c640_70] : memref<128x1280xf32, #tpu.memory_space<vmem>>, vector<4x640xf32>
    tpu.vector_store %arg11[%c76_69, %c640_70], %96 {strides = array<i32>} : memref<128x1280xf32, #tpu.memory_space<vmem>>, vector<4x640xf32>,
    %98 = vector.extract_strided_slice %57 {offsets = [0, 219], sizes = [4, 640], strides = [1, 1]} : vector<4x896xf32> to vector<4x640xf32>
    %c80_71 = arith.constant 80 : index
    %c640_72 = arith.constant 640 : index
    %99 = vector.load %arg11[%c80_71, %c640_72] : memref<128x1280xf32, #tpu.memory_space<vmem>>, vector<4x640xf32>
    tpu.vector_store %arg11[%c80_71, %c640_72], %98 {strides = array<i32>} : memref<128x1280xf32, #tpu.memory_space<vmem>>, vector<4x640xf32>,
    %100 = vector.extract_strided_slice %57 {offsets = [0, 227], sizes = [4, 640], strides = [1, 1]} : vector<4x896xf32> to vector<4x640xf32>
    %c84_73 = arith.constant 84 : index
    %c640_74 = arith.constant 640 : index
    %101 = vector.load %arg11[%c84_73, %c640_74] : memref<128x1280xf32, #tpu.memory_space<vmem>>, vector<4x640xf32>
    tpu.vector_store %arg11[%c84_73, %c640_74], %100 {strides = array<i32>} : memref<128x1280xf32, #tpu.memory_space<vmem>>, vector<4x640xf32>,
    %102 = vector.extract_strided_slice %57 {offsets = [0, 228], sizes = [4, 640], strides = [1, 1]} : vector<4x896xf32> to vector<4x640xf32>
    %c88_75 = arith.constant 88 : index
    %c640_76 = arith.constant 640 : index
    %103 = vector.load %arg11[%c88_75, %c640_76] : memref<128x1280xf32, #tpu.memory_space<vmem>>, vector<4x640xf32>
    tpu.vector_store %arg11[%c88_75, %c640_76], %102 {strides = array<i32>} : memref<128x1280xf32, #tpu.memory_space<vmem>>, vector<4x640xf32>,
    %104 = vector.extract_strided_slice %57 {offsets = [0, 229], sizes = [4, 640], strides = [1, 1]} : vector<4x896xf32> to vector<4x640xf32>
    %c92_77 = arith.constant 92 : index
    %c640_78 = arith.constant 640 : index
    %105 = vector.load %arg11[%c92_77, %c640_78] : memref<128x1280xf32, #tpu.memory_space<vmem>>, vector<4x640xf32>
    tpu.vector_store %arg11[%c92_77, %c640_78], %104 {strides = array<i32>} : memref<128x1280xf32, #tpu.memory_space<vmem>>, vector<4x640xf32>,
    %106 = vector.extract_strided_slice %57 {offsets = [0, 237], sizes = [4, 640], strides = [1, 1]} : vector<4x896xf32> to vector<4x640xf32>
    %c96_79 = arith.constant 96 : index
    %c640_80 = arith.constant 640 : index
    %107 = vector.load %arg11[%c96_79, %c640_80] : memref<128x1280xf32, #tpu.memory_space<vmem>>, vector<4x640xf32>
    tpu.vector_store %arg11[%c96_79, %c640_80], %106 {strides = array<i32>} : memref<128x1280xf32, #tpu.memory_space<vmem>>, vector<4x640xf32>,
    %108 = vector.extract_strided_slice %57 {offsets = [0, 238], sizes = [4, 640], strides = [1, 1]} : vector<4x896xf32> to vector<4x640xf32>
    %c100_81 = arith.constant 100 : index
    %c640_82 = arith.constant 640 : index
    %109 = vector.load %arg11[%c100_81, %c640_82] : memref<128x1280xf32, #tpu.memory_space<vmem>>, vector<4x640xf32>
    tpu.vector_store %arg11[%c100_81, %c640_82], %108 {strides = array<i32>} : memref<128x1280xf32, #tpu.memory_space<vmem>>, vector<4x640xf32>,
    %110 = vector.extract_strided_slice %57 {offsets = [0, 239], sizes = [4, 640], strides = [1, 1]} : vector<4x896xf32> to vector<4x640xf32>
    %c104_83 = arith.constant 104 : index
    %c640_84 = arith.constant 640 : index
    %111 = vector.load %arg11[%c104_83, %c640_84] : memref<128x1280xf32, #tpu.memory_space<vmem>>, vector<4x640xf32>
    tpu.vector_store %arg11[%c104_83, %c640_84], %110 {strides = array<i32>} : memref<128x1280xf32, #tpu.memory_space<vmem>>, vector<4x640xf32>,
    %cst = arith.constant 0.000000e+00 : f32
    %112 = vector.broadcast %cst : f32 to vector<20x1280xf32>
    %c108 = arith.constant 108 : index
    %c0_85 = arith.constant 0 : index
    %113 = vector.load %arg11[%c108, %c0_85] : memref<128x1280xf32, #tpu.memory_space<vmem>>, vector<20x1280xf32>
    tpu.vector_store %arg11[%c108, %c0_85], %112 {strides = array<i32>} : memref<128x1280xf32, #tpu.memory_space<vmem>>, vector<20x1280xf32>,
    %c0_86 = arith.constant 0 : index
    %c0_87 = arith.constant 0 : index
    %114 = vector.load %arg2[%c0_86, %c0_87] : memref<8x128xf32, #tpu.memory_space<vmem>>, vector<8x128xf32>
    %c0_88 = arith.constant 0 : index
    %c0_89 = arith.constant 0 : index
    %115 = vector.load %arg11[%c0_88, %c0_89] : memref<128x1280xf32, #tpu.memory_space<vmem>>, vector<128x1280xf32>
    %cst_90 = arith.constant dense<0.000000e+00> : vector<8x1280xf32>
    %116 = tpu.matmul %114, %115, %cst_90 {dimension_numbers = #tpu.dot_dimension_numbers<[1], [0], [0], [1], [0, 0, 1, 1], [], []>} : vector<8x128xf32>, vector<128x1280xf32>, vector<8x1280xf32> -> vector<8x1280xf32>
    %c0_91 = arith.constant 0 : index
    %c0_92 = arith.constant 0 : index
    %117 = vector.load %arg3[%c0_91, %c0_92] : memref<8x1xf32, #tpu.memory_space<vmem>>, vector<8x1xf32>
    %118 = vector.broadcast %117 : vector<8x1xf32> to vector<8x1280xf32>
    %119 = arith.addf %116, %118 : vector<8x1280xf32>
    %cst_93 = arith.constant 5.000000e-01 : f32
    %120 = vector.broadcast %cst_93 : f32 to vector<8x1280xf32>
    %121 = arith.mulf %120, %119 : vector<8x1280xf32>
    %cst_94 = arith.constant 0.707106769 : f32
    %122 = vector.broadcast %cst_94 : f32 to vector<8x1280xf32>
    %123 = arith.mulf %119, %122 : vector<8x1280xf32>
    %cst_95 = arith.constant 0.000000e+00 : f32
    %124 = vector.broadcast %cst_95 : f32 to vector<8x1280xf32>
    %125 = arith.cmpf oge, %123, %124 : vector<8x1280xf32>
    %cst_96 = arith.constant 1.000000e+00 : f32
    %cst_97 = arith.constant -1.000000e+00 : f32
    %126 = vector.broadcast %cst_96 : f32 to vector<8x1280xf32>
    %127 = vector.broadcast %cst_97 : f32 to vector<8x1280xf32>
    %128 = arith.select %125, %126, %127 : vector<8x1280xi1>, vector<8x1280xf32>
    %129 = math.absf %123 : vector<8x1280xf32>
    %cst_98 = arith.constant 0.327591091 : f32
    %130 = vector.broadcast %cst_98 : f32 to vector<8x1280xf32>
    %131 = arith.mulf %130, %129 : vector<8x1280xf32>
    %cst_99 = arith.constant 1.000000e+00 : f32
    %132 = vector.broadcast %cst_99 : f32 to vector<8x1280xf32>
    %133 = arith.addf %132, %131 : vector<8x1280xf32>
    %cst_100 = arith.constant 1.000000e+00 : f32
    %134 = vector.broadcast %cst_100 : f32 to vector<8x1280xf32>
    %135 = arith.divf %134, %133 : vector<8x1280xf32>
    %cst_101 = arith.constant 1.06140542 : f32
    %136 = vector.broadcast %cst_101 : f32 to vector<8x1280xf32>
    %137 = arith.mulf %136, %135 : vector<8x1280xf32>
    %cst_102 = arith.constant -1.45315206 : f32
    %138 = vector.broadcast %cst_102 : f32 to vector<8x1280xf32>
    %139 = arith.addf %137, %138 : vector<8x1280xf32>
    %140 = arith.mulf %139, %135 : vector<8x1280xf32>
    %cst_103 = arith.constant 1.42141378 : f32
    %141 = vector.broadcast %cst_103 : f32 to vector<8x1280xf32>
    %142 = arith.addf %140, %141 : vector<8x1280xf32>
    %143 = arith.mulf %142, %135 : vector<8x1280xf32>
    %cst_104 = arith.constant -0.284496725 : f32
    %144 = vector.broadcast %cst_104 : f32 to vector<8x1280xf32>
    %145 = arith.addf %143, %144 : vector<8x1280xf32>
    %146 = arith.mulf %145, %135 : vector<8x1280xf32>
    %cst_105 = arith.constant 0.254829586 : f32
    %147 = vector.broadcast %cst_105 : f32 to vector<8x1280xf32>
    %148 = arith.addf %146, %147 : vector<8x1280xf32>
    %149 = arith.mulf %148, %135 : vector<8x1280xf32>
    %cst_106 = arith.constant 0.000000e+00 : f32
    %150 = vector.broadcast %cst_106 : f32 to vector<8x1280xf32>
    %151 = arith.subf %150, %129 : vector<8x1280xf32>
    %152 = arith.mulf %151, %129 : vector<8x1280xf32>
    %153 = math.exp %152 : vector<8x1280xf32>
    %154 = arith.mulf %149, %153 : vector<8x1280xf32>
    %cst_107 = arith.constant 1.000000e+00 : f32
    %155 = vector.broadcast %cst_107 : f32 to vector<8x1280xf32>
    %156 = arith.subf %155, %154 : vector<8x1280xf32>
    %157 = arith.mulf %128, %156 : vector<8x1280xf32>
    %cst_108 = arith.constant 1.000000e+00 : f32
    %158 = vector.broadcast %cst_108 : f32 to vector<8x1280xf32>
    %159 = arith.addf %158, %157 : vector<8x1280xf32>
    %160 = arith.mulf %121, %159 : vector<8x1280xf32>
    %c0_109 = arith.constant 0 : index
    %c0_110 = arith.constant 0 : index
    %161 = vector.load %arg8[%c0_109, %c0_110] : memref<1x1280xf32, #tpu.memory_space<vmem>>, vector<1x1280xf32>
    %162 = vector.broadcast %161 : vector<1x1280xf32> to vector<8x1280xf32>
    %163 = arith.mulf %160, %162 : vector<8x1280xf32>
    %cst_111 = arith.constant 0.000000e+00 : f32
    %164 = vector.broadcast %cst_111 : f32 to vector<8x128xf32>
    %c0_112 = arith.constant 0 : index
    %c0_113 = arith.constant 0 : index
    %165 = vector.load %arg12[%c0_112, %c0_113] : memref<8x1792xf32, #tpu.memory_space<vmem>>, vector<8x128xf32>
    tpu.vector_store %arg12[%c0_112, %c0_113], %164 {strides = array<i32>} : memref<8x1792xf32, #tpu.memory_space<vmem>>, vector<8x128xf32>,
    %cst_114 = arith.constant 0.000000e+00 : f32
    %166 = vector.broadcast %cst_114 : f32 to vector<8x128xf32>
    %c0_115 = arith.constant 0 : index
    %c768 = arith.constant 768 : index
    %167 = vector.load %arg12[%c0_115, %c768] : memref<8x1792xf32, #tpu.memory_space<vmem>>, vector<8x128xf32>
    tpu.vector_store %arg12[%c0_115, %c768], %166 {strides = array<i32>} : memref<8x1792xf32, #tpu.memory_space<vmem>>, vector<8x128xf32>,
    %168 = vector.extract_strided_slice %163 {offsets = [0, 0], sizes = [8, 640], strides = [1, 1]} : vector<8x1280xf32> to vector<8x640xf32>
    %c0_116 = arith.constant 0 : index
    %c128 = arith.constant 128 : index
    %169 = vector.load %arg12[%c0_116, %c128] : memref<8x1792xf32, #tpu.memory_space<vmem>>, vector<8x640xf32>
    tpu.vector_store %arg12[%c0_116, %c128], %168 {strides = array<i32>} : memref<8x1792xf32, #tpu.memory_space<vmem>>, vector<8x640xf32>,
    %cst_117 = arith.constant 0.000000e+00 : f32
    %170 = vector.broadcast %cst_117 : f32 to vector<8x128xf32>
    %c0_118 = arith.constant 0 : index
    %c896 = arith.constant 896 : index
    %171 = vector.load %arg12[%c0_118, %c896] : memref<8x1792xf32, #tpu.memory_space<vmem>>, vector<8x128xf32>
    tpu.vector_store %arg12[%c0_118, %c896], %170 {strides = array<i32>} : memref<8x1792xf32, #tpu.memory_space<vmem>>, vector<8x128xf32>,
    %cst_119 = arith.constant 0.000000e+00 : f32
    %172 = vector.broadcast %cst_119 : f32 to vector<8x128xf32>
    %c0_120 = arith.constant 0 : index
    %c1664 = arith.constant 1664 : index
    %173 = vector.load %arg12[%c0_120, %c1664] : memref<8x1792xf32, #tpu.memory_space<vmem>>, vector<8x128xf32>
    tpu.vector_store %arg12[%c0_120, %c1664], %172 {strides = array<i32>} : memref<8x1792xf32, #tpu.memory_space<vmem>>, vector<8x128xf32>,
    %174 = vector.extract_strided_slice %163 {offsets = [0, 640], sizes = [8, 640], strides = [1, 1]} : vector<8x1280xf32> to vector<8x640xf32>
    %c0_121 = arith.constant 0 : index
    %c1024 = arith.constant 1024 : index
    %175 = vector.load %arg12[%c0_121, %c1024] : memref<8x1792xf32, #tpu.memory_space<vmem>>, vector<8x640xf32>
    tpu.vector_store %arg12[%c0_121, %c1024], %174 {strides = array<i32>} : memref<8x1792xf32, #tpu.memory_space<vmem>>, vector<8x640xf32>,
    %c0_122 = arith.constant 0 : index
    %c0_123 = arith.constant 0 : index
    %176 = vector.load %arg12[%c0_122, %c0_123] : memref<8x1792xf32, #tpu.memory_space<vmem>>, vector<8x1792xf32>
    %177 = vector.extract_strided_slice %176 {offsets = [0, 17], sizes = [8, 640], strides = [1, 1]} : vector<8x1792xf32> to vector<8x640xf32>
    %c0_124 = arith.constant 0 : index
    %c0_125 = arith.constant 0 : index
    %178 = vector.load %arg13[%c0_124, %c0_125] : memref<256x1280xf32, #tpu.memory_space<vmem>>, vector<8x640xf32>
    tpu.vector_store %arg13[%c0_124, %c0_125], %177 {strides = array<i32>} : memref<256x1280xf32, #tpu.memory_space<vmem>>, vector<8x640xf32>,
    %179 = vector.extract_strided_slice %176 {offsets = [0, 18], sizes = [8, 640], strides = [1, 1]} : vector<8x1792xf32> to vector<8x640xf32>
    %c8_126 = arith.constant 8 : index
    %c0_127 = arith.constant 0 : index
    %180 = vector.load %arg13[%c8_126, %c0_127] : memref<256x1280xf32, #tpu.memory_space<vmem>>, vector<8x640xf32>
    tpu.vector_store %arg13[%c8_126, %c0_127], %179 {strides = array<i32>} : memref<256x1280xf32, #tpu.memory_space<vmem>>, vector<8x640xf32>,
    %181 = vector.extract_strided_slice %176 {offsets = [0, 19], sizes = [8, 640], strides = [1, 1]} : vector<8x1792xf32> to vector<8x640xf32>
    %c16_128 = arith.constant 16 : index
    %c0_129 = arith.constant 0 : index
    %182 = vector.load %arg13[%c16_128, %c0_129] : memref<256x1280xf32, #tpu.memory_space<vmem>>, vector<8x640xf32>
    tpu.vector_store %arg13[%c16_128, %c0_129], %181 {strides = array<i32>} : memref<256x1280xf32, #tpu.memory_space<vmem>>, vector<8x640xf32>,
    %183 = vector.extract_strided_slice %176 {offsets = [0, 27], sizes = [8, 640], strides = [1, 1]} : vector<8x1792xf32> to vector<8x640xf32>
    %c24_130 = arith.constant 24 : index
    %c0_131 = arith.constant 0 : index
    %184 = vector.load %arg13[%c24_130, %c0_131] : memref<256x1280xf32, #tpu.memory_space<vmem>>, vector<8x640xf32>
    tpu.vector_store %arg13[%c24_130, %c0_131], %183 {strides = array<i32>} : memref<256x1280xf32, #tpu.memory_space<vmem>>, vector<8x640xf32>,
    %185 = vector.extract_strided_slice %176 {offsets = [0, 28], sizes = [8, 640], strides = [1, 1]} : vector<8x1792xf32> to vector<8x640xf32>
    %c32_132 = arith.constant 32 : index
    %c0_133 = arith.constant 0 : index
    %186 = vector.load %arg13[%c32_132, %c0_133] : memref<256x1280xf32, #tpu.memory_space<vmem>>, vector<8x640xf32>
    tpu.vector_store %arg13[%c32_132, %c0_133], %185 {strides = array<i32>} : memref<256x1280xf32, #tpu.memory_space<vmem>>, vector<8x640xf32>,
    %187 = vector.extract_strided_slice %176 {offsets = [0, 29], sizes = [8, 640], strides = [1, 1]} : vector<8x1792xf32> to vector<8x640xf32>
    %c40_134 = arith.constant 40 : index
    %c0_135 = arith.constant 0 : index
    %188 = vector.load %arg13[%c40_134, %c0_135] : memref<256x1280xf32, #tpu.memory_space<vmem>>, vector<8x640xf32>
    tpu.vector_store %arg13[%c40_134, %c0_135], %187 {strides = array<i32>} : memref<256x1280xf32, #tpu.memory_space<vmem>>, vector<8x640xf32>,
    %189 = vector.extract_strided_slice %176 {offsets = [0, 37], sizes = [8, 640], strides = [1, 1]} : vector<8x1792xf32> to vector<8x640xf32>
    %c48_136 = arith.constant 48 : index
    %c0_137 = arith.constant 0 : index
    %190 = vector.load %arg13[%c48_136, %c0_137] : memref<256x1280xf32, #tpu.memory_space<vmem>>, vector<8x640xf32>
    tpu.vector_store %arg13[%c48_136, %c0_137], %189 {strides = array<i32>} : memref<256x1280xf32, #tpu.memory_space<vmem>>, vector<8x640xf32>,
    %191 = vector.extract_strided_slice %176 {offsets = [0, 38], sizes = [8, 640], strides = [1, 1]} : vector<8x1792xf32> to vector<8x640xf32>
    %c56_138 = arith.constant 56 : index
    %c0_139 = arith.constant 0 : index
    %192 = vector.load %arg13[%c56_138, %c0_139] : memref<256x1280xf32, #tpu.memory_space<vmem>>, vector<8x640xf32>
    tpu.vector_store %arg13[%c56_138, %c0_139], %191 {strides = array<i32>} : memref<256x1280xf32, #tpu.memory_space<vmem>>, vector<8x640xf32>,
    %193 = vector.extract_strided_slice %176 {offsets = [0, 39], sizes = [8, 640], strides = [1, 1]} : vector<8x1792xf32> to vector<8x640xf32>
    %c64_140 = arith.constant 64 : index
    %c0_141 = arith.constant 0 : index
    %194 = vector.load %arg13[%c64_140, %c0_141] : memref<256x1280xf32, #tpu.memory_space<vmem>>, vector<8x640xf32>
    tpu.vector_store %arg13[%c64_140, %c0_141], %193 {strides = array<i32>} : memref<256x1280xf32, #tpu.memory_space<vmem>>, vector<8x640xf32>,
    %195 = vector.extract_strided_slice %176 {offsets = [0, 117], sizes = [8, 640], strides = [1, 1]} : vector<8x1792xf32> to vector<8x640xf32>
    %c72_142 = arith.constant 72 : index
    %c0_143 = arith.constant 0 : index
    %196 = vector.load %arg13[%c72_142, %c0_143] : memref<256x1280xf32, #tpu.memory_space<vmem>>, vector<8x640xf32>
    tpu.vector_store %arg13[%c72_142, %c0_143], %195 {strides = array<i32>} : memref<256x1280xf32, #tpu.memory_space<vmem>>, vector<8x640xf32>,
    %197 = vector.extract_strided_slice %176 {offsets = [0, 118], sizes = [8, 640], strides = [1, 1]} : vector<8x1792xf32> to vector<8x640xf32>
    %c80_144 = arith.constant 80 : index
    %c0_145 = arith.constant 0 : index
    %198 = vector.load %arg13[%c80_144, %c0_145] : memref<256x1280xf32, #tpu.memory_space<vmem>>, vector<8x640xf32>
    tpu.vector_store %arg13[%c80_144, %c0_145], %197 {strides = array<i32>} : memref<256x1280xf32, #tpu.memory_space<vmem>>, vector<8x640xf32>,
    %199 = vector.extract_strided_slice %176 {offsets = [0, 119], sizes = [8, 640], strides = [1, 1]} : vector<8x1792xf32> to vector<8x640xf32>
    %c88_146 = arith.constant 88 : index
    %c0_147 = arith.constant 0 : index
    %200 = vector.load %arg13[%c88_146, %c0_147] : memref<256x1280xf32, #tpu.memory_space<vmem>>, vector<8x640xf32>
    tpu.vector_store %arg13[%c88_146, %c0_147], %199 {strides = array<i32>} : memref<256x1280xf32, #tpu.memory_space<vmem>>, vector<8x640xf32>,
    %201 = vector.extract_strided_slice %176 {offsets = [0, 127], sizes = [8, 640], strides = [1, 1]} : vector<8x1792xf32> to vector<8x640xf32>
    %c96_148 = arith.constant 96 : index
    %c0_149 = arith.constant 0 : index
    %202 = vector.load %arg13[%c96_148, %c0_149] : memref<256x1280xf32, #tpu.memory_space<vmem>>, vector<8x640xf32>
    tpu.vector_store %arg13[%c96_148, %c0_149], %201 {strides = array<i32>} : memref<256x1280xf32, #tpu.memory_space<vmem>>, vector<8x640xf32>,
    %203 = vector.extract_strided_slice %176 {offsets = [0, 128], sizes = [8, 640], strides = [1, 1]} : vector<8x1792xf32> to vector<8x640xf32>
    %c104_150 = arith.constant 104 : index
    %c0_151 = arith.constant 0 : index
    %204 = vector.load %arg13[%c104_150, %c0_151] : memref<256x1280xf32, #tpu.memory_space<vmem>>, vector<8x640xf32>
    tpu.vector_store %arg13[%c104_150, %c0_151], %203 {strides = array<i32>} : memref<256x1280xf32, #tpu.memory_space<vmem>>, vector<8x640xf32>,
    %205 = vector.extract_strided_slice %176 {offsets = [0, 129], sizes = [8, 640], strides = [1, 1]} : vector<8x1792xf32> to vector<8x640xf32>
    %c112 = arith.constant 112 : index
    %c0_152 = arith.constant 0 : index
    %206 = vector.load %arg13[%c112, %c0_152] : memref<256x1280xf32, #tpu.memory_space<vmem>>, vector<8x640xf32>
    tpu.vector_store %arg13[%c112, %c0_152], %205 {strides = array<i32>} : memref<256x1280xf32, #tpu.memory_space<vmem>>, vector<8x640xf32>,
    %207 = vector.extract_strided_slice %176 {offsets = [0, 137], sizes = [8, 640], strides = [1, 1]} : vector<8x1792xf32> to vector<8x640xf32>
    %c120 = arith.constant 120 : index
    %c0_153 = arith.constant 0 : index
    %208 = vector.load %arg13[%c120, %c0_153] : memref<256x1280xf32, #tpu.memory_space<vmem>>, vector<8x640xf32>
    tpu.vector_store %arg13[%c120, %c0_153], %207 {strides = array<i32>} : memref<256x1280xf32, #tpu.memory_space<vmem>>, vector<8x640xf32>,
    %209 = vector.extract_strided_slice %176 {offsets = [0, 138], sizes = [8, 640], strides = [1, 1]} : vector<8x1792xf32> to vector<8x640xf32>
    %c128_154 = arith.constant 128 : index
    %c0_155 = arith.constant 0 : index
    %210 = vector.load %arg13[%c128_154, %c0_155] : memref<256x1280xf32, #tpu.memory_space<vmem>>, vector<8x640xf32>
    tpu.vector_store %arg13[%c128_154, %c0_155], %209 {strides = array<i32>} : memref<256x1280xf32, #tpu.memory_space<vmem>>, vector<8x640xf32>,
    %211 = vector.extract_strided_slice %176 {offsets = [0, 139], sizes = [8, 640], strides = [1, 1]} : vector<8x1792xf32> to vector<8x640xf32>
    %c136 = arith.constant 136 : index
    %c0_156 = arith.constant 0 : index
    %212 = vector.load %arg13[%c136, %c0_156] : memref<256x1280xf32, #tpu.memory_space<vmem>>, vector<8x640xf32>
    tpu.vector_store %arg13[%c136, %c0_156], %211 {strides = array<i32>} : memref<256x1280xf32, #tpu.memory_space<vmem>>, vector<8x640xf32>,
    %213 = vector.extract_strided_slice %176 {offsets = [0, 217], sizes = [8, 640], strides = [1, 1]} : vector<8x1792xf32> to vector<8x640xf32>
    %c144 = arith.constant 144 : index
    %c0_157 = arith.constant 0 : index
    %214 = vector.load %arg13[%c144, %c0_157] : memref<256x1280xf32, #tpu.memory_space<vmem>>, vector<8x640xf32>
    tpu.vector_store %arg13[%c144, %c0_157], %213 {strides = array<i32>} : memref<256x1280xf32, #tpu.memory_space<vmem>>, vector<8x640xf32>,
    %215 = vector.extract_strided_slice %176 {offsets = [0, 218], sizes = [8, 640], strides = [1, 1]} : vector<8x1792xf32> to vector<8x640xf32>
    %c152 = arith.constant 152 : index
    %c0_158 = arith.constant 0 : index
    %216 = vector.load %arg13[%c152, %c0_158] : memref<256x1280xf32, #tpu.memory_space<vmem>>, vector<8x640xf32>
    tpu.vector_store %arg13[%c152, %c0_158], %215 {strides = array<i32>} : memref<256x1280xf32, #tpu.memory_space<vmem>>, vector<8x640xf32>,
    %217 = vector.extract_strided_slice %176 {offsets = [0, 219], sizes = [8, 640], strides = [1, 1]} : vector<8x1792xf32> to vector<8x640xf32>
    %c160 = arith.constant 160 : index
    %c0_159 = arith.constant 0 : index
    %218 = vector.load %arg13[%c160, %c0_159] : memref<256x1280xf32, #tpu.memory_space<vmem>>, vector<8x640xf32>
    tpu.vector_store %arg13[%c160, %c0_159], %217 {strides = array<i32>} : memref<256x1280xf32, #tpu.memory_space<vmem>>, vector<8x640xf32>,
    %219 = vector.extract_strided_slice %176 {offsets = [0, 227], sizes = [8, 640], strides = [1, 1]} : vector<8x1792xf32> to vector<8x640xf32>
    %c168 = arith.constant 168 : index
    %c0_160 = arith.constant 0 : index
    %220 = vector.load %arg13[%c168, %c0_160] : memref<256x1280xf32, #tpu.memory_space<vmem>>, vector<8x640xf32>
    tpu.vector_store %arg13[%c168, %c0_160], %219 {strides = array<i32>} : memref<256x1280xf32, #tpu.memory_space<vmem>>, vector<8x640xf32>,
    %221 = vector.extract_strided_slice %176 {offsets = [0, 228], sizes = [8, 640], strides = [1, 1]} : vector<8x1792xf32> to vector<8x640xf32>
    %c176 = arith.constant 176 : index
    %c0_161 = arith.constant 0 : index
    %222 = vector.load %arg13[%c176, %c0_161] : memref<256x1280xf32, #tpu.memory_space<vmem>>, vector<8x640xf32>
    tpu.vector_store %arg13[%c176, %c0_161], %221 {strides = array<i32>} : memref<256x1280xf32, #tpu.memory_space<vmem>>, vector<8x640xf32>,
    %223 = vector.extract_strided_slice %176 {offsets = [0, 229], sizes = [8, 640], strides = [1, 1]} : vector<8x1792xf32> to vector<8x640xf32>
    %c184 = arith.constant 184 : index
    %c0_162 = arith.constant 0 : index
    %224 = vector.load %arg13[%c184, %c0_162] : memref<256x1280xf32, #tpu.memory_space<vmem>>, vector<8x640xf32>
    tpu.vector_store %arg13[%c184, %c0_162], %223 {strides = array<i32>} : memref<256x1280xf32, #tpu.memory_space<vmem>>, vector<8x640xf32>,
    %225 = vector.extract_strided_slice %176 {offsets = [0, 237], sizes = [8, 640], strides = [1, 1]} : vector<8x1792xf32> to vector<8x640xf32>
    %c192 = arith.constant 192 : index
    %c0_163 = arith.constant 0 : index
    %226 = vector.load %arg13[%c192, %c0_163] : memref<256x1280xf32, #tpu.memory_space<vmem>>, vector<8x640xf32>
    tpu.vector_store %arg13[%c192, %c0_163], %225 {strides = array<i32>} : memref<256x1280xf32, #tpu.memory_space<vmem>>, vector<8x640xf32>,
    %227 = vector.extract_strided_slice %176 {offsets = [0, 238], sizes = [8, 640], strides = [1, 1]} : vector<8x1792xf32> to vector<8x640xf32>
    %c200 = arith.constant 200 : index
    %c0_164 = arith.constant 0 : index
    %228 = vector.load %arg13[%c200, %c0_164] : memref<256x1280xf32, #tpu.memory_space<vmem>>, vector<8x640xf32>
    tpu.vector_store %arg13[%c200, %c0_164], %227 {strides = array<i32>} : memref<256x1280xf32, #tpu.memory_space<vmem>>, vector<8x640xf32>,
    %229 = vector.extract_strided_slice %176 {offsets = [0, 239], sizes = [8, 640], strides = [1, 1]} : vector<8x1792xf32> to vector<8x640xf32>
    %c208 = arith.constant 208 : index
    %c0_165 = arith.constant 0 : index
    %230 = vector.load %arg13[%c208, %c0_165] : memref<256x1280xf32, #tpu.memory_space<vmem>>, vector<8x640xf32>
    tpu.vector_store %arg13[%c208, %c0_165], %229 {strides = array<i32>} : memref<256x1280xf32, #tpu.memory_space<vmem>>, vector<8x640xf32>,
    %231 = vector.extract_strided_slice %176 {offsets = [0, 913], sizes = [8, 640], strides = [1, 1]} : vector<8x1792xf32> to vector<8x640xf32>
    %c0_166 = arith.constant 0 : index
    %c640_167 = arith.constant 640 : index
    %232 = vector.load %arg13[%c0_166, %c640_167] : memref<256x1280xf32, #tpu.memory_space<vmem>>, vector<8x640xf32>
    tpu.vector_store %arg13[%c0_166, %c640_167], %231 {strides = array<i32>} : memref<256x1280xf32, #tpu.memory_space<vmem>>, vector<8x640xf32>,
    %233 = vector.extract_strided_slice %176 {offsets = [0, 914], sizes = [8, 640], strides = [1, 1]} : vector<8x1792xf32> to vector<8x640xf32>
    %c8_168 = arith.constant 8 : index
    %c640_169 = arith.constant 640 : index
    %234 = vector.load %arg13[%c8_168, %c640_169] : memref<256x1280xf32, #tpu.memory_space<vmem>>, vector<8x640xf32>
    tpu.vector_store %arg13[%c8_168, %c640_169], %233 {strides = array<i32>} : memref<256x1280xf32, #tpu.memory_space<vmem>>, vector<8x640xf32>,
    %235 = vector.extract_strided_slice %176 {offsets = [0, 915], sizes = [8, 640], strides = [1, 1]} : vector<8x1792xf32> to vector<8x640xf32>
    %c16_170 = arith.constant 16 : index
    %c640_171 = arith.constant 640 : index
    %236 = vector.load %arg13[%c16_170, %c640_171] : memref<256x1280xf32, #tpu.memory_space<vmem>>, vector<8x640xf32>
    tpu.vector_store %arg13[%c16_170, %c640_171], %235 {strides = array<i32>} : memref<256x1280xf32, #tpu.memory_space<vmem>>, vector<8x640xf32>,
    %237 = vector.extract_strided_slice %176 {offsets = [0, 923], sizes = [8, 640], strides = [1, 1]} : vector<8x1792xf32> to vector<8x640xf32>
    %c24_172 = arith.constant 24 : index
    %c640_173 = arith.constant 640 : index
    %238 = vector.load %arg13[%c24_172, %c640_173] : memref<256x1280xf32, #tpu.memory_space<vmem>>, vector<8x640xf32>
    tpu.vector_store %arg13[%c24_172, %c640_173], %237 {strides = array<i32>} : memref<256x1280xf32, #tpu.memory_space<vmem>>, vector<8x640xf32>,
    %239 = vector.extract_strided_slice %176 {offsets = [0, 924], sizes = [8, 640], strides = [1, 1]} : vector<8x1792xf32> to vector<8x640xf32>
    %c32_174 = arith.constant 32 : index
    %c640_175 = arith.constant 640 : index
    %240 = vector.load %arg13[%c32_174, %c640_175] : memref<256x1280xf32, #tpu.memory_space<vmem>>, vector<8x640xf32>
    tpu.vector_store %arg13[%c32_174, %c640_175], %239 {strides = array<i32>} : memref<256x1280xf32, #tpu.memory_space<vmem>>, vector<8x640xf32>,
    %241 = vector.extract_strided_slice %176 {offsets = [0, 925], sizes = [8, 640], strides = [1, 1]} : vector<8x1792xf32> to vector<8x640xf32>
    %c40_176 = arith.constant 40 : index
    %c640_177 = arith.constant 640 : index
    %242 = vector.load %arg13[%c40_176, %c640_177] : memref<256x1280xf32, #tpu.memory_space<vmem>>, vector<8x640xf32>
    tpu.vector_store %arg13[%c40_176, %c640_177], %241 {strides = array<i32>} : memref<256x1280xf32, #tpu.memory_space<vmem>>, vector<8x640xf32>,
    %243 = vector.extract_strided_slice %176 {offsets = [0, 933], sizes = [8, 640], strides = [1, 1]} : vector<8x1792xf32> to vector<8x640xf32>
    %c48_178 = arith.constant 48 : index
    %c640_179 = arith.constant 640 : index
    %244 = vector.load %arg13[%c48_178, %c640_179] : memref<256x1280xf32, #tpu.memory_space<vmem>>, vector<8x640xf32>
    tpu.vector_store %arg13[%c48_178, %c640_179], %243 {strides = array<i32>} : memref<256x1280xf32, #tpu.memory_space<vmem>>, vector<8x640xf32>,
    %245 = vector.extract_strided_slice %176 {offsets = [0, 934], sizes = [8, 640], strides = [1, 1]} : vector<8x1792xf32> to vector<8x640xf32>
    %c56_180 = arith.constant 56 : index
    %c640_181 = arith.constant 640 : index
    %246 = vector.load %arg13[%c56_180, %c640_181] : memref<256x1280xf32, #tpu.memory_space<vmem>>, vector<8x640xf32>
    tpu.vector_store %arg13[%c56_180, %c640_181], %245 {strides = array<i32>} : memref<256x1280xf32, #tpu.memory_space<vmem>>, vector<8x640xf32>,
    %247 = vector.extract_strided_slice %176 {offsets = [0, 935], sizes = [8, 640], strides = [1, 1]} : vector<8x1792xf32> to vector<8x640xf32>
    %c64_182 = arith.constant 64 : index
    %c640_183 = arith.constant 640 : index
    %248 = vector.load %arg13[%c64_182, %c640_183] : memref<256x1280xf32, #tpu.memory_space<vmem>>, vector<8x640xf32>
    tpu.vector_store %arg13[%c64_182, %c640_183], %247 {strides = array<i32>} : memref<256x1280xf32, #tpu.memory_space<vmem>>, vector<8x640xf32>,
    %249 = vector.extract_strided_slice %176 {offsets = [0, 1013], sizes = [8, 640], strides = [1, 1]} : vector<8x1792xf32> to vector<8x640xf32>
    %c72_184 = arith.constant 72 : index
    %c640_185 = arith.constant 640 : index
    %250 = vector.load %arg13[%c72_184, %c640_185] : memref<256x1280xf32, #tpu.memory_space<vmem>>, vector<8x640xf32>
    tpu.vector_store %arg13[%c72_184, %c640_185], %249 {strides = array<i32>} : memref<256x1280xf32, #tpu.memory_space<vmem>>, vector<8x640xf32>,
    %251 = vector.extract_strided_slice %176 {offsets = [0, 1014], sizes = [8, 640], strides = [1, 1]} : vector<8x1792xf32> to vector<8x640xf32>
    %c80_186 = arith.constant 80 : index
    %c640_187 = arith.constant 640 : index
    %252 = vector.load %arg13[%c80_186, %c640_187] : memref<256x1280xf32, #tpu.memory_space<vmem>>, vector<8x640xf32>
    tpu.vector_store %arg13[%c80_186, %c640_187], %251 {strides = array<i32>} : memref<256x1280xf32, #tpu.memory_space<vmem>>, vector<8x640xf32>,
    %253 = vector.extract_strided_slice %176 {offsets = [0, 1015], sizes = [8, 640], strides = [1, 1]} : vector<8x1792xf32> to vector<8x640xf32>
    %c88_188 = arith.constant 88 : index
    %c640_189 = arith.constant 640 : index
    %254 = vector.load %arg13[%c88_188, %c640_189] : memref<256x1280xf32, #tpu.memory_space<vmem>>, vector<8x640xf32>
    tpu.vector_store %arg13[%c88_188, %c640_189], %253 {strides = array<i32>} : memref<256x1280xf32, #tpu.memory_space<vmem>>, vector<8x640xf32>,
    %255 = vector.extract_strided_slice %176 {offsets = [0, 1023], sizes = [8, 640], strides = [1, 1]} : vector<8x1792xf32> to vector<8x640xf32>
    %c96_190 = arith.constant 96 : index
    %c640_191 = arith.constant 640 : index
    %256 = vector.load %arg13[%c96_190, %c640_191] : memref<256x1280xf32, #tpu.memory_space<vmem>>, vector<8x640xf32>
    tpu.vector_store %arg13[%c96_190, %c640_191], %255 {strides = array<i32>} : memref<256x1280xf32, #tpu.memory_space<vmem>>, vector<8x640xf32>,
    %257 = vector.extract_strided_slice %176 {offsets = [0, 1024], sizes = [8, 640], strides = [1, 1]} : vector<8x1792xf32> to vector<8x640xf32>
    %c104_192 = arith.constant 104 : index
    %c640_193 = arith.constant 640 : index
    %258 = vector.load %arg13[%c104_192, %c640_193] : memref<256x1280xf32, #tpu.memory_space<vmem>>, vector<8x640xf32>
    tpu.vector_store %arg13[%c104_192, %c640_193], %257 {strides = array<i32>} : memref<256x1280xf32, #tpu.memory_space<vmem>>, vector<8x640xf32>,
    %259 = vector.extract_strided_slice %176 {offsets = [0, 1025], sizes = [8, 640], strides = [1, 1]} : vector<8x1792xf32> to vector<8x640xf32>
    %c112_194 = arith.constant 112 : index
    %c640_195 = arith.constant 640 : index
    %260 = vector.load %arg13[%c112_194, %c640_195] : memref<256x1280xf32, #tpu.memory_space<vmem>>, vector<8x640xf32>
    tpu.vector_store %arg13[%c112_194, %c640_195], %259 {strides = array<i32>} : memref<256x1280xf32, #tpu.memory_space<vmem>>, vector<8x640xf32>,
    %261 = vector.extract_strided_slice %176 {offsets = [0, 1033], sizes = [8, 640], strides = [1, 1]} : vector<8x1792xf32> to vector<8x640xf32>
    %c120_196 = arith.constant 120 : index
    %c640_197 = arith.constant 640 : index
    %262 = vector.load %arg13[%c120_196, %c640_197] : memref<256x1280xf32, #tpu.memory_space<vmem>>, vector<8x640xf32>
    tpu.vector_store %arg13[%c120_196, %c640_197], %261 {strides = array<i32>} : memref<256x1280xf32, #tpu.memory_space<vmem>>, vector<8x640xf32>,
    %263 = vector.extract_strided_slice %176 {offsets = [0, 1034], sizes = [8, 640], strides = [1, 1]} : vector<8x1792xf32> to vector<8x640xf32>
    %c128_198 = arith.constant 128 : index
    %c640_199 = arith.constant 640 : index
    %264 = vector.load %arg13[%c128_198, %c640_199] : memref<256x1280xf32, #tpu.memory_space<vmem>>, vector<8x640xf32>
    tpu.vector_store %arg13[%c128_198, %c640_199], %263 {strides = array<i32>} : memref<256x1280xf32, #tpu.memory_space<vmem>>, vector<8x640xf32>,
    %265 = vector.extract_strided_slice %176 {offsets = [0, 1035], sizes = [8, 640], strides = [1, 1]} : vector<8x1792xf32> to vector<8x640xf32>
    %c136_200 = arith.constant 136 : index
    %c640_201 = arith.constant 640 : index
    %266 = vector.load %arg13[%c136_200, %c640_201] : memref<256x1280xf32, #tpu.memory_space<vmem>>, vector<8x640xf32>
    tpu.vector_store %arg13[%c136_200, %c640_201], %265 {strides = array<i32>} : memref<256x1280xf32, #tpu.memory_space<vmem>>, vector<8x640xf32>,
    %267 = vector.extract_strided_slice %176 {offsets = [0, 1113], sizes = [8, 640], strides = [1, 1]} : vector<8x1792xf32> to vector<8x640xf32>
    %c144_202 = arith.constant 144 : index
    %c640_203 = arith.constant 640 : index
    %268 = vector.load %arg13[%c144_202, %c640_203] : memref<256x1280xf32, #tpu.memory_space<vmem>>, vector<8x640xf32>
    tpu.vector_store %arg13[%c144_202, %c640_203], %267 {strides = array<i32>} : memref<256x1280xf32, #tpu.memory_space<vmem>>, vector<8x640xf32>,
    %269 = vector.extract_strided_slice %176 {offsets = [0, 1114], sizes = [8, 640], strides = [1, 1]} : vector<8x1792xf32> to vector<8x640xf32>
    %c152_204 = arith.constant 152 : index
    %c640_205 = arith.constant 640 : index
    %270 = vector.load %arg13[%c152_204, %c640_205] : memref<256x1280xf32, #tpu.memory_space<vmem>>, vector<8x640xf32>
    tpu.vector_store %arg13[%c152_204, %c640_205], %269 {strides = array<i32>} : memref<256x1280xf32, #tpu.memory_space<vmem>>, vector<8x640xf32>,
    %271 = vector.extract_strided_slice %176 {offsets = [0, 1115], sizes = [8, 640], strides = [1, 1]} : vector<8x1792xf32> to vector<8x640xf32>
    %c160_206 = arith.constant 160 : index
    %c640_207 = arith.constant 640 : index
    %272 = vector.load %arg13[%c160_206, %c640_207] : memref<256x1280xf32, #tpu.memory_space<vmem>>, vector<8x640xf32>
    tpu.vector_store %arg13[%c160_206, %c640_207], %271 {strides = array<i32>} : memref<256x1280xf32, #tpu.memory_space<vmem>>, vector<8x640xf32>,
    %273 = vector.extract_strided_slice %176 {offsets = [0, 1123], sizes = [8, 640], strides = [1, 1]} : vector<8x1792xf32> to vector<8x640xf32>
    %c168_208 = arith.constant 168 : index
    %c640_209 = arith.constant 640 : index
    %274 = vector.load %arg13[%c168_208, %c640_209] : memref<256x1280xf32, #tpu.memory_space<vmem>>, vector<8x640xf32>
    tpu.vector_store %arg13[%c168_208, %c640_209], %273 {strides = array<i32>} : memref<256x1280xf32, #tpu.memory_space<vmem>>, vector<8x640xf32>,
    %275 = vector.extract_strided_slice %176 {offsets = [0, 1124], sizes = [8, 640], strides = [1, 1]} : vector<8x1792xf32> to vector<8x640xf32>
    %c176_210 = arith.constant 176 : index
    %c640_211 = arith.constant 640 : index
    %276 = vector.load %arg13[%c176_210, %c640_211] : memref<256x1280xf32, #tpu.memory_space<vmem>>, vector<8x640xf32>
    tpu.vector_store %arg13[%c176_210, %c640_211], %275 {strides = array<i32>} : memref<256x1280xf32, #tpu.memory_space<vmem>>, vector<8x640xf32>,
    %277 = vector.extract_strided_slice %176 {offsets = [0, 1125], sizes = [8, 640], strides = [1, 1]} : vector<8x1792xf32> to vector<8x640xf32>
    %c184_212 = arith.constant 184 : index
    %c640_213 = arith.constant 640 : index
    %278 = vector.load %arg13[%c184_212, %c640_213] : memref<256x1280xf32, #tpu.memory_space<vmem>>, vector<8x640xf32>
    tpu.vector_store %arg13[%c184_212, %c640_213], %277 {strides = array<i32>} : memref<256x1280xf32, #tpu.memory_space<vmem>>, vector<8x640xf32>,
    %279 = vector.extract_strided_slice %176 {offsets = [0, 1133], sizes = [8, 640], strides = [1, 1]} : vector<8x1792xf32> to vector<8x640xf32>
    %c192_214 = arith.constant 192 : index
    %c640_215 = arith.constant 640 : index
    %280 = vector.load %arg13[%c192_214, %c640_215] : memref<256x1280xf32, #tpu.memory_space<vmem>>, vector<8x640xf32>
    tpu.vector_store %arg13[%c192_214, %c640_215], %279 {strides = array<i32>} : memref<256x1280xf32, #tpu.memory_space<vmem>>, vector<8x640xf32>,
    %281 = vector.extract_strided_slice %176 {offsets = [0, 1134], sizes = [8, 640], strides = [1, 1]} : vector<8x1792xf32> to vector<8x640xf32>
    %c200_216 = arith.constant 200 : index
    %c640_217 = arith.constant 640 : index
    %282 = vector.load %arg13[%c200_216, %c640_217] : memref<256x1280xf32, #tpu.memory_space<vmem>>, vector<8x640xf32>
    tpu.vector_store %arg13[%c200_216, %c640_217], %281 {strides = array<i32>} : memref<256x1280xf32, #tpu.memory_space<vmem>>, vector<8x640xf32>,
    %283 = vector.extract_strided_slice %176 {offsets = [0, 1135], sizes = [8, 640], strides = [1, 1]} : vector<8x1792xf32> to vector<8x640xf32>
    %c208_218 = arith.constant 208 : index
    %c640_219 = arith.constant 640 : index
    %284 = vector.load %arg13[%c208_218, %c640_219] : memref<256x1280xf32, #tpu.memory_space<vmem>>, vector<8x640xf32>
    tpu.vector_store %arg13[%c208_218, %c640_219], %283 {strides = array<i32>} : memref<256x1280xf32, #tpu.memory_space<vmem>>, vector<8x640xf32>,
    %cst_220 = arith.constant 0.000000e+00 : f32
    %285 = vector.broadcast %cst_220 : f32 to vector<40x1280xf32>
    %c216 = arith.constant 216 : index
    %c0_221 = arith.constant 0 : index
    %286 = vector.load %arg13[%c216, %c0_221] : memref<256x1280xf32, #tpu.memory_space<vmem>>, vector<40x1280xf32>
    tpu.vector_store %arg13[%c216, %c0_221], %285 {strides = array<i32>} : memref<256x1280xf32, #tpu.memory_space<vmem>>, vector<40x1280xf32>,
    %c0_222 = arith.constant 0 : index
    %c0_223 = arith.constant 0 : index
    %287 = vector.load %arg4[%c0_222, %c0_223] : memref<8x256xf32, #tpu.memory_space<vmem>>, vector<8x256xf32>
    %c0_224 = arith.constant 0 : index
    %c0_225 = arith.constant 0 : index
    %288 = vector.load %arg13[%c0_224, %c0_225] : memref<256x1280xf32, #tpu.memory_space<vmem>>, vector<256x1280xf32>
    %cst_226 = arith.constant dense<0.000000e+00> : vector<8x1280xf32>
    %289 = tpu.matmul %287, %288, %cst_226 {dimension_numbers = #tpu.dot_dimension_numbers<[1], [0], [0], [1], [0, 0, 1, 1], [], []>} : vector<8x256xf32>, vector<256x1280xf32>, vector<8x1280xf32> -> vector<8x1280xf32>
    %c0_227 = arith.constant 0 : index
    %c0_228 = arith.constant 0 : index
    %290 = vector.load %arg5[%c0_227, %c0_228] : memref<8x1xf32, #tpu.memory_space<vmem>>, vector<8x1xf32>
    %291 = vector.broadcast %290 : vector<8x1xf32> to vector<8x1280xf32>
    %292 = arith.addf %289, %291 : vector<8x1280xf32>
    %c0_229 = arith.constant 0 : index
    %c0_230 = arith.constant 0 : index
    %293 = vector.load %arg9[%c0_229, %c0_230] : memref<8x1280xf32, #tpu.memory_space<vmem>>, vector<8x1280xf32>
    %cst_231 = arith.constant dense<0.000000e+00> : vector<8x8xf32>
    %294 = tpu.matmul %292, %293, %cst_231 {dimension_numbers = #tpu.dot_dimension_numbers<[1], [1], [0], [0], [0, 0, 1, 0], [], []>} : vector<8x1280xf32>, vector<8x1280xf32>, vector<8x8xf32> -> vector<8x8xf32>
    %295 = arith.mulf %292, %292 : vector<8x1280xf32>
    %cst_232 = arith.constant dense<0.000000e+00> : vector<8x8xf32>
    %296 = tpu.matmul %295, %293, %cst_232 {dimension_numbers = #tpu.dot_dimension_numbers<[1], [1], [0], [0], [0, 0, 1, 0], [], []>} : vector<8x1280xf32>, vector<8x1280xf32>, vector<8x8xf32> -> vector<8x8xf32>
    %cst_233 = arith.constant dense<0.000000e+00> : vector<8xf32>
    %297 = vector.multi_reduction <add>, %294, %cst_233 [0] : vector<8x8xf32> to vector<8xf32>
    %298 = vector.shape_cast %297 : vector<8xf32> to vector<1x8xf32>
    %cst_234 = arith.constant 3.906250e-03 : f32
    %299 = vector.broadcast %cst_234 : f32 to vector<1x8xf32>
    %300 = arith.mulf %298, %299 : vector<1x8xf32>
    %cst_235 = arith.constant dense<0.000000e+00> : vector<8xf32>
    %301 = vector.multi_reduction <add>, %296, %cst_235 [0] : vector<8x8xf32> to vector<8xf32>
    %302 = vector.shape_cast %301 : vector<8xf32> to vector<1x8xf32>
    %cst_236 = arith.constant 3.906250e-03 : f32
    %303 = vector.broadcast %cst_236 : f32 to vector<1x8xf32>
    %304 = arith.mulf %302, %303 : vector<1x8xf32>
    %305 = arith.mulf %300, %300 : vector<1x8xf32>
    %306 = arith.subf %304, %305 : vector<1x8xf32>
    %cst_237 = arith.constant 0.000000e+00 : f32
    %307 = vector.broadcast %cst_237 : f32 to vector<1x8xf32>
    %308 = arith.maximumf %306, %307 : vector<1x8xf32>
    %cst_238 = arith.constant 9.99999974E-6 : f32
    %309 = vector.broadcast %cst_238 : f32 to vector<1x8xf32>
    %310 = arith.addf %308, %309 : vector<1x8xf32>
    %311 = math.rsqrt %310 : vector<1x8xf32>
    %cst_239 = arith.constant dense<0.000000e+00> : vector<1x1280xf32>
    %312 = tpu.matmul %300, %293, %cst_239 {dimension_numbers = #tpu.dot_dimension_numbers<[1], [0], [0], [1], [0, 0, 1, 1], [], []>} : vector<1x8xf32>, vector<8x1280xf32>, vector<1x1280xf32> -> vector<1x1280xf32>
    %cst_240 = arith.constant dense<0.000000e+00> : vector<1x1280xf32>
    %313 = tpu.matmul %311, %293, %cst_240 {dimension_numbers = #tpu.dot_dimension_numbers<[1], [0], [0], [1], [0, 0, 1, 1], [], []>} : vector<1x8xf32>, vector<8x1280xf32>, vector<1x1280xf32> -> vector<1x1280xf32>
    %314 = vector.broadcast %312 : vector<1x1280xf32> to vector<8x1280xf32>
    %315 = arith.subf %292, %314 : vector<8x1280xf32>
    %316 = vector.broadcast %313 : vector<1x1280xf32> to vector<8x1280xf32>
    %317 = arith.mulf %315, %316 : vector<8x1280xf32>
    %c0_241 = arith.constant 0 : index
    %c0_242 = arith.constant 0 : index
    %318 = vector.load %arg6[%c0_241, %c0_242] : memref<8x1xf32, #tpu.memory_space<vmem>>, vector<8x1xf32>
    %319 = vector.broadcast %318 : vector<8x1xf32> to vector<8x1280xf32>
    %320 = arith.mulf %317, %319 : vector<8x1280xf32>
    %c0_243 = arith.constant 0 : index
    %c0_244 = arith.constant 0 : index
    %321 = vector.load %arg7[%c0_243, %c0_244] : memref<8x1xf32, #tpu.memory_space<vmem>>, vector<8x1xf32>
    %322 = vector.broadcast %321 : vector<8x1xf32> to vector<8x1280xf32>
    %323 = arith.addf %320, %322 : vector<8x1280xf32>
    %324 = vector.extract_strided_slice %323 {offsets = [0, 0], sizes = [4, 640], strides = [1, 1]} : vector<8x1280xf32> to vector<4x640xf32>
    %c0_245 = arith.constant 0 : index
    %c0_246 = arith.constant 0 : index
    %c0_247 = arith.constant 0 : index
    %325 = vector.load %arg10[%c0_245, %c0_246, %c0_247] : memref<2x4x640xf32, #tpu.memory_space<vmem>>, vector<1x4x640xf32>
    %326 = vector.shape_cast %325 : vector<1x4x640xf32> to vector<4x640xf32>
    %327 = vector.shape_cast %324 : vector<4x640xf32> to vector<1x4x640xf32>
    tpu.vector_store %arg10[%c0_245, %c0_246, %c0_247], %327 {strides = array<i32>} : memref<2x4x640xf32, #tpu.memory_space<vmem>>, vector<1x4x640xf32>,
    %328 = vector.extract_strided_slice %323 {offsets = [0, 640], sizes = [4, 640], strides = [1, 1]} : vector<8x1280xf32> to vector<4x640xf32>
    %c1_248 = arith.constant 1 : index
    %c0_249 = arith.constant 0 : index
    %c0_250 = arith.constant 0 : index
    %329 = vector.load %arg10[%c1_248, %c0_249, %c0_250] : memref<2x4x640xf32, #tpu.memory_space<vmem>>, vector<1x4x640xf32>
    %330 = vector.shape_cast %329 : vector<1x4x640xf32> to vector<4x640xf32>
    %331 = vector.shape_cast %328 : vector<4x640xf32> to vector<1x4x640xf32>
    tpu.vector_store %arg10[%c1_248, %c0_249, %c0_250], %331 {strides = array<i32>} : memref<2x4x640xf32, #tpu.memory_space<vmem>>, vector<1x4x640xf32>,
    return
  }
  func.func @transform_0(%arg0: i32) -> (i32, i32, i32) {
    %c0_i32 = arith.constant 0 : i32
    %c0_i32_0 = arith.constant 0 : i32
    %c0_i32_1 = arith.constant 0 : i32
    %c0_i32_2 = arith.constant 0 : i32
    return %c0_i32, %c0_i32_0, %c0_i32_1 : i32, i32, i32
  }
  func.func @transform_1(%arg0: i32) -> (i32, i32) {
    %c0_i32 = arith.constant 0 : i32
    %c0_i32_0 = arith.constant 0 : i32
    %c0_i32_1 = arith.constant 0 : i32
    return %c0_i32, %c0_i32_0 : i32, i32
  }
  func.func @transform_2(%arg0: i32) -> (i32, i32) {
    %c0_i32 = arith.constant 0 : i32
    %c0_i32_0 = arith.constant 0 : i32
    %c0_i32_1 = arith.constant 0 : i32
    return %c0_i32, %c0_i32_0 : i32, i32
  }
  func.func @transform_3(%arg0: i32) -> (i32, i32) {
    %c0_i32 = arith.constant 0 : i32
    %c0_i32_0 = arith.constant 0 : i32
    %c0_i32_1 = arith.constant 0 : i32
    return %c0_i32, %c0_i32_0 : i32, i32
  }
  func.func @transform_4(%arg0: i32) -> (i32, i32) {
    %c0_i32 = arith.constant 0 : i32
    %c0_i32_0 = arith.constant 0 : i32
    %c0_i32_1 = arith.constant 0 : i32
    return %c0_i32, %c0_i32_0 : i32, i32
  }
  func.func @transform_5(%arg0: i32) -> (i32, i32) {
    %c0_i32 = arith.constant 0 : i32
    %c0_i32_0 = arith.constant 0 : i32
    %c0_i32_1 = arith.constant 0 : i32
    return %c0_i32, %c0_i32_0 : i32, i32
  }
  func.func @transform_6(%arg0: i32) -> (i32, i32) {
    %c0_i32 = arith.constant 0 : i32
    %c0_i32_0 = arith.constant 0 : i32
    %c0_i32_1 = arith.constant 0 : i32
    return %c0_i32, %c0_i32_0 : i32, i32
  }
  func.func @transform_7(%arg0: i32) -> (i32, i32) {
    %c0_i32 = arith.constant 0 : i32
    %c0_i32_0 = arith.constant 0 : i32
    %c0_i32_1 = arith.constant 0 : i32
    return %c0_i32, %c0_i32_0 : i32, i32
  }
  func.func @transform_8(%arg0: i32) -> (i32, i32) {
    %c0_i32 = arith.constant 0 : i32
    %c0_i32_0 = arith.constant 0 : i32
    %c0_i32_1 = arith.constant 0 : i32
    return %c0_i32, %c0_i32_0 : i32, i32
  }
  func.func @transform_9(%arg0: i32) -> (i32, i32, i32) {
    %c0_i32 = arith.constant 0 : i32
    %c0_i32_0 = arith.constant 0 : i32
    %c0_i32_1 = arith.constant 0 : i32
    %c0_i32_2 = arith.constant 0 : i32
    return %c0_i32, %c0_i32_0, %c0_i32_1 : i32, i32, i32
  }
}

</mosaic_0001>

<llo_original>
// kernel: tpu_custom_call.1
$region0: #{tpu_custom_call.1}
  #allocation0 [shape = 'u32[]', space=smem, size = 0x4, offset = 0x4, fixed_abs, tag = 'smem constant byte address 0x4 - core index']
  #allocation1 [shape = 'u32[144,128]{1,0:T(1,128)}', space=vmem, size = 0x12000, scoped, tag = 'internal scratch']
  #allocation2 [shape = 'f32[128,1280]{1,0:T(8,128)}', space=vmem, size = 0xa0000, scoped, tag = 'scratch operand']
  #allocation3 [shape = 'f32[8,1792]{1,0:T(8,128)}', space=vmem, size = 0xe000, scoped, tag = 'scratch operand']
  #allocation4 [shape = 'f32[256,1280]{1,0:T(8,128)}', space=vmem, size = 0x140000, scoped, tag = 'scratch operand']
  %s0 = inlined_call_operand.hbm [shape: f32[2,4,896], index: 0, kind: input, shape index: {}]
  %s1 = inlined_call_operand.vmem [shape: f32[8,128], index: 1, kind: input, shape index: {}]
  %s2 = inlined_call_operand.vmem [shape: f32[8,1], index: 2, kind: input, shape index: {}]
  %s3 = inlined_call_operand.vmem [shape: f32[8,256], index: 3, kind: input, shape index: {}]
  %s4 = inlined_call_operand.vmem [shape: f32[8,1], index: 4, kind: input, shape index: {}]
  %s5 = inlined_call_operand.vmem [shape: f32[8,1], index: 5, kind: input, shape index: {}]
  %s6 = inlined_call_operand.vmem [shape: f32[8,1], index: 6, kind: input, shape index: {}]
  %s7 = inlined_call_operand.vmem [shape: f32[1,1280], index: 7, kind: input, shape index: {}]
  %s8 = inlined_call_operand.hbm [shape: f32[8,1280], index: 8, kind: input, shape index: {}]
  %s9 = inlined_call_operand.hbm [shape: f32[2,4,640], index: 9, kind: output, shape index: {}]
  %s10 = sld [smem:[#allocation0]]
  $region54: #{tpu_custom_call.1} parent=0
    _
  %s12 = ssub.s32 1, %s10
  %s13 = scalar_select 0, %s12, %s10
  $region1: #{tpu_custom_call.1} parent=0
    #allocation5 [shape = 'u8[28672]{0}', space=vmem, size = 0x7000, scoped, tag = 'input window, operand 0, single buffered']
    #allocation6 [shape = 's32[1]{0}', space=sflag, size = 0x4, scoped, tag = 'scoped memory for tpu_custom_call.1']
    #allocation7 [shape = 's32[1]{0}', space=sflag, size = 0x4, scoped, tag = 'scoped memory for tpu_custom_call.1']
    #allocation8 [shape = 'u8[40960]{0}', space=vmem, size = 0xa000, scoped, tag = 'input window, operand 8, single buffered']
    #allocation9 [shape = 's32[1]{0}', space=sflag, size = 0x4, scoped, tag = 'scoped memory for tpu_custom_call.1']
    #allocation10 [shape = 'u8[20480]{0}', space=vmem, size = 0x5000, scoped, tag = 'output window, operand 0, single buffered']
    %14 = vsyncpa [#allocation6], 0
    %15 = vsyncpa [#allocation9], 0
    %16 = vsyncpa [#allocation7], 0
    // Predicated region
    $region2: #{tpu_custom_call.1} parent=1 // pred_check
      _
    $region3: #{tpu_custom_call.1} parent=1 // pred_check_branch
      %18 = sbr.rel (0) target = $region5
    $region4: #{tpu_custom_call.1} parent=1 // pred_region
      %s20 = ssub.s32 896, 896
      %21 = vsyncadd [#allocation6], %s20
      %s22 = sshll.u32 [#allocation5], 4
      %s23 = int_to_ptr.vmem [resolvable:$true] %s22
      %28 = dma.hbm_to_vmem [thread:$0]  %s0, 896, %s23, [#allocation6], 448, 448, 28
    $region5: #{tpu_custom_call.1} parent=1 // pred_fallthru
      _
    // Predicated region
    $region6: #{tpu_custom_call.1} parent=1 // pred_check
      _
    $region7: #{tpu_custom_call.1} parent=1 // pred_check_branch
      %30 = sbr.rel (0) target = $region9
    $region8: #{tpu_custom_call.1} parent=1 // pred_region
      _
    $region9: #{tpu_custom_call.1} parent=1 // pred_fallthru
      _
    // Predicated region
    $region10: #{tpu_custom_call.1} parent=1 // pred_check
      _
    $region11: #{tpu_custom_call.1} parent=1 // pred_check_branch
      %32 = sbr.rel (0) target = $region13
    $region12: #{tpu_custom_call.1} parent=1 // pred_region
      _
    $region13: #{tpu_custom_call.1} parent=1 // pred_fallthru
      _
    // Predicated region
    $region14: #{tpu_custom_call.1} parent=1 // pred_check
      _
    $region15: #{tpu_custom_call.1} parent=1 // pred_check_branch
      %34 = sbr.rel (0) target = $region17
    $region16: #{tpu_custom_call.1} parent=1 // pred_region
      _
    $region17: #{tpu_custom_call.1} parent=1 // pred_fallthru
      _
    // Predicated region
    $region18: #{tpu_custom_call.1} parent=1 // pred_check
      _
    $region19: #{tpu_custom_call.1} parent=1 // pred_check_branch
      %36 = sbr.rel (0) target = $region21
    $region20: #{tpu_custom_call.1} parent=1 // pred_region
      _
    $region21: #{tpu_custom_call.1} parent=1 // pred_fallthru
      _
    // Predicated region
    $region22: #{tpu_custom_call.1} parent=1 // pred_check
      _
    $region23: #{tpu_custom_call.1} parent=1 // pred_check_branch
      %38 = sbr.rel (0) target = $region25
    $region24: #{tpu_custom_call.1} parent=1 // pred_region
      _
    $region25: #{tpu_custom_call.1} parent=1 // pred_fallthru
      _
    // Predicated region
    $region26: #{tpu_custom_call.1} parent=1 // pred_check
      _
    $region27: #{tpu_custom_call.1} parent=1 // pred_check_branch
      %40 = sbr.rel (0) target = $region29
    $region28: #{tpu_custom_call.1} parent=1 // pred_region
      _
    $region29: #{tpu_custom_call.1} parent=1 // pred_fallthru
      _
    // Predicated region
    $region30: #{tpu_custom_call.1} parent=1 // pred_check
      _
    $region31: #{tpu_custom_call.1} parent=1 // pred_check_branch
      %42 = sbr.rel (0) target = $region33
    $region32: #{tpu_custom_call.1} parent=1 // pred_region
      _
    $region33: #{tpu_custom_call.1} parent=1 // pred_fallthru
      _
    // Predicated region
    $region34: #{tpu_custom_call.1} parent=1 // pred_check
      _
    $region35: #{tpu_custom_call.1} parent=1 // pred_check_branch
      %44 = sbr.rel (0) target = $region37
    $region36: #{tpu_custom_call.1} parent=1 // pred_region
      %s46 = ssub.s32 1280, 1280
      %47 = vsyncadd [#allocation9], %s46
      %s49 = sshll.u32 [#allocation8], 4
      %s50 = int_to_ptr.vmem [resolvable:$true] %s49
      %52 = dma.hbm_to_vmem [thread:$0]  %s8, 1280, %s50, [#allocation9]
    $region37: #{tpu_custom_call.1} parent=1 // pred_fallthru
      _
    // Predicated region
    $region38: #{tpu_custom_call.1} parent=1 // pred_check
      _
    $region39: #{tpu_custom_call.1} parent=1 // pred_check_branch
      %54 = sbr.rel (0) target = $region41
    $region40: #{tpu_custom_call.1} parent=1 // pred_region
      %55 = dma.done [#allocation6], 896
    $region41: #{tpu_custom_call.1} parent=1 // pred_fallthru
      _
    // Predicated region
    $region42: #{tpu_custom_call.1} parent=1 // pred_check
      _
    $region43: #{tpu_custom_call.1} parent=1 // pred_check_branch
      %57 = sbr.rel (0) target = $region45
    $region44: #{tpu_custom_call.1} parent=1 // pred_region
      %58 = dma.done [#allocation9], 1280
    $region45: #{tpu_custom_call.1} parent=1 // pred_fallthru
      _
    %v59 = vld [vmem:[#allocation5] sm:$0xff]
    %v60 = vld [vmem:[#allocation5 + $0x8] sm:$0xff]
    %v61 = vld [vmem:[#allocation5 + $0x10] sm:$0xff]
    %v62 = vld [vmem:[#allocation5 + $0x18] sm:$0xf]
    %v66 = vcombine.high %v59, %v59
    %v67 = vcombine.high %v60, %v60
    %v68 = vcombine.high %v61, %v61
    %69 = vrot.lane.b32.xlu0 %v59, 111
    %v70 = vpop.permute.xlu0 %69
    %71 = vrot.lane.b32.xlu0 %v66, 111
    %v72 = vpop.permute.xlu0 %71
    %73 = vrot.lane.b32.xlu0 %v60, 111
    %v74 = vpop.permute.xlu0 %73
    %75 = vrot.lane.b32.xlu0 %v67, 111
    %v76 = vpop.permute.xlu0 %75
    %77 = vrot.lane.b32.xlu0 %v61, 111
    %v78 = vpop.permute.xlu0 %77
    %79 = vrot.lane.b32.xlu0 %v68, 111
    %v80 = vpop.permute.xlu0 %79
    %vm81 = vcmask 908288
    %v82 = vsel %vm81, %v70, %v72
    %v83 = vsel %vm81, %v72, %v74
    %v84 = vsel %vm81, %v74, %v76
    %v85 = vsel %vm81, %v76, %v78
    %v86 = vsel %vm81, %v78, %v80
    %92 = vst [vmem:[#allocation2] sm:$0xf] %v82
    %93 = vst [vmem:[#allocation2 + $0x8] sm:$0xf] %v83
    %94 = vst [vmem:[#allocation2 + $0x10] sm:$0xf] %v84
    %95 = vst [vmem:[#allocation2 + $0x18] sm:$0xf] %v85
    %96 = vst [vmem:[#allocation2 + $0x20] sm:$0xf] %v86
    %v97 = vcombine.low %v59, %v59
    %v98 = vcombine.low %v60, %v60
    %v99 = vcombine.low %v61, %v61
    %100 = vrot.lane.b32.xlu0 %v97, 110
    %v101 = vpop.permute.xlu0 %100
    %102 = vrot.lane.b32.xlu0 %v59, 110
    %v103 = vpop.permute.xlu0 %102
    %104 = vrot.lane.b32.xlu0 %v98, 110
    %v105 = vpop.permute.xlu0 %104
    %106 = vrot.lane.b32.xlu0 %v60, 110
    %v107 = vpop.permute.xlu0 %106
    %108 = vrot.lane.b32.xlu0 %v99, 110
    %v109 = vpop.permute.xlu0 %108
    %110 = vrot.lane.b32.xlu0 %v61, 110
    %v111 = vpop.permute.xlu0 %110
    %vm112 = vcmask 900096
    %v113 = vsel %vm112, %v101, %v103
    %v114 = vsel %vm112, %v103, %v105
    %v115 = vsel %vm112, %v105, %v107
    %v116 = vsel %vm112, %v107, %v109
    %v117 = vsel %vm112, %v109, %v111
    %123 = vst [vmem:[#allocation2] sm:$0xf0] %v113
    %124 = vst [vmem:[#allocation2 + $0x8] sm:$0xf0] %v114
    %125 = vst [vmem:[#allocation2 + $0x10] sm:$0xf0] %v115
    %126 = vst [vmem:[#allocation2 + $0x18] sm:$0xf0] %v116
    %127 = vst [vmem:[#allocation2 + $0x20] sm:$0xf0] %v117
    %128 = vrot.lane.b32.xlu0 %v59, 109
    %v129 = vpop.permute.xlu0 %128
    %130 = vrot.lane.b32.xlu0 %v66, 109
    %v131 = vpop.permute.xlu0 %130
    %132 = vrot.lane.b32.xlu0 %v60, 109
    %v133 = vpop.permute.xlu0 %132
    %134 = vrot.lane.b32.xlu0 %v67, 109
    %v135 = vpop.permute.xlu0 %134
    %136 = vrot.lane.b32.xlu0 %v61, 109
    %v137 = vpop.permute.xlu0 %136
    %138 = vrot.lane.b32.xlu0 %v68, 109
    %v139 = vpop.permute.xlu0 %138
    %vm140 = vcmask 891904
    %v141 = vsel %vm140, %v129, %v131
    %v142 = vsel %vm140, %v131, %v133
    %v143 = vsel %vm140, %v133, %v135
    %v144 = vsel %vm140, %v135, %v137
    %v145 = vsel %vm140, %v137, %v139
    %151 = vst [vmem:[#allocation2 + $0x50] sm:$0xf] %v141
    %152 = vst [vmem:[#allocation2 + $0x58] sm:$0xf] %v142
    %153 = vst [vmem:[#allocation2 + $0x60] sm:$0xf] %v143
    %154 = vst [vmem:[#allocation2 + $0x68] sm:$0xf] %v144
    %155 = vst [vmem:[#allocation2 + $0x70] sm:$0xf] %v145
    %156 = vrot.lane.b32.xlu0 %v97, 101
    %v157 = vpop.permute.xlu0 %156
    %158 = vrot.lane.b32.xlu0 %v59, 101
    %v159 = vpop.permute.xlu0 %158
    %160 = vrot.lane.b32.xlu0 %v98, 101
    %v161 = vpop.permute.xlu0 %160
    %162 = vrot.lane.b32.xlu0 %v60, 101
    %v163 = vpop.permute.xlu0 %162
    %164 = vrot.lane.b32.xlu0 %v99, 101
    %v165 = vpop.permute.xlu0 %164
    %166 = vrot.lane.b32.xlu0 %v61, 101
    %v167 = vpop.permute.xlu0 %166
    %vm168 = vcmask 826368
    %v169 = vsel %vm168, %v157, %v159
    %v170 = vsel %vm168, %v159, %v161
    %v171 = vsel %vm168, %v161, %v163
    %v172 = vsel %vm168, %v163, %v165
    %v173 = vsel %vm168, %v165, %v167
    %179 = vst [vmem:[#allocation2 + $0x50] sm:$0xf0] %v169
    %180 = vst [vmem:[#allocation2 + $0x58] sm:$0xf0] %v170
    %181 = vst [vmem:[#allocation2 + $0x60] sm:$0xf0] %v171
    %182 = vst [vmem:[#allocation2 + $0x68] sm:$0xf0] %v172
    %183 = vst [vmem:[#allocation2 + $0x70] sm:$0xf0] %v173
    %184 = vrot.lane.b32.xlu0 %v59, 100
    %v185 = vpop.permute.xlu0 %184
    %186 = vrot.lane.b32.xlu0 %v66, 100
    %v187 = vpop.permute.xlu0 %186
    %188 = vrot.lane.b32.xlu0 %v60, 100
    %v189 = vpop.permute.xlu0 %188
    %190 = vrot.lane.b32.xlu0 %v67, 100
    %v191 = vpop.permute.xlu0 %190
    %192 = vrot.lane.b32.xlu0 %v61, 100
    %v193 = vpop.permute.xlu0 %192
    %194 = vrot.lane.b32.xlu0 %v68, 100
    %v195 = vpop.permute.xlu0 %194
    %vm196 = vcmask 818176
    %v197 = vsel %vm196, %v185, %v187
    %v198 = vsel %vm196, %v187, %v189
    %v199 = vsel %vm196, %v189, %v191
    %v200 = vsel %vm196, %v191, %v193
    %v201 = vsel %vm196, %v193, %v195
    %207 = vst [vmem:[#allocation2 + $0xa0] sm:$0xf] %v197
    %208 = vst [vmem:[#allocation2 + $0xa8] sm:$0xf] %v198
    %209 = vst [vmem:[#allocation2 + $0xb0] sm:$0xf] %v199
    %210 = vst [vmem:[#allocation2 + $0xb8] sm:$0xf] %v200
    %211 = vst [vmem:[#allocation2 + $0xc0] sm:$0xf] %v201
    %212 = vrot.lane.b32.xlu0 %v97, 99
    %v213 = vpop.permute.xlu0 %212
    %214 = vrot.lane.b32.xlu0 %v59, 99
    %v215 = vpop.permute.xlu0 %214
    %216 = vrot.lane.b32.xlu0 %v98, 99
    %v217 = vpop.permute.xlu0 %216
    %218 = vrot.lane.b32.xlu0 %v60, 99
    %v219 = vpop.permute.xlu0 %218
    %220 = vrot.lane.b32.xlu0 %v99, 99
    %v221 = vpop.permute.xlu0 %220
    %222 = vrot.lane.b32.xlu0 %v61, 99
    %v223 = vpop.permute.xlu0 %222
    %vm224 = vcmask 809984
    %v225 = vsel %vm224, %v213, %v215
    %v226 = vsel %vm224, %v215, %v217
    %v227 = vsel %vm224, %v217, %v219
    %v228 = vsel %vm224, %v219, %v221
    %v229 = vsel %vm224, %v221, %v223
    %235 = vst [vmem:[#allocation2 + $0xa0] sm:$0xf0] %v225
    %236 = vst [vmem:[#allocation2 + $0xa8] sm:$0xf0] %v226
    %237 = vst [vmem:[#allocation2 + $0xb0] sm:$0xf0] %v227
    %238 = vst [vmem:[#allocation2 + $0xb8] sm:$0xf0] %v228
    %239 = vst [vmem:[#allocation2 + $0xc0] sm:$0xf0] %v229
    %240 = vrot.lane.b32.xlu0 %v59, 91
    %v241 = vpop.permute.xlu0 %240
    %242 = vrot.lane.b32.xlu0 %v66, 91
    %v243 = vpop.permute.xlu0 %242
    %244 = vrot.lane.b32.xlu0 %v60, 91
    %v245 = vpop.permute.xlu0 %244
    %246 = vrot.lane.b32.xlu0 %v67, 91
    %v247 = vpop.permute.xlu0 %246
    %248 = vrot.lane.b32.xlu0 %v61, 91
    %v249 = vpop.permute.xlu0 %248
    %250 = vrot.lane.b32.xlu0 %v68, 91
    %v251 = vpop.permute.xlu0 %250
    %vm252 = vcmask 744448
    %v253 = vsel %vm252, %v241, %v243
    %v254 = vsel %vm252, %v243, %v245
    %v255 = vsel %vm252, %v245, %v247
    %v256 = vsel %vm252, %v247, %v249
    %v257 = vsel %vm252, %v249, %v251
    %263 = vst [vmem:[#allocation2 + $0xf0] sm:$0xf] %v253
    %264 = vst [vmem:[#allocation2 + $0xf8] sm:$0xf] %v254
    %265 = vst [vmem:[#allocation2 + $0x100] sm:$0xf] %v255
    %266 = vst [vmem:[#allocation2 + $0x108] sm:$0xf] %v256
    %267 = vst [vmem:[#allocation2 + $0x110] sm:$0xf] %v257
    %268 = vrot.lane.b32.xlu0 %v97, 90
    %v269 = vpop.permute.xlu0 %268
    %270 = vrot.lane.b32.xlu0 %v59, 90
    %v271 = vpop.permute.xlu0 %270
    %272 = vrot.lane.b32.xlu0 %v98, 90
    %v273 = vpop.permute.xlu0 %272
    %274 = vrot.lane.b32.xlu0 %v60, 90
    %v275 = vpop.permute.xlu0 %274
    %276 = vrot.lane.b32.xlu0 %v99, 90
    %v277 = vpop.permute.xlu0 %276
    %278 = vrot.lane.b32.xlu0 %v61, 90
    %v279 = vpop.permute.xlu0 %278
    %vm280 = vcmask 736256
    %v281 = vsel %vm280, %v269, %v271
    %v282 = vsel %vm280, %v271, %v273
    %v283 = vsel %vm280, %v273, %v275
    %v284 = vsel %vm280, %v275, %v277
    %v285 = vsel %vm280, %v277, %v279
    %291 = vst [vmem:[#allocation2 + $0xf0] sm:$0xf0] %v281
    %292 = vst [vmem:[#allocation2 + $0xf8] sm:$0xf0] %v282
    %293 = vst [vmem:[#allocation2 + $0x100] sm:$0xf0] %v283
    %294 = vst [vmem:[#allocation2 + $0x108] sm:$0xf0] %v284
    %295 = vst [vmem:[#allocation2 + $0x110] sm:$0xf0] %v285
    %296 = vrot.lane.b32.xlu0 %v59, 89
    %v297 = vpop.permute.xlu0 %296
    %298 = vrot.lane.b32.xlu0 %v66, 89
    %v299 = vpop.permute.xlu0 %298
    %300 = vrot.lane.b32.xlu0 %v60, 89
    %v301 = vpop.permute.xlu0 %300
    %302 = vrot.lane.b32.xlu0 %v67, 89
    %v303 = vpop.permute.xlu0 %302
    %304 = vrot.lane.b32.xlu0 %v61, 89
    %v305 = vpop.permute.xlu0 %304
    %306 = vrot.lane.b32.xlu0 %v68, 89
    %v307 = vpop.permute.xlu0 %306
    %vm308 = vcmask 728064
    %v309 = vsel %vm308, %v297, %v299
    %v310 = vsel %vm308, %v299, %v301
    %v311 = vsel %vm308, %v301, %v303
    %v312 = vsel %vm308, %v303, %v305
    %v313 = vsel %vm308, %v305, %v307
    %319 = vst [vmem:[#allocation2 + $0x140] sm:$0xf] %v309
    %320 = vst [vmem:[#allocation2 + $0x148] sm:$0xf] %v310
    %321 = vst [vmem:[#allocation2 + $0x150] sm:$0xf] %v311
    %322 = vst [vmem:[#allocation2 + $0x158] sm:$0xf] %v312
    %323 = vst [vmem:[#allocation2 + $0x160] sm:$0xf] %v313
    %324 = vrot.lane.b32.xlu0 %v97, 11
    %v325 = vpop.permute.xlu0 %324
    %326 = vrot.lane.b32.xlu0 %v59, 11
    %v327 = vpop.permute.xlu0 %326
    %328 = vrot.lane.b32.xlu0 %v98, 11
    %v329 = vpop.permute.xlu0 %328
    %330 = vrot.lane.b32.xlu0 %v60, 11
    %v331 = vpop.permute.xlu0 %330
    %332 = vrot.lane.b32.xlu0 %v99, 11
    %v333 = vpop.permute.xlu0 %332
    %334 = vrot.lane.b32.xlu0 %v61, 11
    %v335 = vpop.permute.xlu0 %334
    %vm336 = vcmask 89088
    %v337 = vsel %vm336, %v325, %v327
    %v338 = vsel %vm336, %v327, %v329
    %v339 = vsel %vm336, %v329, %v331
    %v340 = vsel %vm336, %v331, %v333
    %v341 = vsel %vm336, %v333, %v335
    %347 = vst [vmem:[#allocation2 + $0x140] sm:$0xf0] %v337
    %348 = vst [vmem:[#allocation2 + $0x148] sm:$0xf0] %v338
    %349 = vst [vmem:[#allocation2 + $0x150] sm:$0xf0] %v339
    %350 = vst [vmem:[#allocation2 + $0x158] sm:$0xf0] %v340
    %351 = vst [vmem:[#allocation2 + $0x160] sm:$0xf0] %v341
    %352 = vrot.lane.b32.xlu0 %v59, 10
    %v353 = vpop.permute.xlu0 %352
    %354 = vrot.lane.b32.xlu0 %v66, 10
    %v355 = vpop.permute.xlu0 %354
    %356 = vrot.lane.b32.xlu0 %v60, 10
    %v357 = vpop.permute.xlu0 %356
    %358 = vrot.lane.b32.xlu0 %v67, 10
    %v359 = vpop.permute.xlu0 %358
    %360 = vrot.lane.b32.xlu0 %v61, 10
    %v361 = vpop.permute.xlu0 %360
    %362 = vrot.lane.b32.xlu0 %v68, 10
    %v363 = vpop.permute.xlu0 %362
    %vm364 = vcmask 80896
    %v365 = vsel %vm364, %v353, %v355
    %v366 = vsel %vm364, %v355, %v357
    %v367 = vsel %vm364, %v357, %v359
    %v368 = vsel %vm364, %v359, %v361
    %v369 = vsel %vm364, %v361, %v363
    %375 = vst [vmem:[#allocation2 + $0x190] sm:$0xf] %v365
    %376 = vst [vmem:[#allocation2 + $0x198] sm:$0xf] %v366
    %377 = vst [vmem:[#allocation2 + $0x1a0] sm:$0xf] %v367
    %378 = vst [vmem:[#allocation2 + $0x1a8] sm:$0xf] %v368
    %379 = vst [vmem:[#allocation2 + $0x1b0] sm:$0xf] %v369
    %380 = vrot.lane.b32.xlu0 %v97, 9
    %v381 = vpop.permute.xlu0 %380
    %382 = vrot.lane.b32.xlu0 %v59, 9
    %v383 = vpop.permute.xlu0 %382
    %384 = vrot.lane.b32.xlu0 %v98, 9
    %v385 = vpop.permute.xlu0 %384
    %386 = vrot.lane.b32.xlu0 %v60, 9
    %v387 = vpop.permute.xlu0 %386
    %388 = vrot.lane.b32.xlu0 %v99, 9
    %v389 = vpop.permute.xlu0 %388
    %390 = vrot.lane.b32.xlu0 %v61, 9
    %v391 = vpop.permute.xlu0 %390
    %vm392 = vcmask 72704
    %v393 = vsel %vm392, %v381, %v383
    %v394 = vsel %vm392, %v383, %v385
    %v395 = vsel %vm392, %v385, %v387
    %v396 = vsel %vm392, %v387, %v389
    %v397 = vsel %vm392, %v389, %v391
    %403 = vst [vmem:[#allocation2 + $0x190] sm:$0xf0] %v393
    %404 = vst [vmem:[#allocation2 + $0x198] sm:$0xf0] %v394
    %405 = vst [vmem:[#allocation2 + $0x1a0] sm:$0xf0] %v395
    %406 = vst [vmem:[#allocation2 + $0x1a8] sm:$0xf0] %v396
    %407 = vst [vmem:[#allocation2 + $0x1b0] sm:$0xf0] %v397
    %408 = vrot.lane.b32.xlu0 %v59, 1
    %v409 = vpop.permute.xlu0 %408
    %410 = vrot.lane.b32.xlu0 %v66, 1
    %v411 = vpop.permute.xlu0 %410
    %412 = vrot.lane.b32.xlu0 %v60, 1
    %v413 = vpop.permute.xlu0 %412
    %414 = vrot.lane.b32.xlu0 %v67, 1
    %v415 = vpop.permute.xlu0 %414
    %416 = vrot.lane.b32.xlu0 %v61, 1
    %v417 = vpop.permute.xlu0 %416
    %418 = vrot.lane.b32.xlu0 %v68, 1
    %v419 = vpop.permute.xlu0 %418
    %vm420 = vcmask 7168
    %v421 = vsel %vm420, %v409, %v411
    %v422 = vsel %vm420, %v411, %v413
    %v423 = vsel %vm420, %v413, %v415
    %v424 = vsel %vm420, %v415, %v417
    %v425 = vsel %vm420, %v417, %v419
    %431 = vst [vmem:[#allocation2 + $0x1e0] sm:$0xf] %v421
    %432 = vst [vmem:[#allocation2 + $0x1e8] sm:$0xf] %v422
    %433 = vst [vmem:[#allocation2 + $0x1f0] sm:$0xf] %v423
    %434 = vst [vmem:[#allocation2 + $0x1f8] sm:$0xf] %v424
    %435 = vst [vmem:[#allocation2 + $0x200] sm:$0xf] %v425
    %438 = vst [vmem:[#allocation2 + $0x1e0] sm:$0xf0] %v59
    %439 = vst [vmem:[#allocation2 + $0x1e8] sm:$0xf0] %v98
    %440 = vst [vmem:[#allocation2 + $0x1f0] sm:$0xf0] %v60
    %441 = vst [vmem:[#allocation2 + $0x1f8] sm:$0xf0] %v99
    %442 = vst [vmem:[#allocation2 + $0x200] sm:$0xf0] %v61
    %444 = vrot.lane.b32.xlu0 %v66, 127
    %v445 = vpop.permute.xlu0 %444
    %446 = vrot.lane.b32.xlu0 %v60, 127
    %v447 = vpop.permute.xlu0 %446
    %448 = vrot.lane.b32.xlu0 %v67, 127
    %v449 = vpop.permute.xlu0 %448
    %450 = vrot.lane.b32.xlu0 %v61, 127
    %v451 = vpop.permute.xlu0 %450
    %452 = vrot.lane.b32.xlu0 %v68, 127
    %v453 = vpop.permute.xlu0 %452
    %454 = vrot.lane.b32.xlu0 %v62, 127
    %v455 = vpop.permute.xlu0 %454
    %vm456 = vcmask 1039360
    %v457 = vsel %vm456, %v445, %v447
    %v458 = vsel %vm456, %v447, %v449
    %v459 = vsel %vm456, %v449, %v451
    %v460 = vsel %vm456, %v451, %v453
    %v461 = vsel %vm456, %v453, %v455
    %467 = vst [vmem:[#allocation2 + $0x230] sm:$0xf] %v457
    %468 = vst [vmem:[#allocation2 + $0x238] sm:$0xf] %v458
    %469 = vst [vmem:[#allocation2 + $0x240] sm:$0xf] %v459
    %470 = vst [vmem:[#allocation2 + $0x248] sm:$0xf] %v460
    %471 = vst [vmem:[#allocation2 + $0x250] sm:$0xf] %v461
    %v472 = vcombine.low %v62, %v62
    %473 = vrot.lane.b32.xlu0 %v59, 119
    %v474 = vpop.permute.xlu0 %473
    %475 = vrot.lane.b32.xlu0 %v98, 119
    %v476 = vpop.permute.xlu0 %475
    %477 = vrot.lane.b32.xlu0 %v60, 119
    %v478 = vpop.permute.xlu0 %477
    %479 = vrot.lane.b32.xlu0 %v99, 119
    %v480 = vpop.permute.xlu0 %479
    %481 = vrot.lane.b32.xlu0 %v61, 119
    %v482 = vpop.permute.xlu0 %481
    %483 = vrot.lane.b32.xlu0 %v472, 119
    %v484 = vpop.permute.xlu0 %483
    %vm485 = vcmask 973824
    %v486 = vsel %vm485, %v474, %v476
    %v487 = vsel %vm485, %v476, %v478
    %v488 = vsel %vm485, %v478, %v480
    %v489 = vsel %vm485, %v480, %v482
    %v490 = vsel %vm485, %v482, %v484
    %496 = vst [vmem:[#allocation2 + $0x230] sm:$0xf0] %v486
    %497 = vst [vmem:[#allocation2 + $0x238] sm:$0xf0] %v487
    %498 = vst [vmem:[#allocation2 + $0x240] sm:$0xf0] %v488
    %499 = vst [vmem:[#allocation2 + $0x248] sm:$0xf0] %v489
    %500 = vst [vmem:[#allocation2 + $0x250] sm:$0xf0] %v490
    %501 = vrot.lane.b32.xlu0 %v66, 118
    %v502 = vpop.permute.xlu0 %501
    %503 = vrot.lane.b32.xlu0 %v60, 118
    %v504 = vpop.permute.xlu0 %503
    %505 = vrot.lane.b32.xlu0 %v67, 118
    %v506 = vpop.permute.xlu0 %505
    %507 = vrot.lane.b32.xlu0 %v61, 118
    %v508 = vpop.permute.xlu0 %507
    %509 = vrot.lane.b32.xlu0 %v68, 118
    %v510 = vpop.permute.xlu0 %509
    %511 = vrot.lane.b32.xlu0 %v62, 118
    %v512 = vpop.permute.xlu0 %511
    %vm513 = vcmask 965632
    %v514 = vsel %vm513, %v502, %v504
    %v515 = vsel %vm513, %v504, %v506
    %v516 = vsel %vm513, %v506, %v508
    %v517 = vsel %vm513, %v508, %v510
    %v518 = vsel %vm513, %v510, %v512
    %524 = vst [vmem:[#allocation2 + $0x280] sm:$0xf] %v514
    %525 = vst [vmem:[#allocation2 + $0x288] sm:$0xf] %v515
    %526 = vst [vmem:[#allocation2 + $0x290] sm:$0xf] %v516
    %527 = vst [vmem:[#allocation2 + $0x298] sm:$0xf] %v517
    %528 = vst [vmem:[#allocation2 + $0x2a0] sm:$0xf] %v518
    %529 = vrot.lane.b32.xlu0 %v59, 117
    %v530 = vpop.permute.xlu0 %529
    %531 = vrot.lane.b32.xlu0 %v98, 117
    %v532 = vpop.permute.xlu0 %531
    %533 = vrot.lane.b32.xlu0 %v60, 117
    %v534 = vpop.permute.xlu0 %533
    %535 = vrot.lane.b32.xlu0 %v99, 117
    %v536 = vpop.permute.xlu0 %535
    %537 = vrot.lane.b32.xlu0 %v61, 117
    %v538 = vpop.permute.xlu0 %537
    %539 = vrot.lane.b32.xlu0 %v472, 117
    %v540 = vpop.permute.xlu0 %539
    %vm541 = vcmask 957440
    %v542 = vsel %vm541, %v530, %v532
    %v543 = vsel %vm541, %v532, %v534
    %v544 = vsel %vm541, %v534, %v536
    %v545 = vsel %vm541, %v536, %v538
    %v546 = vsel %vm541, %v538, %v540
    %552 = vst [vmem:[#allocation2 + $0x280] sm:$0xf0] %v542
    %553 = vst [vmem:[#allocation2 + $0x288] sm:$0xf0] %v543
    %554 = vst [vmem:[#allocation2 + $0x290] sm:$0xf0] %v544
    %555 = vst [vmem:[#allocation2 + $0x298] sm:$0xf0] %v545
    %556 = vst [vmem:[#allocation2 + $0x2a0] sm:$0xf0] %v546
    %557 = vrot.lane.b32.xlu0 %v66, 39
    %v558 = vpop.permute.xlu0 %557
    %559 = vrot.lane.b32.xlu0 %v60, 39
    %v560 = vpop.permute.xlu0 %559
    %561 = vrot.lane.b32.xlu0 %v67, 39
    %v562 = vpop.permute.xlu0 %561
    %563 = vrot.lane.b32.xlu0 %v61, 39
    %v564 = vpop.permute.xlu0 %563
    %565 = vrot.lane.b32.xlu0 %v68, 39
    %v566 = vpop.permute.xlu0 %565
    %567 = vrot.lane.b32.xlu0 %v62, 39
    %v568 = vpop.permute.xlu0 %567
    %vm569 = vcmask 318464
    %v570 = vsel %vm569, %v558, %v560
    %v571 = vsel %vm569, %v560, %v562
    %v572 = vsel %vm569, %v562, %v564
    %v573 = vsel %vm569, %v564, %v566
    %v574 = vsel %vm569, %v566, %v568
    %580 = vst [vmem:[#allocation2 + $0x2d0] sm:$0xf] %v570
    %581 = vst [vmem:[#allocation2 + $0x2d8] sm:$0xf] %v571
    %582 = vst [vmem:[#allocation2 + $0x2e0] sm:$0xf] %v572
    %583 = vst [vmem:[#allocation2 + $0x2e8] sm:$0xf] %v573
    %584 = vst [vmem:[#allocation2 + $0x2f0] sm:$0xf] %v574
    %585 = vrot.lane.b32.xlu0 %v59, 38
    %v586 = vpop.permute.xlu0 %585
    %587 = vrot.lane.b32.xlu0 %v98, 38
    %v588 = vpop.permute.xlu0 %587
    %589 = vrot.lane.b32.xlu0 %v60, 38
    %v590 = vpop.permute.xlu0 %589
    %591 = vrot.lane.b32.xlu0 %v99, 38
    %v592 = vpop.permute.xlu0 %591
    %593 = vrot.lane.b32.xlu0 %v61, 38
    %v594 = vpop.permute.xlu0 %593
    %595 = vrot.lane.b32.xlu0 %v472, 38
    %v596 = vpop.permute.xlu0 %595
    %vm597 = vcmask 310272
    %v598 = vsel %vm597, %v586, %v588
    %v599 = vsel %vm597, %v588, %v590
    %v600 = vsel %vm597, %v590, %v592
    %v601 = vsel %vm597, %v592, %v594
    %v602 = vsel %vm597, %v594, %v596
    %608 = vst [vmem:[#allocation2 + $0x2d0] sm:$0xf0] %v598
    %609 = vst [vmem:[#allocation2 + $0x2d8] sm:$0xf0] %v599
    %610 = vst [vmem:[#allocation2 + $0x2e0] sm:$0xf0] %v600
    %611 = vst [vmem:[#allocation2 + $0x2e8] sm:$0xf0] %v601
    %612 = vst [vmem:[#allocation2 + $0x2f0] sm:$0xf0] %v602
    %613 = vrot.lane.b32.xlu0 %v66, 37
    %v614 = vpop.permute.xlu0 %613
    %615 = vrot.lane.b32.xlu0 %v60, 37
    %v616 = vpop.permute.xlu0 %615
    %617 = vrot.lane.b32.xlu0 %v67, 37
    %v618 = vpop.permute.xlu0 %617
    %619 = vrot.lane.b32.xlu0 %v61, 37
    %v620 = vpop.permute.xlu0 %619
    %621 = vrot.lane.b32.xlu0 %v68, 37
    %v622 = vpop.permute.xlu0 %621
    %623 = vrot.lane.b32.xlu0 %v62, 37
    %v624 = vpop.permute.xlu0 %623
    %vm625 = vcmask 302080
    %v626 = vsel %vm625, %v614, %v616
    %v627 = vsel %vm625, %v616, %v618
    %v628 = vsel %vm625, %v618, %v620
    %v629 = vsel %vm625, %v620, %v622
    %v630 = vsel %vm625, %v622, %v624
    %636 = vst [vmem:[#allocation2 + $0x320] sm:$0xf] %v626
    %637 = vst [vmem:[#allocation2 + $0x328] sm:$0xf] %v627
    %638 = vst [vmem:[#allocation2 + $0x330] sm:$0xf] %v628
    %639 = vst [vmem:[#allocation2 + $0x338] sm:$0xf] %v629
    %640 = vst [vmem:[#allocation2 + $0x340] sm:$0xf] %v630
    %641 = vrot.lane.b32.xlu0 %v59, 29
    %v642 = vpop.permute.xlu0 %641
    %643 = vrot.lane.b32.xlu0 %v98, 29
    %v644 = vpop.permute.xlu0 %643
    %645 = vrot.lane.b32.xlu0 %v60, 29
    %v646 = vpop.permute.xlu0 %645
    %647 = vrot.lane.b32.xlu0 %v99, 29
    %v648 = vpop.permute.xlu0 %647
    %649 = vrot.lane.b32.xlu0 %v61, 29
    %v650 = vpop.permute.xlu0 %649
    %651 = vrot.lane.b32.xlu0 %v472, 29
    %v652 = vpop.permute.xlu0 %651
    %vm653 = vcmask 236544
    %v654 = vsel %vm653, %v642, %v644
    %v655 = vsel %vm653, %v644, %v646
    %v656 = vsel %vm653, %v646, %v648
    %v657 = vsel %vm653, %v648, %v650
    %v658 = vsel %vm653, %v650, %v652
    %664 = vst [vmem:[#allocation2 + $0x320] sm:$0xf0] %v654
    %665 = vst [vmem:[#allocation2 + $0x328] sm:$0xf0] %v655
    %666 = vst [vmem:[#allocation2 + $0x330] sm:$0xf0] %v656
    %667 = vst [vmem:[#allocation2 + $0x338] sm:$0xf0] %v657
    %668 = vst [vmem:[#allocation2 + $0x340] sm:$0xf0] %v658
    %669 = vrot.lane.b32.xlu0 %v66, 28
    %v670 = vpop.permute.xlu0 %669
    %671 = vrot.lane.b32.xlu0 %v60, 28
    %v672 = vpop.permute.xlu0 %671
    %673 = vrot.lane.b32.xlu0 %v67, 28
    %v674 = vpop.permute.xlu0 %673
    %675 = vrot.lane.b32.xlu0 %v61, 28
    %v676 = vpop.permute.xlu0 %675
    %677 = vrot.lane.b32.xlu0 %v68, 28
    %v678 = vpop.permute.xlu0 %677
    %679 = vrot.lane.b32.xlu0 %v62, 28
    %v680 = vpop.permute.xlu0 %679
    %vm681 = vcmask 228352
    %v682 = vsel %vm681, %v670, %v672
    %v683 = vsel %vm681, %v672, %v674
    %v684 = vsel %vm681, %v674, %v676
    %v685 = vsel %vm681, %v676, %v678
    %v686 = vsel %vm681, %v678, %v680
    %692 = vst [vmem:[#allocation2 + $0x370] sm:$0xf] %v682
    %693 = vst [vmem:[#allocation2 + $0x378] sm:$0xf] %v683
    %694 = vst [vmem:[#allocation2 + $0x380] sm:$0xf] %v684
    %695 = vst [vmem:[#allocation2 + $0x388] sm:$0xf] %v685
    %696 = vst [vmem:[#allocation2 + $0x390] sm:$0xf] %v686
    %697 = vrot.lane.b32.xlu0 %v59, 27
    %v698 = vpop.permute.xlu0 %697
    %699 = vrot.lane.b32.xlu0 %v98, 27
    %v700 = vpop.permute.xlu0 %699
    %701 = vrot.lane.b32.xlu0 %v60, 27
    %v702 = vpop.permute.xlu0 %701
    %703 = vrot.lane.b32.xlu0 %v99, 27
    %v704 = vpop.permute.xlu0 %703
    %705 = vrot.lane.b32.xlu0 %v61, 27
    %v706 = vpop.permute.xlu0 %705
    %707 = vrot.lane.b32.xlu0 %v472, 27
    %v708 = vpop.permute.xlu0 %707
    %vm709 = vcmask 220160
    %v710 = vsel %vm709, %v698, %v700
    %v711 = vsel %vm709, %v700, %v702
    %v712 = vsel %vm709, %v702, %v704
    %v713 = vsel %vm709, %v704, %v706
    %v714 = vsel %vm709, %v706, %v708
    %720 = vst [vmem:[#allocation2 + $0x370] sm:$0xf0] %v710
    %721 = vst [vmem:[#allocation2 + $0x378] sm:$0xf0] %v711
    %722 = vst [vmem:[#allocation2 + $0x380] sm:$0xf0] %v712
    %723 = vst [vmem:[#allocation2 + $0x388] sm:$0xf0] %v713
    %724 = vst [vmem:[#allocation2 + $0x390] sm:$0xf0] %v714
    %725 = vrot.lane.b32.xlu0 %v66, 19
    %v726 = vpop.permute.xlu0 %725
    %727 = vrot.lane.b32.xlu0 %v60, 19
    %v728 = vpop.permute.xlu0 %727
    %729 = vrot.lane.b32.xlu0 %v67, 19
    %v730 = vpop.permute.xlu0 %729
    %731 = vrot.lane.b32.xlu0 %v61, 19
    %v732 = vpop.permute.xlu0 %731
    %733 = vrot.lane.b32.xlu0 %v68, 19
    %v734 = vpop.permute.xlu0 %733
    %735 = vrot.lane.b32.xlu0 %v62, 19
    %v736 = vpop.permute.xlu0 %735
    %vm737 = vcmask 154624
    %v738 = vsel %vm737, %v726, %v728
    %v739 = vsel %vm737, %v728, %v730
    %v740 = vsel %vm737, %v730, %v732
    %v741 = vsel %vm737, %v732, %v734
    %v742 = vsel %vm737, %v734, %v736
    %748 = vst [vmem:[#allocation2 + $0x3c0] sm:$0xf] %v738
    %749 = vst [vmem:[#allocation2 + $0x3c8] sm:$0xf] %v739
    %750 = vst [vmem:[#allocation2 + $0x3d0] sm:$0xf] %v740
    %751 = vst [vmem:[#allocation2 + $0x3d8] sm:$0xf] %v741
    %752 = vst [vmem:[#allocation2 + $0x3e0] sm:$0xf] %v742
    %753 = vrot.lane.b32.xlu0 %v59, 18
    %v754 = vpop.permute.xlu0 %753
    %755 = vrot.lane.b32.xlu0 %v98, 18
    %v756 = vpop.permute.xlu0 %755
    %757 = vrot.lane.b32.xlu0 %v60, 18
    %v758 = vpop.permute.xlu0 %757
    %759 = vrot.lane.b32.xlu0 %v99, 18
    %v760 = vpop.permute.xlu0 %759
    %761 = vrot.lane.b32.xlu0 %v61, 18
    %v762 = vpop.permute.xlu0 %761
    %763 = vrot.lane.b32.xlu0 %v472, 18
    %v764 = vpop.permute.xlu0 %763
    %vm765 = vcmask 146432
    %v766 = vsel %vm765, %v754, %v756
    %v767 = vsel %vm765, %v756, %v758
    %v768 = vsel %vm765, %v758, %v760
    %v769 = vsel %vm765, %v760, %v762
    %v770 = vsel %vm765, %v762, %v764
    %776 = vst [vmem:[#allocation2 + $0x3c0] sm:$0xf0] %v766
    %777 = vst [vmem:[#allocation2 + $0x3c8] sm:$0xf0] %v767
    %778 = vst [vmem:[#allocation2 + $0x3d0] sm:$0xf0] %v768
    %779 = vst [vmem:[#allocation2 + $0x3d8] sm:$0xf0] %v769
    %780 = vst [vmem:[#allocation2 + $0x3e0] sm:$0xf0] %v770
    %781 = vrot.lane.b32.xlu0 %v66, 17
    %v782 = vpop.permute.xlu0 %781
    %783 = vrot.lane.b32.xlu0 %v60, 17
    %v784 = vpop.permute.xlu0 %783
    %785 = vrot.lane.b32.xlu0 %v67, 17
    %v786 = vpop.permute.xlu0 %785
    %787 = vrot.lane.b32.xlu0 %v61, 17
    %v788 = vpop.permute.xlu0 %787
    %789 = vrot.lane.b32.xlu0 %v68, 17
    %v790 = vpop.permute.xlu0 %789
    %791 = vrot.lane.b32.xlu0 %v62, 17
    %v792 = vpop.permute.xlu0 %791
    %vm793 = vcmask 138240
    %v794 = vsel %vm793, %v782, %v784
    %v795 = vsel %vm793, %v784, %v786
    %v796 = vsel %vm793, %v786, %v788
    %v797 = vsel %vm793, %v788, %v790
    %v798 = vsel %vm793, %v790, %v792
    %804 = vst [vmem:[#allocation2 + $0x410] sm:$0xf] %v794
    %805 = vst [vmem:[#allocation2 + $0x418] sm:$0xf] %v795
    %806 = vst [vmem:[#allocation2 + $0x420] sm:$0xf] %v796
    %807 = vst [vmem:[#allocation2 + $0x428] sm:$0xf] %v797
    %808 = vst [vmem:[#allocation2 + $0x430] sm:$0xf] %v798
    %s809 = scalar_lea.vmem [#allocation5], 28
    %v810 = vld [vmem:[%s809] sm:$0xff]
    %v811 = vld [vmem:[%s809 + $0x8] sm:$0xff]
    %v812 = vld [vmem:[%s809 + $0x10] sm:$0xff]
    %v813 = vld [vmem:[%s809 + $0x18] sm:$0xf]
    %v817 = vcombine.high %v810, %v810
    %v818 = vcombine.high %v811, %v811
    %v819 = vcombine.high %v812, %v812
    %820 = vrot.lane.b32.xlu0 %v810, 111
    %v821 = vpop.permute.xlu0 %820
    %822 = vrot.lane.b32.xlu0 %v817, 111
    %v823 = vpop.permute.xlu0 %822
    %824 = vrot.lane.b32.xlu0 %v811, 111
    %v825 = vpop.permute.xlu0 %824
    %826 = vrot.lane.b32.xlu0 %v818, 111
    %v827 = vpop.permute.xlu0 %826
    %828 = vrot.lane.b32.xlu0 %v812, 111
    %v829 = vpop.permute.xlu0 %828
    %830 = vrot.lane.b32.xlu0 %v819, 111
    %v831 = vpop.permute.xlu0 %830
    %v832 = vsel %vm81, %v821, %v823
    %v833 = vsel %vm81, %v823, %v825
    %v834 = vsel %vm81, %v825, %v827
    %v835 = vsel %vm81, %v827, %v829
    %v836 = vsel %vm81, %v829, %v831
    %842 = vst [vmem:[#allocation2 + $0x28] sm:$0xf] %v832
    %843 = vst [vmem:[#allocation2 + $0x30] sm:$0xf] %v833
    %844 = vst [vmem:[#allocation2 + $0x38] sm:$0xf] %v834
    %845 = vst [vmem:[#allocation2 + $0x40] sm:$0xf] %v835
    %846 = vst [vmem:[#allocation2 + $0x48] sm:$0xf] %v836
    %v847 = vcombine.low %v810, %v810
    %v848 = vcombine.low %v811, %v811
    %v849 = vcombine.low %v812, %v812
    %850 = vrot.lane.b32.xlu0 %v847, 110
    %v851 = vpop.permute.xlu0 %850
    %852 = vrot.lane.b32.xlu0 %v810, 110
    %v853 = vpop.permute.xlu0 %852
    %854 = vrot.lane.b32.xlu0 %v848, 110
    %v855 = vpop.permute.xlu0 %854
    %856 = vrot.lane.b32.xlu0 %v811, 110
    %v857 = vpop.permute.xlu0 %856
    %858 = vrot.lane.b32.xlu0 %v849, 110
    %v859 = vpop.permute.xlu0 %858
    %860 = vrot.lane.b32.xlu0 %v812, 110
    %v861 = vpop.permute.xlu0 %860
    %v862 = vsel %vm112, %v851, %v853
    %v863 = vsel %vm112, %v853, %v855
    %v864 = vsel %vm112, %v855, %v857
    %v865 = vsel %vm112, %v857, %v859
    %v866 = vsel %vm112, %v859, %v861
    %872 = vst [vmem:[#allocation2 + $0x28] sm:$0xf0] %v862
    %873 = vst [vmem:[#allocation2 + $0x30] sm:$0xf0] %v863
    %874 = vst [vmem:[#allocation2 + $0x38] sm:$0xf0] %v864
    %875 = vst [vmem:[#allocation2 + $0x40] sm:$0xf0] %v865
    %876 = vst [vmem:[#allocation2 + $0x48] sm:$0xf0] %v866
    %877 = vrot.lane.b32.xlu0 %v810, 109
    %v878 = vpop.permute.xlu0 %877
    %879 = vrot.lane.b32.xlu0 %v817, 109
    %v880 = vpop.permute.xlu0 %879
    %881 = vrot.lane.b32.xlu0 %v811, 109
    %v882 = vpop.permute.xlu0 %881
    %883 = vrot.lane.b32.xlu0 %v818, 109
    %v884 = vpop.permute.xlu0 %883
    %885 = vrot.lane.b32.xlu0 %v812, 109
    %v886 = vpop.permute.xlu0 %885
    %887 = vrot.lane.b32.xlu0 %v819, 109
    %v888 = vpop.permute.xlu0 %887
    %v889 = vsel %vm140, %v878, %v880
    %v890 = vsel %vm140, %v880, %v882
    %v891 = vsel %vm140, %v882, %v884
    %v892 = vsel %vm140, %v884, %v886
    %v893 = vsel %vm140, %v886, %v888
    %899 = vst [vmem:[#allocation2 + $0x78] sm:$0xf] %v889
    %900 = vst [vmem:[#allocation2 + $0x80] sm:$0xf] %v890
    %901 = vst [vmem:[#allocation2 + $0x88] sm:$0xf] %v891
    %902 = vst [vmem:[#allocation2 + $0x90] sm:$0xf] %v892
    %903 = vst [vmem:[#allocation2 + $0x98] sm:$0xf] %v893
    %904 = vrot.lane.b32.xlu0 %v847, 101
    %v905 = vpop.permute.xlu0 %904
    %906 = vrot.lane.b32.xlu0 %v810, 101
    %v907 = vpop.permute.xlu0 %906
    %908 = vrot.lane.b32.xlu0 %v848, 101
    %v909 = vpop.permute.xlu0 %908
    %910 = vrot.lane.b32.xlu0 %v811, 101
    %v911 = vpop.permute.xlu0 %910
    %912 = vrot.lane.b32.xlu0 %v849, 101
    %v913 = vpop.permute.xlu0 %912
    %914 = vrot.lane.b32.xlu0 %v812, 101
    %v915 = vpop.permute.xlu0 %914
    %v916 = vsel %vm168, %v905, %v907
    %v917 = vsel %vm168, %v907, %v909
    %v918 = vsel %vm168, %v909, %v911
    %v919 = vsel %vm168, %v911, %v913
    %v920 = vsel %vm168, %v913, %v915
    %926 = vst [vmem:[#allocation2 + $0x78] sm:$0xf0] %v916
    %927 = vst [vmem:[#allocation2 + $0x80] sm:$0xf0] %v917
    %928 = vst [vmem:[#allocation2 + $0x88] sm:$0xf0] %v918
    %929 = vst [vmem:[#allocation2 + $0x90] sm:$0xf0] %v919
    %930 = vst [vmem:[#allocation2 + $0x98] sm:$0xf0] %v920
    %931 = vrot.lane.b32.xlu0 %v810, 100
    %v932 = vpop.permute.xlu0 %931
    %933 = vrot.lane.b32.xlu0 %v817, 100
    %v934 = vpop.permute.xlu0 %933
    %935 = vrot.lane.b32.xlu0 %v811, 100
    %v936 = vpop.permute.xlu0 %935
    %937 = vrot.lane.b32.xlu0 %v818, 100
    %v938 = vpop.permute.xlu0 %937
    %939 = vrot.lane.b32.xlu0 %v812, 100
    %v940 = vpop.permute.xlu0 %939
    %941 = vrot.lane.b32.xlu0 %v819, 100
    %v942 = vpop.permute.xlu0 %941
    %v943 = vsel %vm196, %v932, %v934
    %v944 = vsel %vm196, %v934, %v936
    %v945 = vsel %vm196, %v936, %v938
    %v946 = vsel %vm196, %v938, %v940
    %v947 = vsel %vm196, %v940, %v942
    %953 = vst [vmem:[#allocation2 + $0xc8] sm:$0xf] %v943
    %954 = vst [vmem:[#allocation2 + $0xd0] sm:$0xf] %v944
    %955 = vst [vmem:[#allocation2 + $0xd8] sm:$0xf] %v945
    %956 = vst [vmem:[#allocation2 + $0xe0] sm:$0xf] %v946
    %957 = vst [vmem:[#allocation2 + $0xe8] sm:$0xf] %v947
    %958 = vrot.lane.b32.xlu0 %v847, 99
    %v959 = vpop.permute.xlu0 %958
    %960 = vrot.lane.b32.xlu0 %v810, 99
    %v961 = vpop.permute.xlu0 %960
    %962 = vrot.lane.b32.xlu0 %v848, 99
    %v963 = vpop.permute.xlu0 %962
    %964 = vrot.lane.b32.xlu0 %v811, 99
    %v965 = vpop.permute.xlu0 %964
    %966 = vrot.lane.b32.xlu0 %v849, 99
    %v967 = vpop.permute.xlu0 %966
    %968 = vrot.lane.b32.xlu0 %v812, 99
    %v969 = vpop.permute.xlu0 %968
    %v970 = vsel %vm224, %v959, %v961
    %v971 = vsel %vm224, %v961, %v963
    %v972 = vsel %vm224, %v963, %v965
    %v973 = vsel %vm224, %v965, %v967
    %v974 = vsel %vm224, %v967, %v969
    %980 = vst [vmem:[#allocation2 + $0xc8] sm:$0xf0] %v970
    %981 = vst [vmem:[#allocation2 + $0xd0] sm:$0xf0] %v971
    %982 = vst [vmem:[#allocation2 + $0xd8] sm:$0xf0] %v972
    %983 = vst [vmem:[#allocation2 + $0xe0] sm:$0xf0] %v973
    %984 = vst [vmem:[#allocation2 + $0xe8] sm:$0xf0] %v974
    %985 = vrot.lane.b32.xlu0 %v810, 91
    %v986 = vpop.permute.xlu0 %985
    %987 = vrot.lane.b32.xlu0 %v817, 91
    %v988 = vpop.permute.xlu0 %987
    %989 = vrot.lane.b32.xlu0 %v811, 91
    %v990 = vpop.permute.xlu0 %989
    %991 = vrot.lane.b32.xlu0 %v818, 91
    %v992 = vpop.permute.xlu0 %991
    %993 = vrot.lane.b32.xlu0 %v812, 91
    %v994 = vpop.permute.xlu0 %993
    %995 = vrot.lane.b32.xlu0 %v819, 91
    %v996 = vpop.permute.xlu0 %995
    %v997 = vsel %vm252, %v986, %v988
    %v998 = vsel %vm252, %v988, %v990
    %v999 = vsel %vm252, %v990, %v992
    %v1000 = vsel %vm252, %v992, %v994
    %v1001 = vsel %vm252, %v994, %v996
    %1007 = vst [vmem:[#allocation2 + $0x118] sm:$0xf] %v997
    %1008 = vst [vmem:[#allocation2 + $0x120] sm:$0xf] %v998
    %1009 = vst [vmem:[#allocation2 + $0x128] sm:$0xf] %v999
    %1010 = vst [vmem:[#allocation2 + $0x130] sm:$0xf] %v1000
    %1011 = vst [vmem:[#allocation2 + $0x138] sm:$0xf] %v1001
    %1012 = vrot.lane.b32.xlu0 %v847, 90
    %v1013 = vpop.permute.xlu0 %1012
    %1014 = vrot.lane.b32.xlu0 %v810, 90
    %v1015 = vpop.permute.xlu0 %1014
    %1016 = vrot.lane.b32.xlu0 %v848, 90
    %v1017 = vpop.permute.xlu0 %1016
    %1018 = vrot.lane.b32.xlu0 %v811, 90
    %v1019 = vpop.permute.xlu0 %1018
    %1020 = vrot.lane.b32.xlu0 %v849, 90
    %v1021 = vpop.permute.xlu0 %1020
    %1022 = vrot.lane.b32.xlu0 %v812, 90
    %v1023 = vpop.permute.xlu0 %1022
    %v1024 = vsel %vm280, %v1013, %v1015
    %v1025 = vsel %vm280, %v1015, %v1017
    %v1026 = vsel %vm280, %v1017, %v1019
    %v1027 = vsel %vm280, %v1019, %v1021
    %v1028 = vsel %vm280, %v1021, %v1023
    %1034 = vst [vmem:[#allocation2 + $0x118] sm:$0xf0] %v1024
    %1035 = vst [vmem:[#allocation2 + $0x120] sm:$0xf0] %v1025
    %1036 = vst [vmem:[#allocation2 + $0x128] sm:$0xf0] %v1026
    %1037 = vst [vmem:[#allocation2 + $0x130] sm:$0xf0] %v1027
    %1038 = vst [vmem:[#allocation2 + $0x138] sm:$0xf0] %v1028
    %1039 = vrot.lane.b32.xlu0 %v810, 89
    %v1040 = vpop.permute.xlu0 %1039
    %1041 = vrot.lane.b32.xlu0 %v817, 89
    %v1042 = vpop.permute.xlu0 %1041
    %1043 = vrot.lane.b32.xlu0 %v811, 89
    %v1044 = vpop.permute.xlu0 %1043
    %1045 = vrot.lane.b32.xlu0 %v818, 89
    %v1046 = vpop.permute.xlu0 %1045
    %1047 = vrot.lane.b32.xlu0 %v812, 89
    %v1048 = vpop.permute.xlu0 %1047
    %1049 = vrot.lane.b32.xlu0 %v819, 89
    %v1050 = vpop.permute.xlu0 %1049
    %v1051 = vsel %vm308, %v1040, %v1042
    %v1052 = vsel %vm308, %v1042, %v1044
    %v1053 = vsel %vm308, %v1044, %v1046
    %v1054 = vsel %vm308, %v1046, %v1048
    %v1055 = vsel %vm308, %v1048, %v1050
    %1061 = vst [vmem:[#allocation2 + $0x168] sm:$0xf] %v1051
    %1062 = vst [vmem:[#allocation2 + $0x170] sm:$0xf] %v1052
    %1063 = vst [vmem:[#allocation2 + $0x178] sm:$0xf] %v1053
    %1064 = vst [vmem:[#allocation2 + $0x180] sm:$0xf] %v1054
    %1065 = vst [vmem:[#allocation2 + $0x188] sm:$0xf] %v1055
    %1066 = vrot.lane.b32.xlu0 %v847, 11
    %v1067 = vpop.permute.xlu0 %1066
    %1068 = vrot.lane.b32.xlu0 %v810, 11
    %v1069 = vpop.permute.xlu0 %1068
    %1070 = vrot.lane.b32.xlu0 %v848, 11
    %v1071 = vpop.permute.xlu0 %1070
    %1072 = vrot.lane.b32.xlu0 %v811, 11
    %v1073 = vpop.permute.xlu0 %1072
    %1074 = vrot.lane.b32.xlu0 %v849, 11
    %v1075 = vpop.permute.xlu0 %1074
    %1076 = vrot.lane.b32.xlu0 %v812, 11
    %v1077 = vpop.permute.xlu0 %1076
    %v1078 = vsel %vm336, %v1067, %v1069
    %v1079 = vsel %vm336, %v1069, %v1071
    %v1080 = vsel %vm336, %v1071, %v1073
    %v1081 = vsel %vm336, %v1073, %v1075
    %v1082 = vsel %vm336, %v1075, %v1077
    %1088 = vst [vmem:[#allocation2 + $0x168] sm:$0xf0] %v1078
    %1089 = vst [vmem:[#allocation2 + $0x170] sm:$0xf0] %v1079
    %1090 = vst [vmem:[#allocation2 + $0x178] sm:$0xf0] %v1080
    %1091 = vst [vmem:[#allocation2 + $0x180] sm:$0xf0] %v1081
    %1092 = vst [vmem:[#allocation2 + $0x188] sm:$0xf0] %v1082
    %1093 = vrot.lane.b32.xlu0 %v810, 10
    %v1094 = vpop.permute.xlu0 %1093
    %1095 = vrot.lane.b32.xlu0 %v817, 10
    %v1096 = vpop.permute.xlu0 %1095
    %1097 = vrot.lane.b32.xlu0 %v811, 10
    %v1098 = vpop.permute.xlu0 %1097
    %1099 = vrot.lane.b32.xlu0 %v818, 10
    %v1100 = vpop.permute.xlu0 %1099
    %1101 = vrot.lane.b32.xlu0 %v812, 10
    %v1102 = vpop.permute.xlu0 %1101
    %1103 = vrot.lane.b32.xlu0 %v819, 10
    %v1104 = vpop.permute.xlu0 %1103
    %v1105 = vsel %vm364, %v1094, %v1096
    %v1106 = vsel %vm364, %v1096, %v1098
    %v1107 = vsel %vm364, %v1098, %v1100
    %v1108 = vsel %vm364, %v1100, %v1102
    %v1109 = vsel %vm364, %v1102, %v1104
    %1115 = vst [vmem:[#allocation2 + $0x1b8] sm:$0xf] %v1105
    %1116 = vst [vmem:[#allocation2 + $0x1c0] sm:$0xf] %v1106
    %1117 = vst [vmem:[#allocation2 + $0x1c8] sm:$0xf] %v1107
    %1118 = vst [vmem:[#allocation2 + $0x1d0] sm:$0xf] %v1108
    %1119 = vst [vmem:[#allocation2 + $0x1d8] sm:$0xf] %v1109
    %1120 = vrot.lane.b32.xlu0 %v847, 9
    %v1121 = vpop.permute.xlu0 %1120
    %1122 = vrot.lane.b32.xlu0 %v810, 9
    %v1123 = vpop.permute.xlu0 %1122
    %1124 = vrot.lane.b32.xlu0 %v848, 9
    %v1125 = vpop.permute.xlu0 %1124
    %1126 = vrot.lane.b32.xlu0 %v811, 9
    %v1127 = vpop.permute.xlu0 %1126
    %1128 = vrot.lane.b32.xlu0 %v849, 9
    %v1129 = vpop.permute.xlu0 %1128
    %1130 = vrot.lane.b32.xlu0 %v812, 9
    %v1131 = vpop.permute.xlu0 %1130
    %v1132 = vsel %vm392, %v1121, %v1123
    %v1133 = vsel %vm392, %v1123, %v1125
    %v1134 = vsel %vm392, %v1125, %v1127
    %v1135 = vsel %vm392, %v1127, %v1129
    %v1136 = vsel %vm392, %v1129, %v1131
    %1142 = vst [vmem:[#allocation2 + $0x1b8] sm:$0xf0] %v1132
    %1143 = vst [vmem:[#allocation2 + $0x1c0] sm:$0xf0] %v1133
    %1144 = vst [vmem:[#allocation2 + $0x1c8] sm:$0xf0] %v1134
    %1145 = vst [vmem:[#allocation2 + $0x1d0] sm:$0xf0] %v1135
    %1146 = vst [vmem:[#allocation2 + $0x1d8] sm:$0xf0] %v1136
    %1147 = vrot.lane.b32.xlu0 %v810, 1
    %v1148 = vpop.permute.xlu0 %1147
    %1149 = vrot.lane.b32.xlu0 %v817, 1
    %v1150 = vpop.permute.xlu0 %1149
    %1151 = vrot.lane.b32.xlu0 %v811, 1
    %v1152 = vpop.permute.xlu0 %1151
    %1153 = vrot.lane.b32.xlu0 %v818, 1
    %v1154 = vpop.permute.xlu0 %1153
    %1155 = vrot.lane.b32.xlu0 %v812, 1
    %v1156 = vpop.permute.xlu0 %1155
    %1157 = vrot.lane.b32.xlu0 %v819, 1
    %v1158 = vpop.permute.xlu0 %1157
    %v1159 = vsel %vm420, %v1148, %v1150
    %v1160 = vsel %vm420, %v1150, %v1152
    %v1161 = vsel %vm420, %v1152, %v1154
    %v1162 = vsel %vm420, %v1154, %v1156
    %v1163 = vsel %vm420, %v1156, %v1158
    %1169 = vst [vmem:[#allocation2 + $0x208] sm:$0xf] %v1159
    %1170 = vst [vmem:[#allocation2 + $0x210] sm:$0xf] %v1160
    %1171 = vst [vmem:[#allocation2 + $0x218] sm:$0xf] %v1161
    %1172 = vst [vmem:[#allocation2 + $0x220] sm:$0xf] %v1162
    %1173 = vst [vmem:[#allocation2 + $0x228] sm:$0xf] %v1163
    %1176 = vst [vmem:[#allocation2 + $0x208] sm:$0xf0] %v810
    %1177 = vst [vmem:[#allocation2 + $0x210] sm:$0xf0] %v848
    %1178 = vst [vmem:[#allocation2 + $0x218] sm:$0xf0] %v811
    %1179 = vst [vmem:[#allocation2 + $0x220] sm:$0xf0] %v849
    %1180 = vst [vmem:[#allocation2 + $0x228] sm:$0xf0] %v812
    %1182 = vrot.lane.b32.xlu0 %v817, 127
    %v1183 = vpop.permute.xlu0 %1182
    %1184 = vrot.lane.b32.xlu0 %v811, 127
    %v1185 = vpop.permute.xlu0 %1184
    %1186 = vrot.lane.b32.xlu0 %v818, 127
    %v1187 = vpop.permute.xlu0 %1186
    %1188 = vrot.lane.b32.xlu0 %v812, 127
    %v1189 = vpop.permute.xlu0 %1188
    %1190 = vrot.lane.b32.xlu0 %v819, 127
    %v1191 = vpop.permute.xlu0 %1190
    %1192 = vrot.lane.b32.xlu0 %v813, 127
    %v1193 = vpop.permute.xlu0 %1192
    %v1194 = vsel %vm456, %v1183, %v1185
    %v1195 = vsel %vm456, %v1185, %v1187
    %v1196 = vsel %vm456, %v1187, %v1189
    %v1197 = vsel %vm456, %v1189, %v1191
    %v1198 = vsel %vm456, %v1191, %v1193
    %1204 = vst [vmem:[#allocation2 + $0x258] sm:$0xf] %v1194
    %1205 = vst [vmem:[#allocation2 + $0x260] sm:$0xf] %v1195
    %1206 = vst [vmem:[#allocation2 + $0x268] sm:$0xf] %v1196
    %1207 = vst [vmem:[#allocation2 + $0x270] sm:$0xf] %v1197
    %1208 = vst [vmem:[#allocation2 + $0x278] sm:$0xf] %v1198
    %v1209 = vcombine.low %v813, %v813
    %1210 = vrot.lane.b32.xlu0 %v810, 119
    %v1211 = vpop.permute.xlu0 %1210
    %1212 = vrot.lane.b32.xlu0 %v848, 119
    %v1213 = vpop.permute.xlu0 %1212
    %1214 = vrot.lane.b32.xlu0 %v811, 119
    %v1215 = vpop.permute.xlu0 %1214
    %1216 = vrot.lane.b32.xlu0 %v849, 119
    %v1217 = vpop.permute.xlu0 %1216
    %1218 = vrot.lane.b32.xlu0 %v812, 119
    %v1219 = vpop.permute.xlu0 %1218
    %1220 = vrot.lane.b32.xlu0 %v1209, 119
    %v1221 = vpop.permute.xlu0 %1220
    %v1222 = vsel %vm485, %v1211, %v1213
    %v1223 = vsel %vm485, %v1213, %v1215
    %v1224 = vsel %vm485, %v1215, %v1217
    %v1225 = vsel %vm485, %v1217, %v1219
    %v1226 = vsel %vm485, %v1219, %v1221
    %1232 = vst [vmem:[#allocation2 + $0x258] sm:$0xf0] %v1222
    %1233 = vst [vmem:[#allocation2 + $0x260] sm:$0xf0] %v1223
    %1234 = vst [vmem:[#allocation2 + $0x268] sm:$0xf0] %v1224
    %1235 = vst [vmem:[#allocation2 + $0x270] sm:$0xf0] %v1225
    %1236 = vst [vmem:[#allocation2 + $0x278] sm:$0xf0] %v1226
    %1237 = vrot.lane.b32.xlu0 %v817, 118
    %v1238 = vpop.permute.xlu0 %1237
    %1239 = vrot.lane.b32.xlu0 %v811, 118
    %v1240 = vpop.permute.xlu0 %1239
    %1241 = vrot.lane.b32.xlu0 %v818, 118
    %v1242 = vpop.permute.xlu0 %1241
    %1243 = vrot.lane.b32.xlu0 %v812, 118
    %v1244 = vpop.permute.xlu0 %1243
    %1245 = vrot.lane.b32.xlu0 %v819, 118
    %v1246 = vpop.permute.xlu0 %1245
    %1247 = vrot.lane.b32.xlu0 %v813, 118
    %v1248 = vpop.permute.xlu0 %1247
    %v1249 = vsel %vm513, %v1238, %v1240
    %v1250 = vsel %vm513, %v1240, %v1242
    %v1251 = vsel %vm513, %v1242, %v1244
    %v1252 = vsel %vm513, %v1244, %v1246
    %v1253 = vsel %vm513, %v1246, %v1248
    %1259 = vst [vmem:[#allocation2 + $0x2a8] sm:$0xf] %v1249
    %1260 = vst [vmem:[#allocation2 + $0x2b0] sm:$0xf] %v1250
    %1261 = vst [vmem:[#allocation2 + $0x2b8] sm:$0xf] %v1251
    %1262 = vst [vmem:[#allocation2 + $0x2c0] sm:$0xf] %v1252
    %1263 = vst [vmem:[#allocation2 + $0x2c8] sm:$0xf] %v1253
    %1264 = vrot.lane.b32.xlu0 %v810, 117
    %v1265 = vpop.permute.xlu0 %1264
    %1266 = vrot.lane.b32.xlu0 %v848, 117
    %v1267 = vpop.permute.xlu0 %1266
    %1268 = vrot.lane.b32.xlu0 %v811, 117
    %v1269 = vpop.permute.xlu0 %1268
    %1270 = vrot.lane.b32.xlu0 %v849, 117
    %v1271 = vpop.permute.xlu0 %1270
    %1272 = vrot.lane.b32.xlu0 %v812, 117
    %v1273 = vpop.permute.xlu0 %1272
    %1274 = vrot.lane.b32.xlu0 %v1209, 117
    %v1275 = vpop.permute.xlu0 %1274
    %v1276 = vsel %vm541, %v1265, %v1267
    %v1277 = vsel %vm541, %v1267, %v1269
    %v1278 = vsel %vm541, %v1269, %v1271
    %v1279 = vsel %vm541, %v1271, %v1273
    %v1280 = vsel %vm541, %v1273, %v1275
    %1286 = vst [vmem:[#allocation2 + $0x2a8] sm:$0xf0] %v1276
    %1287 = vst [vmem:[#allocation2 + $0x2b0] sm:$0xf0] %v1277
    %1288 = vst [vmem:[#allocation2 + $0x2b8] sm:$0xf0] %v1278
    %1289 = vst [vmem:[#allocation2 + $0x2c0] sm:$0xf0] %v1279
    %1290 = vst [vmem:[#allocation2 + $0x2c8] sm:$0xf0] %v1280
    %1291 = vrot.lane.b32.xlu0 %v817, 39
    %v1292 = vpop.permute.xlu0 %1291
    %1293 = vrot.lane.b32.xlu0 %v811, 39
    %v1294 = vpop.permute.xlu0 %1293
    %1295 = vrot.lane.b32.xlu0 %v818, 39
    %v1296 = vpop.permute.xlu0 %1295
    %1297 = vrot.lane.b32.xlu0 %v812, 39
    %v1298 = vpop.permute.xlu0 %1297
    %1299 = vrot.lane.b32.xlu0 %v819, 39
    %v1300 = vpop.permute.xlu0 %1299
    %1301 = vrot.lane.b32.xlu0 %v813, 39
    %v1302 = vpop.permute.xlu0 %1301
    %v1303 = vsel %vm569, %v1292, %v1294
    %v1304 = vsel %vm569, %v1294, %v1296
    %v1305 = vsel %vm569, %v1296, %v1298
    %v1306 = vsel %vm569, %v1298, %v1300
    %v1307 = vsel %vm569, %v1300, %v1302
    %1313 = vst [vmem:[#allocation2 + $0x2f8] sm:$0xf] %v1303
    %1314 = vst [vmem:[#allocation2 + $0x300] sm:$0xf] %v1304
    %1315 = vst [vmem:[#allocation2 + $0x308] sm:$0xf] %v1305
    %1316 = vst [vmem:[#allocation2 + $0x310] sm:$0xf] %v1306
    %1317 = vst [vmem:[#allocation2 + $0x318] sm:$0xf] %v1307
    %1318 = vrot.lane.b32.xlu0 %v810, 38
    %v1319 = vpop.permute.xlu0 %1318
    %1320 = vrot.lane.b32.xlu0 %v848, 38
    %v1321 = vpop.permute.xlu0 %1320
    %1322 = vrot.lane.b32.xlu0 %v811, 38
    %v1323 = vpop.permute.xlu0 %1322
    %1324 = vrot.lane.b32.xlu0 %v849, 38
    %v1325 = vpop.permute.xlu0 %1324
    %1326 = vrot.lane.b32.xlu0 %v812, 38
    %v1327 = vpop.permute.xlu0 %1326
    %1328 = vrot.lane.b32.xlu0 %v1209, 38
    %v1329 = vpop.permute.xlu0 %1328
    %v1330 = vsel %vm597, %v1319, %v1321
    %v1331 = vsel %vm597, %v1321, %v1323
    %v1332 = vsel %vm597, %v1323, %v1325
    %v1333 = vsel %vm597, %v1325, %v1327
    %v1334 = vsel %vm597, %v1327, %v1329
    %1340 = vst [vmem:[#allocation2 + $0x2f8] sm:$0xf0] %v1330
    %1341 = vst [vmem:[#allocation2 + $0x300] sm:$0xf0] %v1331
    %1342 = vst [vmem:[#allocation2 + $0x308] sm:$0xf0] %v1332
    %1343 = vst [vmem:[#allocation2 + $0x310] sm:$0xf0] %v1333
    %1344 = vst [vmem:[#allocation2 + $0x318] sm:$0xf0] %v1334
    %1345 = vrot.lane.b32.xlu0 %v817, 37
    %v1346 = vpop.permute.xlu0 %1345
    %1347 = vrot.lane.b32.xlu0 %v811, 37
    %v1348 = vpop.permute.xlu0 %1347
    %1349 = vrot.lane.b32.xlu0 %v818, 37
    %v1350 = vpop.permute.xlu0 %1349
    %1351 = vrot.lane.b32.xlu0 %v812, 37
    %v1352 = vpop.permute.xlu0 %1351
    %1353 = vrot.lane.b32.xlu0 %v819, 37
    %v1354 = vpop.permute.xlu0 %1353
    %1355 = vrot.lane.b32.xlu0 %v813, 37
    %v1356 = vpop.permute.xlu0 %1355
    %v1357 = vsel %vm625, %v1346, %v1348
    %v1358 = vsel %vm625, %v1348, %v1350
    %v1359 = vsel %vm625, %v1350, %v1352
    %v1360 = vsel %vm625, %v1352, %v1354
    %v1361 = vsel %vm625, %v1354, %v1356
    %1367 = vst [vmem:[#allocation2 + $0x348] sm:$0xf] %v1357
    %1368 = vst [vmem:[#allocation2 + $0x350] sm:$0xf] %v1358
    %1369 = vst [vmem:[#allocation2 + $0x358] sm:$0xf] %v1359
    %1370 = vst [vmem:[#allocation2 + $0x360] sm:$0xf] %v1360
    %1371 = vst [vmem:[#allocation2 + $0x368] sm:$0xf] %v1361
    %1372 = vrot.lane.b32.xlu0 %v810, 29
    %v1373 = vpop.permute.xlu0 %1372
    %1374 = vrot.lane.b32.xlu0 %v848, 29
    %v1375 = vpop.permute.xlu0 %1374
    %1376 = vrot.lane.b32.xlu0 %v811, 29
    %v1377 = vpop.permute.xlu0 %1376
    %1378 = vrot.lane.b32.xlu0 %v849, 29
    %v1379 = vpop.permute.xlu0 %1378
    %1380 = vrot.lane.b32.xlu0 %v812, 29
    %v1381 = vpop.permute.xlu0 %1380
    %1382 = vrot.lane.b32.xlu0 %v1209, 29
    %v1383 = vpop.permute.xlu0 %1382
    %v1384 = vsel %vm653, %v1373, %v1375
    %v1385 = vsel %vm653, %v1375, %v1377
    %v1386 = vsel %vm653, %v1377, %v1379
    %v1387 = vsel %vm653, %v1379, %v1381
    %v1388 = vsel %vm653, %v1381, %v1383
    %1394 = vst [vmem:[#allocation2 + $0x348] sm:$0xf0] %v1384
    %1395 = vst [vmem:[#allocation2 + $0x350] sm:$0xf0] %v1385
    %1396 = vst [vmem:[#allocation2 + $0x358] sm:$0xf0] %v1386
    %1397 = vst [vmem:[#allocation2 + $0x360] sm:$0xf0] %v1387
    %1398 = vst [vmem:[#allocation2 + $0x368] sm:$0xf0] %v1388
    %1399 = vrot.lane.b32.xlu0 %v817, 28
    %v1400 = vpop.permute.xlu0 %1399
    %1401 = vrot.lane.b32.xlu0 %v811, 28
    %v1402 = vpop.permute.xlu0 %1401
    %1403 = vrot.lane.b32.xlu0 %v818, 28
    %v1404 = vpop.permute.xlu0 %1403
    %1405 = vrot.lane.b32.xlu0 %v812, 28
    %v1406 = vpop.permute.xlu0 %1405
    %1407 = vrot.lane.b32.xlu0 %v819, 28
    %v1408 = vpop.permute.xlu0 %1407
    %1409 = vrot.lane.b32.xlu0 %v813, 28
    %v1410 = vpop.permute.xlu0 %1409
    %v1411 = vsel %vm681, %v1400, %v1402
    %v1412 = vsel %vm681, %v1402, %v1404
    %v1413 = vsel %vm681, %v1404, %v1406
    %v1414 = vsel %vm681, %v1406, %v1408
    %v1415 = vsel %vm681, %v1408, %v1410
    %1421 = vst [vmem:[#allocation2 + $0x398] sm:$0xf] %v1411
    %1422 = vst [vmem:[#allocation2 + $0x3a0] sm:$0xf] %v1412
    %1423 = vst [vmem:[#allocation2 + $0x3a8] sm:$0xf] %v1413
    %1424 = vst [vmem:[#allocation2 + $0x3b0] sm:$0xf] %v1414
    %1425 = vst [vmem:[#allocation2 + $0x3b8] sm:$0xf] %v1415
    %1426 = vrot.lane.b32.xlu0 %v810, 27
    %v1427 = vpop.permute.xlu0 %1426
    %1428 = vrot.lane.b32.xlu0 %v848, 27
    %v1429 = vpop.permute.xlu0 %1428
    %1430 = vrot.lane.b32.xlu0 %v811, 27
    %v1431 = vpop.permute.xlu0 %1430
    %1432 = vrot.lane.b32.xlu0 %v849, 27
    %v1433 = vpop.permute.xlu0 %1432
    %1434 = vrot.lane.b32.xlu0 %v812, 27
    %v1435 = vpop.permute.xlu0 %1434
    %1436 = vrot.lane.b32.xlu0 %v1209, 27
    %v1437 = vpop.permute.xlu0 %1436
    %v1438 = vsel %vm709, %v1427, %v1429
    %v1439 = vsel %vm709, %v1429, %v1431
    %v1440 = vsel %vm709, %v1431, %v1433
    %v1441 = vsel %vm709, %v1433, %v1435
    %v1442 = vsel %vm709, %v1435, %v1437
    %1448 = vst [vmem:[#allocation2 + $0x398] sm:$0xf0] %v1438
    %1449 = vst [vmem:[#allocation2 + $0x3a0] sm:$0xf0] %v1439
    %1450 = vst [vmem:[#allocation2 + $0x3a8] sm:$0xf0] %v1440
    %1451 = vst [vmem:[#allocation2 + $0x3b0] sm:$0xf0] %v1441
    %1452 = vst [vmem:[#allocation2 + $0x3b8] sm:$0xf0] %v1442
    %1453 = vrot.lane.b32.xlu0 %v817, 19
    %v1454 = vpop.permute.xlu0 %1453
    %1455 = vrot.lane.b32.xlu0 %v811, 19
    %v1456 = vpop.permute.xlu0 %1455
    %1457 = vrot.lane.b32.xlu0 %v818, 19
    %v1458 = vpop.permute.xlu0 %1457
    %1459 = vrot.lane.b32.xlu0 %v812, 19
    %v1460 = vpop.permute.xlu0 %1459
    %1461 = vrot.lane.b32.xlu0 %v819, 19
    %v1462 = vpop.permute.xlu0 %1461
    %1463 = vrot.lane.b32.xlu0 %v813, 19
    %v1464 = vpop.permute.xlu0 %1463
    %v1465 = vsel %vm737, %v1454, %v1456
    %v1466 = vsel %vm737, %v1456, %v1458
    %v1467 = vsel %vm737, %v1458, %v1460
    %v1468 = vsel %vm737, %v1460, %v1462
    %v1469 = vsel %vm737, %v1462, %v1464
    %1475 = vst [vmem:[#allocation2 + $0x3e8] sm:$0xf] %v1465
    %1476 = vst [vmem:[#allocation2 + $0x3f0] sm:$0xf] %v1466
    %1477 = vst [vmem:[#allocation2 + $0x3f8] sm:$0xf] %v1467
    %1478 = vst [vmem:[#allocation2 + $0x400] sm:$0xf] %v1468
    %1479 = vst [vmem:[#allocation2 + $0x408] sm:$0xf] %v1469
    %1480 = vrot.lane.b32.xlu0 %v810, 18
    %v1481 = vpop.permute.xlu0 %1480
    %1482 = vrot.lane.b32.xlu0 %v848, 18
    %v1483 = vpop.permute.xlu0 %1482
    %1484 = vrot.lane.b32.xlu0 %v811, 18
    %v1485 = vpop.permute.xlu0 %1484
    %1486 = vrot.lane.b32.xlu0 %v849, 18
    %v1487 = vpop.permute.xlu0 %1486
    %1488 = vrot.lane.b32.xlu0 %v812, 18
    %v1489 = vpop.permute.xlu0 %1488
    %1490 = vrot.lane.b32.xlu0 %v1209, 18
    %v1491 = vpop.permute.xlu0 %1490
    %v1492 = vsel %vm765, %v1481, %v1483
    %v1493 = vsel %vm765, %v1483, %v1485
    %v1494 = vsel %vm765, %v1485, %v1487
    %v1495 = vsel %vm765, %v1487, %v1489
    %v1496 = vsel %vm765, %v1489, %v1491
    %1502 = vst [vmem:[#allocation2 + $0x3e8] sm:$0xf0] %v1492
    %1503 = vst [vmem:[#allocation2 + $0x3f0] sm:$0xf0] %v1493
    %1504 = vst [vmem:[#allocation2 + $0x3f8] sm:$0xf0] %v1494
    %1505 = vst [vmem:[#allocation2 + $0x400] sm:$0xf0] %v1495
    %1506 = vst [vmem:[#allocation2 + $0x408] sm:$0xf0] %v1496
    %1507 = vrot.lane.b32.xlu0 %v817, 17
    %v1508 = vpop.permute.xlu0 %1507
    %1509 = vrot.lane.b32.xlu0 %v811, 17
    %v1510 = vpop.permute.xlu0 %1509
    %1511 = vrot.lane.b32.xlu0 %v818, 17
    %v1512 = vpop.permute.xlu0 %1511
    %1513 = vrot.lane.b32.xlu0 %v812, 17
    %v1514 = vpop.permute.xlu0 %1513
    %1515 = vrot.lane.b32.xlu0 %v819, 17
    %v1516 = vpop.permute.xlu0 %1515
    %1517 = vrot.lane.b32.xlu0 %v813, 17
    %v1518 = vpop.permute.xlu0 %1517
    %v1519 = vsel %vm793, %v1508, %v1510
    %v1520 = vsel %vm793, %v1510, %v1512
    %v1521 = vsel %vm793, %v1512, %v1514
    %v1522 = vsel %vm793, %v1514, %v1516
    %v1523 = vsel %vm793, %v1516, %v1518
    %1529 = vst [vmem:[#allocation2 + $0x438] sm:$0xf] %v1519
    %1530 = vst [vmem:[#allocation2 + $0x440] sm:$0xf] %v1520
    %1531 = vst [vmem:[#allocation2 + $0x448] sm:$0xf] %v1521
    %1532 = vst [vmem:[#allocation2 + $0x450] sm:$0xf] %v1522
    %1533 = vst [vmem:[#allocation2 + $0x458] sm:$0xf] %v1523
    %1534 = vst [vmem:[#allocation2 + $0x410] sm:$0xf0] 0.0
    %1535 = vst [vmem:[#allocation2 + $0x418] sm:$0xf0] 0.0
    %1536 = vst [vmem:[#allocation2 + $0x420] sm:$0xf0] 0.0
    %1537 = vst [vmem:[#allocation2 + $0x428] sm:$0xf0] 0.0
    %1538 = vst [vmem:[#allocation2 + $0x430] sm:$0xf0] 0.0
    %1539 = vst [vmem:[#allocation2 + $0x438] sm:$0xf0] 0.0
    %1540 = vst [vmem:[#allocation2 + $0x440] sm:$0xf0] 0.0
    %1541 = vst [vmem:[#allocation2 + $0x448] sm:$0xf0] 0.0
    %1542 = vst [vmem:[#allocation2 + $0x450] sm:$0xf0] 0.0
    %1543 = vst [vmem:[#allocation2 + $0x458] sm:$0xf0] 0.0
    %1544 = vst [vmem:[#allocation2 + $0x460] sm:$0xff] 0.0
    %1545 = vst [vmem:[#allocation2 + $0x468] sm:$0xff] 0.0
    %1546 = vst [vmem:[#allocation2 + $0x470] sm:$0xff] 0.0
    %1547 = vst [vmem:[#allocation2 + $0x478] sm:$0xff] 0.0
    %1548 = vst [vmem:[#allocation2 + $0x480] sm:$0xff] 0.0
    %1549 = vst [vmem:[#allocation2 + $0x488] sm:$0xff] 0.0
    %1550 = vst [vmem:[#allocation2 + $0x490] sm:$0xff] 0.0
    %1551 = vst [vmem:[#allocation2 + $0x498] sm:$0xff] 0.0
    %1552 = vst [vmem:[#allocation2 + $0x4a0] sm:$0xff] 0.0
    %1553 = vst [vmem:[#allocation2 + $0x4a8] sm:$0xff] 0.0
    %1554 = vst [vmem:[#allocation2 + $0x4b0] sm:$0xff] 0.0
    %1555 = vst [vmem:[#allocation2 + $0x4b8] sm:$0xff] 0.0
    %1556 = vst [vmem:[#allocation2 + $0x4c0] sm:$0xff] 0.0
    %1557 = vst [vmem:[#allocation2 + $0x4c8] sm:$0xff] 0.0
    %1558 = vst [vmem:[#allocation2 + $0x4d0] sm:$0xff] 0.0
    %1559 = vst [vmem:[#allocation2 + $0x4d8] sm:$0xff] 0.0
    %1560 = vst [vmem:[#allocation2 + $0x4e0] sm:$0xff] 0.0
    %1561 = vst [vmem:[#allocation2 + $0x4e8] sm:$0xff] 0.0
    %1562 = vst [vmem:[#allocation2 + $0x4f0] sm:$0xff] 0.0
    %1563 = vst [vmem:[#allocation2 + $0x4f8] sm:$0xff] 0.0
    %v1564 = vld [vmem:[%s1] sm:$0xff]
    %v1565 = vld [vmem:[#allocation2] sm:$0xff]
    %v1566 = vld [vmem:[#allocation2 + $0x8] sm:$0xff]
    %v1567 = vld [vmem:[#allocation2 + $0x10] sm:$0xff]
    %v1568 = vld [vmem:[#allocation2 + $0x18] sm:$0xff]
    %v1569 = vld [vmem:[#allocation2 + $0x20] sm:$0xff]
    %v1570 = vld [vmem:[#allocation2 + $0x28] sm:$0xff]
    %v1571 = vld [vmem:[#allocation2 + $0x30] sm:$0xff]
    %v1572 = vld [vmem:[#allocation2 + $0x38] sm:$0xff]
    %v1573 = vld [vmem:[#allocation2 + $0x40] sm:$0xff]
    %v1574 = vld [vmem:[#allocation2 + $0x48] sm:$0xff]
    %v1575 = vld [vmem:[#allocation2 + $0x50] sm:$0xff]
    %v1576 = vld [vmem:[#allocation2 + $0x58] sm:$0xff]
    %v1577 = vld [vmem:[#allocation2 + $0x60] sm:$0xff]
    %v1578 = vld [vmem:[#allocation2 + $0x68] sm:$0xff]
    %v1579 = vld [vmem:[#allocation2 + $0x70] sm:$0xff]
    %v1580 = vld [vmem:[#allocation2 + $0x78] sm:$0xff]
    %v1581 = vld [vmem:[#allocation2 + $0x80] sm:$0xff]
    %v1582 = vld [vmem:[#allocation2 + $0x88] sm:$0xff]
    %v1583 = vld [vmem:[#allocation2 + $0x90] sm:$0xff]
    %v1584 = vld [vmem:[#allocation2 + $0x98] sm:$0xff]
    %v1585 = vld [vmem:[#allocation2 + $0xa0] sm:$0xff]
    %v1586 = vld [vmem:[#allocation2 + $0xa8] sm:$0xff]
    %v1587 = vld [vmem:[#allocation2 + $0xb0] sm:$0xff]
    %v1588 = vld [vmem:[#allocation2 + $0xb8] sm:$0xff]
    %v1589 = vld [vmem:[#allocation2 + $0xc0] sm:$0xff]
    %v1590 = vld [vmem:[#allocation2 + $0xc8] sm:$0xff]
    %v1591 = vld [vmem:[#allocation2 + $0xd0] sm:$0xff]
    %v1592 = vld [vmem:[#allocation2 + $0xd8] sm:$0xff]
    %v1593 = vld [vmem:[#allocation2 + $0xe0] sm:$0xff]
    %v1594 = vld [vmem:[#allocation2 + $0xe8] sm:$0xff]
    %v1595 = vld [vmem:[#allocation2 + $0xf0] sm:$0xff]
    %v1596 = vld [vmem:[#allocation2 + $0xf8] sm:$0xff]
    %v1597 = vld [vmem:[#allocation2 + $0x100] sm:$0xff]
    %v1598 = vld [vmem:[#allocation2 + $0x108] sm:$0xff]
    %v1599 = vld [vmem:[#allocation2 + $0x110] sm:$0xff]
    %v1600 = vld [vmem:[#allocation2 + $0x118] sm:$0xff]
    %v1601 = vld [vmem:[#allocation2 + $0x120] sm:$0xff]
    %v1602 = vld [vmem:[#allocation2 + $0x128] sm:$0xff]
    %v1603 = vld [vmem:[#allocation2 + $0x130] sm:$0xff]
    %v1604 = vld [vmem:[#allocation2 + $0x138] sm:$0xff]
    %v1605 = vld [vmem:[#allocation2 + $0x140] sm:$0xff]
    %v1606 = vld [vmem:[#allocation2 + $0x148] sm:$0xff]
    %v1607 = vld [vmem:[#allocation2 + $0x150] sm:$0xff]
    %v1608 = vld [vmem:[#allocation2 + $0x158] sm:$0xff]
    %v1609 = vld [vmem:[#allocation2 + $0x160] sm:$0xff]
    %v1610 = vld [vmem:[#allocation2 + $0x168] sm:$0xff]
    %v1611 = vld [vmem:[#allocation2 + $0x170] sm:$0xff]
    %v1612 = vld [vmem:[#allocation2 + $0x178] sm:$0xff]
    %v1613 = vld [vmem:[#allocation2 + $0x180] sm:$0xff]
    %v1614 = vld [vmem:[#allocation2 + $0x188] sm:$0xff]
    %v1615 = vld [vmem:[#allocation2 + $0x190] sm:$0xff]
    %v1616 = vld [vmem:[#allocation2 + $0x198] sm:$0xff]
    %v1617 = vld [vmem:[#allocation2 + $0x1a0] sm:$0xff]
    %v1618 = vld [vmem:[#allocation2 + $0x1a8] sm:$0xff]
    %v1619 = vld [vmem:[#allocation2 + $0x1b0] sm:$0xff]
    %v1620 = vld [vmem:[#allocation2 + $0x1b8] sm:$0xff]
    %v1621 = vld [vmem:[#allocation2 + $0x1c0] sm:$0xff]
    %v1622 = vld [vmem:[#allocation2 + $0x1c8] sm:$0xff]
    %v1623 = vld [vmem:[#allocation2 + $0x1d0] sm:$0xff]
    %v1624 = vld [vmem:[#allocation2 + $0x1d8] sm:$0xff]
    %v1625 = vld [vmem:[#allocation2 + $0x1e0] sm:$0xff]
    %v1626 = vld [vmem:[#allocation2 + $0x1e8] sm:$0xff]
    %v1627 = vld [vmem:[#allocation2 + $0x1f0] sm:$0xff]
    %v1628 = vld [vmem:[#allocation2 + $0x1f8] sm:$0xff]
    %v1629 = vld [vmem:[#allocation2 + $0x200] sm:$0xff]
    %v1630 = vld [vmem:[#allocation2 + $0x208] sm:$0xff]
    %v1631 = vld [vmem:[#allocation2 + $0x210] sm:$0xff]
    %v1632 = vld [vmem:[#allocation2 + $0x218] sm:$0xff]
    %v1633 = vld [vmem:[#allocation2 + $0x220] sm:$0xff]
    %v1634 = vld [vmem:[#allocation2 + $0x228] sm:$0xff]
    %v1635 = vld [vmem:[#allocation2 + $0x230] sm:$0xff]
    %v1636 = vld [vmem:[#allocation2 + $0x238] sm:$0xff]
    %v1637 = vld [vmem:[#allocation2 + $0x240] sm:$0xff]
    %v1638 = vld [vmem:[#allocation2 + $0x248] sm:$0xff]
    %v1639 = vld [vmem:[#allocation2 + $0x250] sm:$0xff]
    %v1640 = vld [vmem:[#allocation2 + $0x258] sm:$0xff]
    %v1641 = vld [vmem:[#allocation2 + $0x260] sm:$0xff]
    %v1642 = vld [vmem:[#allocation2 + $0x268] sm:$0xff]
    %v1643 = vld [vmem:[#allocation2 + $0x270] sm:$0xff]
    %v1644 = vld [vmem:[#allocation2 + $0x278] sm:$0xff]
    %v1645 = vld [vmem:[#allocation2 + $0x280] sm:$0xff]
    %v1646 = vld [vmem:[#allocation2 + $0x288] sm:$0xff]
    %v1647 = vld [vmem:[#allocation2 + $0x290] sm:$0xff]
    %v1648 = vld [vmem:[#allocation2 + $0x298] sm:$0xff]
    %v1649 = vld [vmem:[#allocation2 + $0x2a0] sm:$0xff]
    %v1650 = vld [vmem:[#allocation2 + $0x2a8] sm:$0xff]
    %v1651 = vld [vmem:[#allocation2 + $0x2b0] sm:$0xff]
    %v1652 = vld [vmem:[#allocation2 + $0x2b8] sm:$0xff]
    %v1653 = vld [vmem:[#allocation2 + $0x2c0] sm:$0xff]
    %v1654 = vld [vmem:[#allocation2 + $0x2c8] sm:$0xff]
    %v1655 = vld [vmem:[#allocation2 + $0x2d0] sm:$0xff]
    %v1656 = vld [vmem:[#allocation2 + $0x2d8] sm:$0xff]
    %v1657 = vld [vmem:[#allocation2 + $0x2e0] sm:$0xff]
    %v1658 = vld [vmem:[#allocation2 + $0x2e8] sm:$0xff]
    %v1659 = vld [vmem:[#allocation2 + $0x2f0] sm:$0xff]
    %v1660 = vld [vmem:[#allocation2 + $0x2f8] sm:$0xff]
    %v1661 = vld [vmem:[#allocation2 + $0x300] sm:$0xff]
    %v1662 = vld [vmem:[#allocation2 + $0x308] sm:$0xff]
    %v1663 = vld [vmem:[#allocation2 + $0x310] sm:$0xff]
    %v1664 = vld [vmem:[#allocation2 + $0x318] sm:$0xff]
    %v1665 = vld [vmem:[#allocation2 + $0x320] sm:$0xff]
    %v1666 = vld [vmem:[#allocation2 + $0x328] sm:$0xff]
    %v1667 = vld [vmem:[#allocation2 + $0x330] sm:$0xff]
    %v1668 = vld [vmem:[#allocation2 + $0x338] sm:$0xff]
    %v1669 = vld [vmem:[#allocation2 + $0x340] sm:$0xff]
    %v1670 = vld [vmem:[#allocation2 + $0x348] sm:$0xff]
    %v1671 = vld [vmem:[#allocation2 + $0x350] sm:$0xff]
    %v1672 = vld [vmem:[#allocation2 + $0x358] sm:$0xff]
    %v1673 = vld [vmem:[#allocation2 + $0x360] sm:$0xff]
    %v1674 = vld [vmem:[#allocation2 + $0x368] sm:$0xff]
    %v1675 = vld [vmem:[#allocation2 + $0x370] sm:$0xff]
    %v1676 = vld [vmem:[#allocation2 + $0x378] sm:$0xff]
    %v1677 = vld [vmem:[#allocation2 + $0x380] sm:$0xff]
    %v1678 = vld [vmem:[#allocation2 + $0x388] sm:$0xff]
    %v1679 = vld [vmem:[#allocation2 + $0x390] sm:$0xff]
    %v1680 = vld [vmem:[#allocation2 + $0x398] sm:$0xff]
    %v1681 = vld [vmem:[#allocation2 + $0x3a0] sm:$0xff]
    %v1682 = vld [vmem:[#allocation2 + $0x3a8] sm:$0xff]
    %v1683 = vld [vmem:[#allocation2 + $0x3b0] sm:$0xff]
    %v1684 = vld [vmem:[#allocation2 + $0x3b8] sm:$0xff]
    %v1685 = vld [vmem:[#allocation2 + $0x3c0] sm:$0xff]
    %v1686 = vld [vmem:[#allocation2 + $0x3c8] sm:$0xff]
    %v1687 = vld [vmem:[#allocation2 + $0x3d0] sm:$0xff]
    %v1688 = vld [vmem:[#allocation2 + $0x3d8] sm:$0xff]
    %v1689 = vld [vmem:[#allocation2 + $0x3e0] sm:$0xff]
    %v1690 = vld [vmem:[#allocation2 + $0x3e8] sm:$0xff]
    %v1691 = vld [vmem:[#allocation2 + $0x3f0] sm:$0xff]
    %v1692 = vld [vmem:[#allocation2 + $0x3f8] sm:$0xff]
    %v1693 = vld [vmem:[#allocation2 + $0x400] sm:$0xff]
    %v1694 = vld [vmem:[#allocation2 + $0x408] sm:$0xff]
    %v1695 = vld [vmem:[#allocation2 + $0x410] sm:$0xff]
    %v1696 = vld [vmem:[#allocation2 + $0x418] sm:$0xff]
    %v1697 = vld [vmem:[#allocation2 + $0x420] sm:$0xff]
    %v1698 = vld [vmem:[#allocation2 + $0x428] sm:$0xff]
    %v1699 = vld [vmem:[#allocation2 + $0x430] sm:$0xff]
    %v1700 = vld [vmem:[#allocation2 + $0x438] sm:$0xff]
    %v1701 = vld [vmem:[#allocation2 + $0x440] sm:$0xff]
    %v1702 = vld [vmem:[#allocation2 + $0x448] sm:$0xff]
    %v1703 = vld [vmem:[#allocation2 + $0x450] sm:$0xff]
    %v1704 = vld [vmem:[#allocation2 + $0x458] sm:$0xff]
    %v1705 = vld [vmem:[#allocation2 + $0x460] sm:$0xff]
    %v1706 = vld [vmem:[#allocation2 + $0x468] sm:$0xff]
    %v1707 = vld [vmem:[#allocation2 + $0x470] sm:$0xff]
    %v1708 = vld [vmem:[#allocation2 + $0x478] sm:$0xff]
    %v1709 = vld [vmem:[#allocation2 + $0x480] sm:$0xff]
    %v1710 = vld [vmem:[#allocation2 + $0x488] sm:$0xff]
    %v1711 = vld [vmem:[#allocation2 + $0x490] sm:$0xff]
    %v1712 = vld [vmem:[#allocation2 + $0x498] sm:$0xff]
    %v1713 = vld [vmem:[#allocation2 + $0x4a0] sm:$0xff]
    %v1714 = vld [vmem:[#allocation2 + $0x4a8] sm:$0xff]
    %v1715 = vld [vmem:[#allocation2 + $0x4b0] sm:$0xff]
    %v1716 = vld [vmem:[#allocation2 + $0x4b8] sm:$0xff]
    %v1717 = vld [vmem:[#allocation2 + $0x4c0] sm:$0xff]
    %v1718 = vld [vmem:[#allocation2 + $0x4c8] sm:$0xff]
    %v1719 = vld [vmem:[#allocation2 + $0x4d0] sm:$0xff]
    %v1720 = vld [vmem:[#allocation2 + $0x4d8] sm:$0xff]
    %v1721 = vld [vmem:[#allocation2 + $0x4e0] sm:$0xff]
    %v1722 = vld [vmem:[#allocation2 + $0x4e8] sm:$0xff]
    %v1723 = vld [vmem:[#allocation2 + $0x4f0] sm:$0xff]
    %v1724 = vld [vmem:[#allocation2 + $0x4f8] sm:$0xff]
    %v1725 = vld [vmem:[%s2] sm:$0xff]
    %1727 = vset.pattern.permute.xlu0 0
    %1728 = vperm.xlu0 %1727, %v1725
    %v1729 = vpop.permute.xlu0 %1728
    %1731 = vmatprep.subr.mxu0 %v1566
    %1732 = vmatpush1.msra.mxu0 %v1565
    %1733 = vmatprep.subr.mxu0 %v1576
    %1734 = vmatpush1.msra.mxu0 %v1575
    %1735 = vmatprep.subr.mxu0 %v1586
    %1736 = vmatpush1.msra.mxu0 %v1585
    %1737 = vmatprep.subr.mxu0 %v1596
    %1738 = vmatpush1.msra.mxu0 %v1595
    %1739 = vmatprep.subr.mxu0 %v1606
    %1740 = vmatpush1.msra.mxu0 %v1605
    %1741 = vmatprep.subr.mxu0 %v1616
    %1742 = vmatpush1.msra.mxu0 %v1615
    %1743 = vmatprep.subr.mxu0 %v1626
    %1744 = vmatpush1.msra.mxu0 %v1625
    %1745 = vmatprep.subr.mxu0 %v1636
    %1746 = vmatpush1.msra.mxu0 %v1635
    %1747 = vmatprep.subr.mxu0 %v1646
    %1748 = vmatpush1.msra.mxu0 %v1645
    %1749 = vmatprep.subr.mxu0 %v1656
    %1750 = vmatpush1.msra.mxu0 %v1655
    %1751 = vmatprep.subr.mxu0 %v1666
    %1752 = vmatpush1.msra.mxu0 %v1665
    %1753 = vmatprep.subr.mxu0 %v1676
    %1754 = vmatpush1.msra.mxu0 %v1675
    %1755 = vmatprep.subr.mxu0 %v1686
    %1756 = vmatpush1.msra.mxu0 %v1685
    %1757 = vmatprep.subr.mxu0 %v1696
    %1758 = vmatpush1.msra.mxu0 %v1695
    %1759 = vmatprep.subr.mxu0 %v1706
    %1760 = vmatpush1.msra.mxu0 %v1705
    %1761 = vmatprep.subr.mxu0 %v1716
    %1762 = vmatpush1.msra.mxu0 %v1715
    %1763 = vmatprep.subr.mxu0 0.0
    %1764 = vmatpush1.msra.mxu0 0.0
    %1765 = vmatprep.subr.mxu0 0.0
    %1766 = vmatpush1.msra.mxu0 0.0
    %1767 = vmatprep.subr.mxu0 0.0
    %1768 = vmatpush1.msra.mxu0 0.0
    %1769 = vmatprep.subr.mxu0 0.0
    %1770 = vmatpush1.msra.mxu0 0.0
    %1771 = vmatprep.subr.mxu0 0.0
    %1772 = vmatpush1.msra.mxu0 0.0
    %1773 = vmatprep.subr.mxu0 0.0
    %1774 = vmatpush1.msra.mxu0 0.0
    %1775 = vmatprep.subr.mxu0 0.0
    %1776 = vmatpush1.msra.mxu0 0.0
    %1777 = vmatprep.subr.mxu0 0.0
    %1778 = vmatpush1.msra.mxu0 0.0
    %1779 = vmatprep.subr.mxu0 0.0
    %1780 = vmatpush1.msra.mxu0 0.0
    %1781 = vmatprep.subr.mxu0 0.0
    %1782 = vmatpush1.msra.mxu0 0.0
    %1783 = vmatprep.subr.mxu0 0.0
    %1784 = vmatpush1.msra.mxu0 0.0
    %1785 = vmatprep.subr.mxu0 0.0
    %1786 = vmatpush1.msra.mxu0 0.0
    %1787 = vmatprep.subr.mxu0 0.0
    %1788 = vmatpush1.msra.mxu0 0.0
    %1789 = vmatprep.subr.mxu0 0.0
    %1790 = vmatpush1.msra.mxu0 0.0
    %1791 = vmatprep.subr.mxu0 0.0
    %1792 = vmatpush1.msra.mxu0 0.0
    %1793 = vmatprep.subr.mxu0 0.0
    %1794 = vmatpush1.msra.mxu0 0.0
    %1795 = vmatprep.mubr.f32.mxu0 0.0
    %1796 = vmatmul.mubr.f32.gmra.mrb[0].mxu0 %v1564
    %v1797 = vpop.f32.mrb[0].mxu0
    %v1798 = vadd.f32 %v1729, %v1797
    %v1799 = vpop.f32.mrb[0].mxu0
    %v1800 = vadd.f32 %v1729, %v1799
    %1801 = vdwg.mxu0
    %1802 = vmatprep.subr.mxu0 %v1568
    %1803 = vmatpush1.msra.mxu0 %v1567
    %1804 = vmatprep.subr.mxu0 %v1578
    %1805 = vmatpush1.msra.mxu0 %v1577
    %1806 = vmatprep.subr.mxu0 %v1588
    %1807 = vmatpush1.msra.mxu0 %v1587
    %1808 = vmatprep.subr.mxu0 %v1598
    %1809 = vmatpush1.msra.mxu0 %v1597
    %1810 = vmatprep.subr.mxu0 %v1608
    %1811 = vmatpush1.msra.mxu0 %v1607
    %1812 = vmatprep.subr.mxu0 %v1618
    %1813 = vmatpush1.msra.mxu0 %v1617
    %1814 = vmatprep.subr.mxu0 %v1628
    %1815 = vmatpush1.msra.mxu0 %v1627
    %1816 = vmatprep.subr.mxu0 %v1638
    %1817 = vmatpush1.msra.mxu0 %v1637
    %1818 = vmatprep.subr.mxu0 %v1648
    %1819 = vmatpush1.msra.mxu0 %v1647
    %1820 = vmatprep.subr.mxu0 %v1658
    %1821 = vmatpush1.msra.mxu0 %v1657
    %1822 = vmatprep.subr.mxu0 %v1668
    %1823 = vmatpush1.msra.mxu0 %v1667
    %1824 = vmatprep.subr.mxu0 %v1678
    %1825 = vmatpush1.msra.mxu0 %v1677
    %1826 = vmatprep.subr.mxu0 %v1688
    %1827 = vmatpush1.msra.mxu0 %v1687
    %1828 = vmatprep.subr.mxu0 %v1698
    %1829 = vmatpush1.msra.mxu0 %v1697
    %1830 = vmatprep.subr.mxu0 %v1708
    %1831 = vmatpush1.msra.mxu0 %v1707
    %1832 = vmatprep.subr.mxu0 %v1718
    %1833 = vmatpush1.msra.mxu0 %v1717
    %1834 = vmatprep.subr.mxu0 0.0
    %1835 = vmatpush1.msra.mxu0 0.0
    %1836 = vmatprep.subr.mxu0 0.0
    %1837 = vmatpush1.msra.mxu0 0.0
    %1838 = vmatprep.subr.mxu0 0.0
    %1839 = vmatpush1.msra.mxu0 0.0
    %1840 = vmatprep.subr.mxu0 0.0
    %1841 = vmatpush1.msra.mxu0 0.0
    %1842 = vmatprep.subr.mxu0 0.0
    %1843 = vmatpush1.msra.mxu0 0.0
    %1844 = vmatprep.subr.mxu0 0.0
    %1845 = vmatpush1.msra.mxu0 0.0
    %1846 = vmatprep.subr.mxu0 0.0
    %1847 = vmatpush1.msra.mxu0 0.0
    %1848 = vmatprep.subr.mxu0 0.0
    %1849 = vmatpush1.msra.mxu0 0.0
    %1850 = vmatprep.subr.mxu0 0.0
    %1851 = vmatpush1.msra.mxu0 0.0
    %1852 = vmatprep.subr.mxu0 0.0
    %1853 = vmatpush1.msra.mxu0 0.0
    %1854 = vmatprep.subr.mxu0 0.0
    %1855 = vmatpush1.msra.mxu0 0.0
    %1856 = vmatprep.subr.mxu0 0.0
    %1857 = vmatpush1.msra.mxu0 0.0
    %1858 = vmatprep.subr.mxu0 0.0
    %1859 = vmatpush1.msra.mxu0 0.0
    %1860 = vmatprep.subr.mxu0 0.0
    %1861 = vmatpush1.msra.mxu0 0.0
    %1862 = vmatprep.subr.mxu0 0.0
    %1863 = vmatpush1.msra.mxu0 0.0
    %1864 = vmatprep.subr.mxu0 0.0
    %1865 = vmatpush1.msra.mxu0 0.0
    %1866 = vmatprep.mubr.f32.mxu0 0.0
    %1867 = vmatmul.mubr.f32.gmra.mrb[0].mxu0 %v1564
    %v1868 = vpop.f32.mrb[0].mxu0
    %v1869 = vadd.f32 %v1729, %v1868
    %v1870 = vpop.f32.mrb[0].mxu0
    %v1871 = vadd.f32 %v1729, %v1870
    %1872 = vdwg.mxu0
    %1873 = vmatprep.subr.mxu0 %v1570
    %1874 = vmatpush1.msra.mxu0 %v1569
    %1875 = vmatprep.subr.mxu0 %v1580
    %1876 = vmatpush1.msra.mxu0 %v1579
    %1877 = vmatprep.subr.mxu0 %v1590
    %1878 = vmatpush1.msra.mxu0 %v1589
    %1879 = vmatprep.subr.mxu0 %v1600
    %1880 = vmatpush1.msra.mxu0 %v1599
    %1881 = vmatprep.subr.mxu0 %v1610
    %1882 = vmatpush1.msra.mxu0 %v1609
    %1883 = vmatprep.subr.mxu0 %v1620
    %1884 = vmatpush1.msra.mxu0 %v1619
    %1885 = vmatprep.subr.mxu0 %v1630
    %1886 = vmatpush1.msra.mxu0 %v1629
    %1887 = vmatprep.subr.mxu0 %v1640
    %1888 = vmatpush1.msra.mxu0 %v1639
    %1889 = vmatprep.subr.mxu0 %v1650
    %1890 = vmatpush1.msra.mxu0 %v1649
    %1891 = vmatprep.subr.mxu0 %v1660
    %1892 = vmatpush1.msra.mxu0 %v1659
    %1893 = vmatprep.subr.mxu0 %v1670
    %1894 = vmatpush1.msra.mxu0 %v1669
    %1895 = vmatprep.subr.mxu0 %v1680
    %1896 = vmatpush1.msra.mxu0 %v1679
    %1897 = vmatprep.subr.mxu0 %v1690
    %1898 = vmatpush1.msra.mxu0 %v1689
    %1899 = vmatprep.subr.mxu0 %v1700
    %1900 = vmatpush1.msra.mxu0 %v1699
    %1901 = vmatprep.subr.mxu0 %v1710
    %1902 = vmatpush1.msra.mxu0 %v1709
    %1903 = vmatprep.subr.mxu0 %v1720
    %1904 = vmatpush1.msra.mxu0 %v1719
    %1905 = vmatprep.subr.mxu0 0.0
    %1906 = vmatpush1.msra.mxu0 0.0
    %1907 = vmatprep.subr.mxu0 0.0
    %1908 = vmatpush1.msra.mxu0 0.0
    %1909 = vmatprep.subr.mxu0 0.0
    %1910 = vmatpush1.msra.mxu0 0.0
    %1911 = vmatprep.subr.mxu0 0.0
    %1912 = vmatpush1.msra.mxu0 0.0
    %1913 = vmatprep.subr.mxu0 0.0
    %1914 = vmatpush1.msra.mxu0 0.0
    %1915 = vmatprep.subr.mxu0 0.0
    %1916 = vmatpush1.msra.mxu0 0.0
    %1917 = vmatprep.subr.mxu0 0.0
    %1918 = vmatpush1.msra.mxu0 0.0
    %1919 = vmatprep.subr.mxu0 0.0
    %1920 = vmatpush1.msra.mxu0 0.0
    %1921 = vmatprep.subr.mxu0 0.0
    %1922 = vmatpush1.msra.mxu0 0.0
    %1923 = vmatprep.subr.mxu0 0.0
    %1924 = vmatpush1.msra.mxu0 0.0
    %1925 = vmatprep.subr.mxu0 0.0
    %1926 = vmatpush1.msra.mxu0 0.0
    %1927 = vmatprep.subr.mxu0 0.0
    %1928 = vmatpush1.msra.mxu0 0.0
    %1929 = vmatprep.subr.mxu0 0.0
    %1930 = vmatpush1.msra.mxu0 0.0
    %1931 = vmatprep.subr.mxu0 0.0
    %1932 = vmatpush1.msra.mxu0 0.0
    %1933 = vmatprep.subr.mxu0 0.0
    %1934 = vmatpush1.msra.mxu0 0.0
    %1935 = vmatprep.subr.mxu0 0.0
    %1936 = vmatpush1.msra.mxu0 0.0
    %1937 = vmatprep.mubr.f32.mxu0 0.0
    %1938 = vmatmul.mubr.f32.gmra.mrb[0].mxu0 %v1564
    %v1939 = vpop.f32.mrb[0].mxu0
    %v1940 = vadd.f32 %v1729, %v1939
    %v1941 = vpop.f32.mrb[0].mxu0
    %v1942 = vadd.f32 %v1729, %v1941
    %1943 = vdwg.mxu0
    %1944 = vmatprep.subr.mxu0 %v1572
    %1945 = vmatpush1.msra.mxu0 %v1571
    %1946 = vmatprep.subr.mxu0 %v1582
    %1947 = vmatpush1.msra.mxu0 %v1581
    %1948 = vmatprep.subr.mxu0 %v1592
    %1949 = vmatpush1.msra.mxu0 %v1591
    %1950 = vmatprep.subr.mxu0 %v1602
    %1951 = vmatpush1.msra.mxu0 %v1601
    %1952 = vmatprep.subr.mxu0 %v1612
    %1953 = vmatpush1.msra.mxu0 %v1611
    %1954 = vmatprep.subr.mxu0 %v1622
    %1955 = vmatpush1.msra.mxu0 %v1621
    %1956 = vmatprep.subr.mxu0 %v1632
    %1957 = vmatpush1.msra.mxu0 %v1631
    %1958 = vmatprep.subr.mxu0 %v1642
    %1959 = vmatpush1.msra.mxu0 %v1641
    %1960 = vmatprep.subr.mxu0 %v1652
    %1961 = vmatpush1.msra.mxu0 %v1651
    %1962 = vmatprep.subr.mxu0 %v1662
    %1963 = vmatpush1.msra.mxu0 %v1661
    %1964 = vmatprep.subr.mxu0 %v1672
    %1965 = vmatpush1.msra.mxu0 %v1671
    %1966 = vmatprep.subr.mxu0 %v1682
    %1967 = vmatpush1.msra.mxu0 %v1681
    %1968 = vmatprep.subr.mxu0 %v1692
    %1969 = vmatpush1.msra.mxu0 %v1691
    %1970 = vmatprep.subr.mxu0 %v1702
    %1971 = vmatpush1.msra.mxu0 %v1701
    %1972 = vmatprep.subr.mxu0 %v1712
    %1973 = vmatpush1.msra.mxu0 %v1711
    %1974 = vmatprep.subr.mxu0 %v1722
    %1975 = vmatpush1.msra.mxu0 %v1721
    %1976 = vmatprep.subr.mxu0 0.0
    %1977 = vmatpush1.msra.mxu0 0.0
    %1978 = vmatprep.subr.mxu0 0.0
    %1979 = vmatpush1.msra.mxu0 0.0
    %1980 = vmatprep.subr.mxu0 0.0
    %1981 = vmatpush1.msra.mxu0 0.0
    %1982 = vmatprep.subr.mxu0 0.0
    %1983 = vmatpush1.msra.mxu0 0.0
    %1984 = vmatprep.subr.mxu0 0.0
    %1985 = vmatpush1.msra.mxu0 0.0
    %1986 = vmatprep.subr.mxu0 0.0
    %1987 = vmatpush1.msra.mxu0 0.0
    %1988 = vmatprep.subr.mxu0 0.0
    %1989 = vmatpush1.msra.mxu0 0.0
    %1990 = vmatprep.subr.mxu0 0.0
    %1991 = vmatpush1.msra.mxu0 0.0
    %1992 = vmatprep.subr.mxu0 0.0
    %1993 = vmatpush1.msra.mxu0 0.0
    %1994 = vmatprep.subr.mxu0 0.0
    %1995 = vmatpush1.msra.mxu0 0.0
    %1996 = vmatprep.subr.mxu0 0.0
    %1997 = vmatpush1.msra.mxu0 0.0
    %1998 = vmatprep.subr.mxu0 0.0
    %1999 = vmatpush1.msra.mxu0 0.0
    %2000 = vmatprep.subr.mxu0 0.0
    %2001 = vmatpush1.msra.mxu0 0.0
    %2002 = vmatprep.subr.mxu0 0.0
    %2003 = vmatpush1.msra.mxu0 0.0
    %2004 = vmatprep.subr.mxu0 0.0
    %2005 = vmatpush1.msra.mxu0 0.0
    %2006 = vmatprep.subr.mxu0 0.0
    %2007 = vmatpush1.msra.mxu0 0.0
    %2008 = vmatprep.mubr.f32.mxu0 0.0
    %2009 = vmatmul.mubr.f32.gmra.mrb[0].mxu0 %v1564
    %v2010 = vpop.f32.mrb[0].mxu0
    %v2011 = vadd.f32 %v1729, %v2010
    %v2012 = vpop.f32.mrb[0].mxu0
    %v2013 = vadd.f32 %v1729, %v2012
    %2014 = vdwg.mxu0
    %2015 = vmatprep.subr.mxu0 %v1574
    %2016 = vmatpush1.msra.mxu0 %v1573
    %2017 = vmatprep.subr.mxu0 %v1584
    %2018 = vmatpush1.msra.mxu0 %v1583
    %2019 = vmatprep.subr.mxu0 %v1594
    %2020 = vmatpush1.msra.mxu0 %v1593
    %2021 = vmatprep.subr.mxu0 %v1604
    %2022 = vmatpush1.msra.mxu0 %v1603
    %2023 = vmatprep.subr.mxu0 %v1614
    %2024 = vmatpush1.msra.mxu0 %v1613
    %2025 = vmatprep.subr.mxu0 %v1624
    %2026 = vmatpush1.msra.mxu0 %v1623
    %2027 = vmatprep.subr.mxu0 %v1634
    %2028 = vmatpush1.msra.mxu0 %v1633
    %2029 = vmatprep.subr.mxu0 %v1644
    %2030 = vmatpush1.msra.mxu0 %v1643
    %2031 = vmatprep.subr.mxu0 %v1654
    %2032 = vmatpush1.msra.mxu0 %v1653
    %2033 = vmatprep.subr.mxu0 %v1664
    %2034 = vmatpush1.msra.mxu0 %v1663
    %2035 = vmatprep.subr.mxu0 %v1674
    %2036 = vmatpush1.msra.mxu0 %v1673
    %2037 = vmatprep.subr.mxu0 %v1684
    %2038 = vmatpush1.msra.mxu0 %v1683
    %2039 = vmatprep.subr.mxu0 %v1694
    %2040 = vmatpush1.msra.mxu0 %v1693
    %2041 = vmatprep.subr.mxu0 %v1704
    %2042 = vmatpush1.msra.mxu0 %v1703
    %2043 = vmatprep.subr.mxu0 %v1714
    %2044 = vmatpush1.msra.mxu0 %v1713
    %2045 = vmatprep.subr.mxu0 %v1724
    %2046 = vmatpush1.msra.mxu0 %v1723
    %2047 = vmatprep.subr.mxu0 0.0
    %2048 = vmatpush1.msra.mxu0 0.0
    %2049 = vmatprep.subr.mxu0 0.0
    %2050 = vmatpush1.msra.mxu0 0.0
    %2051 = vmatprep.subr.mxu0 0.0
    %2052 = vmatpush1.msra.mxu0 0.0
    %2053 = vmatprep.subr.mxu0 0.0
    %2054 = vmatpush1.msra.mxu0 0.0
    %2055 = vmatprep.subr.mxu0 0.0
    %2056 = vmatpush1.msra.mxu0 0.0
    %2057 = vmatprep.subr.mxu0 0.0
    %2058 = vmatpush1.msra.mxu0 0.0
    %2059 = vmatprep.subr.mxu0 0.0
    %2060 = vmatpush1.msra.mxu0 0.0
    %2061 = vmatprep.subr.mxu0 0.0
    %2062 = vmatpush1.msra.mxu0 0.0
    %2063 = vmatprep.subr.mxu0 0.0
    %2064 = vmatpush1.msra.mxu0 0.0
    %2065 = vmatprep.subr.mxu0 0.0
    %2066 = vmatpush1.msra.mxu0 0.0
    %2067 = vmatprep.subr.mxu0 0.0
    %2068 = vmatpush1.msra.mxu0 0.0
    %2069 = vmatprep.subr.mxu0 0.0
    %2070 = vmatpush1.msra.mxu0 0.0
    %2071 = vmatprep.subr.mxu0 0.0
    %2072 = vmatpush1.msra.mxu0 0.0
    %2073 = vmatprep.subr.mxu0 0.0
    %2074 = vmatpush1.msra.mxu0 0.0
    %2075 = vmatprep.subr.mxu0 0.0
    %2076 = vmatpush1.msra.mxu0 0.0
    %2077 = vmatprep.subr.mxu0 0.0
    %2078 = vmatpush1.msra.mxu0 0.0
    %2079 = vmatprep.mubr.f32.mxu0 0.0
    %2080 = vmatmul.mubr.f32.gmra.mrb[0].mxu0 %v1564
    %v2081 = vpop.f32.mrb[0].mxu0
    %v2082 = vadd.f32 %v1729, %v2081
    %v2083 = vpop.f32.mrb[0].mxu0
    %v2084 = vadd.f32 %v1729, %v2083
    %2085 = vdwg.mxu0
    %v2086 = vmul.f32 %v1798, 0.5
    %v2087 = vmul.f32 %v1800, 0.5
    %v2088 = vmul.f32 %v1869, 0.5
    %v2089 = vmul.f32 %v1871, 0.5
    %v2090 = vmul.f32 %v1940, 0.5
    %v2091 = vmul.f32 %v1942, 0.5
    %v2092 = vmul.f32 %v2011, 0.5
    %v2093 = vmul.f32 %v2013, 0.5
    %v2094 = vmul.f32 %v2082, 0.5
    %v2095 = vmul.f32 %v2084, 0.5
    %v2096 = vmul.f32 %v1798, 0.70710677
    %v2097 = vmul.f32 %v1800, 0.70710677
    %v2098 = vmul.f32 %v1869, 0.70710677
    %v2099 = vmul.f32 %v1871, 0.70710677
    %v2100 = vmul.f32 %v1940, 0.70710677
    %v2101 = vmul.f32 %v1942, 0.70710677
    %v2102 = vmul.f32 %v2011, 0.70710677
    %v2103 = vmul.f32 %v2013, 0.70710677
    %v2104 = vmul.f32 %v2082, 0.70710677
    %v2105 = vmul.f32 %v2084, 0.70710677
    %vm2106 = vcmp.ge.f32.partialorder %v2096, 0.0
    %vm2107 = vcmp.ge.f32.partialorder %v2097, 0.0
    %vm2108 = vcmp.ge.f32.partialorder %v2098, 0.0
    %vm2109 = vcmp.ge.f32.partialorder %v2099, 0.0
    %vm2110 = vcmp.ge.f32.partialorder %v2100, 0.0
    %vm2111 = vcmp.ge.f32.partialorder %v2101, 0.0
    %vm2112 = vcmp.ge.f32.partialorder %v2102, 0.0
    %vm2113 = vcmp.ge.f32.partialorder %v2103, 0.0
    %vm2114 = vcmp.ge.f32.partialorder %v2104, 0.0
    %vm2115 = vcmp.ge.f32.partialorder %v2105, 0.0
    %v2116 = vsel %vm2106, 1.0, -1.0
    %v2117 = vsel %vm2107, 1.0, -1.0
    %v2118 = vsel %vm2108, 1.0, -1.0
    %v2119 = vsel %vm2109, 1.0, -1.0
    %v2120 = vsel %vm2110, 1.0, -1.0
    %v2121 = vsel %vm2111, 1.0, -1.0
    %v2122 = vsel %vm2112, 1.0, -1.0
    %v2123 = vsel %vm2113, 1.0, -1.0
    %v2124 = vsel %vm2114, 1.0, -1.0
    %v2125 = vsel %vm2115, 1.0, -1.0
    %v2126 = vand.u32 2147483647, %v2096
    %v2127 = vand.u32 2147483647, %v2097
    %v2128 = vand.u32 2147483647, %v2098
    %v2129 = vand.u32 2147483647, %v2099
    %v2130 = vand.u32 2147483647, %v2100
    %v2131 = vand.u32 2147483647, %v2101
    %v2132 = vand.u32 2147483647, %v2102
    %v2133 = vand.u32 2147483647, %v2103
    %v2134 = vand.u32 2147483647, %v2104
    %v2135 = vand.u32 2147483647, %v2105
    %v2136 = vmul.f32 %v2126, 0.3275911
    %v2137 = vmul.f32 %v2127, 0.3275911
    %v2138 = vmul.f32 %v2128, 0.3275911
    %v2139 = vmul.f32 %v2129, 0.3275911
    %v2140 = vmul.f32 %v2130, 0.3275911
    %v2141 = vmul.f32 %v2131, 0.3275911
    %v2142 = vmul.f32 %v2132, 0.3275911
    %v2143 = vmul.f32 %v2133, 0.3275911
    %v2144 = vmul.f32 %v2134, 0.3275911
    %v2145 = vmul.f32 %v2135, 0.3275911
    %v2146 = vadd.f32 %v2136, 1.0
    %v2147 = vadd.f32 %v2137, 1.0
    %v2148 = vadd.f32 %v2138, 1.0
    %v2149 = vadd.f32 %v2139, 1.0
    %v2150 = vadd.f32 %v2140, 1.0
    %v2151 = vadd.f32 %v2141, 1.0
    %v2152 = vadd.f32 %v2142, 1.0
    %v2153 = vadd.f32 %v2143, 1.0
    %v2154 = vadd.f32 %v2144, 1.0
    %v2155 = vadd.f32 %v2145, 1.0
    %v2156 = vrcp.pop %v2146
    %v2157 = vmul.f32 1.0, %v2156
    %v2158 = vrcp.pop %v2147
    %v2159 = vmul.f32 1.0, %v2158
    %v2160 = vrcp.pop %v2148
    %v2161 = vmul.f32 1.0, %v2160
    %v2162 = vrcp.pop %v2149
    %v2163 = vmul.f32 1.0, %v2162
    %v2164 = vrcp.pop %v2150
    %v2165 = vmul.f32 1.0, %v2164
    %v2166 = vrcp.pop %v2151
    %v2167 = vmul.f32 1.0, %v2166
    %v2168 = vrcp.pop %v2152
    %v2169 = vmul.f32 1.0, %v2168
    %v2170 = vrcp.pop %v2153
    %v2171 = vmul.f32 1.0, %v2170
    %v2172 = vrcp.pop %v2154
    %v2173 = vmul.f32 1.0, %v2172
    %v2174 = vrcp.pop %v2155
    %v2175 = vmul.f32 1.0, %v2174
    %v2176 = vmul.f32 %v2157, 1.0614054
    %v2177 = vmul.f32 %v2159, 1.0614054
    %v2178 = vmul.f32 %v2161, 1.0614054
    %v2179 = vmul.f32 %v2163, 1.0614054
    %v2180 = vmul.f32 %v2165, 1.0614054
    %v2181 = vmul.f32 %v2167, 1.0614054
    %v2182 = vmul.f32 %v2169, 1.0614054
    %v2183 = vmul.f32 %v2171, 1.0614054
    %v2184 = vmul.f32 %v2173, 1.0614054
    %v2185 = vmul.f32 %v2175, 1.0614054
    %v2186 = vadd.f32 %v2176, -1.4531521
    %v2187 = vadd.f32 %v2177, -1.4531521
    %v2188 = vadd.f32 %v2178, -1.4531521
    %v2189 = vadd.f32 %v2179, -1.4531521
    %v2190 = vadd.f32 %v2180, -1.4531521
    %v2191 = vadd.f32 %v2181, -1.4531521
    %v2192 = vadd.f32 %v2182, -1.4531521
    %v2193 = vadd.f32 %v2183, -1.4531521
    %v2194 = vadd.f32 %v2184, -1.4531521
    %v2195 = vadd.f32 %v2185, -1.4531521
    %v2196 = vmul.f32 %v2186, %v2157
    %v2197 = vmul.f32 %v2187, %v2159
    %v2198 = vmul.f32 %v2188, %v2161
    %v2199 = vmul.f32 %v2189, %v2163
    %v2200 = vmul.f32 %v2190, %v2165
    %v2201 = vmul.f32 %v2191, %v2167
    %v2202 = vmul.f32 %v2192, %v2169
    %v2203 = vmul.f32 %v2193, %v2171
    %v2204 = vmul.f32 %v2194, %v2173
    %v2205 = vmul.f32 %v2195, %v2175
    %v2206 = vadd.f32 %v2196, 1.4214138
    %v2207 = vadd.f32 %v2197, 1.4214138
    %v2208 = vadd.f32 %v2198, 1.4214138
    %v2209 = vadd.f32 %v2199, 1.4214138
    %v2210 = vadd.f32 %v2200, 1.4214138
    %v2211 = vadd.f32 %v2201, 1.4214138
    %v2212 = vadd.f32 %v2202, 1.4214138
    %v2213 = vadd.f32 %v2203, 1.4214138
    %v2214 = vadd.f32 %v2204, 1.4214138
    %v2215 = vadd.f32 %v2205, 1.4214138
    %v2216 = vmul.f32 %v2206, %v2157
    %v2217 = vmul.f32 %v2207, %v2159
    %v2218 = vmul.f32 %v2208, %v2161
    %v2219 = vmul.f32 %v2209, %v2163
    %v2220 = vmul.f32 %v2210, %v2165
    %v2221 = vmul.f32 %v2211, %v2167
    %v2222 = vmul.f32 %v2212, %v2169
    %v2223 = vmul.f32 %v2213, %v2171
    %v2224 = vmul.f32 %v2214, %v2173
    %v2225 = vmul.f32 %v2215, %v2175
    %v2226 = vadd.f32 %v2216, -0.28449672
    %v2227 = vadd.f32 %v2217, -0.28449672
    %v2228 = vadd.f32 %v2218, -0.28449672
    %v2229 = vadd.f32 %v2219, -0.28449672
    %v2230 = vadd.f32 %v2220, -0.28449672
    %v2231 = vadd.f32 %v2221, -0.28449672
    %v2232 = vadd.f32 %v2222, -0.28449672
    %v2233 = vadd.f32 %v2223, -0.28449672
    %v2234 = vadd.f32 %v2224, -0.28449672
    %v2235 = vadd.f32 %v2225, -0.28449672
    %v2236 = vmul.f32 %v2226, %v2157
    %v2237 = vmul.f32 %v2227, %v2159
    %v2238 = vmul.f32 %v2228, %v2161
    %v2239 = vmul.f32 %v2229, %v2163
    %v2240 = vmul.f32 %v2230, %v2165
    %v2241 = vmul.f32 %v2231, %v2167
    %v2242 = vmul.f32 %v2232, %v2169
    %v2243 = vmul.f32 %v2233, %v2171
    %v2244 = vmul.f32 %v2234, %v2173
    %v2245 = vmul.f32 %v2235, %v2175
    %v2246 = vadd.f32 %v2236, 0.2548296
    %v2247 = vadd.f32 %v2237, 0.2548296
    %v2248 = vadd.f32 %v2238, 0.2548296
    %v2249 = vadd.f32 %v2239, 0.2548296
    %v2250 = vadd.f32 %v2240, 0.2548296
    %v2251 = vadd.f32 %v2241, 0.2548296
    %v2252 = vadd.f32 %v2242, 0.2548296
    %v2253 = vadd.f32 %v2243, 0.2548296
    %v2254 = vadd.f32 %v2244, 0.2548296
    %v2255 = vadd.f32 %v2245, 0.2548296
    %v2256 = vmul.f32 %v2246, %v2157
    %v2257 = vmul.f32 %v2247, %v2159
    %v2258 = vmul.f32 %v2248, %v2161
    %v2259 = vmul.f32 %v2249, %v2163
    %v2260 = vmul.f32 %v2250, %v2165
    %v2261 = vmul.f32 %v2251, %v2167
    %v2262 = vmul.f32 %v2252, %v2169
    %v2263 = vmul.f32 %v2253, %v2171
    %v2264 = vmul.f32 %v2254, %v2173
    %v2265 = vmul.f32 %v2255, %v2175
    %v2266 = vsub.f32 0.0, %v2126
    %v2267 = vsub.f32 0.0, %v2127
    %v2268 = vsub.f32 0.0, %v2128
    %v2269 = vsub.f32 0.0, %v2129
    %v2270 = vsub.f32 0.0, %v2130
    %v2271 = vsub.f32 0.0, %v2131
    %v2272 = vsub.f32 0.0, %v2132
    %v2273 = vsub.f32 0.0, %v2133
    %v2274 = vsub.f32 0.0, %v2134
    %v2275 = vsub.f32 0.0, %v2135
    %v2276 = vmul.f32 %v2266, %v2126
    %v2277 = vmul.f32 %v2267, %v2127
    %v2278 = vmul.f32 %v2268, %v2128
    %v2279 = vmul.f32 %v2269, %v2129
    %v2280 = vmul.f32 %v2270, %v2130
    %v2281 = vmul.f32 %v2271, %v2131
    %v2282 = vmul.f32 %v2272, %v2132
    %v2283 = vmul.f32 %v2273, %v2133
    %v2284 = vmul.f32 %v2274, %v2134
    %v2285 = vmul.f32 %v2275, %v2135
    %v2286 = vmul.f32 %v2276, 1.442695
    %v2287 = vpow.pop %v2286
    %v2288 = vmul.f32 %v2277, 1.442695
    %v2289 = vpow.pop %v2288
    %v2290 = vmul.f32 %v2278, 1.442695
    %v2291 = vpow.pop %v2290
    %v2292 = vmul.f32 %v2279, 1.442695
    %v2293 = vpow.pop %v2292
    %v2294 = vmul.f32 %v2280, 1.442695
    %v2295 = vpow.pop %v2294
    %v2296 = vmul.f32 %v2281, 1.442695
    %v2297 = vpow.pop %v2296
    %v2298 = vmul.f32 %v2282, 1.442695
    %v2299 = vpow.pop %v2298
    %v2300 = vmul.f32 %v2283, 1.442695
    %v2301 = vpow.pop %v2300
    %v2302 = vmul.f32 %v2284, 1.442695
    %v2303 = vpow.pop %v2302
    %v2304 = vmul.f32 %v2285, 1.442695
    %v2305 = vpow.pop %v2304
    %v2306 = vmul.f32 %v2256, %v2287
    %v2307 = vmul.f32 %v2257, %v2289
    %v2308 = vmul.f32 %v2258, %v2291
    %v2309 = vmul.f32 %v2259, %v2293
    %v2310 = vmul.f32 %v2260, %v2295
    %v2311 = vmul.f32 %v2261, %v2297
    %v2312 = vmul.f32 %v2262, %v2299
    %v2313 = vmul.f32 %v2263, %v2301
    %v2314 = vmul.f32 %v2264, %v2303
    %v2315 = vmul.f32 %v2265, %v2305
    %v2316 = vsub.f32 1.0, %v2306
    %v2317 = vsub.f32 1.0, %v2307
    %v2318 = vsub.f32 1.0, %v2308
    %v2319 = vsub.f32 1.0, %v2309
    %v2320 = vsub.f32 1.0, %v2310
    %v2321 = vsub.f32 1.0, %v2311
    %v2322 = vsub.f32 1.0, %v2312
    %v2323 = vsub.f32 1.0, %v2313
    %v2324 = vsub.f32 1.0, %v2314
    %v2325 = vsub.f32 1.0, %v2315
    %v2326 = vmul.f32 %v2116, %v2316
    %v2327 = vmul.f32 %v2117, %v2317
    %v2328 = vmul.f32 %v2118, %v2318
    %v2329 = vmul.f32 %v2119, %v2319
    %v2330 = vmul.f32 %v2120, %v2320
    %v2331 = vmul.f32 %v2121, %v2321
    %v2332 = vmul.f32 %v2122, %v2322
    %v2333 = vmul.f32 %v2123, %v2323
    %v2334 = vmul.f32 %v2124, %v2324
    %v2335 = vmul.f32 %v2125, %v2325
    %v2336 = vadd.f32 %v2326, 1.0
    %v2337 = vadd.f32 %v2327, 1.0
    %v2338 = vadd.f32 %v2328, 1.0
    %v2339 = vadd.f32 %v2329, 1.0
    %v2340 = vadd.f32 %v2330, 1.0
    %v2341 = vadd.f32 %v2331, 1.0
    %v2342 = vadd.f32 %v2332, 1.0
    %v2343 = vadd.f32 %v2333, 1.0
    %v2344 = vadd.f32 %v2334, 1.0
    %v2345 = vadd.f32 %v2335, 1.0
    %v2346 = vmul.f32 %v2086, %v2336
    %v2347 = vmul.f32 %v2087, %v2337
    %v2348 = vmul.f32 %v2088, %v2338
    %v2349 = vmul.f32 %v2089, %v2339
    %v2350 = vmul.f32 %v2090, %v2340
    %v2351 = vmul.f32 %v2091, %v2341
    %v2352 = vmul.f32 %v2092, %v2342
    %v2353 = vmul.f32 %v2093, %v2343
    %v2354 = vmul.f32 %v2094, %v2344
    %v2355 = vmul.f32 %v2095, %v2345
    %v2356 = vld [vmem:[%s7] sm:$0xff]
    %v2357 = vld [vmem:[%s7 + $0x8] sm:$0x3]
    %v2360 = vlaneseq
    %v2361 = vshrl.u32 %v2360, 7
    %v2362 = vsub.s32 0, %v2361
    %v2363 = vrot.slane %v2356, %v2362
    %v2364 = vlaneseq
    %v2365 = vshrl.u32 %v2364, 7
    %v2366 = vsub.s32 1, %v2365
    %v2367 = vrot.slane %v2356, %v2366
    %v2368 = vlaneseq
    %v2369 = vshrl.u32 %v2368, 7
    %v2370 = vsub.s32 2, %v2369
    %v2371 = vrot.slane %v2356, %v2370
    %v2372 = vlaneseq
    %v2373 = vshrl.u32 %v2372, 7
    %v2374 = vsub.s32 3, %v2373
    %v2375 = vrot.slane %v2356, %v2374
    %v2376 = vlaneseq
    %v2377 = vshrl.u32 %v2376, 7
    %v2378 = vsub.s32 4, %v2377
    %v2379 = vrot.slane %v2356, %v2378
    %v2380 = vlaneseq
    %v2381 = vshrl.u32 %v2380, 7
    %v2382 = vsub.s32 5, %v2381
    %v2383 = vrot.slane %v2356, %v2382
    %v2384 = vlaneseq
    %v2385 = vshrl.u32 %v2384, 7
    %v2386 = vsub.s32 6, %v2385
    %v2387 = vrot.slane %v2356, %v2386
    %v2388 = vlaneseq
    %v2389 = vshrl.u32 %v2388, 7
    %v2390 = vsub.s32 7, %v2389
    %v2391 = vrot.slane %v2356, %v2390
    %v2392 = vlaneseq
    %v2393 = vshrl.u32 %v2392, 7
    %v2394 = vsub.s32 0, %v2393
    %v2395 = vrot.slane %v2357, %v2394
    %v2396 = vlaneseq
    %v2397 = vshrl.u32 %v2396, 7
    %v2398 = vsub.s32 1, %v2397
    %v2399 = vrot.slane %v2357, %v2398
    %v2410 = vmul.f32 %v2346, %v2363
    %v2411 = vmul.f32 %v2347, %v2367
    %v2412 = vmul.f32 %v2348, %v2371
    %v2413 = vmul.f32 %v2349, %v2375
    %v2414 = vmul.f32 %v2350, %v2379
    %v2415 = vmul.f32 %v2351, %v2383
    %v2416 = vmul.f32 %v2352, %v2387
    %v2417 = vmul.f32 %v2353, %v2391
    %v2418 = vmul.f32 %v2354, %v2395
    %v2419 = vmul.f32 %v2355, %v2399
    %2420 = vst [vmem:[#allocation3] sm:$0xff] 0.0
    %2421 = vst [vmem:[#allocation3 + $0x30] sm:$0xff] 0.0
    %2422 = vst [vmem:[#allocation3 + $0x8] sm:$0xff] %v2410
    %2423 = vst [vmem:[#allocation3 + $0x10] sm:$0xff] %v2411
    %2424 = vst [vmem:[#allocation3 + $0x18] sm:$0xff] %v2412
    %2425 = vst [vmem:[#allocation3 + $0x20] sm:$0xff] %v2413
    %2426 = vst [vmem:[#allocation3 + $0x28] sm:$0xff] %v2414
    %2427 = vst [vmem:[#allocation3 + $0x38] sm:$0xff] 0.0
    %2428 = vst [vmem:[#allocation3 + $0x68] sm:$0xff] 0.0
    %2429 = vst [vmem:[#allocation3 + $0x40] sm:$0xff] %v2415
    %2430 = vst [vmem:[#allocation3 + $0x48] sm:$0xff] %v2416
    %2431 = vst [vmem:[#allocation3 + $0x50] sm:$0xff] %v2417
    %2432 = vst [vmem:[#allocation3 + $0x58] sm:$0xff] %v2418
    %2433 = vst [vmem:[#allocation3 + $0x60] sm:$0xff] %v2419
    %v2434 = vld [vmem:[#allocation3] sm:$0xff]
    %v2435 = vld [vmem:[#allocation3 + $0x8] sm:$0xff]
    %v2436 = vld [vmem:[#allocation3 + $0x10] sm:$0xff]
    %v2437 = vld [vmem:[#allocation3 + $0x18] sm:$0xff]
    %v2438 = vld [vmem:[#allocation3 + $0x20] sm:$0xff]
    %v2439 = vld [vmem:[#allocation3 + $0x28] sm:$0xff]
    %v2440 = vld [vmem:[#allocation3 + $0x30] sm:$0xff]
    %v2441 = vld [vmem:[#allocation3 + $0x38] sm:$0xff]
    %v2442 = vld [vmem:[#allocation3 + $0x40] sm:$0xff]
    %v2443 = vld [vmem:[#allocation3 + $0x48] sm:$0xff]
    %v2444 = vld [vmem:[#allocation3 + $0x50] sm:$0xff]
    %v2445 = vld [vmem:[#allocation3 + $0x58] sm:$0xff]
    %v2446 = vld [vmem:[#allocation3 + $0x60] sm:$0xff]
    %v2447 = vld [vmem:[#allocation3 + $0x68] sm:$0xff]
    %2454 = vrot.lane.b32.xlu0 %v2434, 111
    %v2455 = vpop.permute.xlu0 %2454
    %2456 = vrot.lane.b32.xlu0 %v2435, 111
    %v2457 = vpop.permute.xlu0 %2456
    %2458 = vrot.lane.b32.xlu0 %v2436, 111
    %v2459 = vpop.permute.xlu0 %2458
    %2460 = vrot.lane.b32.xlu0 %v2437, 111
    %v2461 = vpop.permute.xlu0 %2460
    %2462 = vrot.lane.b32.xlu0 %v2438, 111
    %v2463 = vpop.permute.xlu0 %2462
    %2464 = vrot.lane.b32.xlu0 %v2439, 111
    %v2465 = vpop.permute.xlu0 %2464
    %v2466 = vsel %vm81, %v2455, %v2457
    %v2467 = vsel %vm81, %v2457, %v2459
    %v2468 = vsel %vm81, %v2459, %v2461
    %v2469 = vsel %vm81, %v2461, %v2463
    %v2470 = vsel %vm81, %v2463, %v2465
    %2476 = vst [vmem:[#allocation4] sm:$0xff] %v2466
    %2477 = vst [vmem:[#allocation4 + $0x8] sm:$0xff] %v2467
    %2478 = vst [vmem:[#allocation4 + $0x10] sm:$0xff] %v2468
    %2479 = vst [vmem:[#allocation4 + $0x18] sm:$0xff] %v2469
    %2480 = vst [vmem:[#allocation4 + $0x20] sm:$0xff] %v2470
    %2481 = vrot.lane.b32.xlu0 %v2434, 110
    %v2482 = vpop.permute.xlu0 %2481
    %2483 = vrot.lane.b32.xlu0 %v2435, 110
    %v2484 = vpop.permute.xlu0 %2483
    %2485 = vrot.lane.b32.xlu0 %v2436, 110
    %v2486 = vpop.permute.xlu0 %2485
    %2487 = vrot.lane.b32.xlu0 %v2437, 110
    %v2488 = vpop.permute.xlu0 %2487
    %2489 = vrot.lane.b32.xlu0 %v2438, 110
    %v2490 = vpop.permute.xlu0 %2489
    %2491 = vrot.lane.b32.xlu0 %v2439, 110
    %v2492 = vpop.permute.xlu0 %2491
    %v2493 = vsel %vm112, %v2482, %v2484
    %v2494 = vsel %vm112, %v2484, %v2486
    %v2495 = vsel %vm112, %v2486, %v2488
    %v2496 = vsel %vm112, %v2488, %v2490
    %v2497 = vsel %vm112, %v2490, %v2492
    %2503 = vst [vmem:[#allocation4 + $0x50] sm:$0xff] %v2493
    %2504 = vst [vmem:[#allocation4 + $0x58] sm:$0xff] %v2494
    %2505 = vst [vmem:[#allocation4 + $0x60] sm:$0xff] %v2495
    %2506 = vst [vmem:[#allocation4 + $0x68] sm:$0xff] %v2496
    %2507 = vst [vmem:[#allocation4 + $0x70] sm:$0xff] %v2497
    %2508 = vrot.lane.b32.xlu0 %v2434, 109
    %v2509 = vpop.permute.xlu0 %2508
    %2510 = vrot.lane.b32.xlu0 %v2435, 109
    %v2511 = vpop.permute.xlu0 %2510
    %2512 = vrot.lane.b32.xlu0 %v2436, 109
    %v2513 = vpop.permute.xlu0 %2512
    %2514 = vrot.lane.b32.xlu0 %v2437, 109
    %v2515 = vpop.permute.xlu0 %2514
    %2516 = vrot.lane.b32.xlu0 %v2438, 109
    %v2517 = vpop.permute.xlu0 %2516
    %2518 = vrot.lane.b32.xlu0 %v2439, 109
    %v2519 = vpop.permute.xlu0 %2518
    %v2520 = vsel %vm140, %v2509, %v2511
    %v2521 = vsel %vm140, %v2511, %v2513
    %v2522 = vsel %vm140, %v2513, %v2515
    %v2523 = vsel %vm140, %v2515, %v2517
    %v2524 = vsel %vm140, %v2517, %v2519
    %2530 = vst [vmem:[#allocation4 + $0xa0] sm:$0xff] %v2520
    %2531 = vst [vmem:[#allocation4 + $0xa8] sm:$0xff] %v2521
    %2532 = vst [vmem:[#allocation4 + $0xb0] sm:$0xff] %v2522
    %2533 = vst [vmem:[#allocation4 + $0xb8] sm:$0xff] %v2523
    %2534 = vst [vmem:[#allocation4 + $0xc0] sm:$0xff] %v2524
    %2535 = vrot.lane.b32.xlu0 %v2434, 101
    %v2536 = vpop.permute.xlu0 %2535
    %2537 = vrot.lane.b32.xlu0 %v2435, 101
    %v2538 = vpop.permute.xlu0 %2537
    %2539 = vrot.lane.b32.xlu0 %v2436, 101
    %v2540 = vpop.permute.xlu0 %2539
    %2541 = vrot.lane.b32.xlu0 %v2437, 101
    %v2542 = vpop.permute.xlu0 %2541
    %2543 = vrot.lane.b32.xlu0 %v2438, 101
    %v2544 = vpop.permute.xlu0 %2543
    %2545 = vrot.lane.b32.xlu0 %v2439, 101
    %v2546 = vpop.permute.xlu0 %2545
    %v2547 = vsel %vm168, %v2536, %v2538
    %v2548 = vsel %vm168, %v2538, %v2540
    %v2549 = vsel %vm168, %v2540, %v2542
    %v2550 = vsel %vm168, %v2542, %v2544
    %v2551 = vsel %vm168, %v2544, %v2546
    %2557 = vst [vmem:[#allocation4 + $0xf0] sm:$0xff] %v2547
    %2558 = vst [vmem:[#allocation4 + $0xf8] sm:$0xff] %v2548
    %2559 = vst [vmem:[#allocation4 + $0x100] sm:$0xff] %v2549
    %2560 = vst [vmem:[#allocation4 + $0x108] sm:$0xff] %v2550
    %2561 = vst [vmem:[#allocation4 + $0x110] sm:$0xff] %v2551
    %2562 = vrot.lane.b32.xlu0 %v2434, 100
    %v2563 = vpop.permute.xlu0 %2562
    %2564 = vrot.lane.b32.xlu0 %v2435, 100
    %v2565 = vpop.permute.xlu0 %2564
    %2566 = vrot.lane.b32.xlu0 %v2436, 100
    %v2567 = vpop.permute.xlu0 %2566
    %2568 = vrot.lane.b32.xlu0 %v2437, 100
    %v2569 = vpop.permute.xlu0 %2568
    %2570 = vrot.lane.b32.xlu0 %v2438, 100
    %v2571 = vpop.permute.xlu0 %2570
    %2572 = vrot.lane.b32.xlu0 %v2439, 100
    %v2573 = vpop.permute.xlu0 %2572
    %v2574 = vsel %vm196, %v2563, %v2565
    %v2575 = vsel %vm196, %v2565, %v2567
    %v2576 = vsel %vm196, %v2567, %v2569
    %v2577 = vsel %vm196, %v2569, %v2571
    %v2578 = vsel %vm196, %v2571, %v2573
    %2584 = vst [vmem:[#allocation4 + $0x140] sm:$0xff] %v2574
    %2585 = vst [vmem:[#allocation4 + $0x148] sm:$0xff] %v2575
    %2586 = vst [vmem:[#allocation4 + $0x150] sm:$0xff] %v2576
    %2587 = vst [vmem:[#allocation4 + $0x158] sm:$0xff] %v2577
    %2588 = vst [vmem:[#allocation4 + $0x160] sm:$0xff] %v2578
    %2589 = vrot.lane.b32.xlu0 %v2434, 99
    %v2590 = vpop.permute.xlu0 %2589
    %2591 = vrot.lane.b32.xlu0 %v2435, 99
    %v2592 = vpop.permute.xlu0 %2591
    %2593 = vrot.lane.b32.xlu0 %v2436, 99
    %v2594 = vpop.permute.xlu0 %2593
    %2595 = vrot.lane.b32.xlu0 %v2437, 99
    %v2596 = vpop.permute.xlu0 %2595
    %2597 = vrot.lane.b32.xlu0 %v2438, 99
    %v2598 = vpop.permute.xlu0 %2597
    %2599 = vrot.lane.b32.xlu0 %v2439, 99
    %v2600 = vpop.permute.xlu0 %2599
    %v2601 = vsel %vm224, %v2590, %v2592
    %v2602 = vsel %vm224, %v2592, %v2594
    %v2603 = vsel %vm224, %v2594, %v2596
    %v2604 = vsel %vm224, %v2596, %v2598
    %v2605 = vsel %vm224, %v2598, %v2600
    %2611 = vst [vmem:[#allocation4 + $0x190] sm:$0xff] %v2601
    %2612 = vst [vmem:[#allocation4 + $0x198] sm:$0xff] %v2602
    %2613 = vst [vmem:[#allocation4 + $0x1a0] sm:$0xff] %v2603
    %2614 = vst [vmem:[#allocation4 + $0x1a8] sm:$0xff] %v2604
    %2615 = vst [vmem:[#allocation4 + $0x1b0] sm:$0xff] %v2605
    %2616 = vrot.lane.b32.xlu0 %v2434, 91
    %v2617 = vpop.permute.xlu0 %2616
    %2618 = vrot.lane.b32.xlu0 %v2435, 91
    %v2619 = vpop.permute.xlu0 %2618
    %2620 = vrot.lane.b32.xlu0 %v2436, 91
    %v2621 = vpop.permute.xlu0 %2620
    %2622 = vrot.lane.b32.xlu0 %v2437, 91
    %v2623 = vpop.permute.xlu0 %2622
    %2624 = vrot.lane.b32.xlu0 %v2438, 91
    %v2625 = vpop.permute.xlu0 %2624
    %2626 = vrot.lane.b32.xlu0 %v2439, 91
    %v2627 = vpop.permute.xlu0 %2626
    %v2628 = vsel %vm252, %v2617, %v2619
    %v2629 = vsel %vm252, %v2619, %v2621
    %v2630 = vsel %vm252, %v2621, %v2623
    %v2631 = vsel %vm252, %v2623, %v2625
    %v2632 = vsel %vm252, %v2625, %v2627
    %2638 = vst [vmem:[#allocation4 + $0x1e0] sm:$0xff] %v2628
    %2639 = vst [vmem:[#allocation4 + $0x1e8] sm:$0xff] %v2629
    %2640 = vst [vmem:[#allocation4 + $0x1f0] sm:$0xff] %v2630
    %2641 = vst [vmem:[#allocation4 + $0x1f8] sm:$0xff] %v2631
    %2642 = vst [vmem:[#allocation4 + $0x200] sm:$0xff] %v2632
    %2643 = vrot.lane.b32.xlu0 %v2434, 90
    %v2644 = vpop.permute.xlu0 %2643
    %2645 = vrot.lane.b32.xlu0 %v2435, 90
    %v2646 = vpop.permute.xlu0 %2645
    %2647 = vrot.lane.b32.xlu0 %v2436, 90
    %v2648 = vpop.permute.xlu0 %2647
    %2649 = vrot.lane.b32.xlu0 %v2437, 90
    %v2650 = vpop.permute.xlu0 %2649
    %2651 = vrot.lane.b32.xlu0 %v2438, 90
    %v2652 = vpop.permute.xlu0 %2651
    %2653 = vrot.lane.b32.xlu0 %v2439, 90
    %v2654 = vpop.permute.xlu0 %2653
    %v2655 = vsel %vm280, %v2644, %v2646
    %v2656 = vsel %vm280, %v2646, %v2648
    %v2657 = vsel %vm280, %v2648, %v2650
    %v2658 = vsel %vm280, %v2650, %v2652
    %v2659 = vsel %vm280, %v2652, %v2654
    %2665 = vst [vmem:[#allocation4 + $0x230] sm:$0xff] %v2655
    %2666 = vst [vmem:[#allocation4 + $0x238] sm:$0xff] %v2656
    %2667 = vst [vmem:[#allocation4 + $0x240] sm:$0xff] %v2657
    %2668 = vst [vmem:[#allocation4 + $0x248] sm:$0xff] %v2658
    %2669 = vst [vmem:[#allocation4 + $0x250] sm:$0xff] %v2659
    %2670 = vrot.lane.b32.xlu0 %v2434, 89
    %v2671 = vpop.permute.xlu0 %2670
    %2672 = vrot.lane.b32.xlu0 %v2435, 89
    %v2673 = vpop.permute.xlu0 %2672
    %2674 = vrot.lane.b32.xlu0 %v2436, 89
    %v2675 = vpop.permute.xlu0 %2674
    %2676 = vrot.lane.b32.xlu0 %v2437, 89
    %v2677 = vpop.permute.xlu0 %2676
    %2678 = vrot.lane.b32.xlu0 %v2438, 89
    %v2679 = vpop.permute.xlu0 %2678
    %2680 = vrot.lane.b32.xlu0 %v2439, 89
    %v2681 = vpop.permute.xlu0 %2680
    %v2682 = vsel %vm308, %v2671, %v2673
    %v2683 = vsel %vm308, %v2673, %v2675
    %v2684 = vsel %vm308, %v2675, %v2677
    %v2685 = vsel %vm308, %v2677, %v2679
    %v2686 = vsel %vm308, %v2679, %v2681
    %2692 = vst [vmem:[#allocation4 + $0x280] sm:$0xff] %v2682
    %2693 = vst [vmem:[#allocation4 + $0x288] sm:$0xff] %v2683
    %2694 = vst [vmem:[#allocation4 + $0x290] sm:$0xff] %v2684
    %2695 = vst [vmem:[#allocation4 + $0x298] sm:$0xff] %v2685
    %2696 = vst [vmem:[#allocation4 + $0x2a0] sm:$0xff] %v2686
    %2697 = vrot.lane.b32.xlu0 %v2434, 11
    %v2698 = vpop.permute.xlu0 %2697
    %2699 = vrot.lane.b32.xlu0 %v2435, 11
    %v2700 = vpop.permute.xlu0 %2699
    %2701 = vrot.lane.b32.xlu0 %v2436, 11
    %v2702 = vpop.permute.xlu0 %2701
    %2703 = vrot.lane.b32.xlu0 %v2437, 11
    %v2704 = vpop.permute.xlu0 %2703
    %2705 = vrot.lane.b32.xlu0 %v2438, 11
    %v2706 = vpop.permute.xlu0 %2705
    %2707 = vrot.lane.b32.xlu0 %v2439, 11
    %v2708 = vpop.permute.xlu0 %2707
    %v2709 = vsel %vm336, %v2698, %v2700
    %v2710 = vsel %vm336, %v2700, %v2702
    %v2711 = vsel %vm336, %v2702, %v2704
    %v2712 = vsel %vm336, %v2704, %v2706
    %v2713 = vsel %vm336, %v2706, %v2708
    %2719 = vst [vmem:[#allocation4 + $0x2d0] sm:$0xff] %v2709
    %2720 = vst [vmem:[#allocation4 + $0x2d8] sm:$0xff] %v2710
    %2721 = vst [vmem:[#allocation4 + $0x2e0] sm:$0xff] %v2711
    %2722 = vst [vmem:[#allocation4 + $0x2e8] sm:$0xff] %v2712
    %2723 = vst [vmem:[#allocation4 + $0x2f0] sm:$0xff] %v2713
    %2724 = vrot.lane.b32.xlu0 %v2434, 10
    %v2725 = vpop.permute.xlu0 %2724
    %2726 = vrot.lane.b32.xlu0 %v2435, 10
    %v2727 = vpop.permute.xlu0 %2726
    %2728 = vrot.lane.b32.xlu0 %v2436, 10
    %v2729 = vpop.permute.xlu0 %2728
    %2730 = vrot.lane.b32.xlu0 %v2437, 10
    %v2731 = vpop.permute.xlu0 %2730
    %2732 = vrot.lane.b32.xlu0 %v2438, 10
    %v2733 = vpop.permute.xlu0 %2732
    %2734 = vrot.lane.b32.xlu0 %v2439, 10
    %v2735 = vpop.permute.xlu0 %2734
    %v2736 = vsel %vm364, %v2725, %v2727
    %v2737 = vsel %vm364, %v2727, %v2729
    %v2738 = vsel %vm364, %v2729, %v2731
    %v2739 = vsel %vm364, %v2731, %v2733
    %v2740 = vsel %vm364, %v2733, %v2735
    %2746 = vst [vmem:[#allocation4 + $0x320] sm:$0xff] %v2736
    %2747 = vst [vmem:[#allocation4 + $0x328] sm:$0xff] %v2737
    %2748 = vst [vmem:[#allocation4 + $0x330] sm:$0xff] %v2738
    %2749 = vst [vmem:[#allocation4 + $0x338] sm:$0xff] %v2739
    %2750 = vst [vmem:[#allocation4 + $0x340] sm:$0xff] %v2740
    %2751 = vrot.lane.b32.xlu0 %v2434, 9
    %v2752 = vpop.permute.xlu0 %2751
    %2753 = vrot.lane.b32.xlu0 %v2435, 9
    %v2754 = vpop.permute.xlu0 %2753
    %2755 = vrot.lane.b32.xlu0 %v2436, 9
    %v2756 = vpop.permute.xlu0 %2755
    %2757 = vrot.lane.b32.xlu0 %v2437, 9
    %v2758 = vpop.permute.xlu0 %2757
    %2759 = vrot.lane.b32.xlu0 %v2438, 9
    %v2760 = vpop.permute.xlu0 %2759
    %2761 = vrot.lane.b32.xlu0 %v2439, 9
    %v2762 = vpop.permute.xlu0 %2761
    %v2763 = vsel %vm392, %v2752, %v2754
    %v2764 = vsel %vm392, %v2754, %v2756
    %v2765 = vsel %vm392, %v2756, %v2758
    %v2766 = vsel %vm392, %v2758, %v2760
    %v2767 = vsel %vm392, %v2760, %v2762
    %2773 = vst [vmem:[#allocation4 + $0x370] sm:$0xff] %v2763
    %2774 = vst [vmem:[#allocation4 + $0x378] sm:$0xff] %v2764
    %2775 = vst [vmem:[#allocation4 + $0x380] sm:$0xff] %v2765
    %2776 = vst [vmem:[#allocation4 + $0x388] sm:$0xff] %v2766
    %2777 = vst [vmem:[#allocation4 + $0x390] sm:$0xff] %v2767
    %2778 = vrot.lane.b32.xlu0 %v2434, 1
    %v2779 = vpop.permute.xlu0 %2778
    %2780 = vrot.lane.b32.xlu0 %v2435, 1
    %v2781 = vpop.permute.xlu0 %2780
    %2782 = vrot.lane.b32.xlu0 %v2436, 1
    %v2783 = vpop.permute.xlu0 %2782
    %2784 = vrot.lane.b32.xlu0 %v2437, 1
    %v2785 = vpop.permute.xlu0 %2784
    %2786 = vrot.lane.b32.xlu0 %v2438, 1
    %v2787 = vpop.permute.xlu0 %2786
    %2788 = vrot.lane.b32.xlu0 %v2439, 1
    %v2789 = vpop.permute.xlu0 %2788
    %v2790 = vsel %vm420, %v2779, %v2781
    %v2791 = vsel %vm420, %v2781, %v2783
    %v2792 = vsel %vm420, %v2783, %v2785
    %v2793 = vsel %vm420, %v2785, %v2787
    %v2794 = vsel %vm420, %v2787, %v2789
    %2800 = vst [vmem:[#allocation4 + $0x3c0] sm:$0xff] %v2790
    %2801 = vst [vmem:[#allocation4 + $0x3c8] sm:$0xff] %v2791
    %2802 = vst [vmem:[#allocation4 + $0x3d0] sm:$0xff] %v2792
    %2803 = vst [vmem:[#allocation4 + $0x3d8] sm:$0xff] %v2793
    %2804 = vst [vmem:[#allocation4 + $0x3e0] sm:$0xff] %v2794
    %2805 = vst [vmem:[#allocation4 + $0x410] sm:$0xff] %v2435
    %2806 = vst [vmem:[#allocation4 + $0x418] sm:$0xff] %v2436
    %2807 = vst [vmem:[#allocation4 + $0x420] sm:$0xff] %v2437
    %2808 = vst [vmem:[#allocation4 + $0x428] sm:$0xff] %v2438
    %2809 = vst [vmem:[#allocation4 + $0x430] sm:$0xff] %v2439
    %2811 = vrot.lane.b32.xlu0 %v2435, 127
    %v2812 = vpop.permute.xlu0 %2811
    %2813 = vrot.lane.b32.xlu0 %v2436, 127
    %v2814 = vpop.permute.xlu0 %2813
    %2815 = vrot.lane.b32.xlu0 %v2437, 127
    %v2816 = vpop.permute.xlu0 %2815
    %2817 = vrot.lane.b32.xlu0 %v2438, 127
    %v2818 = vpop.permute.xlu0 %2817
    %2819 = vrot.lane.b32.xlu0 %v2439, 127
    %v2820 = vpop.permute.xlu0 %2819
    %2821 = vrot.lane.b32.xlu0 %v2440, 127
    %v2822 = vpop.permute.xlu0 %2821
    %v2823 = vsel %vm456, %v2812, %v2814
    %v2824 = vsel %vm456, %v2814, %v2816
    %v2825 = vsel %vm456, %v2816, %v2818
    %v2826 = vsel %vm456, %v2818, %v2820
    %v2827 = vsel %vm456, %v2820, %v2822
    %2833 = vst [vmem:[#allocation4 + $0x460] sm:$0xff] %v2823
    %2834 = vst [vmem:[#allocation4 + $0x468] sm:$0xff] %v2824
    %2835 = vst [vmem:[#allocation4 + $0x470] sm:$0xff] %v2825
    %2836 = vst [vmem:[#allocation4 + $0x478] sm:$0xff] %v2826
    %2837 = vst [vmem:[#allocation4 + $0x480] sm:$0xff] %v2827
    %2838 = vrot.lane.b32.xlu0 %v2435, 119
    %v2839 = vpop.permute.xlu0 %2838
    %2840 = vrot.lane.b32.xlu0 %v2436, 119
    %v2841 = vpop.permute.xlu0 %2840
    %2842 = vrot.lane.b32.xlu0 %v2437, 119
    %v2843 = vpop.permute.xlu0 %2842
    %2844 = vrot.lane.b32.xlu0 %v2438, 119
    %v2845 = vpop.permute.xlu0 %2844
    %2846 = vrot.lane.b32.xlu0 %v2439, 119
    %v2847 = vpop.permute.xlu0 %2846
    %2848 = vrot.lane.b32.xlu0 %v2440, 119
    %v2849 = vpop.permute.xlu0 %2848
    %v2850 = vsel %vm485, %v2839, %v2841
    %v2851 = vsel %vm485, %v2841, %v2843
    %v2852 = vsel %vm485, %v2843, %v2845
    %v2853 = vsel %vm485, %v2845, %v2847
    %v2854 = vsel %vm485, %v2847, %v2849
    %2860 = vst [vmem:[#allocation4 + $0x4b0] sm:$0xff] %v2850
    %2861 = vst [vmem:[#allocation4 + $0x4b8] sm:$0xff] %v2851
    %2862 = vst [vmem:[#allocation4 + $0x4c0] sm:$0xff] %v2852
    %2863 = vst [vmem:[#allocation4 + $0x4c8] sm:$0xff] %v2853
    %2864 = vst [vmem:[#allocation4 + $0x4d0] sm:$0xff] %v2854
    %2865 = vrot.lane.b32.xlu0 %v2435, 118
    %v2866 = vpop.permute.xlu0 %2865
    %2867 = vrot.lane.b32.xlu0 %v2436, 118
    %v2868 = vpop.permute.xlu0 %2867
    %2869 = vrot.lane.b32.xlu0 %v2437, 118
    %v2870 = vpop.permute.xlu0 %2869
    %2871 = vrot.lane.b32.xlu0 %v2438, 118
    %v2872 = vpop.permute.xlu0 %2871
    %2873 = vrot.lane.b32.xlu0 %v2439, 118
    %v2874 = vpop.permute.xlu0 %2873
    %2875 = vrot.lane.b32.xlu0 %v2440, 118
    %v2876 = vpop.permute.xlu0 %2875
    %v2877 = vsel %vm513, %v2866, %v2868
    %v2878 = vsel %vm513, %v2868, %v2870
    %v2879 = vsel %vm513, %v2870, %v2872
    %v2880 = vsel %vm513, %v2872, %v2874
    %v2881 = vsel %vm513, %v2874, %v2876
    %2887 = vst [vmem:[#allocation4 + $0x500] sm:$0xff] %v2877
    %2888 = vst [vmem:[#allocation4 + $0x508] sm:$0xff] %v2878
    %2889 = vst [vmem:[#allocation4 + $0x510] sm:$0xff] %v2879
    %2890 = vst [vmem:[#allocation4 + $0x518] sm:$0xff] %v2880
    %2891 = vst [vmem:[#allocation4 + $0x520] sm:$0xff] %v2881
    %2892 = vrot.lane.b32.xlu0 %v2435, 117
    %v2893 = vpop.permute.xlu0 %2892
    %2894 = vrot.lane.b32.xlu0 %v2436, 117
    %v2895 = vpop.permute.xlu0 %2894
    %2896 = vrot.lane.b32.xlu0 %v2437, 117
    %v2897 = vpop.permute.xlu0 %2896
    %2898 = vrot.lane.b32.xlu0 %v2438, 117
    %v2899 = vpop.permute.xlu0 %2898
    %2900 = vrot.lane.b32.xlu0 %v2439, 117
    %v2901 = vpop.permute.xlu0 %2900
    %2902 = vrot.lane.b32.xlu0 %v2440, 117
    %v2903 = vpop.permute.xlu0 %2902
    %v2904 = vsel %vm541, %v2893, %v2895
    %v2905 = vsel %vm541, %v2895, %v2897
    %v2906 = vsel %vm541, %v2897, %v2899
    %v2907 = vsel %vm541, %v2899, %v2901
    %v2908 = vsel %vm541, %v2901, %v2903
    %2914 = vst [vmem:[#allocation4 + $0x550] sm:$0xff] %v2904
    %2915 = vst [vmem:[#allocation4 + $0x558] sm:$0xff] %v2905
    %2916 = vst [vmem:[#allocation4 + $0x560] sm:$0xff] %v2906
    %2917 = vst [vmem:[#allocation4 + $0x568] sm:$0xff] %v2907
    %2918 = vst [vmem:[#allocation4 + $0x570] sm:$0xff] %v2908
    %2919 = vrot.lane.b32.xlu0 %v2435, 39
    %v2920 = vpop.permute.xlu0 %2919
    %2921 = vrot.lane.b32.xlu0 %v2436, 39
    %v2922 = vpop.permute.xlu0 %2921
    %2923 = vrot.lane.b32.xlu0 %v2437, 39
    %v2924 = vpop.permute.xlu0 %2923
    %2925 = vrot.lane.b32.xlu0 %v2438, 39
    %v2926 = vpop.permute.xlu0 %2925
    %2927 = vrot.lane.b32.xlu0 %v2439, 39
    %v2928 = vpop.permute.xlu0 %2927
    %2929 = vrot.lane.b32.xlu0 %v2440, 39
    %v2930 = vpop.permute.xlu0 %2929
    %v2931 = vsel %vm569, %v2920, %v2922
    %v2932 = vsel %vm569, %v2922, %v2924
    %v2933 = vsel %vm569, %v2924, %v2926
    %v2934 = vsel %vm569, %v2926, %v2928
    %v2935 = vsel %vm569, %v2928, %v2930
    %2941 = vst [vmem:[#allocation4 + $0x5a0] sm:$0xff] %v2931
    %2942 = vst [vmem:[#allocation4 + $0x5a8] sm:$0xff] %v2932
    %2943 = vst [vmem:[#allocation4 + $0x5b0] sm:$0xff] %v2933
    %2944 = vst [vmem:[#allocation4 + $0x5b8] sm:$0xff] %v2934
    %2945 = vst [vmem:[#allocation4 + $0x5c0] sm:$0xff] %v2935
    %2946 = vrot.lane.b32.xlu0 %v2435, 38
    %v2947 = vpop.permute.xlu0 %2946
    %2948 = vrot.lane.b32.xlu0 %v2436, 38
    %v2949 = vpop.permute.xlu0 %2948
    %2950 = vrot.lane.b32.xlu0 %v2437, 38
    %v2951 = vpop.permute.xlu0 %2950
    %2952 = vrot.lane.b32.xlu0 %v2438, 38
    %v2953 = vpop.permute.xlu0 %2952
    %2954 = vrot.lane.b32.xlu0 %v2439, 38
    %v2955 = vpop.permute.xlu0 %2954
    %2956 = vrot.lane.b32.xlu0 %v2440, 38
    %v2957 = vpop.permute.xlu0 %2956
    %v2958 = vsel %vm597, %v2947, %v2949
    %v2959 = vsel %vm597, %v2949, %v2951
    %v2960 = vsel %vm597, %v2951, %v2953
    %v2961 = vsel %vm597, %v2953, %v2955
    %v2962 = vsel %vm597, %v2955, %v2957
    %2968 = vst [vmem:[#allocation4 + $0x5f0] sm:$0xff] %v2958
    %2969 = vst [vmem:[#allocation4 + $0x5f8] sm:$0xff] %v2959
    %2970 = vst [vmem:[#allocation4 + $0x600] sm:$0xff] %v2960
    %2971 = vst [vmem:[#allocation4 + $0x608] sm:$0xff] %v2961
    %2972 = vst [vmem:[#allocation4 + $0x610] sm:$0xff] %v2962
    %2973 = vrot.lane.b32.xlu0 %v2435, 37
    %v2974 = vpop.permute.xlu0 %2973
    %2975 = vrot.lane.b32.xlu0 %v2436, 37
    %v2976 = vpop.permute.xlu0 %2975
    %2977 = vrot.lane.b32.xlu0 %v2437, 37
    %v2978 = vpop.permute.xlu0 %2977
    %2979 = vrot.lane.b32.xlu0 %v2438, 37
    %v2980 = vpop.permute.xlu0 %2979
    %2981 = vrot.lane.b32.xlu0 %v2439, 37
    %v2982 = vpop.permute.xlu0 %2981
    %2983 = vrot.lane.b32.xlu0 %v2440, 37
    %v2984 = vpop.permute.xlu0 %2983
    %v2985 = vsel %vm625, %v2974, %v2976
    %v2986 = vsel %vm625, %v2976, %v2978
    %v2987 = vsel %vm625, %v2978, %v2980
    %v2988 = vsel %vm625, %v2980, %v2982
    %v2989 = vsel %vm625, %v2982, %v2984
    %2995 = vst [vmem:[#allocation4 + $0x640] sm:$0xff] %v2985
    %2996 = vst [vmem:[#allocation4 + $0x648] sm:$0xff] %v2986
    %2997 = vst [vmem:[#allocation4 + $0x650] sm:$0xff] %v2987
    %2998 = vst [vmem:[#allocation4 + $0x658] sm:$0xff] %v2988
    %2999 = vst [vmem:[#allocation4 + $0x660] sm:$0xff] %v2989
    %3000 = vrot.lane.b32.xlu0 %v2435, 29
    %v3001 = vpop.permute.xlu0 %3000
    %3002 = vrot.lane.b32.xlu0 %v2436, 29
    %v3003 = vpop.permute.xlu0 %3002
    %3004 = vrot.lane.b32.xlu0 %v2437, 29
    %v3005 = vpop.permute.xlu0 %3004
    %3006 = vrot.lane.b32.xlu0 %v2438, 29
    %v3007 = vpop.permute.xlu0 %3006
    %3008 = vrot.lane.b32.xlu0 %v2439, 29
    %v3009 = vpop.permute.xlu0 %3008
    %3010 = vrot.lane.b32.xlu0 %v2440, 29
    %v3011 = vpop.permute.xlu0 %3010
    %v3012 = vsel %vm653, %v3001, %v3003
    %v3013 = vsel %vm653, %v3003, %v3005
    %v3014 = vsel %vm653, %v3005, %v3007
    %v3015 = vsel %vm653, %v3007, %v3009
    %v3016 = vsel %vm653, %v3009, %v3011
    %3022 = vst [vmem:[#allocation4 + $0x690] sm:$0xff] %v3012
    %3023 = vst [vmem:[#allocation4 + $0x698] sm:$0xff] %v3013
    %3024 = vst [vmem:[#allocation4 + $0x6a0] sm:$0xff] %v3014
    %3025 = vst [vmem:[#allocation4 + $0x6a8] sm:$0xff] %v3015
    %3026 = vst [vmem:[#allocation4 + $0x6b0] sm:$0xff] %v3016
    %3027 = vrot.lane.b32.xlu0 %v2435, 28
    %v3028 = vpop.permute.xlu0 %3027
    %3029 = vrot.lane.b32.xlu0 %v2436, 28
    %v3030 = vpop.permute.xlu0 %3029
    %3031 = vrot.lane.b32.xlu0 %v2437, 28
    %v3032 = vpop.permute.xlu0 %3031
    %3033 = vrot.lane.b32.xlu0 %v2438, 28
    %v3034 = vpop.permute.xlu0 %3033
    %3035 = vrot.lane.b32.xlu0 %v2439, 28
    %v3036 = vpop.permute.xlu0 %3035
    %3037 = vrot.lane.b32.xlu0 %v2440, 28
    %v3038 = vpop.permute.xlu0 %3037
    %v3039 = vsel %vm681, %v3028, %v3030
    %v3040 = vsel %vm681, %v3030, %v3032
    %v3041 = vsel %vm681, %v3032, %v3034
    %v3042 = vsel %vm681, %v3034, %v3036
    %v3043 = vsel %vm681, %v3036, %v3038
    %3049 = vst [vmem:[#allocation4 + $0x6e0] sm:$0xff] %v3039
    %3050 = vst [vmem:[#allocation4 + $0x6e8] sm:$0xff] %v3040
    %3051 = vst [vmem:[#allocation4 + $0x6f0] sm:$0xff] %v3041
    %3052 = vst [vmem:[#allocation4 + $0x6f8] sm:$0xff] %v3042
    %3053 = vst [vmem:[#allocation4 + $0x700] sm:$0xff] %v3043
    %3054 = vrot.lane.b32.xlu0 %v2435, 27
    %v3055 = vpop.permute.xlu0 %3054
    %3056 = vrot.lane.b32.xlu0 %v2436, 27
    %v3057 = vpop.permute.xlu0 %3056
    %3058 = vrot.lane.b32.xlu0 %v2437, 27
    %v3059 = vpop.permute.xlu0 %3058
    %3060 = vrot.lane.b32.xlu0 %v2438, 27
    %v3061 = vpop.permute.xlu0 %3060
    %3062 = vrot.lane.b32.xlu0 %v2439, 27
    %v3063 = vpop.permute.xlu0 %3062
    %3064 = vrot.lane.b32.xlu0 %v2440, 27
    %v3065 = vpop.permute.xlu0 %3064
    %v3066 = vsel %vm709, %v3055, %v3057
    %v3067 = vsel %vm709, %v3057, %v3059
    %v3068 = vsel %vm709, %v3059, %v3061
    %v3069 = vsel %vm709, %v3061, %v3063
    %v3070 = vsel %vm709, %v3063, %v3065
    %3076 = vst [vmem:[#allocation4 + $0x730] sm:$0xff] %v3066
    %3077 = vst [vmem:[#allocation4 + $0x738] sm:$0xff] %v3067
    %3078 = vst [vmem:[#allocation4 + $0x740] sm:$0xff] %v3068
    %3079 = vst [vmem:[#allocation4 + $0x748] sm:$0xff] %v3069
    %3080 = vst [vmem:[#allocation4 + $0x750] sm:$0xff] %v3070
    %3081 = vrot.lane.b32.xlu0 %v2435, 19
    %v3082 = vpop.permute.xlu0 %3081
    %3083 = vrot.lane.b32.xlu0 %v2436, 19
    %v3084 = vpop.permute.xlu0 %3083
    %3085 = vrot.lane.b32.xlu0 %v2437, 19
    %v3086 = vpop.permute.xlu0 %3085
    %3087 = vrot.lane.b32.xlu0 %v2438, 19
    %v3088 = vpop.permute.xlu0 %3087
    %3089 = vrot.lane.b32.xlu0 %v2439, 19
    %v3090 = vpop.permute.xlu0 %3089
    %3091 = vrot.lane.b32.xlu0 %v2440, 19
    %v3092 = vpop.permute.xlu0 %3091
    %v3093 = vsel %vm737, %v3082, %v3084
    %v3094 = vsel %vm737, %v3084, %v3086
    %v3095 = vsel %vm737, %v3086, %v3088
    %v3096 = vsel %vm737, %v3088, %v3090
    %v3097 = vsel %vm737, %v3090, %v3092
    %3103 = vst [vmem:[#allocation4 + $0x780] sm:$0xff] %v3093
    %3104 = vst [vmem:[#allocation4 + $0x788] sm:$0xff] %v3094
    %3105 = vst [vmem:[#allocation4 + $0x790] sm:$0xff] %v3095
    %3106 = vst [vmem:[#allocation4 + $0x798] sm:$0xff] %v3096
    %3107 = vst [vmem:[#allocation4 + $0x7a0] sm:$0xff] %v3097
    %3108 = vrot.lane.b32.xlu0 %v2435, 18
    %v3109 = vpop.permute.xlu0 %3108
    %3110 = vrot.lane.b32.xlu0 %v2436, 18
    %v3111 = vpop.permute.xlu0 %3110
    %3112 = vrot.lane.b32.xlu0 %v2437, 18
    %v3113 = vpop.permute.xlu0 %3112
    %3114 = vrot.lane.b32.xlu0 %v2438, 18
    %v3115 = vpop.permute.xlu0 %3114
    %3116 = vrot.lane.b32.xlu0 %v2439, 18
    %v3117 = vpop.permute.xlu0 %3116
    %3118 = vrot.lane.b32.xlu0 %v2440, 18
    %v3119 = vpop.permute.xlu0 %3118
    %v3120 = vsel %vm765, %v3109, %v3111
    %v3121 = vsel %vm765, %v3111, %v3113
    %v3122 = vsel %vm765, %v3113, %v3115
    %v3123 = vsel %vm765, %v3115, %v3117
    %v3124 = vsel %vm765, %v3117, %v3119
    %3130 = vst [vmem:[#allocation4 + $0x7d0] sm:$0xff] %v3120
    %3131 = vst [vmem:[#allocation4 + $0x7d8] sm:$0xff] %v3121
    %3132 = vst [vmem:[#allocation4 + $0x7e0] sm:$0xff] %v3122
    %3133 = vst [vmem:[#allocation4 + $0x7e8] sm:$0xff] %v3123
    %3134 = vst [vmem:[#allocation4 + $0x7f0] sm:$0xff] %v3124
    %3135 = vrot.lane.b32.xlu0 %v2435, 17
    %v3136 = vpop.permute.xlu0 %3135
    %3137 = vrot.lane.b32.xlu0 %v2436, 17
    %v3138 = vpop.permute.xlu0 %3137
    %3139 = vrot.lane.b32.xlu0 %v2437, 17
    %v3140 = vpop.permute.xlu0 %3139
    %3141 = vrot.lane.b32.xlu0 %v2438, 17
    %v3142 = vpop.permute.xlu0 %3141
    %3143 = vrot.lane.b32.xlu0 %v2439, 17
    %v3144 = vpop.permute.xlu0 %3143
    %3145 = vrot.lane.b32.xlu0 %v2440, 17
    %v3146 = vpop.permute.xlu0 %3145
    %v3147 = vsel %vm793, %v3136, %v3138
    %v3148 = vsel %vm793, %v3138, %v3140
    %v3149 = vsel %vm793, %v3140, %v3142
    %v3150 = vsel %vm793, %v3142, %v3144
    %v3151 = vsel %vm793, %v3144, %v3146
    %3157 = vst [vmem:[#allocation4 + $0x820] sm:$0xff] %v3147
    %3158 = vst [vmem:[#allocation4 + $0x828] sm:$0xff] %v3148
    %3159 = vst [vmem:[#allocation4 + $0x830] sm:$0xff] %v3149
    %3160 = vst [vmem:[#allocation4 + $0x838] sm:$0xff] %v3150
    %3161 = vst [vmem:[#allocation4 + $0x840] sm:$0xff] %v3151
    %3168 = vrot.lane.b32.xlu0 %v2441, 111
    %v3169 = vpop.permute.xlu0 %3168
    %3170 = vrot.lane.b32.xlu0 %v2442, 111
    %v3171 = vpop.permute.xlu0 %3170
    %3172 = vrot.lane.b32.xlu0 %v2443, 111
    %v3173 = vpop.permute.xlu0 %3172
    %3174 = vrot.lane.b32.xlu0 %v2444, 111
    %v3175 = vpop.permute.xlu0 %3174
    %3176 = vrot.lane.b32.xlu0 %v2445, 111
    %v3177 = vpop.permute.xlu0 %3176
    %3178 = vrot.lane.b32.xlu0 %v2446, 111
    %v3179 = vpop.permute.xlu0 %3178
    %v3180 = vsel %vm81, %v3169, %v3171
    %v3181 = vsel %vm81, %v3171, %v3173
    %v3182 = vsel %vm81, %v3173, %v3175
    %v3183 = vsel %vm81, %v3175, %v3177
    %v3184 = vsel %vm81, %v3177, %v3179
    %3190 = vst [vmem:[#allocation4 + $0x28] sm:$0xff] %v3180
    %3191 = vst [vmem:[#allocation4 + $0x30] sm:$0xff] %v3181
    %3192 = vst [vmem:[#allocation4 + $0x38] sm:$0xff] %v3182
    %3193 = vst [vmem:[#allocation4 + $0x40] sm:$0xff] %v3183
    %3194 = vst [vmem:[#allocation4 + $0x48] sm:$0xff] %v3184
    %3195 = vrot.lane.b32.xlu0 %v2441, 110
    %v3196 = vpop.permute.xlu0 %3195
    %3197 = vrot.lane.b32.xlu0 %v2442, 110
    %v3198 = vpop.permute.xlu0 %3197
    %3199 = vrot.lane.b32.xlu0 %v2443, 110
    %v3200 = vpop.permute.xlu0 %3199
    %3201 = vrot.lane.b32.xlu0 %v2444, 110
    %v3202 = vpop.permute.xlu0 %3201
    %3203 = vrot.lane.b32.xlu0 %v2445, 110
    %v3204 = vpop.permute.xlu0 %3203
    %3205 = vrot.lane.b32.xlu0 %v2446, 110
    %v3206 = vpop.permute.xlu0 %3205
    %v3207 = vsel %vm112, %v3196, %v3198
    %v3208 = vsel %vm112, %v3198, %v3200
    %v3209 = vsel %vm112, %v3200, %v3202
    %v3210 = vsel %vm112, %v3202, %v3204
    %v3211 = vsel %vm112, %v3204, %v3206
    %3217 = vst [vmem:[#allocation4 + $0x78] sm:$0xff] %v3207
    %3218 = vst [vmem:[#allocation4 + $0x80] sm:$0xff] %v3208
    %3219 = vst [vmem:[#allocation4 + $0x88] sm:$0xff] %v3209
    %3220 = vst [vmem:[#allocation4 + $0x90] sm:$0xff] %v3210
    %3221 = vst [vmem:[#allocation4 + $0x98] sm:$0xff] %v3211
    %3222 = vrot.lane.b32.xlu0 %v2441, 109
    %v3223 = vpop.permute.xlu0 %3222
    %3224 = vrot.lane.b32.xlu0 %v2442, 109
    %v3225 = vpop.permute.xlu0 %3224
    %3226 = vrot.lane.b32.xlu0 %v2443, 109
    %v3227 = vpop.permute.xlu0 %3226
    %3228 = vrot.lane.b32.xlu0 %v2444, 109
    %v3229 = vpop.permute.xlu0 %3228
    %3230 = vrot.lane.b32.xlu0 %v2445, 109
    %v3231 = vpop.permute.xlu0 %3230
    %3232 = vrot.lane.b32.xlu0 %v2446, 109
    %v3233 = vpop.permute.xlu0 %3232
    %v3234 = vsel %vm140, %v3223, %v3225
    %v3235 = vsel %vm140, %v3225, %v3227
    %v3236 = vsel %vm140, %v3227, %v3229
    %v3237 = vsel %vm140, %v3229, %v3231
    %v3238 = vsel %vm140, %v3231, %v3233
    %3244 = vst [vmem:[#allocation4 + $0xc8] sm:$0xff] %v3234
    %3245 = vst [vmem:[#allocation4 + $0xd0] sm:$0xff] %v3235
    %3246 = vst [vmem:[#allocation4 + $0xd8] sm:$0xff] %v3236
    %3247 = vst [vmem:[#allocation4 + $0xe0] sm:$0xff] %v3237
    %3248 = vst [vmem:[#allocation4 + $0xe8] sm:$0xff] %v3238
    %3249 = vrot.lane.b32.xlu0 %v2441, 101
    %v3250 = vpop.permute.xlu0 %3249
    %3251 = vrot.lane.b32.xlu0 %v2442, 101
    %v3252 = vpop.permute.xlu0 %3251
    %3253 = vrot.lane.b32.xlu0 %v2443, 101
    %v3254 = vpop.permute.xlu0 %3253
    %3255 = vrot.lane.b32.xlu0 %v2444, 101
    %v3256 = vpop.permute.xlu0 %3255
    %3257 = vrot.lane.b32.xlu0 %v2445, 101
    %v3258 = vpop.permute.xlu0 %3257
    %3259 = vrot.lane.b32.xlu0 %v2446, 101
    %v3260 = vpop.permute.xlu0 %3259
    %v3261 = vsel %vm168, %v3250, %v3252
    %v3262 = vsel %vm168, %v3252, %v3254
    %v3263 = vsel %vm168, %v3254, %v3256
    %v3264 = vsel %vm168, %v3256, %v3258
    %v3265 = vsel %vm168, %v3258, %v3260
    %3271 = vst [vmem:[#allocation4 + $0x118] sm:$0xff] %v3261
    %3272 = vst [vmem:[#allocation4 + $0x120] sm:$0xff] %v3262
    %3273 = vst [vmem:[#allocation4 + $0x128] sm:$0xff] %v3263
    %3274 = vst [vmem:[#allocation4 + $0x130] sm:$0xff] %v3264
    %3275 = vst [vmem:[#allocation4 + $0x138] sm:$0xff] %v3265
    %3276 = vrot.lane.b32.xlu0 %v2441, 100
    %v3277 = vpop.permute.xlu0 %3276
    %3278 = vrot.lane.b32.xlu0 %v2442, 100
    %v3279 = vpop.permute.xlu0 %3278
    %3280 = vrot.lane.b32.xlu0 %v2443, 100
    %v3281 = vpop.permute.xlu0 %3280
    %3282 = vrot.lane.b32.xlu0 %v2444, 100
    %v3283 = vpop.permute.xlu0 %3282
    %3284 = vrot.lane.b32.xlu0 %v2445, 100
    %v3285 = vpop.permute.xlu0 %3284
    %3286 = vrot.lane.b32.xlu0 %v2446, 100
    %v3287 = vpop.permute.xlu0 %3286
    %v3288 = vsel %vm196, %v3277, %v3279
    %v3289 = vsel %vm196, %v3279, %v3281
    %v3290 = vsel %vm196, %v3281, %v3283
    %v3291 = vsel %vm196, %v3283, %v3285
    %v3292 = vsel %vm196, %v3285, %v3287
    %3298 = vst [vmem:[#allocation4 + $0x168] sm:$0xff] %v3288
    %3299 = vst [vmem:[#allocation4 + $0x170] sm:$0xff] %v3289
    %3300 = vst [vmem:[#allocation4 + $0x178] sm:$0xff] %v3290
    %3301 = vst [vmem:[#allocation4 + $0x180] sm:$0xff] %v3291
    %3302 = vst [vmem:[#allocation4 + $0x188] sm:$0xff] %v3292
    %3303 = vrot.lane.b32.xlu0 %v2441, 99
    %v3304 = vpop.permute.xlu0 %3303
    %3305 = vrot.lane.b32.xlu0 %v2442, 99
    %v3306 = vpop.permute.xlu0 %3305
    %3307 = vrot.lane.b32.xlu0 %v2443, 99
    %v3308 = vpop.permute.xlu0 %3307
    %3309 = vrot.lane.b32.xlu0 %v2444, 99
    %v3310 = vpop.permute.xlu0 %3309
    %3311 = vrot.lane.b32.xlu0 %v2445, 99
    %v3312 = vpop.permute.xlu0 %3311
    %3313 = vrot.lane.b32.xlu0 %v2446, 99
    %v3314 = vpop.permute.xlu0 %3313
    %v3315 = vsel %vm224, %v3304, %v3306
    %v3316 = vsel %vm224, %v3306, %v3308
    %v3317 = vsel %vm224, %v3308, %v3310
    %v3318 = vsel %vm224, %v3310, %v3312
    %v3319 = vsel %vm224, %v3312, %v3314
    %3325 = vst [vmem:[#allocation4 + $0x1b8] sm:$0xff] %v3315
    %3326 = vst [vmem:[#allocation4 + $0x1c0] sm:$0xff] %v3316
    %3327 = vst [vmem:[#allocation4 + $0x1c8] sm:$0xff] %v3317
    %3328 = vst [vmem:[#allocation4 + $0x1d0] sm:$0xff] %v3318
    %3329 = vst [vmem:[#allocation4 + $0x1d8] sm:$0xff] %v3319
    %3330 = vrot.lane.b32.xlu0 %v2441, 91
    %v3331 = vpop.permute.xlu0 %3330
    %3332 = vrot.lane.b32.xlu0 %v2442, 91
    %v3333 = vpop.permute.xlu0 %3332
    %3334 = vrot.lane.b32.xlu0 %v2443, 91
    %v3335 = vpop.permute.xlu0 %3334
    %3336 = vrot.lane.b32.xlu0 %v2444, 91
    %v3337 = vpop.permute.xlu0 %3336
    %3338 = vrot.lane.b32.xlu0 %v2445, 91
    %v3339 = vpop.permute.xlu0 %3338
    %3340 = vrot.lane.b32.xlu0 %v2446, 91
    %v3341 = vpop.permute.xlu0 %3340
    %v3342 = vsel %vm252, %v3331, %v3333
    %v3343 = vsel %vm252, %v3333, %v3335
    %v3344 = vsel %vm252, %v3335, %v3337
    %v3345 = vsel %vm252, %v3337, %v3339
    %v3346 = vsel %vm252, %v3339, %v3341
    %3352 = vst [vmem:[#allocation4 + $0x208] sm:$0xff] %v3342
    %3353 = vst [vmem:[#allocation4 + $0x210] sm:$0xff] %v3343
    %3354 = vst [vmem:[#allocation4 + $0x218] sm:$0xff] %v3344
    %3355 = vst [vmem:[#allocation4 + $0x220] sm:$0xff] %v3345
    %3356 = vst [vmem:[#allocation4 + $0x228] sm:$0xff] %v3346
    %3357 = vrot.lane.b32.xlu0 %v2441, 90
    %v3358 = vpop.permute.xlu0 %3357
    %3359 = vrot.lane.b32.xlu0 %v2442, 90
    %v3360 = vpop.permute.xlu0 %3359
    %3361 = vrot.lane.b32.xlu0 %v2443, 90
    %v3362 = vpop.permute.xlu0 %3361
    %3363 = vrot.lane.b32.xlu0 %v2444, 90
    %v3364 = vpop.permute.xlu0 %3363
    %3365 = vrot.lane.b32.xlu0 %v2445, 90
    %v3366 = vpop.permute.xlu0 %3365
    %3367 = vrot.lane.b32.xlu0 %v2446, 90
    %v3368 = vpop.permute.xlu0 %3367
    %v3369 = vsel %vm280, %v3358, %v3360
    %v3370 = vsel %vm280, %v3360, %v3362
    %v3371 = vsel %vm280, %v3362, %v3364
    %v3372 = vsel %vm280, %v3364, %v3366
    %v3373 = vsel %vm280, %v3366, %v3368
    %3379 = vst [vmem:[#allocation4 + $0x258] sm:$0xff] %v3369
    %3380 = vst [vmem:[#allocation4 + $0x260] sm:$0xff] %v3370
    %3381 = vst [vmem:[#allocation4 + $0x268] sm:$0xff] %v3371
    %3382 = vst [vmem:[#allocation4 + $0x270] sm:$0xff] %v3372
    %3383 = vst [vmem:[#allocation4 + $0x278] sm:$0xff] %v3373
    %3384 = vrot.lane.b32.xlu0 %v2441, 89
    %v3385 = vpop.permute.xlu0 %3384
    %3386 = vrot.lane.b32.xlu0 %v2442, 89
    %v3387 = vpop.permute.xlu0 %3386
    %3388 = vrot.lane.b32.xlu0 %v2443, 89
    %v3389 = vpop.permute.xlu0 %3388
    %3390 = vrot.lane.b32.xlu0 %v2444, 89
    %v3391 = vpop.permute.xlu0 %3390
    %3392 = vrot.lane.b32.xlu0 %v2445, 89
    %v3393 = vpop.permute.xlu0 %3392
    %3394 = vrot.lane.b32.xlu0 %v2446, 89
    %v3395 = vpop.permute.xlu0 %3394
    %v3396 = vsel %vm308, %v3385, %v3387
    %v3397 = vsel %vm308, %v3387, %v3389
    %v3398 = vsel %vm308, %v3389, %v3391
    %v3399 = vsel %vm308, %v3391, %v3393
    %v3400 = vsel %vm308, %v3393, %v3395
    %3406 = vst [vmem:[#allocation4 + $0x2a8] sm:$0xff] %v3396
    %3407 = vst [vmem:[#allocation4 + $0x2b0] sm:$0xff] %v3397
    %3408 = vst [vmem:[#allocation4 + $0x2b8] sm:$0xff] %v3398
    %3409 = vst [vmem:[#allocation4 + $0x2c0] sm:$0xff] %v3399
    %3410 = vst [vmem:[#allocation4 + $0x2c8] sm:$0xff] %v3400
    %3411 = vrot.lane.b32.xlu0 %v2441, 11
    %v3412 = vpop.permute.xlu0 %3411
    %3413 = vrot.lane.b32.xlu0 %v2442, 11
    %v3414 = vpop.permute.xlu0 %3413
    %3415 = vrot.lane.b32.xlu0 %v2443, 11
    %v3416 = vpop.permute.xlu0 %3415
    %3417 = vrot.lane.b32.xlu0 %v2444, 11
    %v3418 = vpop.permute.xlu0 %3417
    %3419 = vrot.lane.b32.xlu0 %v2445, 11
    %v3420 = vpop.permute.xlu0 %3419
    %3421 = vrot.lane.b32.xlu0 %v2446, 11
    %v3422 = vpop.permute.xlu0 %3421
    %v3423 = vsel %vm336, %v3412, %v3414
    %v3424 = vsel %vm336, %v3414, %v3416
    %v3425 = vsel %vm336, %v3416, %v3418
    %v3426 = vsel %vm336, %v3418, %v3420
    %v3427 = vsel %vm336, %v3420, %v3422
    %3433 = vst [vmem:[#allocation4 + $0x2f8] sm:$0xff] %v3423
    %3434 = vst [vmem:[#allocation4 + $0x300] sm:$0xff] %v3424
    %3435 = vst [vmem:[#allocation4 + $0x308] sm:$0xff] %v3425
    %3436 = vst [vmem:[#allocation4 + $0x310] sm:$0xff] %v3426
    %3437 = vst [vmem:[#allocation4 + $0x318] sm:$0xff] %v3427
    %3438 = vrot.lane.b32.xlu0 %v2441, 10
    %v3439 = vpop.permute.xlu0 %3438
    %3440 = vrot.lane.b32.xlu0 %v2442, 10
    %v3441 = vpop.permute.xlu0 %3440
    %3442 = vrot.lane.b32.xlu0 %v2443, 10
    %v3443 = vpop.permute.xlu0 %3442
    %3444 = vrot.lane.b32.xlu0 %v2444, 10
    %v3445 = vpop.permute.xlu0 %3444
    %3446 = vrot.lane.b32.xlu0 %v2445, 10
    %v3447 = vpop.permute.xlu0 %3446
    %3448 = vrot.lane.b32.xlu0 %v2446, 10
    %v3449 = vpop.permute.xlu0 %3448
    %v3450 = vsel %vm364, %v3439, %v3441
    %v3451 = vsel %vm364, %v3441, %v3443
    %v3452 = vsel %vm364, %v3443, %v3445
    %v3453 = vsel %vm364, %v3445, %v3447
    %v3454 = vsel %vm364, %v3447, %v3449
    %3460 = vst [vmem:[#allocation4 + $0x348] sm:$0xff] %v3450
    %3461 = vst [vmem:[#allocation4 + $0x350] sm:$0xff] %v3451
    %3462 = vst [vmem:[#allocation4 + $0x358] sm:$0xff] %v3452
    %3463 = vst [vmem:[#allocation4 + $0x360] sm:$0xff] %v3453
    %3464 = vst [vmem:[#allocation4 + $0x368] sm:$0xff] %v3454
    %3465 = vrot.lane.b32.xlu0 %v2441, 9
    %v3466 = vpop.permute.xlu0 %3465
    %3467 = vrot.lane.b32.xlu0 %v2442, 9
    %v3468 = vpop.permute.xlu0 %3467
    %3469 = vrot.lane.b32.xlu0 %v2443, 9
    %v3470 = vpop.permute.xlu0 %3469
    %3471 = vrot.lane.b32.xlu0 %v2444, 9
    %v3472 = vpop.permute.xlu0 %3471
    %3473 = vrot.lane.b32.xlu0 %v2445, 9
    %v3474 = vpop.permute.xlu0 %3473
    %3475 = vrot.lane.b32.xlu0 %v2446, 9
    %v3476 = vpop.permute.xlu0 %3475
    %v3477 = vsel %vm392, %v3466, %v3468
    %v3478 = vsel %vm392, %v3468, %v3470
    %v3479 = vsel %vm392, %v3470, %v3472
    %v3480 = vsel %vm392, %v3472, %v3474
    %v3481 = vsel %vm392, %v3474, %v3476
    %3487 = vst [vmem:[#allocation4 + $0x398] sm:$0xff] %v3477
    %3488 = vst [vmem:[#allocation4 + $0x3a0] sm:$0xff] %v3478
    %3489 = vst [vmem:[#allocation4 + $0x3a8] sm:$0xff] %v3479
    %3490 = vst [vmem:[#allocation4 + $0x3b0] sm:$0xff] %v3480
    %3491 = vst [vmem:[#allocation4 + $0x3b8] sm:$0xff] %v3481
    %3492 = vrot.lane.b32.xlu0 %v2441, 1
    %v3493 = vpop.permute.xlu0 %3492
    %3494 = vrot.lane.b32.xlu0 %v2442, 1
    %v3495 = vpop.permute.xlu0 %3494
    %3496 = vrot.lane.b32.xlu0 %v2443, 1
    %v3497 = vpop.permute.xlu0 %3496
    %3498 = vrot.lane.b32.xlu0 %v2444, 1
    %v3499 = vpop.permute.xlu0 %3498
    %3500 = vrot.lane.b32.xlu0 %v2445, 1
    %v3501 = vpop.permute.xlu0 %3500
    %3502 = vrot.lane.b32.xlu0 %v2446, 1
    %v3503 = vpop.permute.xlu0 %3502
    %v3504 = vsel %vm420, %v3493, %v3495
    %v3505 = vsel %vm420, %v3495, %v3497
    %v3506 = vsel %vm420, %v3497, %v3499
    %v3507 = vsel %vm420, %v3499, %v3501
    %v3508 = vsel %vm420, %v3501, %v3503
    %3514 = vst [vmem:[#allocation4 + $0x3e8] sm:$0xff] %v3504
    %3515 = vst [vmem:[#allocation4 + $0x3f0] sm:$0xff] %v3505
    %3516 = vst [vmem:[#allocation4 + $0x3f8] sm:$0xff] %v3506
    %3517 = vst [vmem:[#allocation4 + $0x400] sm:$0xff] %v3507
    %3518 = vst [vmem:[#allocation4 + $0x408] sm:$0xff] %v3508
    %3519 = vst [vmem:[#allocation4 + $0x438] sm:$0xff] %v2442
    %3520 = vst [vmem:[#allocation4 + $0x440] sm:$0xff] %v2443
    %3521 = vst [vmem:[#allocation4 + $0x448] sm:$0xff] %v2444
    %3522 = vst [vmem:[#allocation4 + $0x450] sm:$0xff] %v2445
    %3523 = vst [vmem:[#allocation4 + $0x458] sm:$0xff] %v2446
    %3525 = vrot.lane.b32.xlu0 %v2442, 127
    %v3526 = vpop.permute.xlu0 %3525
    %3527 = vrot.lane.b32.xlu0 %v2443, 127
    %v3528 = vpop.permute.xlu0 %3527
    %3529 = vrot.lane.b32.xlu0 %v2444, 127
    %v3530 = vpop.permute.xlu0 %3529
    %3531 = vrot.lane.b32.xlu0 %v2445, 127
    %v3532 = vpop.permute.xlu0 %3531
    %3533 = vrot.lane.b32.xlu0 %v2446, 127
    %v3534 = vpop.permute.xlu0 %3533
    %3535 = vrot.lane.b32.xlu0 %v2447, 127
    %v3536 = vpop.permute.xlu0 %3535
    %v3537 = vsel %vm456, %v3526, %v3528
    %v3538 = vsel %vm456, %v3528, %v3530
    %v3539 = vsel %vm456, %v3530, %v3532
    %v3540 = vsel %vm456, %v3532, %v3534
    %v3541 = vsel %vm456, %v3534, %v3536
    %3547 = vst [vmem:[#allocation4 + $0x488] sm:$0xff] %v3537
    %3548 = vst [vmem:[#allocation4 + $0x490] sm:$0xff] %v3538
    %3549 = vst [vmem:[#allocation4 + $0x498] sm:$0xff] %v3539
    %3550 = vst [vmem:[#allocation4 + $0x4a0] sm:$0xff] %v3540
    %3551 = vst [vmem:[#allocation4 + $0x4a8] sm:$0xff] %v3541
    %3552 = vrot.lane.b32.xlu0 %v2442, 119
    %v3553 = vpop.permute.xlu0 %3552
    %3554 = vrot.lane.b32.xlu0 %v2443, 119
    %v3555 = vpop.permute.xlu0 %3554
    %3556 = vrot.lane.b32.xlu0 %v2444, 119
    %v3557 = vpop.permute.xlu0 %3556
    %3558 = vrot.lane.b32.xlu0 %v2445, 119
    %v3559 = vpop.permute.xlu0 %3558
    %3560 = vrot.lane.b32.xlu0 %v2446, 119
    %v3561 = vpop.permute.xlu0 %3560
    %3562 = vrot.lane.b32.xlu0 %v2447, 119
    %v3563 = vpop.permute.xlu0 %3562
    %v3564 = vsel %vm485, %v3553, %v3555
    %v3565 = vsel %vm485, %v3555, %v3557
    %v3566 = vsel %vm485, %v3557, %v3559
    %v3567 = vsel %vm485, %v3559, %v3561
    %v3568 = vsel %vm485, %v3561, %v3563
    %3574 = vst [vmem:[#allocation4 + $0x4d8] sm:$0xff] %v3564
    %3575 = vst [vmem:[#allocation4 + $0x4e0] sm:$0xff] %v3565
    %3576 = vst [vmem:[#allocation4 + $0x4e8] sm:$0xff] %v3566
    %3577 = vst [vmem:[#allocation4 + $0x4f0] sm:$0xff] %v3567
    %3578 = vst [vmem:[#allocation4 + $0x4f8] sm:$0xff] %v3568
    %3579 = vrot.lane.b32.xlu0 %v2442, 118
    %v3580 = vpop.permute.xlu0 %3579
    %3581 = vrot.lane.b32.xlu0 %v2443, 118
    %v3582 = vpop.permute.xlu0 %3581
    %3583 = vrot.lane.b32.xlu0 %v2444, 118
    %v3584 = vpop.permute.xlu0 %3583
    %3585 = vrot.lane.b32.xlu0 %v2445, 118
    %v3586 = vpop.permute.xlu0 %3585
    %3587 = vrot.lane.b32.xlu0 %v2446, 118
    %v3588 = vpop.permute.xlu0 %3587
    %3589 = vrot.lane.b32.xlu0 %v2447, 118
    %v3590 = vpop.permute.xlu0 %3589
    %v3591 = vsel %vm513, %v3580, %v3582
    %v3592 = vsel %vm513, %v3582, %v3584
    %v3593 = vsel %vm513, %v3584, %v3586
    %v3594 = vsel %vm513, %v3586, %v3588
    %v3595 = vsel %vm513, %v3588, %v3590
    %3601 = vst [vmem:[#allocation4 + $0x528] sm:$0xff] %v3591
    %3602 = vst [vmem:[#allocation4 + $0x530] sm:$0xff] %v3592
    %3603 = vst [vmem:[#allocation4 + $0x538] sm:$0xff] %v3593
    %3604 = vst [vmem:[#allocation4 + $0x540] sm:$0xff] %v3594
    %3605 = vst [vmem:[#allocation4 + $0x548] sm:$0xff] %v3595
    %3606 = vrot.lane.b32.xlu0 %v2442, 117
    %v3607 = vpop.permute.xlu0 %3606
    %3608 = vrot.lane.b32.xlu0 %v2443, 117
    %v3609 = vpop.permute.xlu0 %3608
    %3610 = vrot.lane.b32.xlu0 %v2444, 117
    %v3611 = vpop.permute.xlu0 %3610
    %3612 = vrot.lane.b32.xlu0 %v2445, 117
    %v3613 = vpop.permute.xlu0 %3612
    %3614 = vrot.lane.b32.xlu0 %v2446, 117
    %v3615 = vpop.permute.xlu0 %3614
    %3616 = vrot.lane.b32.xlu0 %v2447, 117
    %v3617 = vpop.permute.xlu0 %3616
    %v3618 = vsel %vm541, %v3607, %v3609
    %v3619 = vsel %vm541, %v3609, %v3611
    %v3620 = vsel %vm541, %v3611, %v3613
    %v3621 = vsel %vm541, %v3613, %v3615
    %v3622 = vsel %vm541, %v3615, %v3617
    %3628 = vst [vmem:[#allocation4 + $0x578] sm:$0xff] %v3618
    %3629 = vst [vmem:[#allocation4 + $0x580] sm:$0xff] %v3619
    %3630 = vst [vmem:[#allocation4 + $0x588] sm:$0xff] %v3620
    %3631 = vst [vmem:[#allocation4 + $0x590] sm:$0xff] %v3621
    %3632 = vst [vmem:[#allocation4 + $0x598] sm:$0xff] %v3622
    %3633 = vrot.lane.b32.xlu0 %v2442, 39
    %v3634 = vpop.permute.xlu0 %3633
    %3635 = vrot.lane.b32.xlu0 %v2443, 39
    %v3636 = vpop.permute.xlu0 %3635
    %3637 = vrot.lane.b32.xlu0 %v2444, 39
    %v3638 = vpop.permute.xlu0 %3637
    %3639 = vrot.lane.b32.xlu0 %v2445, 39
    %v3640 = vpop.permute.xlu0 %3639
    %3641 = vrot.lane.b32.xlu0 %v2446, 39
    %v3642 = vpop.permute.xlu0 %3641
    %3643 = vrot.lane.b32.xlu0 %v2447, 39
    %v3644 = vpop.permute.xlu0 %3643
    %v3645 = vsel %vm569, %v3634, %v3636
    %v3646 = vsel %vm569, %v3636, %v3638
    %v3647 = vsel %vm569, %v3638, %v3640
    %v3648 = vsel %vm569, %v3640, %v3642
    %v3649 = vsel %vm569, %v3642, %v3644
    %3655 = vst [vmem:[#allocation4 + $0x5c8] sm:$0xff] %v3645
    %3656 = vst [vmem:[#allocation4 + $0x5d0] sm:$0xff] %v3646
    %3657 = vst [vmem:[#allocation4 + $0x5d8] sm:$0xff] %v3647
    %3658 = vst [vmem:[#allocation4 + $0x5e0] sm:$0xff] %v3648
    %3659 = vst [vmem:[#allocation4 + $0x5e8] sm:$0xff] %v3649
    %3660 = vrot.lane.b32.xlu0 %v2442, 38
    %v3661 = vpop.permute.xlu0 %3660
    %3662 = vrot.lane.b32.xlu0 %v2443, 38
    %v3663 = vpop.permute.xlu0 %3662
    %3664 = vrot.lane.b32.xlu0 %v2444, 38
    %v3665 = vpop.permute.xlu0 %3664
    %3666 = vrot.lane.b32.xlu0 %v2445, 38
    %v3667 = vpop.permute.xlu0 %3666
    %3668 = vrot.lane.b32.xlu0 %v2446, 38
    %v3669 = vpop.permute.xlu0 %3668
    %3670 = vrot.lane.b32.xlu0 %v2447, 38
    %v3671 = vpop.permute.xlu0 %3670
    %v3672 = vsel %vm597, %v3661, %v3663
    %v3673 = vsel %vm597, %v3663, %v3665
    %v3674 = vsel %vm597, %v3665, %v3667
    %v3675 = vsel %vm597, %v3667, %v3669
    %v3676 = vsel %vm597, %v3669, %v3671
    %3682 = vst [vmem:[#allocation4 + $0x618] sm:$0xff] %v3672
    %3683 = vst [vmem:[#allocation4 + $0x620] sm:$0xff] %v3673
    %3684 = vst [vmem:[#allocation4 + $0x628] sm:$0xff] %v3674
    %3685 = vst [vmem:[#allocation4 + $0x630] sm:$0xff] %v3675
    %3686 = vst [vmem:[#allocation4 + $0x638] sm:$0xff] %v3676
    %3687 = vrot.lane.b32.xlu0 %v2442, 37
    %v3688 = vpop.permute.xlu0 %3687
    %3689 = vrot.lane.b32.xlu0 %v2443, 37
    %v3690 = vpop.permute.xlu0 %3689
    %3691 = vrot.lane.b32.xlu0 %v2444, 37
    %v3692 = vpop.permute.xlu0 %3691
    %3693 = vrot.lane.b32.xlu0 %v2445, 37
    %v3694 = vpop.permute.xlu0 %3693
    %3695 = vrot.lane.b32.xlu0 %v2446, 37
    %v3696 = vpop.permute.xlu0 %3695
    %3697 = vrot.lane.b32.xlu0 %v2447, 37
    %v3698 = vpop.permute.xlu0 %3697
    %v3699 = vsel %vm625, %v3688, %v3690
    %v3700 = vsel %vm625, %v3690, %v3692
    %v3701 = vsel %vm625, %v3692, %v3694
    %v3702 = vsel %vm625, %v3694, %v3696
    %v3703 = vsel %vm625, %v3696, %v3698
    %3709 = vst [vmem:[#allocation4 + $0x668] sm:$0xff] %v3699
    %3710 = vst [vmem:[#allocation4 + $0x670] sm:$0xff] %v3700
    %3711 = vst [vmem:[#allocation4 + $0x678] sm:$0xff] %v3701
    %3712 = vst [vmem:[#allocation4 + $0x680] sm:$0xff] %v3702
    %3713 = vst [vmem:[#allocation4 + $0x688] sm:$0xff] %v3703
    %3714 = vrot.lane.b32.xlu0 %v2442, 29
    %v3715 = vpop.permute.xlu0 %3714
    %3716 = vrot.lane.b32.xlu0 %v2443, 29
    %v3717 = vpop.permute.xlu0 %3716
    %3718 = vrot.lane.b32.xlu0 %v2444, 29
    %v3719 = vpop.permute.xlu0 %3718
    %3720 = vrot.lane.b32.xlu0 %v2445, 29
    %v3721 = vpop.permute.xlu0 %3720
    %3722 = vrot.lane.b32.xlu0 %v2446, 29
    %v3723 = vpop.permute.xlu0 %3722
    %3724 = vrot.lane.b32.xlu0 %v2447, 29
    %v3725 = vpop.permute.xlu0 %3724
    %v3726 = vsel %vm653, %v3715, %v3717
    %v3727 = vsel %vm653, %v3717, %v3719
    %v3728 = vsel %vm653, %v3719, %v3721
    %v3729 = vsel %vm653, %v3721, %v3723
    %v3730 = vsel %vm653, %v3723, %v3725
    %3736 = vst [vmem:[#allocation4 + $0x6b8] sm:$0xff] %v3726
    %3737 = vst [vmem:[#allocation4 + $0x6c0] sm:$0xff] %v3727
    %3738 = vst [vmem:[#allocation4 + $0x6c8] sm:$0xff] %v3728
    %3739 = vst [vmem:[#allocation4 + $0x6d0] sm:$0xff] %v3729
    %3740 = vst [vmem:[#allocation4 + $0x6d8] sm:$0xff] %v3730
    %3741 = vrot.lane.b32.xlu0 %v2442, 28
    %v3742 = vpop.permute.xlu0 %3741
    %3743 = vrot.lane.b32.xlu0 %v2443, 28
    %v3744 = vpop.permute.xlu0 %3743
    %3745 = vrot.lane.b32.xlu0 %v2444, 28
    %v3746 = vpop.permute.xlu0 %3745
    %3747 = vrot.lane.b32.xlu0 %v2445, 28
    %v3748 = vpop.permute.xlu0 %3747
    %3749 = vrot.lane.b32.xlu0 %v2446, 28
    %v3750 = vpop.permute.xlu0 %3749
    %3751 = vrot.lane.b32.xlu0 %v2447, 28
    %v3752 = vpop.permute.xlu0 %3751
    %v3753 = vsel %vm681, %v3742, %v3744
    %v3754 = vsel %vm681, %v3744, %v3746
    %v3755 = vsel %vm681, %v3746, %v3748
    %v3756 = vsel %vm681, %v3748, %v3750
    %v3757 = vsel %vm681, %v3750, %v3752
    %3763 = vst [vmem:[#allocation4 + $0x708] sm:$0xff] %v3753
    %3764 = vst [vmem:[#allocation4 + $0x710] sm:$0xff] %v3754
    %3765 = vst [vmem:[#allocation4 + $0x718] sm:$0xff] %v3755
    %3766 = vst [vmem:[#allocation4 + $0x720] sm:$0xff] %v3756
    %3767 = vst [vmem:[#allocation4 + $0x728] sm:$0xff] %v3757
    %3768 = vrot.lane.b32.xlu0 %v2442, 27
    %v3769 = vpop.permute.xlu0 %3768
    %3770 = vrot.lane.b32.xlu0 %v2443, 27
    %v3771 = vpop.permute.xlu0 %3770
    %3772 = vrot.lane.b32.xlu0 %v2444, 27
    %v3773 = vpop.permute.xlu0 %3772
    %3774 = vrot.lane.b32.xlu0 %v2445, 27
    %v3775 = vpop.permute.xlu0 %3774
    %3776 = vrot.lane.b32.xlu0 %v2446, 27
    %v3777 = vpop.permute.xlu0 %3776
    %3778 = vrot.lane.b32.xlu0 %v2447, 27
    %v3779 = vpop.permute.xlu0 %3778
    %v3780 = vsel %vm709, %v3769, %v3771
    %v3781 = vsel %vm709, %v3771, %v3773
    %v3782 = vsel %vm709, %v3773, %v3775
    %v3783 = vsel %vm709, %v3775, %v3777
    %v3784 = vsel %vm709, %v3777, %v3779
    %3790 = vst [vmem:[#allocation4 + $0x758] sm:$0xff] %v3780
    %3791 = vst [vmem:[#allocation4 + $0x760] sm:$0xff] %v3781
    %3792 = vst [vmem:[#allocation4 + $0x768] sm:$0xff] %v3782
    %3793 = vst [vmem:[#allocation4 + $0x770] sm:$0xff] %v3783
    %3794 = vst [vmem:[#allocation4 + $0x778] sm:$0xff] %v3784
    %3795 = vrot.lane.b32.xlu0 %v2442, 19
    %v3796 = vpop.permute.xlu0 %3795
    %3797 = vrot.lane.b32.xlu0 %v2443, 19
    %v3798 = vpop.permute.xlu0 %3797
    %3799 = vrot.lane.b32.xlu0 %v2444, 19
    %v3800 = vpop.permute.xlu0 %3799
    %3801 = vrot.lane.b32.xlu0 %v2445, 19
    %v3802 = vpop.permute.xlu0 %3801
    %3803 = vrot.lane.b32.xlu0 %v2446, 19
    %v3804 = vpop.permute.xlu0 %3803
    %3805 = vrot.lane.b32.xlu0 %v2447, 19
    %v3806 = vpop.permute.xlu0 %3805
    %v3807 = vsel %vm737, %v3796, %v3798
    %v3808 = vsel %vm737, %v3798, %v3800
    %v3809 = vsel %vm737, %v3800, %v3802
    %v3810 = vsel %vm737, %v3802, %v3804
    %v3811 = vsel %vm737, %v3804, %v3806
    %3817 = vst [vmem:[#allocation4 + $0x7a8] sm:$0xff] %v3807
    %3818 = vst [vmem:[#allocation4 + $0x7b0] sm:$0xff] %v3808
    %3819 = vst [vmem:[#allocation4 + $0x7b8] sm:$0xff] %v3809
    %3820 = vst [vmem:[#allocation4 + $0x7c0] sm:$0xff] %v3810
    %3821 = vst [vmem:[#allocation4 + $0x7c8] sm:$0xff] %v3811
    %3822 = vrot.lane.b32.xlu0 %v2442, 18
    %v3823 = vpop.permute.xlu0 %3822
    %3824 = vrot.lane.b32.xlu0 %v2443, 18
    %v3825 = vpop.permute.xlu0 %3824
    %3826 = vrot.lane.b32.xlu0 %v2444, 18
    %v3827 = vpop.permute.xlu0 %3826
    %3828 = vrot.lane.b32.xlu0 %v2445, 18
    %v3829 = vpop.permute.xlu0 %3828
    %3830 = vrot.lane.b32.xlu0 %v2446, 18
    %v3831 = vpop.permute.xlu0 %3830
    %3832 = vrot.lane.b32.xlu0 %v2447, 18
    %v3833 = vpop.permute.xlu0 %3832
    %v3834 = vsel %vm765, %v3823, %v3825
    %v3835 = vsel %vm765, %v3825, %v3827
    %v3836 = vsel %vm765, %v3827, %v3829
    %v3837 = vsel %vm765, %v3829, %v3831
    %v3838 = vsel %vm765, %v3831, %v3833
    %3844 = vst [vmem:[#allocation4 + $0x7f8] sm:$0xff] %v3834
    %3845 = vst [vmem:[#allocation4 + $0x800] sm:$0xff] %v3835
    %3846 = vst [vmem:[#allocation4 + $0x808] sm:$0xff] %v3836
    %3847 = vst [vmem:[#allocation4 + $0x810] sm:$0xff] %v3837
    %3848 = vst [vmem:[#allocation4 + $0x818] sm:$0xff] %v3838
    %3849 = vrot.lane.b32.xlu0 %v2442, 17
    %v3850 = vpop.permute.xlu0 %3849
    %3851 = vrot.lane.b32.xlu0 %v2443, 17
    %v3852 = vpop.permute.xlu0 %3851
    %3853 = vrot.lane.b32.xlu0 %v2444, 17
    %v3854 = vpop.permute.xlu0 %3853
    %3855 = vrot.lane.b32.xlu0 %v2445, 17
    %v3856 = vpop.permute.xlu0 %3855
    %3857 = vrot.lane.b32.xlu0 %v2446, 17
    %v3858 = vpop.permute.xlu0 %3857
    %3859 = vrot.lane.b32.xlu0 %v2447, 17
    %v3860 = vpop.permute.xlu0 %3859
    %v3861 = vsel %vm793, %v3850, %v3852
    %v3862 = vsel %vm793, %v3852, %v3854
    %v3863 = vsel %vm793, %v3854, %v3856
    %v3864 = vsel %vm793, %v3856, %v3858
    %v3865 = vsel %vm793, %v3858, %v3860
    %3871 = vst [vmem:[#allocation4 + $0x848] sm:$0xff] %v3861
    %3872 = vst [vmem:[#allocation4 + $0x850] sm:$0xff] %v3862
    %3873 = vst [vmem:[#allocation4 + $0x858] sm:$0xff] %v3863
    %3874 = vst [vmem:[#allocation4 + $0x860] sm:$0xff] %v3864
    %3875 = vst [vmem:[#allocation4 + $0x868] sm:$0xff] %v3865
    %3876 = vst [vmem:[#allocation4 + $0x870] sm:$0xff] 0.0
    %3877 = vst [vmem:[#allocation4 + $0x878] sm:$0xff] 0.0
    %3878 = vst [vmem:[#allocation4 + $0x880] sm:$0xff] 0.0
    %3879 = vst [vmem:[#allocation4 + $0x888] sm:$0xff] 0.0
    %3880 = vst [vmem:[#allocation4 + $0x890] sm:$0xff] 0.0
    %3881 = vst [vmem:[#allocation4 + $0x898] sm:$0xff] 0.0
    %3882 = vst [vmem:[#allocation4 + $0x8a0] sm:$0xff] 0.0
    %3883 = vst [vmem:[#allocation4 + $0x8a8] sm:$0xff] 0.0
    %3884 = vst [vmem:[#allocation4 + $0x8b0] sm:$0xff] 0.0
    %3885 = vst [vmem:[#allocation4 + $0x8b8] sm:$0xff] 0.0
    %3886 = vst [vmem:[#allocation4 + $0x8c0] sm:$0xff] 0.0
    %3887 = vst [vmem:[#allocation4 + $0x8c8] sm:$0xff] 0.0
    %3888 = vst [vmem:[#allocation4 + $0x8d0] sm:$0xff] 0.0
    %3889 = vst [vmem:[#allocation4 + $0x8d8] sm:$0xff] 0.0
    %3890 = vst [vmem:[#allocation4 + $0x8e0] sm:$0xff] 0.0
    %3891 = vst [vmem:[#allocation4 + $0x8e8] sm:$0xff] 0.0
    %3892 = vst [vmem:[#allocation4 + $0x8f0] sm:$0xff] 0.0
    %3893 = vst [vmem:[#allocation4 + $0x8f8] sm:$0xff] 0.0
    %3894 = vst [vmem:[#allocation4 + $0x900] sm:$0xff] 0.0
    %3895 = vst [vmem:[#allocation4 + $0x908] sm:$0xff] 0.0
    %3896 = vst [vmem:[#allocation4 + $0x910] sm:$0xff] 0.0
    %3897 = vst [vmem:[#allocation4 + $0x918] sm:$0xff] 0.0
    %3898 = vst [vmem:[#allocation4 + $0x920] sm:$0xff] 0.0
    %3899 = vst [vmem:[#allocation4 + $0x928] sm:$0xff] 0.0
    %3900 = vst [vmem:[#allocation4 + $0x930] sm:$0xff] 0.0
    %3901 = vst [vmem:[#allocation4 + $0x938] sm:$0xff] 0.0
    %3902 = vst [vmem:[#allocation4 + $0x940] sm:$0xff] 0.0
    %3903 = vst [vmem:[#allocation4 + $0x948] sm:$0xff] 0.0
    %3904 = vst [vmem:[#allocation4 + $0x950] sm:$0xff] 0.0
    %3905 = vst [vmem:[#allocation4 + $0x958] sm:$0xff] 0.0
    %3906 = vst [vmem:[#allocation4 + $0x960] sm:$0xff] 0.0
    %3907 = vst [vmem:[#allocation4 + $0x968] sm:$0xff] 0.0
    %3908 = vst [vmem:[#allocation4 + $0x970] sm:$0xff] 0.0
    %3909 = vst [vmem:[#allocation4 + $0x978] sm:$0xff] 0.0
    %3910 = vst [vmem:[#allocation4 + $0x980] sm:$0xff] 0.0
    %3911 = vst [vmem:[#allocation4 + $0x988] sm:$0xff] 0.0
    %3912 = vst [vmem:[#allocation4 + $0x990] sm:$0xff] 0.0
    %3913 = vst [vmem:[#allocation4 + $0x998] sm:$0xff] 0.0
    %3914 = vst [vmem:[#allocation4 + $0x9a0] sm:$0xff] 0.0
    %3915 = vst [vmem:[#allocation4 + $0x9a8] sm:$0xff] 0.0
    %3916 = vst [vmem:[#allocation4 + $0x9b0] sm:$0xff] 0.0
    %3917 = vst [vmem:[#allocation4 + $0x9b8] sm:$0xff] 0.0
    %3918 = vst [vmem:[#allocation4 + $0x9c0] sm:$0xff] 0.0
    %3919 = vst [vmem:[#allocation4 + $0x9c8] sm:$0xff] 0.0
    %3920 = vst [vmem:[#allocation4 + $0x9d0] sm:$0xff] 0.0
    %3921 = vst [vmem:[#allocation4 + $0x9d8] sm:$0xff] 0.0
    %3922 = vst [vmem:[#allocation4 + $0x9e0] sm:$0xff] 0.0
    %3923 = vst [vmem:[#allocation4 + $0x9e8] sm:$0xff] 0.0
    %3924 = vst [vmem:[#allocation4 + $0x9f0] sm:$0xff] 0.0
    %3925 = vst [vmem:[#allocation4 + $0x9f8] sm:$0xff] 0.0
    %v3926 = vld [vmem:[%s3] sm:$0xff]
    %v3927 = vld [vmem:[%s3 + $0x8] sm:$0xff]
    %v3928 = vld [vmem:[#allocation4] sm:$0xff]
    %v3929 = vld [vmem:[#allocation4 + $0x8] sm:$0xff]
    %v3930 = vld [vmem:[#allocation4 + $0x10] sm:$0xff]
    %v3931 = vld [vmem:[#allocation4 + $0x18] sm:$0xff]
    %v3932 = vld [vmem:[#allocation4 + $0x20] sm:$0xff]
    %v3933 = vld [vmem:[#allocation4 + $0x28] sm:$0xff]
    %v3934 = vld [vmem:[#allocation4 + $0x30] sm:$0xff]
    %v3935 = vld [vmem:[#allocation4 + $0x38] sm:$0xff]
    %v3936 = vld [vmem:[#allocation4 + $0x40] sm:$0xff]
    %v3937 = vld [vmem:[#allocation4 + $0x48] sm:$0xff]
    %v3938 = vld [vmem:[#allocation4 + $0x50] sm:$0xff]
    %v3939 = vld [vmem:[#allocation4 + $0x58] sm:$0xff]
    %v3940 = vld [vmem:[#allocation4 + $0x60] sm:$0xff]
    %v3941 = vld [vmem:[#allocation4 + $0x68] sm:$0xff]
    %v3942 = vld [vmem:[#allocation4 + $0x70] sm:$0xff]
    %v3943 = vld [vmem:[#allocation4 + $0x78] sm:$0xff]
    %v3944 = vld [vmem:[#allocation4 + $0x80] sm:$0xff]
    %v3945 = vld [vmem:[#allocation4 + $0x88] sm:$0xff]
    %v3946 = vld [vmem:[#allocation4 + $0x90] sm:$0xff]
    %v3947 = vld [vmem:[#allocation4 + $0x98] sm:$0xff]
    %v3948 = vld [vmem:[#allocation4 + $0xa0] sm:$0xff]
    %v3949 = vld [vmem:[#allocation4 + $0xa8] sm:$0xff]
    %v3950 = vld [vmem:[#allocation4 + $0xb0] sm:$0xff]
    %v3951 = vld [vmem:[#allocation4 + $0xb8] sm:$0xff]
    %v3952 = vld [vmem:[#allocation4 + $0xc0] sm:$0xff]
    %v3953 = vld [vmem:[#allocation4 + $0xc8] sm:$0xff]
    %v3954 = vld [vmem:[#allocation4 + $0xd0] sm:$0xff]
    %v3955 = vld [vmem:[#allocation4 + $0xd8] sm:$0xff]
    %v3956 = vld [vmem:[#allocation4 + $0xe0] sm:$0xff]
    %v3957 = vld [vmem:[#allocation4 + $0xe8] sm:$0xff]
    %v3958 = vld [vmem:[#allocation4 + $0xf0] sm:$0xff]
    %v3959 = vld [vmem:[#allocation4 + $0xf8] sm:$0xff]
    %v3960 = vld [vmem:[#allocation4 + $0x100] sm:$0xff]
    %v3961 = vld [vmem:[#allocation4 + $0x108] sm:$0xff]
    %v3962 = vld [vmem:[#allocation4 + $0x110] sm:$0xff]
    %v3963 = vld [vmem:[#allocation4 + $0x118] sm:$0xff]
    %v3964 = vld [vmem:[#allocation4 + $0x120] sm:$0xff]
    %v3965 = vld [vmem:[#allocation4 + $0x128] sm:$0xff]
    %v3966 = vld [vmem:[#allocation4 + $0x130] sm:$0xff]
    %v3967 = vld [vmem:[#allocation4 + $0x138] sm:$0xff]
    %v3968 = vld [vmem:[#allocation4 + $0x140] sm:$0xff]
    %v3969 = vld [vmem:[#allocation4 + $0x148] sm:$0xff]
    %v3970 = vld [vmem:[#allocation4 + $0x150] sm:$0xff]
    %v3971 = vld [vmem:[#allocation4 + $0x158] sm:$0xff]
    %v3972 = vld [vmem:[#allocation4 + $0x160] sm:$0xff]
    %v3973 = vld [vmem:[#allocation4 + $0x168] sm:$0xff]
    %v3974 = vld [vmem:[#allocation4 + $0x170] sm:$0xff]
    %v3975 = vld [vmem:[#allocation4 + $0x178] sm:$0xff]
    %v3976 = vld [vmem:[#allocation4 + $0x180] sm:$0xff]
    %v3977 = vld [vmem:[#allocation4 + $0x188] sm:$0xff]
    %v3978 = vld [vmem:[#allocation4 + $0x190] sm:$0xff]
    %v3979 = vld [vmem:[#allocation4 + $0x198] sm:$0xff]
    %v3980 = vld [vmem:[#allocation4 + $0x1a0] sm:$0xff]
    %v3981 = vld [vmem:[#allocation4 + $0x1a8] sm:$0xff]
    %v3982 = vld [vmem:[#allocation4 + $0x1b0] sm:$0xff]
    %v3983 = vld [vmem:[#allocation4 + $0x1b8] sm:$0xff]
    %v3984 = vld [vmem:[#allocation4 + $0x1c0] sm:$0xff]
    %v3985 = vld [vmem:[#allocation4 + $0x1c8] sm:$0xff]
    %v3986 = vld [vmem:[#allocation4 + $0x1d0] sm:$0xff]
    %v3987 = vld [vmem:[#allocation4 + $0x1d8] sm:$0xff]
    %v3988 = vld [vmem:[#allocation4 + $0x1e0] sm:$0xff]
    %v3989 = vld [vmem:[#allocation4 + $0x1e8] sm:$0xff]
    %v3990 = vld [vmem:[#allocation4 + $0x1f0] sm:$0xff]
    %v3991 = vld [vmem:[#allocation4 + $0x1f8] sm:$0xff]
    %v3992 = vld [vmem:[#allocation4 + $0x200] sm:$0xff]
    %v3993 = vld [vmem:[#allocation4 + $0x208] sm:$0xff]
    %v3994 = vld [vmem:[#allocation4 + $0x210] sm:$0xff]
    %v3995 = vld [vmem:[#allocation4 + $0x218] sm:$0xff]
    %v3996 = vld [vmem:[#allocation4 + $0x220] sm:$0xff]
    %v3997 = vld [vmem:[#allocation4 + $0x228] sm:$0xff]
    %v3998 = vld [vmem:[#allocation4 + $0x230] sm:$0xff]
    %v3999 = vld [vmem:[#allocation4 + $0x238] sm:$0xff]
    %v4000 = vld [vmem:[#allocation4 + $0x240] sm:$0xff]
    %v4001 = vld [vmem:[#allocation4 + $0x248] sm:$0xff]
    %v4002 = vld [vmem:[#allocation4 + $0x250] sm:$0xff]
    %v4003 = vld [vmem:[#allocation4 + $0x258] sm:$0xff]
    %v4004 = vld [vmem:[#allocation4 + $0x260] sm:$0xff]
    %v4005 = vld [vmem:[#allocation4 + $0x268] sm:$0xff]
    %v4006 = vld [vmem:[#allocation4 + $0x270] sm:$0xff]
    %v4007 = vld [vmem:[#allocation4 + $0x278] sm:$0xff]
    %v4008 = vld [vmem:[#allocation4 + $0x280] sm:$0xff]
    %v4009 = vld [vmem:[#allocation4 + $0x288] sm:$0xff]
    %v4010 = vld [vmem:[#allocation4 + $0x290] sm:$0xff]
    %v4011 = vld [vmem:[#allocation4 + $0x298] sm:$0xff]
    %v4012 = vld [vmem:[#allocation4 + $0x2a0] sm:$0xff]
    %v4013 = vld [vmem:[#allocation4 + $0x2a8] sm:$0xff]
    %v4014 = vld [vmem:[#allocation4 + $0x2b0] sm:$0xff]
    %v4015 = vld [vmem:[#allocation4 + $0x2b8] sm:$0xff]
    %v4016 = vld [vmem:[#allocation4 + $0x2c0] sm:$0xff]
    %v4017 = vld [vmem:[#allocation4 + $0x2c8] sm:$0xff]
    %v4018 = vld [vmem:[#allocation4 + $0x2d0] sm:$0xff]
    %v4019 = vld [vmem:[#allocation4 + $0x2d8] sm:$0xff]
    %v4020 = vld [vmem:[#allocation4 + $0x2e0] sm:$0xff]
    %v4021 = vld [vmem:[#allocation4 + $0x2e8] sm:$0xff]
    %v4022 = vld [vmem:[#allocation4 + $0x2f0] sm:$0xff]
    %v4023 = vld [vmem:[#allocation4 + $0x2f8] sm:$0xff]
    %v4024 = vld [vmem:[#allocation4 + $0x300] sm:$0xff]
    %v4025 = vld [vmem:[#allocation4 + $0x308] sm:$0xff]
    %v4026 = vld [vmem:[#allocation4 + $0x310] sm:$0xff]
    %v4027 = vld [vmem:[#allocation4 + $0x318] sm:$0xff]
    %v4028 = vld [vmem:[#allocation4 + $0x320] sm:$0xff]
    %v4029 = vld [vmem:[#allocation4 + $0x328] sm:$0xff]
    %v4030 = vld [vmem:[#allocation4 + $0x330] sm:$0xff]
    %v4031 = vld [vmem:[#allocation4 + $0x338] sm:$0xff]
    %v4032 = vld [vmem:[#allocation4 + $0x340] sm:$0xff]
    %v4033 = vld [vmem:[#allocation4 + $0x348] sm:$0xff]
    %v4034 = vld [vmem:[#allocation4 + $0x350] sm:$0xff]
    %v4035 = vld [vmem:[#allocation4 + $0x358] sm:$0xff]
    %v4036 = vld [vmem:[#allocation4 + $0x360] sm:$0xff]
    %v4037 = vld [vmem:[#allocation4 + $0x368] sm:$0xff]
    %v4038 = vld [vmem:[#allocation4 + $0x370] sm:$0xff]
    %v4039 = vld [vmem:[#allocation4 + $0x378] sm:$0xff]
    %v4040 = vld [vmem:[#allocation4 + $0x380] sm:$0xff]
    %v4041 = vld [vmem:[#allocation4 + $0x388] sm:$0xff]
    %v4042 = vld [vmem:[#allocation4 + $0x390] sm:$0xff]
    %v4043 = vld [vmem:[#allocation4 + $0x398] sm:$0xff]
    %v4044 = vld [vmem:[#allocation4 + $0x3a0] sm:$0xff]
    %v4045 = vld [vmem:[#allocation4 + $0x3a8] sm:$0xff]
    %v4046 = vld [vmem:[#allocation4 + $0x3b0] sm:$0xff]
    %v4047 = vld [vmem:[#allocation4 + $0x3b8] sm:$0xff]
    %v4048 = vld [vmem:[#allocation4 + $0x3c0] sm:$0xff]
    %v4049 = vld [vmem:[#allocation4 + $0x3c8] sm:$0xff]
    %v4050 = vld [vmem:[#allocation4 + $0x3d0] sm:$0xff]
    %v4051 = vld [vmem:[#allocation4 + $0x3d8] sm:$0xff]
    %v4052 = vld [vmem:[#allocation4 + $0x3e0] sm:$0xff]
    %v4053 = vld [vmem:[#allocation4 + $0x3e8] sm:$0xff]
    %v4054 = vld [vmem:[#allocation4 + $0x3f0] sm:$0xff]
    %v4055 = vld [vmem:[#allocation4 + $0x3f8] sm:$0xff]
    %v4056 = vld [vmem:[#allocation4 + $0x400] sm:$0xff]
    %v4057 = vld [vmem:[#allocation4 + $0x408] sm:$0xff]
    %v4058 = vld [vmem:[#allocation4 + $0x410] sm:$0xff]
    %v4059 = vld [vmem:[#allocation4 + $0x418] sm:$0xff]
    %v4060 = vld [vmem:[#allocation4 + $0x420] sm:$0xff]
    %v4061 = vld [vmem:[#allocation4 + $0x428] sm:$0xff]
    %v4062 = vld [vmem:[#allocation4 + $0x430] sm:$0xff]
    %v4063 = vld [vmem:[#allocation4 + $0x438] sm:$0xff]
    %v4064 = vld [vmem:[#allocation4 + $0x440] sm:$0xff]
    %v4065 = vld [vmem:[#allocation4 + $0x448] sm:$0xff]
    %v4066 = vld [vmem:[#allocation4 + $0x450] sm:$0xff]
    %v4067 = vld [vmem:[#allocation4 + $0x458] sm:$0xff]
    %v4068 = vld [vmem:[#allocation4 + $0x460] sm:$0xff]
    %v4069 = vld [vmem:[#allocation4 + $0x468] sm:$0xff]
    %v4070 = vld [vmem:[#allocation4 + $0x470] sm:$0xff]
    %v4071 = vld [vmem:[#allocation4 + $0x478] sm:$0xff]
    %v4072 = vld [vmem:[#allocation4 + $0x480] sm:$0xff]
    %v4073 = vld [vmem:[#allocation4 + $0x488] sm:$0xff]
    %v4074 = vld [vmem:[#allocation4 + $0x490] sm:$0xff]
    %v4075 = vld [vmem:[#allocation4 + $0x498] sm:$0xff]
    %v4076 = vld [vmem:[#allocation4 + $0x4a0] sm:$0xff]
    %v4077 = vld [vmem:[#allocation4 + $0x4a8] sm:$0xff]
    %v4078 = vld [vmem:[#allocation4 + $0x4b0] sm:$0xff]
    %v4079 = vld [vmem:[#allocation4 + $0x4b8] sm:$0xff]
    %v4080 = vld [vmem:[#allocation4 + $0x4c0] sm:$0xff]
    %v4081 = vld [vmem:[#allocation4 + $0x4c8] sm:$0xff]
    %v4082 = vld [vmem:[#allocation4 + $0x4d0] sm:$0xff]
    %v4083 = vld [vmem:[#allocation4 + $0x4d8] sm:$0xff]
    %v4084 = vld [vmem:[#allocation4 + $0x4e0] sm:$0xff]
    %v4085 = vld [vmem:[#allocation4 + $0x4e8] sm:$0xff]
    %v4086 = vld [vmem:[#allocation4 + $0x4f0] sm:$0xff]
    %v4087 = vld [vmem:[#allocation4 + $0x4f8] sm:$0xff]
    %v4088 = vld [vmem:[#allocation4 + $0x500] sm:$0xff]
    %v4089 = vld [vmem:[#allocation4 + $0x508] sm:$0xff]
    %v4090 = vld [vmem:[#allocation4 + $0x510] sm:$0xff]
    %v4091 = vld [vmem:[#allocation4 + $0x518] sm:$0xff]
    %v4092 = vld [vmem:[#allocation4 + $0x520] sm:$0xff]
    %v4093 = vld [vmem:[#allocation4 + $0x528] sm:$0xff]
    %v4094 = vld [vmem:[#allocation4 + $0x530] sm:$0xff]
    %v4095 = vld [vmem:[#allocation4 + $0x538] sm:$0xff]
    %v4096 = vld [vmem:[#allocation4 + $0x540] sm:$0xff]
    %v4097 = vld [vmem:[#allocation4 + $0x548] sm:$0xff]
    %v4098 = vld [vmem:[#allocation4 + $0x550] sm:$0xff]
    %v4099 = vld [vmem:[#allocation4 + $0x558] sm:$0xff]
    %v4100 = vld [vmem:[#allocation4 + $0x560] sm:$0xff]
    %v4101 = vld [vmem:[#allocation4 + $0x568] sm:$0xff]
    %v4102 = vld [vmem:[#allocation4 + $0x570] sm:$0xff]
    %v4103 = vld [vmem:[#allocation4 + $0x578] sm:$0xff]
    %v4104 = vld [vmem:[#allocation4 + $0x580] sm:$0xff]
    %v4105 = vld [vmem:[#allocation4 + $0x588] sm:$0xff]
    %v4106 = vld [vmem:[#allocation4 + $0x590] sm:$0xff]
    %v4107 = vld [vmem:[#allocation4 + $0x598] sm:$0xff]
    %v4108 = vld [vmem:[#allocation4 + $0x5a0] sm:$0xff]
    %v4109 = vld [vmem:[#allocation4 + $0x5a8] sm:$0xff]
    %v4110 = vld [vmem:[#allocation4 + $0x5b0] sm:$0xff]
    %v4111 = vld [vmem:[#allocation4 + $0x5b8] sm:$0xff]
    %v4112 = vld [vmem:[#allocation4 + $0x5c0] sm:$0xff]
    %v4113 = vld [vmem:[#allocation4 + $0x5c8] sm:$0xff]
    %v4114 = vld [vmem:[#allocation4 + $0x5d0] sm:$0xff]
    %v4115 = vld [vmem:[#allocation4 + $0x5d8] sm:$0xff]
    %v4116 = vld [vmem:[#allocation4 + $0x5e0] sm:$0xff]
    %v4117 = vld [vmem:[#allocation4 + $0x5e8] sm:$0xff]
    %v4118 = vld [vmem:[#allocation4 + $0x5f0] sm:$0xff]
    %v4119 = vld [vmem:[#allocation4 + $0x5f8] sm:$0xff]
    %v4120 = vld [vmem:[#allocation4 + $0x600] sm:$0xff]
    %v4121 = vld [vmem:[#allocation4 + $0x608] sm:$0xff]
    %v4122 = vld [vmem:[#allocation4 + $0x610] sm:$0xff]
    %v4123 = vld [vmem:[#allocation4 + $0x618] sm:$0xff]
    %v4124 = vld [vmem:[#allocation4 + $0x620] sm:$0xff]
    %v4125 = vld [vmem:[#allocation4 + $0x628] sm:$0xff]
    %v4126 = vld [vmem:[#allocation4 + $0x630] sm:$0xff]
    %v4127 = vld [vmem:[#allocation4 + $0x638] sm:$0xff]
    %v4128 = vld [vmem:[#allocation4 + $0x640] sm:$0xff]
    %v4129 = vld [vmem:[#allocation4 + $0x648] sm:$0xff]
    %v4130 = vld [vmem:[#allocation4 + $0x650] sm:$0xff]
    %v4131 = vld [vmem:[#allocation4 + $0x658] sm:$0xff]
    %v4132 = vld [vmem:[#allocation4 + $0x660] sm:$0xff]
    %v4133 = vld [vmem:[#allocation4 + $0x668] sm:$0xff]
    %v4134 = vld [vmem:[#allocation4 + $0x670] sm:$0xff]
    %v4135 = vld [vmem:[#allocation4 + $0x678] sm:$0xff]
    %v4136 = vld [vmem:[#allocation4 + $0x680] sm:$0xff]
    %v4137 = vld [vmem:[#allocation4 + $0x688] sm:$0xff]
    %v4138 = vld [vmem:[#allocation4 + $0x690] sm:$0xff]
    %v4139 = vld [vmem:[#allocation4 + $0x698] sm:$0xff]
    %v4140 = vld [vmem:[#allocation4 + $0x6a0] sm:$0xff]
    %v4141 = vld [vmem:[#allocation4 + $0x6a8] sm:$0xff]
    %v4142 = vld [vmem:[#allocation4 + $0x6b0] sm:$0xff]
    %v4143 = vld [vmem:[#allocation4 + $0x6b8] sm:$0xff]
    %v4144 = vld [vmem:[#allocation4 + $0x6c0] sm:$0xff]
    %v4145 = vld [vmem:[#allocation4 + $0x6c8] sm:$0xff]
    %v4146 = vld [vmem:[#allocation4 + $0x6d0] sm:$0xff]
    %v4147 = vld [vmem:[#allocation4 + $0x6d8] sm:$0xff]
    %v4148 = vld [vmem:[#allocation4 + $0x6e0] sm:$0xff]
    %v4149 = vld [vmem:[#allocation4 + $0x6e8] sm:$0xff]
    %v4150 = vld [vmem:[#allocation4 + $0x6f0] sm:$0xff]
    %v4151 = vld [vmem:[#allocation4 + $0x6f8] sm:$0xff]
    %v4152 = vld [vmem:[#allocation4 + $0x700] sm:$0xff]
    %v4153 = vld [vmem:[#allocation4 + $0x708] sm:$0xff]
    %v4154 = vld [vmem:[#allocation4 + $0x710] sm:$0xff]
    %v4155 = vld [vmem:[#allocation4 + $0x718] sm:$0xff]
    %v4156 = vld [vmem:[#allocation4 + $0x720] sm:$0xff]
    %v4157 = vld [vmem:[#allocation4 + $0x728] sm:$0xff]
    %v4158 = vld [vmem:[#allocation4 + $0x730] sm:$0xff]
    %v4159 = vld [vmem:[#allocation4 + $0x738] sm:$0xff]
    %v4160 = vld [vmem:[#allocation4 + $0x740] sm:$0xff]
    %v4161 = vld [vmem:[#allocation4 + $0x748] sm:$0xff]
    %v4162 = vld [vmem:[#allocation4 + $0x750] sm:$0xff]
    %v4163 = vld [vmem:[#allocation4 + $0x758] sm:$0xff]
    %v4164 = vld [vmem:[#allocation4 + $0x760] sm:$0xff]
    %v4165 = vld [vmem:[#allocation4 + $0x768] sm:$0xff]
    %v4166 = vld [vmem:[#allocation4 + $0x770] sm:$0xff]
    %v4167 = vld [vmem:[#allocation4 + $0x778] sm:$0xff]
    %v4168 = vld [vmem:[#allocation4 + $0x780] sm:$0xff]
    %v4169 = vld [vmem:[#allocation4 + $0x788] sm:$0xff]
    %v4170 = vld [vmem:[#allocation4 + $0x790] sm:$0xff]
    %v4171 = vld [vmem:[#allocation4 + $0x798] sm:$0xff]
    %v4172 = vld [vmem:[#allocation4 + $0x7a0] sm:$0xff]
    %v4173 = vld [vmem:[#allocation4 + $0x7a8] sm:$0xff]
    %v4174 = vld [vmem:[#allocation4 + $0x7b0] sm:$0xff]
    %v4175 = vld [vmem:[#allocation4 + $0x7b8] sm:$0xff]
    %v4176 = vld [vmem:[#allocation4 + $0x7c0] sm:$0xff]
    %v4177 = vld [vmem:[#allocation4 + $0x7c8] sm:$0xff]
    %v4178 = vld [vmem:[#allocation4 + $0x7d0] sm:$0xff]
    %v4179 = vld [vmem:[#allocation4 + $0x7d8] sm:$0xff]
    %v4180 = vld [vmem:[#allocation4 + $0x7e0] sm:$0xff]
    %v4181 = vld [vmem:[#allocation4 + $0x7e8] sm:$0xff]
    %v4182 = vld [vmem:[#allocation4 + $0x7f0] sm:$0xff]
    %v4183 = vld [vmem:[#allocation4 + $0x7f8] sm:$0xff]
    %v4184 = vld [vmem:[#allocation4 + $0x800] sm:$0xff]
    %v4185 = vld [vmem:[#allocation4 + $0x808] sm:$0xff]
    %v4186 = vld [vmem:[#allocation4 + $0x810] sm:$0xff]
    %v4187 = vld [vmem:[#allocation4 + $0x818] sm:$0xff]
    %v4188 = vld [vmem:[#allocation4 + $0x820] sm:$0xff]
    %v4189 = vld [vmem:[#allocation4 + $0x828] sm:$0xff]
    %v4190 = vld [vmem:[#allocation4 + $0x830] sm:$0xff]
    %v4191 = vld [vmem:[#allocation4 + $0x838] sm:$0xff]
    %v4192 = vld [vmem:[#allocation4 + $0x840] sm:$0xff]
    %v4193 = vld [vmem:[#allocation4 + $0x848] sm:$0xff]
    %v4194 = vld [vmem:[#allocation4 + $0x850] sm:$0xff]
    %v4195 = vld [vmem:[#allocation4 + $0x858] sm:$0xff]
    %v4196 = vld [vmem:[#allocation4 + $0x860] sm:$0xff]
    %v4197 = vld [vmem:[#allocation4 + $0x868] sm:$0xff]
    %v4198 = vld [vmem:[#allocation4 + $0x870] sm:$0xff]
    %v4199 = vld [vmem:[#allocation4 + $0x878] sm:$0xff]
    %v4200 = vld [vmem:[#allocation4 + $0x880] sm:$0xff]
    %v4201 = vld [vmem:[#allocation4 + $0x888] sm:$0xff]
    %v4202 = vld [vmem:[#allocation4 + $0x890] sm:$0xff]
    %v4203 = vld [vmem:[#allocation4 + $0x898] sm:$0xff]
    %v4204 = vld [vmem:[#allocation4 + $0x8a0] sm:$0xff]
    %v4205 = vld [vmem:[#allocation4 + $0x8a8] sm:$0xff]
    %v4206 = vld [vmem:[#allocation4 + $0x8b0] sm:$0xff]
    %v4207 = vld [vmem:[#allocation4 + $0x8b8] sm:$0xff]
    %v4208 = vld [vmem:[#allocation4 + $0x8c0] sm:$0xff]
    %v4209 = vld [vmem:[#allocation4 + $0x8c8] sm:$0xff]
    %v4210 = vld [vmem:[#allocation4 + $0x8d0] sm:$0xff]
    %v4211 = vld [vmem:[#allocation4 + $0x8d8] sm:$0xff]
    %v4212 = vld [vmem:[#allocation4 + $0x8e0] sm:$0xff]
    %v4213 = vld [vmem:[#allocation4 + $0x8e8] sm:$0xff]
    %v4214 = vld [vmem:[#allocation4 + $0x8f0] sm:$0xff]
    %v4215 = vld [vmem:[#allocation4 + $0x8f8] sm:$0xff]
    %v4216 = vld [vmem:[#allocation4 + $0x900] sm:$0xff]
    %v4217 = vld [vmem:[#allocation4 + $0x908] sm:$0xff]
    %v4218 = vld [vmem:[#allocation4 + $0x910] sm:$0xff]
    %v4219 = vld [vmem:[#allocation4 + $0x918] sm:$0xff]
    %v4220 = vld [vmem:[#allocation4 + $0x920] sm:$0xff]
    %v4221 = vld [vmem:[#allocation4 + $0x928] sm:$0xff]
    %v4222 = vld [vmem:[#allocation4 + $0x930] sm:$0xff]
    %v4223 = vld [vmem:[#allocation4 + $0x938] sm:$0xff]
    %v4224 = vld [vmem:[#allocation4 + $0x940] sm:$0xff]
    %v4225 = vld [vmem:[#allocation4 + $0x948] sm:$0xff]
    %v4226 = vld [vmem:[#allocation4 + $0x950] sm:$0xff]
    %v4227 = vld [vmem:[#allocation4 + $0x958] sm:$0xff]
    %v4228 = vld [vmem:[#allocation4 + $0x960] sm:$0xff]
    %v4229 = vld [vmem:[#allocation4 + $0x968] sm:$0xff]
    %v4230 = vld [vmem:[#allocation4 + $0x970] sm:$0xff]
    %v4231 = vld [vmem:[#allocation4 + $0x978] sm:$0xff]
    %v4232 = vld [vmem:[#allocation4 + $0x980] sm:$0xff]
    %v4233 = vld [vmem:[#allocation4 + $0x988] sm:$0xff]
    %v4234 = vld [vmem:[#allocation4 + $0x990] sm:$0xff]
    %v4235 = vld [vmem:[#allocation4 + $0x998] sm:$0xff]
    %v4236 = vld [vmem:[#allocation4 + $0x9a0] sm:$0xff]
    %v4237 = vld [vmem:[#allocation4 + $0x9a8] sm:$0xff]
    %v4238 = vld [vmem:[#allocation4 + $0x9b0] sm:$0xff]
    %v4239 = vld [vmem:[#allocation4 + $0x9b8] sm:$0xff]
    %v4240 = vld [vmem:[#allocation4 + $0x9c0] sm:$0xff]
    %v4241 = vld [vmem:[#allocation4 + $0x9c8] sm:$0xff]
    %v4242 = vld [vmem:[#allocation4 + $0x9d0] sm:$0xff]
    %v4243 = vld [vmem:[#allocation4 + $0x9d8] sm:$0xff]
    %v4244 = vld [vmem:[#allocation4 + $0x9e0] sm:$0xff]
    %v4245 = vld [vmem:[#allocation4 + $0x9e8] sm:$0xff]
    %v4246 = vld [vmem:[#allocation4 + $0x9f0] sm:$0xff]
    %v4247 = vld [vmem:[#allocation4 + $0x9f8] sm:$0xff]
    %v4248 = vld [vmem:[%s4] sm:$0xff]
    %4250 = vset.pattern.permute.xlu0 0
    %4251 = vperm.xlu0 %4250, %v4248
    %v4252 = vpop.permute.xlu0 %4251
    %4254 = vmatprep.subr.mxu0 %v3929
    %4255 = vmatpush1.msra.mxu0 %v3928
    %4256 = vmatprep.subr.mxu0 %v3939
    %4257 = vmatpush1.msra.mxu0 %v3938
    %4258 = vmatprep.subr.mxu0 %v3949
    %4259 = vmatpush1.msra.mxu0 %v3948
    %4260 = vmatprep.subr.mxu0 %v3959
    %4261 = vmatpush1.msra.mxu0 %v3958
    %4262 = vmatprep.subr.mxu0 %v3969
    %4263 = vmatpush1.msra.mxu0 %v3968
    %4264 = vmatprep.subr.mxu0 %v3979
    %4265 = vmatpush1.msra.mxu0 %v3978
    %4266 = vmatprep.subr.mxu0 %v3989
    %4267 = vmatpush1.msra.mxu0 %v3988
    %4268 = vmatprep.subr.mxu0 %v3999
    %4269 = vmatpush1.msra.mxu0 %v3998
    %4270 = vmatprep.subr.mxu0 %v4009
    %4271 = vmatpush1.msra.mxu0 %v4008
    %4272 = vmatprep.subr.mxu0 %v4019
    %4273 = vmatpush1.msra.mxu0 %v4018
    %4274 = vmatprep.subr.mxu0 %v4029
    %4275 = vmatpush1.msra.mxu0 %v4028
    %4276 = vmatprep.subr.mxu0 %v4039
    %4277 = vmatpush1.msra.mxu0 %v4038
    %4278 = vmatprep.subr.mxu0 %v4049
    %4279 = vmatpush1.msra.mxu0 %v4048
    %4280 = vmatprep.subr.mxu0 %v4059
    %4281 = vmatpush1.msra.mxu0 %v4058
    %4282 = vmatprep.subr.mxu0 %v4069
    %4283 = vmatpush1.msra.mxu0 %v4068
    %4284 = vmatprep.subr.mxu0 %v4079
    %4285 = vmatpush1.msra.mxu0 %v4078
    %4286 = vmatprep.subr.mxu0 %v4089
    %4287 = vmatpush1.msra.mxu0 %v4088
    %4288 = vmatprep.subr.mxu0 %v4099
    %4289 = vmatpush1.msra.mxu0 %v4098
    %4290 = vmatprep.subr.mxu0 %v4109
    %4291 = vmatpush1.msra.mxu0 %v4108
    %4292 = vmatprep.subr.mxu0 %v4119
    %4293 = vmatpush1.msra.mxu0 %v4118
    %4294 = vmatprep.subr.mxu0 %v4129
    %4295 = vmatpush1.msra.mxu0 %v4128
    %4296 = vmatprep.subr.mxu0 %v4139
    %4297 = vmatpush1.msra.mxu0 %v4138
    %4298 = vmatprep.subr.mxu0 %v4149
    %4299 = vmatpush1.msra.mxu0 %v4148
    %4300 = vmatprep.subr.mxu0 %v4159
    %4301 = vmatpush1.msra.mxu0 %v4158
    %4302 = vmatprep.subr.mxu0 %v4169
    %4303 = vmatpush1.msra.mxu0 %v4168
    %4304 = vmatprep.subr.mxu0 %v4179
    %4305 = vmatpush1.msra.mxu0 %v4178
    %4306 = vmatprep.subr.mxu0 %v4189
    %4307 = vmatpush1.msra.mxu0 %v4188
    %4308 = vmatprep.subr.mxu0 %v4199
    %4309 = vmatpush1.msra.mxu0 %v4198
    %4310 = vmatprep.subr.mxu0 %v4209
    %4311 = vmatpush1.msra.mxu0 %v4208
    %4312 = vmatprep.subr.mxu0 %v4219
    %4313 = vmatpush1.msra.mxu0 %v4218
    %4314 = vmatprep.subr.mxu0 %v4229
    %4315 = vmatpush1.msra.mxu0 %v4228
    %4316 = vmatprep.subr.mxu0 %v4239
    %4317 = vmatpush1.msra.mxu0 %v4238
    %4318 = vmatprep.mubr.f32.mxu0 %v3927
    %4319 = vmatmul.mubr.f32.gmra.mrb[0].mxu0 %v3926
    %v4320 = vpop.f32.mrb[0].mxu0
    %v4321 = vadd.f32 %v4252, %v4320
    %v4322 = vpop.f32.mrb[0].mxu0
    %v4323 = vadd.f32 %v4252, %v4322
    %4324 = vdwg.mxu0
    %4325 = vmatprep.subr.mxu0 %v3931
    %4326 = vmatpush1.msra.mxu0 %v3930
    %4327 = vmatprep.subr.mxu0 %v3941
    %4328 = vmatpush1.msra.mxu0 %v3940
    %4329 = vmatprep.subr.mxu0 %v3951
    %4330 = vmatpush1.msra.mxu0 %v3950
    %4331 = vmatprep.subr.mxu0 %v3961
    %4332 = vmatpush1.msra.mxu0 %v3960
    %4333 = vmatprep.subr.mxu0 %v3971
    %4334 = vmatpush1.msra.mxu0 %v3970
    %4335 = vmatprep.subr.mxu0 %v3981
    %4336 = vmatpush1.msra.mxu0 %v3980
    %4337 = vmatprep.subr.mxu0 %v3991
    %4338 = vmatpush1.msra.mxu0 %v3990
    %4339 = vmatprep.subr.mxu0 %v4001
    %4340 = vmatpush1.msra.mxu0 %v4000
    %4341 = vmatprep.subr.mxu0 %v4011
    %4342 = vmatpush1.msra.mxu0 %v4010
    %4343 = vmatprep.subr.mxu0 %v4021
    %4344 = vmatpush1.msra.mxu0 %v4020
    %4345 = vmatprep.subr.mxu0 %v4031
    %4346 = vmatpush1.msra.mxu0 %v4030
    %4347 = vmatprep.subr.mxu0 %v4041
    %4348 = vmatpush1.msra.mxu0 %v4040
    %4349 = vmatprep.subr.mxu0 %v4051
    %4350 = vmatpush1.msra.mxu0 %v4050
    %4351 = vmatprep.subr.mxu0 %v4061
    %4352 = vmatpush1.msra.mxu0 %v4060
    %4353 = vmatprep.subr.mxu0 %v4071
    %4354 = vmatpush1.msra.mxu0 %v4070
    %4355 = vmatprep.subr.mxu0 %v4081
    %4356 = vmatpush1.msra.mxu0 %v4080
    %4357 = vmatprep.subr.mxu0 %v4091
    %4358 = vmatpush1.msra.mxu0 %v4090
    %4359 = vmatprep.subr.mxu0 %v4101
    %4360 = vmatpush1.msra.mxu0 %v4100
    %4361 = vmatprep.subr.mxu0 %v4111
    %4362 = vmatpush1.msra.mxu0 %v4110
    %4363 = vmatprep.subr.mxu0 %v4121
    %4364 = vmatpush1.msra.mxu0 %v4120
    %4365 = vmatprep.subr.mxu0 %v4131
    %4366 = vmatpush1.msra.mxu0 %v4130
    %4367 = vmatprep.subr.mxu0 %v4141
    %4368 = vmatpush1.msra.mxu0 %v4140
    %4369 = vmatprep.subr.mxu0 %v4151
    %4370 = vmatpush1.msra.mxu0 %v4150
    %4371 = vmatprep.subr.mxu0 %v4161
    %4372 = vmatpush1.msra.mxu0 %v4160
    %4373 = vmatprep.subr.mxu0 %v4171
    %4374 = vmatpush1.msra.mxu0 %v4170
    %4375 = vmatprep.subr.mxu0 %v4181
    %4376 = vmatpush1.msra.mxu0 %v4180
    %4377 = vmatprep.subr.mxu0 %v4191
    %4378 = vmatpush1.msra.mxu0 %v4190
    %4379 = vmatprep.subr.mxu0 %v4201
    %4380 = vmatpush1.msra.mxu0 %v4200
    %4381 = vmatprep.subr.mxu0 %v4211
    %4382 = vmatpush1.msra.mxu0 %v4210
    %4383 = vmatprep.subr.mxu0 %v4221
    %4384 = vmatpush1.msra.mxu0 %v4220
    %4385 = vmatprep.subr.mxu0 %v4231
    %4386 = vmatpush1.msra.mxu0 %v4230
    %4387 = vmatprep.subr.mxu0 %v4241
    %4388 = vmatpush1.msra.mxu0 %v4240
    %4389 = vmatprep.mubr.f32.mxu0 %v3927
    %4390 = vmatmul.mubr.f32.gmra.mrb[0].mxu0 %v3926
    %v4391 = vpop.f32.mrb[0].mxu0
    %v4392 = vadd.f32 %v4252, %v4391
    %v4393 = vpop.f32.mrb[0].mxu0
    %v4394 = vadd.f32 %v4252, %v4393
    %4395 = vdwg.mxu0
    %4396 = vmatprep.subr.mxu0 %v3933
    %4397 = vmatpush1.msra.mxu0 %v3932
    %4398 = vmatprep.subr.mxu0 %v3943
    %4399 = vmatpush1.msra.mxu0 %v3942
    %4400 = vmatprep.subr.mxu0 %v3953
    %4401 = vmatpush1.msra.mxu0 %v3952
    %4402 = vmatprep.subr.mxu0 %v3963
    %4403 = vmatpush1.msra.mxu0 %v3962
    %4404 = vmatprep.subr.mxu0 %v3973
    %4405 = vmatpush1.msra.mxu0 %v3972
    %4406 = vmatprep.subr.mxu0 %v3983
    %4407 = vmatpush1.msra.mxu0 %v3982
    %4408 = vmatprep.subr.mxu0 %v3993
    %4409 = vmatpush1.msra.mxu0 %v3992
    %4410 = vmatprep.subr.mxu0 %v4003
    %4411 = vmatpush1.msra.mxu0 %v4002
    %4412 = vmatprep.subr.mxu0 %v4013
    %4413 = vmatpush1.msra.mxu0 %v4012
    %4414 = vmatprep.subr.mxu0 %v4023
    %4415 = vmatpush1.msra.mxu0 %v4022
    %4416 = vmatprep.subr.mxu0 %v4033
    %4417 = vmatpush1.msra.mxu0 %v4032
    %4418 = vmatprep.subr.mxu0 %v4043
    %4419 = vmatpush1.msra.mxu0 %v4042
    %4420 = vmatprep.subr.mxu0 %v4053
    %4421 = vmatpush1.msra.mxu0 %v4052
    %4422 = vmatprep.subr.mxu0 %v4063
    %4423 = vmatpush1.msra.mxu0 %v4062
    %4424 = vmatprep.subr.mxu0 %v4073
    %4425 = vmatpush1.msra.mxu0 %v4072
    %4426 = vmatprep.subr.mxu0 %v4083
    %4427 = vmatpush1.msra.mxu0 %v4082
    %4428 = vmatprep.subr.mxu0 %v4093
    %4429 = vmatpush1.msra.mxu0 %v4092
    %4430 = vmatprep.subr.mxu0 %v4103
    %4431 = vmatpush1.msra.mxu0 %v4102
    %4432 = vmatprep.subr.mxu0 %v4113
    %4433 = vmatpush1.msra.mxu0 %v4112
    %4434 = vmatprep.subr.mxu0 %v4123
    %4435 = vmatpush1.msra.mxu0 %v4122
    %4436 = vmatprep.subr.mxu0 %v4133
    %4437 = vmatpush1.msra.mxu0 %v4132
    %4438 = vmatprep.subr.mxu0 %v4143
    %4439 = vmatpush1.msra.mxu0 %v4142
    %4440 = vmatprep.subr.mxu0 %v4153
    %4441 = vmatpush1.msra.mxu0 %v4152
    %4442 = vmatprep.subr.mxu0 %v4163
    %4443 = vmatpush1.msra.mxu0 %v4162
    %4444 = vmatprep.subr.mxu0 %v4173
    %4445 = vmatpush1.msra.mxu0 %v4172
    %4446 = vmatprep.subr.mxu0 %v4183
    %4447 = vmatpush1.msra.mxu0 %v4182
    %4448 = vmatprep.subr.mxu0 %v4193
    %4449 = vmatpush1.msra.mxu0 %v4192
    %4450 = vmatprep.subr.mxu0 %v4203
    %4451 = vmatpush1.msra.mxu0 %v4202
    %4452 = vmatprep.subr.mxu0 %v4213
    %4453 = vmatpush1.msra.mxu0 %v4212
    %4454 = vmatprep.subr.mxu0 %v4223
    %4455 = vmatpush1.msra.mxu0 %v4222
    %4456 = vmatprep.subr.mxu0 %v4233
    %4457 = vmatpush1.msra.mxu0 %v4232
    %4458 = vmatprep.subr.mxu0 %v4243
    %4459 = vmatpush1.msra.mxu0 %v4242
    %4460 = vmatprep.mubr.f32.mxu0 %v3927
    %4461 = vmatmul.mubr.f32.gmra.mrb[0].mxu0 %v3926
    %v4462 = vpop.f32.mrb[0].mxu0
    %v4463 = vadd.f32 %v4252, %v4462
    %v4464 = vpop.f32.mrb[0].mxu0
    %v4465 = vadd.f32 %v4252, %v4464
    %4466 = vdwg.mxu0
    %4467 = vmatprep.subr.mxu0 %v3935
    %4468 = vmatpush1.msra.mxu0 %v3934
    %4469 = vmatprep.subr.mxu0 %v3945
    %4470 = vmatpush1.msra.mxu0 %v3944
    %4471 = vmatprep.subr.mxu0 %v3955
    %4472 = vmatpush1.msra.mxu0 %v3954
    %4473 = vmatprep.subr.mxu0 %v3965
    %4474 = vmatpush1.msra.mxu0 %v3964
    %4475 = vmatprep.subr.mxu0 %v3975
    %4476 = vmatpush1.msra.mxu0 %v3974
    %4477 = vmatprep.subr.mxu0 %v3985
    %4478 = vmatpush1.msra.mxu0 %v3984
    %4479 = vmatprep.subr.mxu0 %v3995
    %4480 = vmatpush1.msra.mxu0 %v3994
    %4481 = vmatprep.subr.mxu0 %v4005
    %4482 = vmatpush1.msra.mxu0 %v4004
    %4483 = vmatprep.subr.mxu0 %v4015
    %4484 = vmatpush1.msra.mxu0 %v4014
    %4485 = vmatprep.subr.mxu0 %v4025
    %4486 = vmatpush1.msra.mxu0 %v4024
    %4487 = vmatprep.subr.mxu0 %v4035
    %4488 = vmatpush1.msra.mxu0 %v4034
    %4489 = vmatprep.subr.mxu0 %v4045
    %4490 = vmatpush1.msra.mxu0 %v4044
    %4491 = vmatprep.subr.mxu0 %v4055
    %4492 = vmatpush1.msra.mxu0 %v4054
    %4493 = vmatprep.subr.mxu0 %v4065
    %4494 = vmatpush1.msra.mxu0 %v4064
    %4495 = vmatprep.subr.mxu0 %v4075
    %4496 = vmatpush1.msra.mxu0 %v4074
    %4497 = vmatprep.subr.mxu0 %v4085
    %4498 = vmatpush1.msra.mxu0 %v4084
    %4499 = vmatprep.subr.mxu0 %v4095
    %4500 = vmatpush1.msra.mxu0 %v4094
    %4501 = vmatprep.subr.mxu0 %v4105
    %4502 = vmatpush1.msra.mxu0 %v4104
    %4503 = vmatprep.subr.mxu0 %v4115
    %4504 = vmatpush1.msra.mxu0 %v4114
    %4505 = vmatprep.subr.mxu0 %v4125
    %4506 = vmatpush1.msra.mxu0 %v4124
    %4507 = vmatprep.subr.mxu0 %v4135
    %4508 = vmatpush1.msra.mxu0 %v4134
    %4509 = vmatprep.subr.mxu0 %v4145
    %4510 = vmatpush1.msra.mxu0 %v4144
    %4511 = vmatprep.subr.mxu0 %v4155
    %4512 = vmatpush1.msra.mxu0 %v4154
    %4513 = vmatprep.subr.mxu0 %v4165
    %4514 = vmatpush1.msra.mxu0 %v4164
    %4515 = vmatprep.subr.mxu0 %v4175
    %4516 = vmatpush1.msra.mxu0 %v4174
    %4517 = vmatprep.subr.mxu0 %v4185
    %4518 = vmatpush1.msra.mxu0 %v4184
    %4519 = vmatprep.subr.mxu0 %v4195
    %4520 = vmatpush1.msra.mxu0 %v4194
    %4521 = vmatprep.subr.mxu0 %v4205
    %4522 = vmatpush1.msra.mxu0 %v4204
    %4523 = vmatprep.subr.mxu0 %v4215
    %4524 = vmatpush1.msra.mxu0 %v4214
    %4525 = vmatprep.subr.mxu0 %v4225
    %4526 = vmatpush1.msra.mxu0 %v4224
    %4527 = vmatprep.subr.mxu0 %v4235
    %4528 = vmatpush1.msra.mxu0 %v4234
    %4529 = vmatprep.subr.mxu0 %v4245
    %4530 = vmatpush1.msra.mxu0 %v4244
    %4531 = vmatprep.mubr.f32.mxu0 %v3927
    %4532 = vmatmul.mubr.f32.gmra.mrb[0].mxu0 %v3926
    %v4533 = vpop.f32.mrb[0].mxu0
    %v4534 = vadd.f32 %v4252, %v4533
    %v4535 = vpop.f32.mrb[0].mxu0
    %v4536 = vadd.f32 %v4252, %v4535
    %4537 = vdwg.mxu0
    %4538 = vmatprep.subr.mxu0 %v3937
    %4539 = vmatpush1.msra.mxu0 %v3936
    %4540 = vmatprep.subr.mxu0 %v3947
    %4541 = vmatpush1.msra.mxu0 %v3946
    %4542 = vmatprep.subr.mxu0 %v3957
    %4543 = vmatpush1.msra.mxu0 %v3956
    %4544 = vmatprep.subr.mxu0 %v3967
    %4545 = vmatpush1.msra.mxu0 %v3966
    %4546 = vmatprep.subr.mxu0 %v3977
    %4547 = vmatpush1.msra.mxu0 %v3976
    %4548 = vmatprep.subr.mxu0 %v3987
    %4549 = vmatpush1.msra.mxu0 %v3986
    %4550 = vmatprep.subr.mxu0 %v3997
    %4551 = vmatpush1.msra.mxu0 %v3996
    %4552 = vmatprep.subr.mxu0 %v4007
    %4553 = vmatpush1.msra.mxu0 %v4006
    %4554 = vmatprep.subr.mxu0 %v4017
    %4555 = vmatpush1.msra.mxu0 %v4016
    %4556 = vmatprep.subr.mxu0 %v4027
    %4557 = vmatpush1.msra.mxu0 %v4026
    %4558 = vmatprep.subr.mxu0 %v4037
    %4559 = vmatpush1.msra.mxu0 %v4036
    %4560 = vmatprep.subr.mxu0 %v4047
    %4561 = vmatpush1.msra.mxu0 %v4046
    %4562 = vmatprep.subr.mxu0 %v4057
    %4563 = vmatpush1.msra.mxu0 %v4056
    %4564 = vmatprep.subr.mxu0 %v4067
    %4565 = vmatpush1.msra.mxu0 %v4066
    %4566 = vmatprep.subr.mxu0 %v4077
    %4567 = vmatpush1.msra.mxu0 %v4076
    %4568 = vmatprep.subr.mxu0 %v4087
    %4569 = vmatpush1.msra.mxu0 %v4086
    %4570 = vmatprep.subr.mxu0 %v4097
    %4571 = vmatpush1.msra.mxu0 %v4096
    %4572 = vmatprep.subr.mxu0 %v4107
    %4573 = vmatpush1.msra.mxu0 %v4106
    %4574 = vmatprep.subr.mxu0 %v4117
    %4575 = vmatpush1.msra.mxu0 %v4116
    %4576 = vmatprep.subr.mxu0 %v4127
    %4577 = vmatpush1.msra.mxu0 %v4126
    %4578 = vmatprep.subr.mxu0 %v4137
    %4579 = vmatpush1.msra.mxu0 %v4136
    %4580 = vmatprep.subr.mxu0 %v4147
    %4581 = vmatpush1.msra.mxu0 %v4146
    %4582 = vmatprep.subr.mxu0 %v4157
    %4583 = vmatpush1.msra.mxu0 %v4156
    %4584 = vmatprep.subr.mxu0 %v4167
    %4585 = vmatpush1.msra.mxu0 %v4166
    %4586 = vmatprep.subr.mxu0 %v4177
    %4587 = vmatpush1.msra.mxu0 %v4176
    %4588 = vmatprep.subr.mxu0 %v4187
    %4589 = vmatpush1.msra.mxu0 %v4186
    %4590 = vmatprep.subr.mxu0 %v4197
    %4591 = vmatpush1.msra.mxu0 %v4196
    %4592 = vmatprep.subr.mxu0 %v4207
    %4593 = vmatpush1.msra.mxu0 %v4206
    %4594 = vmatprep.subr.mxu0 %v4217
    %4595 = vmatpush1.msra.mxu0 %v4216
    %4596 = vmatprep.subr.mxu0 %v4227
    %4597 = vmatpush1.msra.mxu0 %v4226
    %4598 = vmatprep.subr.mxu0 %v4237
    %4599 = vmatpush1.msra.mxu0 %v4236
    %4600 = vmatprep.subr.mxu0 %v4247
    %4601 = vmatpush1.msra.mxu0 %v4246
    %4602 = vmatprep.mubr.f32.mxu0 %v3927
    %4603 = vmatmul.mubr.f32.gmra.mrb[0].mxu0 %v3926
    %v4604 = vpop.f32.mrb[0].mxu0
    %v4605 = vadd.f32 %v4252, %v4604
    %v4606 = vpop.f32.mrb[0].mxu0
    %v4607 = vadd.f32 %v4252, %v4606
    %4608 = vdwg.mxu0
    %v4609 = vld [vmem:[#allocation8] sm:$0xff]
    %v4610 = vld [vmem:[#allocation8 + $0x8] sm:$0xff]
    %v4611 = vld [vmem:[#allocation8 + $0x10] sm:$0xff]
    %v4612 = vld [vmem:[#allocation8 + $0x18] sm:$0xff]
    %v4613 = vld [vmem:[#allocation8 + $0x20] sm:$0xff]
    %v4614 = vld [vmem:[#allocation8 + $0x28] sm:$0xff]
    %v4615 = vld [vmem:[#allocation8 + $0x30] sm:$0xff]
    %v4616 = vld [vmem:[#allocation8 + $0x38] sm:$0xff]
    %v4617 = vld [vmem:[#allocation8 + $0x40] sm:$0xff]
    %v4618 = vld [vmem:[#allocation8 + $0x48] sm:$0xff]
    %4619 = vmatprep.subr.mxu0 %v4610
    %4620 = vmatpush1.xpose.msra.mxu0 %v4609
    %4621 = vmatprep.subr.mxu0 0.0
    %4622 = vmatpush1.xpose.msra.mxu0 0.0
    %4623 = vmatprep.subr.mxu0 0.0
    %4624 = vmatpush1.xpose.msra.mxu0 0.0
    %4625 = vmatprep.subr.mxu0 0.0
    %4626 = vmatpush1.xpose.msra.mxu0 0.0
    %4627 = vmatprep.subr.mxu0 0.0
    %4628 = vmatpush1.xpose.msra.mxu0 0.0
    %4629 = vmatprep.subr.mxu0 0.0
    %4630 = vmatpush1.xpose.msra.mxu0 0.0
    %4631 = vmatprep.subr.mxu0 0.0
    %4632 = vmatpush1.xpose.msra.mxu0 0.0
    %4633 = vmatprep.subr.mxu0 0.0
    %4634 = vmatpush1.xpose.msra.mxu0 0.0
    %4635 = vmatprep.subr.mxu0 0.0
    %4636 = vmatpush1.xpose.msra.mxu0 0.0
    %4637 = vmatprep.subr.mxu0 0.0
    %4638 = vmatpush1.xpose.msra.mxu0 0.0
    %4639 = vmatprep.subr.mxu0 0.0
    %4640 = vmatpush1.xpose.msra.mxu0 0.0
    %4641 = vmatprep.subr.mxu0 0.0
    %4642 = vmatpush1.xpose.msra.mxu0 0.0
    %4643 = vmatprep.subr.mxu0 0.0
    %4644 = vmatpush1.xpose.msra.mxu0 0.0
    %4645 = vmatprep.subr.mxu0 0.0
    %4646 = vmatpush1.xpose.msra.mxu0 0.0
    %4647 = vmatprep.subr.mxu0 0.0
    %4648 = vmatpush1.xpose.msra.mxu0 0.0
    %4649 = vmatprep.subr.mxu0 0.0
    %4650 = vmatpush1.xpose.msra.mxu0 0.0
    %4651 = vmatprep.subr.mxu0 0.0
    %4652 = vmatpush1.xpose.msra.mxu0 0.0
    %4653 = vmatprep.subr.mxu0 0.0
    %4654 = vmatpush1.xpose.msra.mxu0 0.0
    %4655 = vmatprep.subr.mxu0 0.0
    %4656 = vmatpush1.xpose.msra.mxu0 0.0
    %4657 = vmatprep.subr.mxu0 0.0
    %4658 = vmatpush1.xpose.msra.mxu0 0.0
    %4659 = vmatprep.subr.mxu0 0.0
    %4660 = vmatpush1.xpose.msra.mxu0 0.0
    %4661 = vmatprep.subr.mxu0 0.0
    %4662 = vmatpush1.xpose.msra.mxu0 0.0
    %4663 = vmatprep.subr.mxu0 0.0
    %4664 = vmatpush1.xpose.msra.mxu0 0.0
    %4665 = vmatprep.subr.mxu0 0.0
    %4666 = vmatpush1.xpose.msra.mxu0 0.0
    %4667 = vmatprep.subr.mxu0 0.0
    %4668 = vmatpush1.xpose.msra.mxu0 0.0
    %4669 = vmatprep.subr.mxu0 0.0
    %4670 = vmatpush1.xpose.msra.mxu0 0.0
    %4671 = vmatprep.subr.mxu0 0.0
    %4672 = vmatpush1.xpose.msra.mxu0 0.0
    %4673 = vmatprep.subr.mxu0 0.0
    %4674 = vmatpush1.xpose.msra.mxu0 0.0
    %4675 = vmatprep.subr.mxu0 0.0
    %4676 = vmatpush1.xpose.msra.mxu0 0.0
    %4677 = vmatprep.subr.mxu0 0.0
    %4678 = vmatpush1.xpose.msra.mxu0 0.0
    %4679 = vmatprep.subr.mxu0 0.0
    %4680 = vmatpush1.xpose.msra.mxu0 0.0
    %4681 = vmatprep.subr.mxu0 0.0
    %4682 = vmatpush1.xpose.msra.mxu0 0.0
    %4683 = vmatprep.mubr.f32.mxu0 %v4323
    %4684 = vmatmul.mubr.f32.gmra.mrb[0].mxu0 %v4321
    %v4685 = vpop.f32.mrb[0].mxu0
    %v4686 = vadd.f32 0.0, %v4685
    %v4687 = vpop.f32.mrb[0].mxu0
    %4688 = vdwg.mxu0
    %4689 = vmatprep.subr.mxu0 %v4612
    %4690 = vmatpush1.xpose.msra.mxu0 %v4611
    %4691 = vmatprep.subr.mxu0 0.0
    %4692 = vmatpush1.xpose.msra.mxu0 0.0
    %4693 = vmatprep.subr.mxu0 0.0
    %4694 = vmatpush1.xpose.msra.mxu0 0.0
    %4695 = vmatprep.subr.mxu0 0.0
    %4696 = vmatpush1.xpose.msra.mxu0 0.0
    %4697 = vmatprep.subr.mxu0 0.0
    %4698 = vmatpush1.xpose.msra.mxu0 0.0
    %4699 = vmatprep.subr.mxu0 0.0
    %4700 = vmatpush1.xpose.msra.mxu0 0.0
    %4701 = vmatprep.subr.mxu0 0.0
    %4702 = vmatpush1.xpose.msra.mxu0 0.0
    %4703 = vmatprep.subr.mxu0 0.0
    %4704 = vmatpush1.xpose.msra.mxu0 0.0
    %4705 = vmatprep.subr.mxu0 0.0
    %4706 = vmatpush1.xpose.msra.mxu0 0.0
    %4707 = vmatprep.subr.mxu0 0.0
    %4708 = vmatpush1.xpose.msra.mxu0 0.0
    %4709 = vmatprep.subr.mxu0 0.0
    %4710 = vmatpush1.xpose.msra.mxu0 0.0
    %4711 = vmatprep.subr.mxu0 0.0
    %4712 = vmatpush1.xpose.msra.mxu0 0.0
    %4713 = vmatprep.subr.mxu0 0.0
    %4714 = vmatpush1.xpose.msra.mxu0 0.0
    %4715 = vmatprep.subr.mxu0 0.0
    %4716 = vmatpush1.xpose.msra.mxu0 0.0
    %4717 = vmatprep.subr.mxu0 0.0
    %4718 = vmatpush1.xpose.msra.mxu0 0.0
    %4719 = vmatprep.subr.mxu0 0.0
    %4720 = vmatpush1.xpose.msra.mxu0 0.0
    %4721 = vmatprep.subr.mxu0 0.0
    %4722 = vmatpush1.xpose.msra.mxu0 0.0
    %4723 = vmatprep.subr.mxu0 0.0
    %4724 = vmatpush1.xpose.msra.mxu0 0.0
    %4725 = vmatprep.subr.mxu0 0.0
    %4726 = vmatpush1.xpose.msra.mxu0 0.0
    %4727 = vmatprep.subr.mxu0 0.0
    %4728 = vmatpush1.xpose.msra.mxu0 0.0
    %4729 = vmatprep.subr.mxu0 0.0
    %4730 = vmatpush1.xpose.msra.mxu0 0.0
    %4731 = vmatprep.subr.mxu0 0.0
    %4732 = vmatpush1.xpose.msra.mxu0 0.0
    %4733 = vmatprep.subr.mxu0 0.0
    %4734 = vmatpush1.xpose.msra.mxu0 0.0
    %4735 = vmatprep.subr.mxu0 0.0
    %4736 = vmatpush1.xpose.msra.mxu0 0.0
    %4737 = vmatprep.subr.mxu0 0.0
    %4738 = vmatpush1.xpose.msra.mxu0 0.0
    %4739 = vmatprep.subr.mxu0 0.0
    %4740 = vmatpush1.xpose.msra.mxu0 0.0
    %4741 = vmatprep.subr.mxu0 0.0
    %4742 = vmatpush1.xpose.msra.mxu0 0.0
    %4743 = vmatprep.subr.mxu0 0.0
    %4744 = vmatpush1.xpose.msra.mxu0 0.0
    %4745 = vmatprep.subr.mxu0 0.0
    %4746 = vmatpush1.xpose.msra.mxu0 0.0
    %4747 = vmatprep.subr.mxu0 0.0
    %4748 = vmatpush1.xpose.msra.mxu0 0.0
    %4749 = vmatprep.subr.mxu0 0.0
    %4750 = vmatpush1.xpose.msra.mxu0 0.0
    %4751 = vmatprep.subr.mxu0 0.0
    %4752 = vmatpush1.xpose.msra.mxu0 0.0
    %4753 = vmatprep.mubr.f32.mxu0 %v4394
    %4754 = vmatmul.mubr.f32.gmra.mrb[0].mxu0 %v4392
    %v4755 = vpop.f32.mrb[0].mxu0
    %v4756 = vadd.f32 %v4686, %v4755
    %v4757 = vpop.f32.mrb[0].mxu0
    %4758 = vdwg.mxu0
    %4759 = vmatprep.subr.mxu0 %v4614
    %4760 = vmatpush1.xpose.msra.mxu0 %v4613
    %4761 = vmatprep.subr.mxu0 0.0
    %4762 = vmatpush1.xpose.msra.mxu0 0.0
    %4763 = vmatprep.subr.mxu0 0.0
    %4764 = vmatpush1.xpose.msra.mxu0 0.0
    %4765 = vmatprep.subr.mxu0 0.0
    %4766 = vmatpush1.xpose.msra.mxu0 0.0
    %4767 = vmatprep.subr.mxu0 0.0
    %4768 = vmatpush1.xpose.msra.mxu0 0.0
    %4769 = vmatprep.subr.mxu0 0.0
    %4770 = vmatpush1.xpose.msra.mxu0 0.0
    %4771 = vmatprep.subr.mxu0 0.0
    %4772 = vmatpush1.xpose.msra.mxu0 0.0
    %4773 = vmatprep.subr.mxu0 0.0
    %4774 = vmatpush1.xpose.msra.mxu0 0.0
    %4775 = vmatprep.subr.mxu0 0.0
    %4776 = vmatpush1.xpose.msra.mxu0 0.0
    %4777 = vmatprep.subr.mxu0 0.0
    %4778 = vmatpush1.xpose.msra.mxu0 0.0
    %4779 = vmatprep.subr.mxu0 0.0
    %4780 = vmatpush1.xpose.msra.mxu0 0.0
    %4781 = vmatprep.subr.mxu0 0.0
    %4782 = vmatpush1.xpose.msra.mxu0 0.0
    %4783 = vmatprep.subr.mxu0 0.0
    %4784 = vmatpush1.xpose.msra.mxu0 0.0
    %4785 = vmatprep.subr.mxu0 0.0
    %4786 = vmatpush1.xpose.msra.mxu0 0.0
    %4787 = vmatprep.subr.mxu0 0.0
    %4788 = vmatpush1.xpose.msra.mxu0 0.0
    %4789 = vmatprep.subr.mxu0 0.0
    %4790 = vmatpush1.xpose.msra.mxu0 0.0
    %4791 = vmatprep.subr.mxu0 0.0
    %4792 = vmatpush1.xpose.msra.mxu0 0.0
    %4793 = vmatprep.subr.mxu0 0.0
    %4794 = vmatpush1.xpose.msra.mxu0 0.0
    %4795 = vmatprep.subr.mxu0 0.0
    %4796 = vmatpush1.xpose.msra.mxu0 0.0
    %4797 = vmatprep.subr.mxu0 0.0
    %4798 = vmatpush1.xpose.msra.mxu0 0.0
    %4799 = vmatprep.subr.mxu0 0.0
    %4800 = vmatpush1.xpose.msra.mxu0 0.0
    %4801 = vmatprep.subr.mxu0 0.0
    %4802 = vmatpush1.xpose.msra.mxu0 0.0
    %4803 = vmatprep.subr.mxu0 0.0
    %4804 = vmatpush1.xpose.msra.mxu0 0.0
    %4805 = vmatprep.subr.mxu0 0.0
    %4806 = vmatpush1.xpose.msra.mxu0 0.0
    %4807 = vmatprep.subr.mxu0 0.0
    %4808 = vmatpush1.xpose.msra.mxu0 0.0
    %4809 = vmatprep.subr.mxu0 0.0
    %4810 = vmatpush1.xpose.msra.mxu0 0.0
    %4811 = vmatprep.subr.mxu0 0.0
    %4812 = vmatpush1.xpose.msra.mxu0 0.0
    %4813 = vmatprep.subr.mxu0 0.0
    %4814 = vmatpush1.xpose.msra.mxu0 0.0
    %4815 = vmatprep.subr.mxu0 0.0
    %4816 = vmatpush1.xpose.msra.mxu0 0.0
    %4817 = vmatprep.subr.mxu0 0.0
    %4818 = vmatpush1.xpose.msra.mxu0 0.0
    %4819 = vmatprep.subr.mxu0 0.0
    %4820 = vmatpush1.xpose.msra.mxu0 0.0
    %4821 = vmatprep.subr.mxu0 0.0
    %4822 = vmatpush1.xpose.msra.mxu0 0.0
    %4823 = vmatprep.mubr.f32.mxu0 %v4465
    %4824 = vmatmul.mubr.f32.gmra.mrb[0].mxu0 %v4463
    %v4825 = vpop.f32.mrb[0].mxu0
    %v4826 = vadd.f32 %v4756, %v4825
    %v4827 = vpop.f32.mrb[0].mxu0
    %4828 = vdwg.mxu0
    %4829 = vmatprep.subr.mxu0 %v4616
    %4830 = vmatpush1.xpose.msra.mxu0 %v4615
    %4831 = vmatprep.subr.mxu0 0.0
    %4832 = vmatpush1.xpose.msra.mxu0 0.0
    %4833 = vmatprep.subr.mxu0 0.0
    %4834 = vmatpush1.xpose.msra.mxu0 0.0
    %4835 = vmatprep.subr.mxu0 0.0
    %4836 = vmatpush1.xpose.msra.mxu0 0.0
    %4837 = vmatprep.subr.mxu0 0.0
    %4838 = vmatpush1.xpose.msra.mxu0 0.0
    %4839 = vmatprep.subr.mxu0 0.0
    %4840 = vmatpush1.xpose.msra.mxu0 0.0
    %4841 = vmatprep.subr.mxu0 0.0
    %4842 = vmatpush1.xpose.msra.mxu0 0.0
    %4843 = vmatprep.subr.mxu0 0.0
    %4844 = vmatpush1.xpose.msra.mxu0 0.0
    %4845 = vmatprep.subr.mxu0 0.0
    %4846 = vmatpush1.xpose.msra.mxu0 0.0
    %4847 = vmatprep.subr.mxu0 0.0
    %4848 = vmatpush1.xpose.msra.mxu0 0.0
    %4849 = vmatprep.subr.mxu0 0.0
    %4850 = vmatpush1.xpose.msra.mxu0 0.0
    %4851 = vmatprep.subr.mxu0 0.0
    %4852 = vmatpush1.xpose.msra.mxu0 0.0
    %4853 = vmatprep.subr.mxu0 0.0
    %4854 = vmatpush1.xpose.msra.mxu0 0.0
    %4855 = vmatprep.subr.mxu0 0.0
    %4856 = vmatpush1.xpose.msra.mxu0 0.0
    %4857 = vmatprep.subr.mxu0 0.0
    %4858 = vmatpush1.xpose.msra.mxu0 0.0
    %4859 = vmatprep.subr.mxu0 0.0
    %4860 = vmatpush1.xpose.msra.mxu0 0.0
    %4861 = vmatprep.subr.mxu0 0.0
    %4862 = vmatpush1.xpose.msra.mxu0 0.0
    %4863 = vmatprep.subr.mxu0 0.0
    %4864 = vmatpush1.xpose.msra.mxu0 0.0
    %4865 = vmatprep.subr.mxu0 0.0
    %4866 = vmatpush1.xpose.msra.mxu0 0.0
    %4867 = vmatprep.subr.mxu0 0.0
    %4868 = vmatpush1.xpose.msra.mxu0 0.0
    %4869 = vmatprep.subr.mxu0 0.0
    %4870 = vmatpush1.xpose.msra.mxu0 0.0
    %4871 = vmatprep.subr.mxu0 0.0
    %4872 = vmatpush1.xpose.msra.mxu0 0.0
    %4873 = vmatprep.subr.mxu0 0.0
    %4874 = vmatpush1.xpose.msra.mxu0 0.0
    %4875 = vmatprep.subr.mxu0 0.0
    %4876 = vmatpush1.xpose.msra.mxu0 0.0
    %4877 = vmatprep.subr.mxu0 0.0
    %4878 = vmatpush1.xpose.msra.mxu0 0.0
    %4879 = vmatprep.subr.mxu0 0.0
    %4880 = vmatpush1.xpose.msra.mxu0 0.0
    %4881 = vmatprep.subr.mxu0 0.0
    %4882 = vmatpush1.xpose.msra.mxu0 0.0
    %4883 = vmatprep.subr.mxu0 0.0
    %4884 = vmatpush1.xpose.msra.mxu0 0.0
    %4885 = vmatprep.subr.mxu0 0.0
    %4886 = vmatpush1.xpose.msra.mxu0 0.0
    %4887 = vmatprep.subr.mxu0 0.0
    %4888 = vmatpush1.xpose.msra.mxu0 0.0
    %4889 = vmatprep.subr.mxu0 0.0
    %4890 = vmatpush1.xpose.msra.mxu0 0.0
    %4891 = vmatprep.subr.mxu0 0.0
    %4892 = vmatpush1.xpose.msra.mxu0 0.0
    %4893 = vmatprep.mubr.f32.mxu0 %v4536
    %4894 = vmatmul.mubr.f32.gmra.mrb[0].mxu0 %v4534
    %v4895 = vpop.f32.mrb[0].mxu0
    %v4896 = vadd.f32 %v4826, %v4895
    %v4897 = vpop.f32.mrb[0].mxu0
    %4898 = vdwg.mxu0
    %4899 = vmatprep.subr.mxu0 %v4618
    %4900 = vmatpush1.xpose.msra.mxu0 %v4617
    %4901 = vmatprep.subr.mxu0 0.0
    %4902 = vmatpush1.xpose.msra.mxu0 0.0
    %4903 = vmatprep.subr.mxu0 0.0
    %4904 = vmatpush1.xpose.msra.mxu0 0.0
    %4905 = vmatprep.subr.mxu0 0.0
    %4906 = vmatpush1.xpose.msra.mxu0 0.0
    %4907 = vmatprep.subr.mxu0 0.0
    %4908 = vmatpush1.xpose.msra.mxu0 0.0
    %4909 = vmatprep.subr.mxu0 0.0
    %4910 = vmatpush1.xpose.msra.mxu0 0.0
    %4911 = vmatprep.subr.mxu0 0.0
    %4912 = vmatpush1.xpose.msra.mxu0 0.0
    %4913 = vmatprep.subr.mxu0 0.0
    %4914 = vmatpush1.xpose.msra.mxu0 0.0
    %4915 = vmatprep.subr.mxu0 0.0
    %4916 = vmatpush1.xpose.msra.mxu0 0.0
    %4917 = vmatprep.subr.mxu0 0.0
    %4918 = vmatpush1.xpose.msra.mxu0 0.0
    %4919 = vmatprep.subr.mxu0 0.0
    %4920 = vmatpush1.xpose.msra.mxu0 0.0
    %4921 = vmatprep.subr.mxu0 0.0
    %4922 = vmatpush1.xpose.msra.mxu0 0.0
    %4923 = vmatprep.subr.mxu0 0.0
    %4924 = vmatpush1.xpose.msra.mxu0 0.0
    %4925 = vmatprep.subr.mxu0 0.0
    %4926 = vmatpush1.xpose.msra.mxu0 0.0
    %4927 = vmatprep.subr.mxu0 0.0
    %4928 = vmatpush1.xpose.msra.mxu0 0.0
    %4929 = vmatprep.subr.mxu0 0.0
    %4930 = vmatpush1.xpose.msra.mxu0 0.0
    %4931 = vmatprep.subr.mxu0 0.0
    %4932 = vmatpush1.xpose.msra.mxu0 0.0
    %4933 = vmatprep.subr.mxu0 0.0
    %4934 = vmatpush1.xpose.msra.mxu0 0.0
    %4935 = vmatprep.subr.mxu0 0.0
    %4936 = vmatpush1.xpose.msra.mxu0 0.0
    %4937 = vmatprep.subr.mxu0 0.0
    %4938 = vmatpush1.xpose.msra.mxu0 0.0
    %4939 = vmatprep.subr.mxu0 0.0
    %4940 = vmatpush1.xpose.msra.mxu0 0.0
    %4941 = vmatprep.subr.mxu0 0.0
    %4942 = vmatpush1.xpose.msra.mxu0 0.0
    %4943 = vmatprep.subr.mxu0 0.0
    %4944 = vmatpush1.xpose.msra.mxu0 0.0
    %4945 = vmatprep.subr.mxu0 0.0
    %4946 = vmatpush1.xpose.msra.mxu0 0.0
    %4947 = vmatprep.subr.mxu0 0.0
    %4948 = vmatpush1.xpose.msra.mxu0 0.0
    %4949 = vmatprep.subr.mxu0 0.0
    %4950 = vmatpush1.xpose.msra.mxu0 0.0
    %4951 = vmatprep.subr.mxu0 0.0
    %4952 = vmatpush1.xpose.msra.mxu0 0.0
    %4953 = vmatprep.subr.mxu0 0.0
    %4954 = vmatpush1.xpose.msra.mxu0 0.0
    %4955 = vmatprep.subr.mxu0 0.0
    %4956 = vmatpush1.xpose.msra.mxu0 0.0
    %4957 = vmatprep.subr.mxu0 0.0
    %4958 = vmatpush1.xpose.msra.mxu0 0.0
    %4959 = vmatprep.subr.mxu0 0.0
    %4960 = vmatpush1.xpose.msra.mxu0 0.0
    %4961 = vmatprep.subr.mxu0 0.0
    %4962 = vmatpush1.xpose.msra.mxu0 0.0
    %4963 = vmatprep.mubr.f32.mxu0 %v4607
    %4964 = vmatmul.mubr.f32.gmra.mrb[0].mxu0 %v4605
    %v4965 = vpop.f32.mrb[0].mxu0
    %v4966 = vadd.f32 %v4896, %v4965
    %v4967 = vpop.f32.mrb[0].mxu0
    %4968 = vdwg.mxu0
    %v4969 = vmul.f32 %v4321, %v4321
    %v4970 = vmul.f32 %v4323, %v4323
    %v4971 = vmul.f32 %v4392, %v4392
    %v4972 = vmul.f32 %v4394, %v4394
    %v4973 = vmul.f32 %v4463, %v4463
    %v4974 = vmul.f32 %v4465, %v4465
    %v4975 = vmul.f32 %v4534, %v4534
    %v4976 = vmul.f32 %v4536, %v4536
    %v4977 = vmul.f32 %v4605, %v4605
    %v4978 = vmul.f32 %v4607, %v4607
    %4979 = vmatprep.subr.mxu0 %v4610
    %4980 = vmatpush1.xpose.msra.mxu0 %v4609
    %4981 = vmatprep.subr.mxu0 0.0
    %4982 = vmatpush1.xpose.msra.mxu0 0.0
    %4983 = vmatprep.subr.mxu0 0.0
    %4984 = vmatpush1.xpose.msra.mxu0 0.0
    %4985 = vmatprep.subr.mxu0 0.0
    %4986 = vmatpush1.xpose.msra.mxu0 0.0
    %4987 = vmatprep.subr.mxu0 0.0
    %4988 = vmatpush1.xpose.msra.mxu0 0.0
    %4989 = vmatprep.subr.mxu0 0.0
    %4990 = vmatpush1.xpose.msra.mxu0 0.0
    %4991 = vmatprep.subr.mxu0 0.0
    %4992 = vmatpush1.xpose.msra.mxu0 0.0
    %4993 = vmatprep.subr.mxu0 0.0
    %4994 = vmatpush1.xpose.msra.mxu0 0.0
    %4995 = vmatprep.subr.mxu0 0.0
    %4996 = vmatpush1.xpose.msra.mxu0 0.0
    %4997 = vmatprep.subr.mxu0 0.0
    %4998 = vmatpush1.xpose.msra.mxu0 0.0
    %4999 = vmatprep.subr.mxu0 0.0
    %5000 = vmatpush1.xpose.msra.mxu0 0.0
    %5001 = vmatprep.subr.mxu0 0.0
    %5002 = vmatpush1.xpose.msra.mxu0 0.0
    %5003 = vmatprep.subr.mxu0 0.0
    %5004 = vmatpush1.xpose.msra.mxu0 0.0
    %5005 = vmatprep.subr.mxu0 0.0
    %5006 = vmatpush1.xpose.msra.mxu0 0.0
    %5007 = vmatprep.subr.mxu0 0.0
    %5008 = vmatpush1.xpose.msra.mxu0 0.0
    %5009 = vmatprep.subr.mxu0 0.0
    %5010 = vmatpush1.xpose.msra.mxu0 0.0
    %5011 = vmatprep.subr.mxu0 0.0
    %5012 = vmatpush1.xpose.msra.mxu0 0.0
    %5013 = vmatprep.subr.mxu0 0.0
    %5014 = vmatpush1.xpose.msra.mxu0 0.0
    %5015 = vmatprep.subr.mxu0 0.0
    %5016 = vmatpush1.xpose.msra.mxu0 0.0
    %5017 = vmatprep.subr.mxu0 0.0
    %5018 = vmatpush1.xpose.msra.mxu0 0.0
    %5019 = vmatprep.subr.mxu0 0.0
    %5020 = vmatpush1.xpose.msra.mxu0 0.0
    %5021 = vmatprep.subr.mxu0 0.0
    %5022 = vmatpush1.xpose.msra.mxu0 0.0
    %5023 = vmatprep.subr.mxu0 0.0
    %5024 = vmatpush1.xpose.msra.mxu0 0.0
    %5025 = vmatprep.subr.mxu0 0.0
    %5026 = vmatpush1.xpose.msra.mxu0 0.0
    %5027 = vmatprep.subr.mxu0 0.0
    %5028 = vmatpush1.xpose.msra.mxu0 0.0
    %5029 = vmatprep.subr.mxu0 0.0
    %5030 = vmatpush1.xpose.msra.mxu0 0.0
    %5031 = vmatprep.subr.mxu0 0.0
    %5032 = vmatpush1.xpose.msra.mxu0 0.0
    %5033 = vmatprep.subr.mxu0 0.0
    %5034 = vmatpush1.xpose.msra.mxu0 0.0
    %5035 = vmatprep.subr.mxu0 0.0
    %5036 = vmatpush1.xpose.msra.mxu0 0.0
    %5037 = vmatprep.subr.mxu0 0.0
    %5038 = vmatpush1.xpose.msra.mxu0 0.0
    %5039 = vmatprep.subr.mxu0 0.0
    %5040 = vmatpush1.xpose.msra.mxu0 0.0
    %5041 = vmatprep.subr.mxu0 0.0
    %5042 = vmatpush1.xpose.msra.mxu0 0.0
    %5043 = vmatprep.mubr.f32.mxu0 %v4970
    %5044 = vmatmul.mubr.f32.gmra.mrb[0].mxu0 %v4969
    %v5045 = vpop.f32.mrb[0].mxu0
    %v5046 = vadd.f32 0.0, %v5045
    %v5047 = vpop.f32.mrb[0].mxu0
    %5048 = vdwg.mxu0
    %5049 = vmatprep.subr.mxu0 %v4612
    %5050 = vmatpush1.xpose.msra.mxu0 %v4611
    %5051 = vmatprep.subr.mxu0 0.0
    %5052 = vmatpush1.xpose.msra.mxu0 0.0
    %5053 = vmatprep.subr.mxu0 0.0
    %5054 = vmatpush1.xpose.msra.mxu0 0.0
    %5055 = vmatprep.subr.mxu0 0.0
    %5056 = vmatpush1.xpose.msra.mxu0 0.0
    %5057 = vmatprep.subr.mxu0 0.0
    %5058 = vmatpush1.xpose.msra.mxu0 0.0
    %5059 = vmatprep.subr.mxu0 0.0
    %5060 = vmatpush1.xpose.msra.mxu0 0.0
    %5061 = vmatprep.subr.mxu0 0.0
    %5062 = vmatpush1.xpose.msra.mxu0 0.0
    %5063 = vmatprep.subr.mxu0 0.0
    %5064 = vmatpush1.xpose.msra.mxu0 0.0
    %5065 = vmatprep.subr.mxu0 0.0
    %5066 = vmatpush1.xpose.msra.mxu0 0.0
    %5067 = vmatprep.subr.mxu0 0.0
    %5068 = vmatpush1.xpose.msra.mxu0 0.0
    %5069 = vmatprep.subr.mxu0 0.0
    %5070 = vmatpush1.xpose.msra.mxu0 0.0
    %5071 = vmatprep.subr.mxu0 0.0
    %5072 = vmatpush1.xpose.msra.mxu0 0.0
    %5073 = vmatprep.subr.mxu0 0.0
    %5074 = vmatpush1.xpose.msra.mxu0 0.0
    %5075 = vmatprep.subr.mxu0 0.0
    %5076 = vmatpush1.xpose.msra.mxu0 0.0
    %5077 = vmatprep.subr.mxu0 0.0
    %5078 = vmatpush1.xpose.msra.mxu0 0.0
    %5079 = vmatprep.subr.mxu0 0.0
    %5080 = vmatpush1.xpose.msra.mxu0 0.0
    %5081 = vmatprep.subr.mxu0 0.0
    %5082 = vmatpush1.xpose.msra.mxu0 0.0
    %5083 = vmatprep.subr.mxu0 0.0
    %5084 = vmatpush1.xpose.msra.mxu0 0.0
    %5085 = vmatprep.subr.mxu0 0.0
    %5086 = vmatpush1.xpose.msra.mxu0 0.0
    %5087 = vmatprep.subr.mxu0 0.0
    %5088 = vmatpush1.xpose.msra.mxu0 0.0
    %5089 = vmatprep.subr.mxu0 0.0
    %5090 = vmatpush1.xpose.msra.mxu0 0.0
    %5091 = vmatprep.subr.mxu0 0.0
    %5092 = vmatpush1.xpose.msra.mxu0 0.0
    %5093 = vmatprep.subr.mxu0 0.0
    %5094 = vmatpush1.xpose.msra.mxu0 0.0
    %5095 = vmatprep.subr.mxu0 0.0
    %5096 = vmatpush1.xpose.msra.mxu0 0.0
    %5097 = vmatprep.subr.mxu0 0.0
    %5098 = vmatpush1.xpose.msra.mxu0 0.0
    %5099 = vmatprep.subr.mxu0 0.0
    %5100 = vmatpush1.xpose.msra.mxu0 0.0
    %5101 = vmatprep.subr.mxu0 0.0
    %5102 = vmatpush1.xpose.msra.mxu0 0.0
    %5103 = vmatprep.subr.mxu0 0.0
    %5104 = vmatpush1.xpose.msra.mxu0 0.0
    %5105 = vmatprep.subr.mxu0 0.0
    %5106 = vmatpush1.xpose.msra.mxu0 0.0
    %5107 = vmatprep.subr.mxu0 0.0
    %5108 = vmatpush1.xpose.msra.mxu0 0.0
    %5109 = vmatprep.subr.mxu0 0.0
    %5110 = vmatpush1.xpose.msra.mxu0 0.0
    %5111 = vmatprep.subr.mxu0 0.0
    %5112 = vmatpush1.xpose.msra.mxu0 0.0
    %5113 = vmatprep.mubr.f32.mxu0 %v4972
    %5114 = vmatmul.mubr.f32.gmra.mrb[0].mxu0 %v4971
    %v5115 = vpop.f32.mrb[0].mxu0
    %v5116 = vadd.f32 %v5046, %v5115
    %v5117 = vpop.f32.mrb[0].mxu0
    %5118 = vdwg.mxu0
    %5119 = vmatprep.subr.mxu0 %v4614
    %5120 = vmatpush1.xpose.msra.mxu0 %v4613
    %5121 = vmatprep.subr.mxu0 0.0
    %5122 = vmatpush1.xpose.msra.mxu0 0.0
    %5123 = vmatprep.subr.mxu0 0.0
    %5124 = vmatpush1.xpose.msra.mxu0 0.0
    %5125 = vmatprep.subr.mxu0 0.0
    %5126 = vmatpush1.xpose.msra.mxu0 0.0
    %5127 = vmatprep.subr.mxu0 0.0
    %5128 = vmatpush1.xpose.msra.mxu0 0.0
    %5129 = vmatprep.subr.mxu0 0.0
    %5130 = vmatpush1.xpose.msra.mxu0 0.0
    %5131 = vmatprep.subr.mxu0 0.0
    %5132 = vmatpush1.xpose.msra.mxu0 0.0
    %5133 = vmatprep.subr.mxu0 0.0
    %5134 = vmatpush1.xpose.msra.mxu0 0.0
    %5135 = vmatprep.subr.mxu0 0.0
    %5136 = vmatpush1.xpose.msra.mxu0 0.0
    %5137 = vmatprep.subr.mxu0 0.0
    %5138 = vmatpush1.xpose.msra.mxu0 0.0
    %5139 = vmatprep.subr.mxu0 0.0
    %5140 = vmatpush1.xpose.msra.mxu0 0.0
    %5141 = vmatprep.subr.mxu0 0.0
    %5142 = vmatpush1.xpose.msra.mxu0 0.0
    %5143 = vmatprep.subr.mxu0 0.0
    %5144 = vmatpush1.xpose.msra.mxu0 0.0
    %5145 = vmatprep.subr.mxu0 0.0
    %5146 = vmatpush1.xpose.msra.mxu0 0.0
    %5147 = vmatprep.subr.mxu0 0.0
    %5148 = vmatpush1.xpose.msra.mxu0 0.0
    %5149 = vmatprep.subr.mxu0 0.0
    %5150 = vmatpush1.xpose.msra.mxu0 0.0
    %5151 = vmatprep.subr.mxu0 0.0
    %5152 = vmatpush1.xpose.msra.mxu0 0.0
    %5153 = vmatprep.subr.mxu0 0.0
    %5154 = vmatpush1.xpose.msra.mxu0 0.0
    %5155 = vmatprep.subr.mxu0 0.0
    %5156 = vmatpush1.xpose.msra.mxu0 0.0
    %5157 = vmatprep.subr.mxu0 0.0
    %5158 = vmatpush1.xpose.msra.mxu0 0.0
    %5159 = vmatprep.subr.mxu0 0.0
    %5160 = vmatpush1.xpose.msra.mxu0 0.0
    %5161 = vmatprep.subr.mxu0 0.0
    %5162 = vmatpush1.xpose.msra.mxu0 0.0
    %5163 = vmatprep.subr.mxu0 0.0
    %5164 = vmatpush1.xpose.msra.mxu0 0.0
    %5165 = vmatprep.subr.mxu0 0.0
    %5166 = vmatpush1.xpose.msra.mxu0 0.0
    %5167 = vmatprep.subr.mxu0 0.0
    %5168 = vmatpush1.xpose.msra.mxu0 0.0
    %5169 = vmatprep.subr.mxu0 0.0
    %5170 = vmatpush1.xpose.msra.mxu0 0.0
    %5171 = vmatprep.subr.mxu0 0.0
    %5172 = vmatpush1.xpose.msra.mxu0 0.0
    %5173 = vmatprep.subr.mxu0 0.0
    %5174 = vmatpush1.xpose.msra.mxu0 0.0
    %5175 = vmatprep.subr.mxu0 0.0
    %5176 = vmatpush1.xpose.msra.mxu0 0.0
    %5177 = vmatprep.subr.mxu0 0.0
    %5178 = vmatpush1.xpose.msra.mxu0 0.0
    %5179 = vmatprep.subr.mxu0 0.0
    %5180 = vmatpush1.xpose.msra.mxu0 0.0
    %5181 = vmatprep.subr.mxu0 0.0
    %5182 = vmatpush1.xpose.msra.mxu0 0.0
    %5183 = vmatprep.mubr.f32.mxu0 %v4974
    %5184 = vmatmul.mubr.f32.gmra.mrb[0].mxu0 %v4973
    %v5185 = vpop.f32.mrb[0].mxu0
    %v5186 = vadd.f32 %v5116, %v5185
    %v5187 = vpop.f32.mrb[0].mxu0
    %5188 = vdwg.mxu0
    %5189 = vmatprep.subr.mxu0 %v4616
    %5190 = vmatpush1.xpose.msra.mxu0 %v4615
    %5191 = vmatprep.subr.mxu0 0.0
    %5192 = vmatpush1.xpose.msra.mxu0 0.0
    %5193 = vmatprep.subr.mxu0 0.0
    %5194 = vmatpush1.xpose.msra.mxu0 0.0
    %5195 = vmatprep.subr.mxu0 0.0
    %5196 = vmatpush1.xpose.msra.mxu0 0.0
    %5197 = vmatprep.subr.mxu0 0.0
    %5198 = vmatpush1.xpose.msra.mxu0 0.0
    %5199 = vmatprep.subr.mxu0 0.0
    %5200 = vmatpush1.xpose.msra.mxu0 0.0
    %5201 = vmatprep.subr.mxu0 0.0
    %5202 = vmatpush1.xpose.msra.mxu0 0.0
    %5203 = vmatprep.subr.mxu0 0.0
    %5204 = vmatpush1.xpose.msra.mxu0 0.0
    %5205 = vmatprep.subr.mxu0 0.0
    %5206 = vmatpush1.xpose.msra.mxu0 0.0
    %5207 = vmatprep.subr.mxu0 0.0
    %5208 = vmatpush1.xpose.msra.mxu0 0.0
    %5209 = vmatprep.subr.mxu0 0.0
    %5210 = vmatpush1.xpose.msra.mxu0 0.0
    %5211 = vmatprep.subr.mxu0 0.0
    %5212 = vmatpush1.xpose.msra.mxu0 0.0
    %5213 = vmatprep.subr.mxu0 0.0
    %5214 = vmatpush1.xpose.msra.mxu0 0.0
    %5215 = vmatprep.subr.mxu0 0.0
    %5216 = vmatpush1.xpose.msra.mxu0 0.0
    %5217 = vmatprep.subr.mxu0 0.0
    %5218 = vmatpush1.xpose.msra.mxu0 0.0
    %5219 = vmatprep.subr.mxu0 0.0
    %5220 = vmatpush1.xpose.msra.mxu0 0.0
    %5221 = vmatprep.subr.mxu0 0.0
    %5222 = vmatpush1.xpose.msra.mxu0 0.0
    %5223 = vmatprep.subr.mxu0 0.0
    %5224 = vmatpush1.xpose.msra.mxu0 0.0
    %5225 = vmatprep.subr.mxu0 0.0
    %5226 = vmatpush1.xpose.msra.mxu0 0.0
    %5227 = vmatprep.subr.mxu0 0.0
    %5228 = vmatpush1.xpose.msra.mxu0 0.0
    %5229 = vmatprep.subr.mxu0 0.0
    %5230 = vmatpush1.xpose.msra.mxu0 0.0
    %5231 = vmatprep.subr.mxu0 0.0
    %5232 = vmatpush1.xpose.msra.mxu0 0.0
    %5233 = vmatprep.subr.mxu0 0.0
    %5234 = vmatpush1.xpose.msra.mxu0 0.0
    %5235 = vmatprep.subr.mxu0 0.0
    %5236 = vmatpush1.xpose.msra.mxu0 0.0
    %5237 = vmatprep.subr.mxu0 0.0
    %5238 = vmatpush1.xpose.msra.mxu0 0.0
    %5239 = vmatprep.subr.mxu0 0.0
    %5240 = vmatpush1.xpose.msra.mxu0 0.0
    %5241 = vmatprep.subr.mxu0 0.0
    %5242 = vmatpush1.xpose.msra.mxu0 0.0
    %5243 = vmatprep.subr.mxu0 0.0
    %5244 = vmatpush1.xpose.msra.mxu0 0.0
    %5245 = vmatprep.subr.mxu0 0.0
    %5246 = vmatpush1.xpose.msra.mxu0 0.0
    %5247 = vmatprep.subr.mxu0 0.0
    %5248 = vmatpush1.xpose.msra.mxu0 0.0
    %5249 = vmatprep.subr.mxu0 0.0
    %5250 = vmatpush1.xpose.msra.mxu0 0.0
    %5251 = vmatprep.subr.mxu0 0.0
    %5252 = vmatpush1.xpose.msra.mxu0 0.0
    %5253 = vmatprep.mubr.f32.mxu0 %v4976
    %5254 = vmatmul.mubr.f32.gmra.mrb[0].mxu0 %v4975
    %v5255 = vpop.f32.mrb[0].mxu0
    %v5256 = vadd.f32 %v5186, %v5255
    %v5257 = vpop.f32.mrb[0].mxu0
    %5258 = vdwg.mxu0
    %5259 = vmatprep.subr.mxu0 %v4618
    %5260 = vmatpush1.xpose.msra.mxu0 %v4617
    %5261 = vmatprep.subr.mxu0 0.0
    %5262 = vmatpush1.xpose.msra.mxu0 0.0
    %5263 = vmatprep.subr.mxu0 0.0
    %5264 = vmatpush1.xpose.msra.mxu0 0.0
    %5265 = vmatprep.subr.mxu0 0.0
    %5266 = vmatpush1.xpose.msra.mxu0 0.0
    %5267 = vmatprep.subr.mxu0 0.0
    %5268 = vmatpush1.xpose.msra.mxu0 0.0
    %5269 = vmatprep.subr.mxu0 0.0
    %5270 = vmatpush1.xpose.msra.mxu0 0.0
    %5271 = vmatprep.subr.mxu0 0.0
    %5272 = vmatpush1.xpose.msra.mxu0 0.0
    %5273 = vmatprep.subr.mxu0 0.0
    %5274 = vmatpush1.xpose.msra.mxu0 0.0
    %5275 = vmatprep.subr.mxu0 0.0
    %5276 = vmatpush1.xpose.msra.mxu0 0.0
    %5277 = vmatprep.subr.mxu0 0.0
    %5278 = vmatpush1.xpose.msra.mxu0 0.0
    %5279 = vmatprep.subr.mxu0 0.0
    %5280 = vmatpush1.xpose.msra.mxu0 0.0
    %5281 = vmatprep.subr.mxu0 0.0
    %5282 = vmatpush1.xpose.msra.mxu0 0.0
    %5283 = vmatprep.subr.mxu0 0.0
    %5284 = vmatpush1.xpose.msra.mxu0 0.0
    %5285 = vmatprep.subr.mxu0 0.0
    %5286 = vmatpush1.xpose.msra.mxu0 0.0
    %5287 = vmatprep.subr.mxu0 0.0
    %5288 = vmatpush1.xpose.msra.mxu0 0.0
    %5289 = vmatprep.subr.mxu0 0.0
    %5290 = vmatpush1.xpose.msra.mxu0 0.0
    %5291 = vmatprep.subr.mxu0 0.0
    %5292 = vmatpush1.xpose.msra.mxu0 0.0
    %5293 = vmatprep.subr.mxu0 0.0
    %5294 = vmatpush1.xpose.msra.mxu0 0.0
    %5295 = vmatprep.subr.mxu0 0.0
    %5296 = vmatpush1.xpose.msra.mxu0 0.0
    %5297 = vmatprep.subr.mxu0 0.0
    %5298 = vmatpush1.xpose.msra.mxu0 0.0
    %5299 = vmatprep.subr.mxu0 0.0
    %5300 = vmatpush1.xpose.msra.mxu0 0.0
    %5301 = vmatprep.subr.mxu0 0.0
    %5302 = vmatpush1.xpose.msra.mxu0 0.0
    %5303 = vmatprep.subr.mxu0 0.0
    %5304 = vmatpush1.xpose.msra.mxu0 0.0
    %5305 = vmatprep.subr.mxu0 0.0
    %5306 = vmatpush1.xpose.msra.mxu0 0.0
    %5307 = vmatprep.subr.mxu0 0.0
    %5308 = vmatpush1.xpose.msra.mxu0 0.0
    %5309 = vmatprep.subr.mxu0 0.0
    %5310 = vmatpush1.xpose.msra.mxu0 0.0
    %5311 = vmatprep.subr.mxu0 0.0
    %5312 = vmatpush1.xpose.msra.mxu0 0.0
    %5313 = vmatprep.subr.mxu0 0.0
    %5314 = vmatpush1.xpose.msra.mxu0 0.0
    %5315 = vmatprep.subr.mxu0 0.0
    %5316 = vmatpush1.xpose.msra.mxu0 0.0
    %5317 = vmatprep.subr.mxu0 0.0
    %5318 = vmatpush1.xpose.msra.mxu0 0.0
    %5319 = vmatprep.subr.mxu0 0.0
    %5320 = vmatpush1.xpose.msra.mxu0 0.0
    %5321 = vmatprep.subr.mxu0 0.0
    %5322 = vmatpush1.xpose.msra.mxu0 0.0
    %5323 = vmatprep.mubr.f32.mxu0 %v4978
    %5324 = vmatmul.mubr.f32.gmra.mrb[0].mxu0 %v4977
    %v5325 = vpop.f32.mrb[0].mxu0
    %v5326 = vadd.f32 %v5256, %v5325
    %v5327 = vpop.f32.mrb[0].mxu0
    %5328 = vdwg.mxu0
    %vm5329 = vcmask 64512
    %v5330 = vsel %vm5329, %v4966, 0.0
    %v5331 = vrot.slane %v5330, 4
    %v5332 = vadd.f32 %v5330, %v5331
    %v5333 = vrot.slane %v5332, 2
    %v5334 = vadd.f32 %v5332, %v5333
    %v5335 = vrot.slane %v5334, 1
    %v5336 = vadd.f32 %v5334, %v5335
    %v5337 = vmul.f32 %v5336, 0.00390625
    %v5338 = vsel %vm5329, %v5326, 0.0
    %v5339 = vrot.slane %v5338, 4
    %v5340 = vadd.f32 %v5338, %v5339
    %v5341 = vrot.slane %v5340, 2
    %v5342 = vadd.f32 %v5340, %v5341
    %v5343 = vrot.slane %v5342, 1
    %v5344 = vadd.f32 %v5342, %v5343
    %v5345 = vmul.f32 %v5344, 0.00390625
    %v5346 = vmul.f32 %v5337, %v5337
    %v5347 = vsub.f32 %v5345, %v5346
    %v5348 = vmax.f32 %v5347, 0.0
    %v5349 = vadd.f32 %v5348, 1e-05
    %v5350 = vrsqrt.pop %v5349
    %v5352 = vsel %vm5329, %v5337, 0
    %5354 = vmatprep.subr.mxu0 %v4610
    %5355 = vmatpush1.msra.mxu0 %v4609
    %5356 = vmatprep.subr.mxu0 0.0
    %5357 = vmatpush1.msra.mxu0 0.0
    %5358 = vmatprep.subr.mxu0 0.0
    %5359 = vmatpush1.msra.mxu0 0.0
    %5360 = vmatprep.subr.mxu0 0.0
    %5361 = vmatpush1.msra.mxu0 0.0
    %5362 = vmatprep.subr.mxu0 0.0
    %5363 = vmatpush1.msra.mxu0 0.0
    %5364 = vmatprep.subr.mxu0 0.0
    %5365 = vmatpush1.msra.mxu0 0.0
    %5366 = vmatprep.subr.mxu0 0.0
    %5367 = vmatpush1.msra.mxu0 0.0
    %5368 = vmatprep.subr.mxu0 0.0
    %5369 = vmatpush1.msra.mxu0 0.0
    %5370 = vmatprep.subr.mxu0 0.0
    %5371 = vmatpush1.msra.mxu0 0.0
    %5372 = vmatprep.subr.mxu0 0.0
    %5373 = vmatpush1.msra.mxu0 0.0
    %5374 = vmatprep.subr.mxu0 0.0
    %5375 = vmatpush1.msra.mxu0 0.0
    %5376 = vmatprep.subr.mxu0 0.0
    %5377 = vmatpush1.msra.mxu0 0.0
    %5378 = vmatprep.subr.mxu0 0.0
    %5379 = vmatpush1.msra.mxu0 0.0
    %5380 = vmatprep.subr.mxu0 0.0
    %5381 = vmatpush1.msra.mxu0 0.0
    %5382 = vmatprep.subr.mxu0 0.0
    %5383 = vmatpush1.msra.mxu0 0.0
    %5384 = vmatprep.subr.mxu0 0.0
    %5385 = vmatpush1.msra.mxu0 0.0
    %5386 = vmatprep.subr.mxu0 0.0
    %5387 = vmatpush1.msra.mxu0 0.0
    %5388 = vmatprep.subr.mxu0 0.0
    %5389 = vmatpush1.msra.mxu0 0.0
    %5390 = vmatprep.subr.mxu0 0.0
    %5391 = vmatpush1.msra.mxu0 0.0
    %5392 = vmatprep.subr.mxu0 0.0
    %5393 = vmatpush1.msra.mxu0 0.0
    %5394 = vmatprep.subr.mxu0 0.0
    %5395 = vmatpush1.msra.mxu0 0.0
    %5396 = vmatprep.subr.mxu0 0.0
    %5397 = vmatpush1.msra.mxu0 0.0
    %5398 = vmatprep.subr.mxu0 0.0
    %5399 = vmatpush1.msra.mxu0 0.0
    %5400 = vmatprep.subr.mxu0 0.0
    %5401 = vmatpush1.msra.mxu0 0.0
    %5402 = vmatprep.subr.mxu0 0.0
    %5403 = vmatpush1.msra.mxu0 0.0
    %5404 = vmatprep.subr.mxu0 0.0
    %5405 = vmatpush1.msra.mxu0 0.0
    %5406 = vmatprep.subr.mxu0 0.0
    %5407 = vmatpush1.msra.mxu0 0.0
    %5408 = vmatprep.subr.mxu0 0.0
    %5409 = vmatpush1.msra.mxu0 0.0
    %5410 = vmatprep.subr.mxu0 0.0
    %5411 = vmatpush1.msra.mxu0 0.0
    %5412 = vmatprep.subr.mxu0 0.0
    %5413 = vmatpush1.msra.mxu0 0.0
    %5414 = vmatprep.subr.mxu0 0.0
    %5415 = vmatpush1.msra.mxu0 0.0
    %5416 = vmatprep.subr.mxu0 0.0
    %5417 = vmatpush1.msra.mxu0 0.0
    %5418 = vmatprep.mubr.f32.mxu0 0.0
    %5419 = vmatmul.mubr.f32.gmra.mrb[0].mxu0 %v5352
    %v5420 = vpop.f32.mrb[0].mxu0
    %v5421 = vadd.f32 0.0, %v5420
    %v5422 = vpop.f32.mrb[0].mxu0
    %v5423 = vadd.f32 0.0, %v5422
    %5424 = vdwg.mxu0
    %5425 = vmatprep.subr.mxu0 %v4612
    %5426 = vmatpush1.msra.mxu0 %v4611
    %5427 = vmatprep.subr.mxu0 0.0
    %5428 = vmatpush1.msra.mxu0 0.0
    %5429 = vmatprep.subr.mxu0 0.0
    %5430 = vmatpush1.msra.mxu0 0.0
    %5431 = vmatprep.subr.mxu0 0.0
    %5432 = vmatpush1.msra.mxu0 0.0
    %5433 = vmatprep.subr.mxu0 0.0
    %5434 = vmatpush1.msra.mxu0 0.0
    %5435 = vmatprep.subr.mxu0 0.0
    %5436 = vmatpush1.msra.mxu0 0.0
    %5437 = vmatprep.subr.mxu0 0.0
    %5438 = vmatpush1.msra.mxu0 0.0
    %5439 = vmatprep.subr.mxu0 0.0
    %5440 = vmatpush1.msra.mxu0 0.0
    %5441 = vmatprep.subr.mxu0 0.0
    %5442 = vmatpush1.msra.mxu0 0.0
    %5443 = vmatprep.subr.mxu0 0.0
    %5444 = vmatpush1.msra.mxu0 0.0
    %5445 = vmatprep.subr.mxu0 0.0
    %5446 = vmatpush1.msra.mxu0 0.0
    %5447 = vmatprep.subr.mxu0 0.0
    %5448 = vmatpush1.msra.mxu0 0.0
    %5449 = vmatprep.subr.mxu0 0.0
    %5450 = vmatpush1.msra.mxu0 0.0
    %5451 = vmatprep.subr.mxu0 0.0
    %5452 = vmatpush1.msra.mxu0 0.0
    %5453 = vmatprep.subr.mxu0 0.0
    %5454 = vmatpush1.msra.mxu0 0.0
    %5455 = vmatprep.subr.mxu0 0.0
    %5456 = vmatpush1.msra.mxu0 0.0
    %5457 = vmatprep.subr.mxu0 0.0
    %5458 = vmatpush1.msra.mxu0 0.0
    %5459 = vmatprep.subr.mxu0 0.0
    %5460 = vmatpush1.msra.mxu0 0.0
    %5461 = vmatprep.subr.mxu0 0.0
    %5462 = vmatpush1.msra.mxu0 0.0
    %5463 = vmatprep.subr.mxu0 0.0
    %5464 = vmatpush1.msra.mxu0 0.0
    %5465 = vmatprep.subr.mxu0 0.0
    %5466 = vmatpush1.msra.mxu0 0.0
    %5467 = vmatprep.subr.mxu0 0.0
    %5468 = vmatpush1.msra.mxu0 0.0
    %5469 = vmatprep.subr.mxu0 0.0
    %5470 = vmatpush1.msra.mxu0 0.0
    %5471 = vmatprep.subr.mxu0 0.0
    %5472 = vmatpush1.msra.mxu0 0.0
    %5473 = vmatprep.subr.mxu0 0.0
    %5474 = vmatpush1.msra.mxu0 0.0
    %5475 = vmatprep.subr.mxu0 0.0
    %5476 = vmatpush1.msra.mxu0 0.0
    %5477 = vmatprep.subr.mxu0 0.0
    %5478 = vmatpush1.msra.mxu0 0.0
    %5479 = vmatprep.subr.mxu0 0.0
    %5480 = vmatpush1.msra.mxu0 0.0
    %5481 = vmatprep.subr.mxu0 0.0
    %5482 = vmatpush1.msra.mxu0 0.0
    %5483 = vmatprep.subr.mxu0 0.0
    %5484 = vmatpush1.msra.mxu0 0.0
    %5485 = vmatprep.subr.mxu0 0.0
    %5486 = vmatpush1.msra.mxu0 0.0
    %5487 = vmatprep.subr.mxu0 0.0
    %5488 = vmatpush1.msra.mxu0 0.0
    %5489 = vmatprep.mubr.f32.mxu0 0.0
    %5490 = vmatmul.mubr.f32.gmra.mrb[0].mxu0 %v5352
    %v5491 = vpop.f32.mrb[0].mxu0
    %v5492 = vadd.f32 0.0, %v5491
    %v5493 = vpop.f32.mrb[0].mxu0
    %v5494 = vadd.f32 0.0, %v5493
    %5495 = vdwg.mxu0
    %5496 = vmatprep.subr.mxu0 %v4614
    %5497 = vmatpush1.msra.mxu0 %v4613
    %5498 = vmatprep.subr.mxu0 0.0
    %5499 = vmatpush1.msra.mxu0 0.0
    %5500 = vmatprep.subr.mxu0 0.0
    %5501 = vmatpush1.msra.mxu0 0.0
    %5502 = vmatprep.subr.mxu0 0.0
    %5503 = vmatpush1.msra.mxu0 0.0
    %5504 = vmatprep.subr.mxu0 0.0
    %5505 = vmatpush1.msra.mxu0 0.0
    %5506 = vmatprep.subr.mxu0 0.0
    %5507 = vmatpush1.msra.mxu0 0.0
    %5508 = vmatprep.subr.mxu0 0.0
    %5509 = vmatpush1.msra.mxu0 0.0
    %5510 = vmatprep.subr.mxu0 0.0
    %5511 = vmatpush1.msra.mxu0 0.0
    %5512 = vmatprep.subr.mxu0 0.0
    %5513 = vmatpush1.msra.mxu0 0.0
    %5514 = vmatprep.subr.mxu0 0.0
    %5515 = vmatpush1.msra.mxu0 0.0
    %5516 = vmatprep.subr.mxu0 0.0
    %5517 = vmatpush1.msra.mxu0 0.0
    %5518 = vmatprep.subr.mxu0 0.0
    %5519 = vmatpush1.msra.mxu0 0.0
    %5520 = vmatprep.subr.mxu0 0.0
    %5521 = vmatpush1.msra.mxu0 0.0
    %5522 = vmatprep.subr.mxu0 0.0
    %5523 = vmatpush1.msra.mxu0 0.0
    %5524 = vmatprep.subr.mxu0 0.0
    %5525 = vmatpush1.msra.mxu0 0.0
    %5526 = vmatprep.subr.mxu0 0.0
    %5527 = vmatpush1.msra.mxu0 0.0
    %5528 = vmatprep.subr.mxu0 0.0
    %5529 = vmatpush1.msra.mxu0 0.0
    %5530 = vmatprep.subr.mxu0 0.0
    %5531 = vmatpush1.msra.mxu0 0.0
    %5532 = vmatprep.subr.mxu0 0.0
    %5533 = vmatpush1.msra.mxu0 0.0
    %5534 = vmatprep.subr.mxu0 0.0
    %5535 = vmatpush1.msra.mxu0 0.0
    %5536 = vmatprep.subr.mxu0 0.0
    %5537 = vmatpush1.msra.mxu0 0.0
    %5538 = vmatprep.subr.mxu0 0.0
    %5539 = vmatpush1.msra.mxu0 0.0
    %5540 = vmatprep.subr.mxu0 0.0
    %5541 = vmatpush1.msra.mxu0 0.0
    %5542 = vmatprep.subr.mxu0 0.0
    %5543 = vmatpush1.msra.mxu0 0.0
    %5544 = vmatprep.subr.mxu0 0.0
    %5545 = vmatpush1.msra.mxu0 0.0
    %5546 = vmatprep.subr.mxu0 0.0
    %5547 = vmatpush1.msra.mxu0 0.0
    %5548 = vmatprep.subr.mxu0 0.0
    %5549 = vmatpush1.msra.mxu0 0.0
    %5550 = vmatprep.subr.mxu0 0.0
    %5551 = vmatpush1.msra.mxu0 0.0
    %5552 = vmatprep.subr.mxu0 0.0
    %5553 = vmatpush1.msra.mxu0 0.0
    %5554 = vmatprep.subr.mxu0 0.0
    %5555 = vmatpush1.msra.mxu0 0.0
    %5556 = vmatprep.subr.mxu0 0.0
    %5557 = vmatpush1.msra.mxu0 0.0
    %5558 = vmatprep.subr.mxu0 0.0
    %5559 = vmatpush1.msra.mxu0 0.0
    %5560 = vmatprep.mubr.f32.mxu0 0.0
    %5561 = vmatmul.mubr.f32.gmra.mrb[0].mxu0 %v5352
    %v5562 = vpop.f32.mrb[0].mxu0
    %v5563 = vadd.f32 0.0, %v5562
    %v5564 = vpop.f32.mrb[0].mxu0
    %v5565 = vadd.f32 0.0, %v5564
    %5566 = vdwg.mxu0
    %5567 = vmatprep.subr.mxu0 %v4616
    %5568 = vmatpush1.msra.mxu0 %v4615
    %5569 = vmatprep.subr.mxu0 0.0
    %5570 = vmatpush1.msra.mxu0 0.0
    %5571 = vmatprep.subr.mxu0 0.0
    %5572 = vmatpush1.msra.mxu0 0.0
    %5573 = vmatprep.subr.mxu0 0.0
    %5574 = vmatpush1.msra.mxu0 0.0
    %5575 = vmatprep.subr.mxu0 0.0
    %5576 = vmatpush1.msra.mxu0 0.0
    %5577 = vmatprep.subr.mxu0 0.0
    %5578 = vmatpush1.msra.mxu0 0.0
    %5579 = vmatprep.subr.mxu0 0.0
    %5580 = vmatpush1.msra.mxu0 0.0
    %5581 = vmatprep.subr.mxu0 0.0
    %5582 = vmatpush1.msra.mxu0 0.0
    %5583 = vmatprep.subr.mxu0 0.0
    %5584 = vmatpush1.msra.mxu0 0.0
    %5585 = vmatprep.subr.mxu0 0.0
    %5586 = vmatpush1.msra.mxu0 0.0
    %5587 = vmatprep.subr.mxu0 0.0
    %5588 = vmatpush1.msra.mxu0 0.0
    %5589 = vmatprep.subr.mxu0 0.0
    %5590 = vmatpush1.msra.mxu0 0.0
    %5591 = vmatprep.subr.mxu0 0.0
    %5592 = vmatpush1.msra.mxu0 0.0
    %5593 = vmatprep.subr.mxu0 0.0
    %5594 = vmatpush1.msra.mxu0 0.0
    %5595 = vmatprep.subr.mxu0 0.0
    %5596 = vmatpush1.msra.mxu0 0.0
    %5597 = vmatprep.subr.mxu0 0.0
    %5598 = vmatpush1.msra.mxu0 0.0
    %5599 = vmatprep.subr.mxu0 0.0
    %5600 = vmatpush1.msra.mxu0 0.0
    %5601 = vmatprep.subr.mxu0 0.0
    %5602 = vmatpush1.msra.mxu0 0.0
    %5603 = vmatprep.subr.mxu0 0.0
    %5604 = vmatpush1.msra.mxu0 0.0
    %5605 = vmatprep.subr.mxu0 0.0
    %5606 = vmatpush1.msra.mxu0 0.0
    %5607 = vmatprep.subr.mxu0 0.0
    %5608 = vmatpush1.msra.mxu0 0.0
    %5609 = vmatprep.subr.mxu0 0.0
    %5610 = vmatpush1.msra.mxu0 0.0
    %5611 = vmatprep.subr.mxu0 0.0
    %5612 = vmatpush1.msra.mxu0 0.0
    %5613 = vmatprep.subr.mxu0 0.0
    %5614 = vmatpush1.msra.mxu0 0.0
    %5615 = vmatprep.subr.mxu0 0.0
    %5616 = vmatpush1.msra.mxu0 0.0
    %5617 = vmatprep.subr.mxu0 0.0
    %5618 = vmatpush1.msra.mxu0 0.0
    %5619 = vmatprep.subr.mxu0 0.0
    %5620 = vmatpush1.msra.mxu0 0.0
    %5621 = vmatprep.subr.mxu0 0.0
    %5622 = vmatpush1.msra.mxu0 0.0
    %5623 = vmatprep.subr.mxu0 0.0
    %5624 = vmatpush1.msra.mxu0 0.0
    %5625 = vmatprep.subr.mxu0 0.0
    %5626 = vmatpush1.msra.mxu0 0.0
    %5627 = vmatprep.subr.mxu0 0.0
    %5628 = vmatpush1.msra.mxu0 0.0
    %5629 = vmatprep.subr.mxu0 0.0
    %5630 = vmatpush1.msra.mxu0 0.0
    %5631 = vmatprep.mubr.f32.mxu0 0.0
    %5632 = vmatmul.mubr.f32.gmra.mrb[0].mxu0 %v5352
    %v5633 = vpop.f32.mrb[0].mxu0
    %v5634 = vadd.f32 0.0, %v5633
    %v5635 = vpop.f32.mrb[0].mxu0
    %v5636 = vadd.f32 0.0, %v5635
    %5637 = vdwg.mxu0
    %5638 = vmatprep.subr.mxu0 %v4618
    %5639 = vmatpush1.msra.mxu0 %v4617
    %5640 = vmatprep.subr.mxu0 0.0
    %5641 = vmatpush1.msra.mxu0 0.0
    %5642 = vmatprep.subr.mxu0 0.0
    %5643 = vmatpush1.msra.mxu0 0.0
    %5644 = vmatprep.subr.mxu0 0.0
    %5645 = vmatpush1.msra.mxu0 0.0
    %5646 = vmatprep.subr.mxu0 0.0
    %5647 = vmatpush1.msra.mxu0 0.0
    %5648 = vmatprep.subr.mxu0 0.0
    %5649 = vmatpush1.msra.mxu0 0.0
    %5650 = vmatprep.subr.mxu0 0.0
    %5651 = vmatpush1.msra.mxu0 0.0
    %5652 = vmatprep.subr.mxu0 0.0
    %5653 = vmatpush1.msra.mxu0 0.0
    %5654 = vmatprep.subr.mxu0 0.0
    %5655 = vmatpush1.msra.mxu0 0.0
    %5656 = vmatprep.subr.mxu0 0.0
    %5657 = vmatpush1.msra.mxu0 0.0
    %5658 = vmatprep.subr.mxu0 0.0
    %5659 = vmatpush1.msra.mxu0 0.0
    %5660 = vmatprep.subr.mxu0 0.0
    %5661 = vmatpush1.msra.mxu0 0.0
    %5662 = vmatprep.subr.mxu0 0.0
    %5663 = vmatpush1.msra.mxu0 0.0
    %5664 = vmatprep.subr.mxu0 0.0
    %5665 = vmatpush1.msra.mxu0 0.0
    %5666 = vmatprep.subr.mxu0 0.0
    %5667 = vmatpush1.msra.mxu0 0.0
    %5668 = vmatprep.subr.mxu0 0.0
    %5669 = vmatpush1.msra.mxu0 0.0
    %5670 = vmatprep.subr.mxu0 0.0
    %5671 = vmatpush1.msra.mxu0 0.0
    %5672 = vmatprep.subr.mxu0 0.0
    %5673 = vmatpush1.msra.mxu0 0.0
    %5674 = vmatprep.subr.mxu0 0.0
    %5675 = vmatpush1.msra.mxu0 0.0
    %5676 = vmatprep.subr.mxu0 0.0
    %5677 = vmatpush1.msra.mxu0 0.0
    %5678 = vmatprep.subr.mxu0 0.0
    %5679 = vmatpush1.msra.mxu0 0.0
    %5680 = vmatprep.subr.mxu0 0.0
    %5681 = vmatpush1.msra.mxu0 0.0
    %5682 = vmatprep.subr.mxu0 0.0
    %5683 = vmatpush1.msra.mxu0 0.0
    %5684 = vmatprep.subr.mxu0 0.0
    %5685 = vmatpush1.msra.mxu0 0.0
    %5686 = vmatprep.subr.mxu0 0.0
    %5687 = vmatpush1.msra.mxu0 0.0
    %5688 = vmatprep.subr.mxu0 0.0
    %5689 = vmatpush1.msra.mxu0 0.0
    %5690 = vmatprep.subr.mxu0 0.0
    %5691 = vmatpush1.msra.mxu0 0.0
    %5692 = vmatprep.subr.mxu0 0.0
    %5693 = vmatpush1.msra.mxu0 0.0
    %5694 = vmatprep.subr.mxu0 0.0
    %5695 = vmatpush1.msra.mxu0 0.0
    %5696 = vmatprep.subr.mxu0 0.0
    %5697 = vmatpush1.msra.mxu0 0.0
    %5698 = vmatprep.subr.mxu0 0.0
    %5699 = vmatpush1.msra.mxu0 0.0
    %5700 = vmatprep.subr.mxu0 0.0
    %5701 = vmatpush1.msra.mxu0 0.0
    %5702 = vmatprep.mubr.f32.mxu0 0.0
    %5703 = vmatmul.mubr.f32.gmra.mrb[0].mxu0 %v5352
    %v5704 = vpop.f32.mrb[0].mxu0
    %v5705 = vadd.f32 0.0, %v5704
    %v5706 = vpop.f32.mrb[0].mxu0
    %v5707 = vadd.f32 0.0, %v5706
    %5708 = vdwg.mxu0
    %v5710 = vsel %vm5329, %v5350, 0
    %5712 = vmatprep.subr.mxu0 %v4610
    %5713 = vmatpush1.msra.mxu0 %v4609
    %5714 = vmatprep.subr.mxu0 0.0
    %5715 = vmatpush1.msra.mxu0 0.0
    %5716 = vmatprep.subr.mxu0 0.0
    %5717 = vmatpush1.msra.mxu0 0.0
    %5718 = vmatprep.subr.mxu0 0.0
    %5719 = vmatpush1.msra.mxu0 0.0
    %5720 = vmatprep.subr.mxu0 0.0
    %5721 = vmatpush1.msra.mxu0 0.0
    %5722 = vmatprep.subr.mxu0 0.0
    %5723 = vmatpush1.msra.mxu0 0.0
    %5724 = vmatprep.subr.mxu0 0.0
    %5725 = vmatpush1.msra.mxu0 0.0
    %5726 = vmatprep.subr.mxu0 0.0
    %5727 = vmatpush1.msra.mxu0 0.0
    %5728 = vmatprep.subr.mxu0 0.0
    %5729 = vmatpush1.msra.mxu0 0.0
    %5730 = vmatprep.subr.mxu0 0.0
    %5731 = vmatpush1.msra.mxu0 0.0
    %5732 = vmatprep.subr.mxu0 0.0
    %5733 = vmatpush1.msra.mxu0 0.0
    %5734 = vmatprep.subr.mxu0 0.0
    %5735 = vmatpush1.msra.mxu0 0.0
    %5736 = vmatprep.subr.mxu0 0.0
    %5737 = vmatpush1.msra.mxu0 0.0
    %5738 = vmatprep.subr.mxu0 0.0
    %5739 = vmatpush1.msra.mxu0 0.0
    %5740 = vmatprep.subr.mxu0 0.0
    %5741 = vmatpush1.msra.mxu0 0.0
    %5742 = vmatprep.subr.mxu0 0.0
    %5743 = vmatpush1.msra.mxu0 0.0
    %5744 = vmatprep.subr.mxu0 0.0
    %5745 = vmatpush1.msra.mxu0 0.0
    %5746 = vmatprep.subr.mxu0 0.0
    %5747 = vmatpush1.msra.mxu0 0.0
    %5748 = vmatprep.subr.mxu0 0.0
    %5749 = vmatpush1.msra.mxu0 0.0
    %5750 = vmatprep.subr.mxu0 0.0
    %5751 = vmatpush1.msra.mxu0 0.0
    %5752 = vmatprep.subr.mxu0 0.0
    %5753 = vmatpush1.msra.mxu0 0.0
    %5754 = vmatprep.subr.mxu0 0.0
    %5755 = vmatpush1.msra.mxu0 0.0
    %5756 = vmatprep.subr.mxu0 0.0
    %5757 = vmatpush1.msra.mxu0 0.0
    %5758 = vmatprep.subr.mxu0 0.0
    %5759 = vmatpush1.msra.mxu0 0.0
    %5760 = vmatprep.subr.mxu0 0.0
    %5761 = vmatpush1.msra.mxu0 0.0
    %5762 = vmatprep.subr.mxu0 0.0
    %5763 = vmatpush1.msra.mxu0 0.0
    %5764 = vmatprep.subr.mxu0 0.0
    %5765 = vmatpush1.msra.mxu0 0.0
    %5766 = vmatprep.subr.mxu0 0.0
    %5767 = vmatpush1.msra.mxu0 0.0
    %5768 = vmatprep.subr.mxu0 0.0
    %5769 = vmatpush1.msra.mxu0 0.0
    %5770 = vmatprep.subr.mxu0 0.0
    %5771 = vmatpush1.msra.mxu0 0.0
    %5772 = vmatprep.subr.mxu0 0.0
    %5773 = vmatpush1.msra.mxu0 0.0
    %5774 = vmatprep.subr.mxu0 0.0
    %5775 = vmatpush1.msra.mxu0 0.0
    %5776 = vmatprep.mubr.f32.mxu0 0.0
    %5777 = vmatmul.mubr.f32.gmra.mrb[0].mxu0 %v5710
    %v5778 = vpop.f32.mrb[0].mxu0
    %v5779 = vadd.f32 0.0, %v5778
    %v5780 = vpop.f32.mrb[0].mxu0
    %v5781 = vadd.f32 0.0, %v5780
    %5782 = vdwg.mxu0
    %5783 = vmatprep.subr.mxu0 %v4612
    %5784 = vmatpush1.msra.mxu0 %v4611
    %5785 = vmatprep.subr.mxu0 0.0
    %5786 = vmatpush1.msra.mxu0 0.0
    %5787 = vmatprep.subr.mxu0 0.0
    %5788 = vmatpush1.msra.mxu0 0.0
    %5789 = vmatprep.subr.mxu0 0.0
    %5790 = vmatpush1.msra.mxu0 0.0
    %5791 = vmatprep.subr.mxu0 0.0
    %5792 = vmatpush1.msra.mxu0 0.0
    %5793 = vmatprep.subr.mxu0 0.0
    %5794 = vmatpush1.msra.mxu0 0.0
    %5795 = vmatprep.subr.mxu0 0.0
    %5796 = vmatpush1.msra.mxu0 0.0
    %5797 = vmatprep.subr.mxu0 0.0
    %5798 = vmatpush1.msra.mxu0 0.0
    %5799 = vmatprep.subr.mxu0 0.0
    %5800 = vmatpush1.msra.mxu0 0.0
    %5801 = vmatprep.subr.mxu0 0.0
    %5802 = vmatpush1.msra.mxu0 0.0
    %5803 = vmatprep.subr.mxu0 0.0
    %5804 = vmatpush1.msra.mxu0 0.0
    %5805 = vmatprep.subr.mxu0 0.0
    %5806 = vmatpush1.msra.mxu0 0.0
    %5807 = vmatprep.subr.mxu0 0.0
    %5808 = vmatpush1.msra.mxu0 0.0
    %5809 = vmatprep.subr.mxu0 0.0
    %5810 = vmatpush1.msra.mxu0 0.0
    %5811 = vmatprep.subr.mxu0 0.0
    %5812 = vmatpush1.msra.mxu0 0.0
    %5813 = vmatprep.subr.mxu0 0.0
    %5814 = vmatpush1.msra.mxu0 0.0
    %5815 = vmatprep.subr.mxu0 0.0
    %5816 = vmatpush1.msra.mxu0 0.0
    %5817 = vmatprep.subr.mxu0 0.0
    %5818 = vmatpush1.msra.mxu0 0.0
    %5819 = vmatprep.subr.mxu0 0.0
    %5820 = vmatpush1.msra.mxu0 0.0
    %5821 = vmatprep.subr.mxu0 0.0
    %5822 = vmatpush1.msra.mxu0 0.0
    %5823 = vmatprep.subr.mxu0 0.0
    %5824 = vmatpush1.msra.mxu0 0.0
    %5825 = vmatprep.subr.mxu0 0.0
    %5826 = vmatpush1.msra.mxu0 0.0
    %5827 = vmatprep.subr.mxu0 0.0
    %5828 = vmatpush1.msra.mxu0 0.0
    %5829 = vmatprep.subr.mxu0 0.0
    %5830 = vmatpush1.msra.mxu0 0.0
    %5831 = vmatprep.subr.mxu0 0.0
    %5832 = vmatpush1.msra.mxu0 0.0
    %5833 = vmatprep.subr.mxu0 0.0
    %5834 = vmatpush1.msra.mxu0 0.0
    %5835 = vmatprep.subr.mxu0 0.0
    %5836 = vmatpush1.msra.mxu0 0.0
    %5837 = vmatprep.subr.mxu0 0.0
    %5838 = vmatpush1.msra.mxu0 0.0
    %5839 = vmatprep.subr.mxu0 0.0
    %5840 = vmatpush1.msra.mxu0 0.0
    %5841 = vmatprep.subr.mxu0 0.0
    %5842 = vmatpush1.msra.mxu0 0.0
    %5843 = vmatprep.subr.mxu0 0.0
    %5844 = vmatpush1.msra.mxu0 0.0
    %5845 = vmatprep.subr.mxu0 0.0
    %5846 = vmatpush1.msra.mxu0 0.0
    %5847 = vmatprep.mubr.f32.mxu0 0.0
    %5848 = vmatmul.mubr.f32.gmra.mrb[0].mxu0 %v5710
    %v5849 = vpop.f32.mrb[0].mxu0
    %v5850 = vadd.f32 0.0, %v5849
    %v5851 = vpop.f32.mrb[0].mxu0
    %v5852 = vadd.f32 0.0, %v5851
    %5853 = vdwg.mxu0
    %5854 = vmatprep.subr.mxu0 %v4614
    %5855 = vmatpush1.msra.mxu0 %v4613
    %5856 = vmatprep.subr.mxu0 0.0
    %5857 = vmatpush1.msra.mxu0 0.0
    %5858 = vmatprep.subr.mxu0 0.0
    %5859 = vmatpush1.msra.mxu0 0.0
    %5860 = vmatprep.subr.mxu0 0.0
    %5861 = vmatpush1.msra.mxu0 0.0
    %5862 = vmatprep.subr.mxu0 0.0
    %5863 = vmatpush1.msra.mxu0 0.0
    %5864 = vmatprep.subr.mxu0 0.0
    %5865 = vmatpush1.msra.mxu0 0.0
    %5866 = vmatprep.subr.mxu0 0.0
    %5867 = vmatpush1.msra.mxu0 0.0
    %5868 = vmatprep.subr.mxu0 0.0
    %5869 = vmatpush1.msra.mxu0 0.0
    %5870 = vmatprep.subr.mxu0 0.0
    %5871 = vmatpush1.msra.mxu0 0.0
    %5872 = vmatprep.subr.mxu0 0.0
    %5873 = vmatpush1.msra.mxu0 0.0
    %5874 = vmatprep.subr.mxu0 0.0
    %5875 = vmatpush1.msra.mxu0 0.0
    %5876 = vmatprep.subr.mxu0 0.0
    %5877 = vmatpush1.msra.mxu0 0.0
    %5878 = vmatprep.subr.mxu0 0.0
    %5879 = vmatpush1.msra.mxu0 0.0
    %5880 = vmatprep.subr.mxu0 0.0
    %5881 = vmatpush1.msra.mxu0 0.0
    %5882 = vmatprep.subr.mxu0 0.0
    %5883 = vmatpush1.msra.mxu0 0.0
    %5884 = vmatprep.subr.mxu0 0.0
    %5885 = vmatpush1.msra.mxu0 0.0
    %5886 = vmatprep.subr.mxu0 0.0
    %5887 = vmatpush1.msra.mxu0 0.0
    %5888 = vmatprep.subr.mxu0 0.0
    %5889 = vmatpush1.msra.mxu0 0.0
    %5890 = vmatprep.subr.mxu0 0.0
    %5891 = vmatpush1.msra.mxu0 0.0
    %5892 = vmatprep.subr.mxu0 0.0
    %5893 = vmatpush1.msra.mxu0 0.0
    %5894 = vmatprep.subr.mxu0 0.0
    %5895 = vmatpush1.msra.mxu0 0.0
    %5896 = vmatprep.subr.mxu0 0.0
    %5897 = vmatpush1.msra.mxu0 0.0
    %5898 = vmatprep.subr.mxu0 0.0
    %5899 = vmatpush1.msra.mxu0 0.0
    %5900 = vmatprep.subr.mxu0 0.0
    %5901 = vmatpush1.msra.mxu0 0.0
    %5902 = vmatprep.subr.mxu0 0.0
    %5903 = vmatpush1.msra.mxu0 0.0
    %5904 = vmatprep.subr.mxu0 0.0
    %5905 = vmatpush1.msra.mxu0 0.0
    %5906 = vmatprep.subr.mxu0 0.0
    %5907 = vmatpush1.msra.mxu0 0.0
    %5908 = vmatprep.subr.mxu0 0.0
    %5909 = vmatpush1.msra.mxu0 0.0
    %5910 = vmatprep.subr.mxu0 0.0
    %5911 = vmatpush1.msra.mxu0 0.0
    %5912 = vmatprep.subr.mxu0 0.0
    %5913 = vmatpush1.msra.mxu0 0.0
    %5914 = vmatprep.subr.mxu0 0.0
    %5915 = vmatpush1.msra.mxu0 0.0
    %5916 = vmatprep.subr.mxu0 0.0
    %5917 = vmatpush1.msra.mxu0 0.0
    %5918 = vmatprep.mubr.f32.mxu0 0.0
    %5919 = vmatmul.mubr.f32.gmra.mrb[0].mxu0 %v5710
    %v5920 = vpop.f32.mrb[0].mxu0
    %v5921 = vadd.f32 0.0, %v5920
    %v5922 = vpop.f32.mrb[0].mxu0
    %v5923 = vadd.f32 0.0, %v5922
    %5924 = vdwg.mxu0
    %5925 = vmatprep.subr.mxu0 %v4616
    %5926 = vmatpush1.msra.mxu0 %v4615
    %5927 = vmatprep.subr.mxu0 0.0
    %5928 = vmatpush1.msra.mxu0 0.0
    %5929 = vmatprep.subr.mxu0 0.0
    %5930 = vmatpush1.msra.mxu0 0.0
    %5931 = vmatprep.subr.mxu0 0.0
    %5932 = vmatpush1.msra.mxu0 0.0
    %5933 = vmatprep.subr.mxu0 0.0
    %5934 = vmatpush1.msra.mxu0 0.0
    %5935 = vmatprep.subr.mxu0 0.0
    %5936 = vmatpush1.msra.mxu0 0.0
    %5937 = vmatprep.subr.mxu0 0.0
    %5938 = vmatpush1.msra.mxu0 0.0
    %5939 = vmatprep.subr.mxu0 0.0
    %5940 = vmatpush1.msra.mxu0 0.0
    %5941 = vmatprep.subr.mxu0 0.0
    %5942 = vmatpush1.msra.mxu0 0.0
    %5943 = vmatprep.subr.mxu0 0.0
    %5944 = vmatpush1.msra.mxu0 0.0
    %5945 = vmatprep.subr.mxu0 0.0
    %5946 = vmatpush1.msra.mxu0 0.0
    %5947 = vmatprep.subr.mxu0 0.0
    %5948 = vmatpush1.msra.mxu0 0.0
    %5949 = vmatprep.subr.mxu0 0.0
    %5950 = vmatpush1.msra.mxu0 0.0
    %5951 = vmatprep.subr.mxu0 0.0
    %5952 = vmatpush1.msra.mxu0 0.0
    %5953 = vmatprep.subr.mxu0 0.0
    %5954 = vmatpush1.msra.mxu0 0.0
    %5955 = vmatprep.subr.mxu0 0.0
    %5956 = vmatpush1.msra.mxu0 0.0
    %5957 = vmatprep.subr.mxu0 0.0
    %5958 = vmatpush1.msra.mxu0 0.0
    %5959 = vmatprep.subr.mxu0 0.0
    %5960 = vmatpush1.msra.mxu0 0.0
    %5961 = vmatprep.subr.mxu0 0.0
    %5962 = vmatpush1.msra.mxu0 0.0
    %5963 = vmatprep.subr.mxu0 0.0
    %5964 = vmatpush1.msra.mxu0 0.0
    %5965 = vmatprep.subr.mxu0 0.0
    %5966 = vmatpush1.msra.mxu0 0.0
    %5967 = vmatprep.subr.mxu0 0.0
    %5968 = vmatpush1.msra.mxu0 0.0
    %5969 = vmatprep.subr.mxu0 0.0
    %5970 = vmatpush1.msra.mxu0 0.0
    %5971 = vmatprep.subr.mxu0 0.0
    %5972 = vmatpush1.msra.mxu0 0.0
    %5973 = vmatprep.subr.mxu0 0.0
    %5974 = vmatpush1.msra.mxu0 0.0
    %5975 = vmatprep.subr.mxu0 0.0
    %5976 = vmatpush1.msra.mxu0 0.0
    %5977 = vmatprep.subr.mxu0 0.0
    %5978 = vmatpush1.msra.mxu0 0.0
    %5979 = vmatprep.subr.mxu0 0.0
    %5980 = vmatpush1.msra.mxu0 0.0
    %5981 = vmatprep.subr.mxu0 0.0
    %5982 = vmatpush1.msra.mxu0 0.0
    %5983 = vmatprep.subr.mxu0 0.0
    %5984 = vmatpush1.msra.mxu0 0.0
    %5985 = vmatprep.subr.mxu0 0.0
    %5986 = vmatpush1.msra.mxu0 0.0
    %5987 = vmatprep.subr.mxu0 0.0
    %5988 = vmatpush1.msra.mxu0 0.0
    %5989 = vmatprep.mubr.f32.mxu0 0.0
    %5990 = vmatmul.mubr.f32.gmra.mrb[0].mxu0 %v5710
    %v5991 = vpop.f32.mrb[0].mxu0
    %v5992 = vadd.f32 0.0, %v5991
    %v5993 = vpop.f32.mrb[0].mxu0
    %v5994 = vadd.f32 0.0, %v5993
    %5995 = vdwg.mxu0
    %5996 = vmatprep.subr.mxu0 %v4618
    %5997 = vmatpush1.msra.mxu0 %v4617
    %5998 = vmatprep.subr.mxu0 0.0
    %5999 = vmatpush1.msra.mxu0 0.0
    %6000 = vmatprep.subr.mxu0 0.0
    %6001 = vmatpush1.msra.mxu0 0.0
    %6002 = vmatprep.subr.mxu0 0.0
    %6003 = vmatpush1.msra.mxu0 0.0
    %6004 = vmatprep.subr.mxu0 0.0
    %6005 = vmatpush1.msra.mxu0 0.0
    %6006 = vmatprep.subr.mxu0 0.0
    %6007 = vmatpush1.msra.mxu0 0.0
    %6008 = vmatprep.subr.mxu0 0.0
    %6009 = vmatpush1.msra.mxu0 0.0
    %6010 = vmatprep.subr.mxu0 0.0
    %6011 = vmatpush1.msra.mxu0 0.0
    %6012 = vmatprep.subr.mxu0 0.0
    %6013 = vmatpush1.msra.mxu0 0.0
    %6014 = vmatprep.subr.mxu0 0.0
    %6015 = vmatpush1.msra.mxu0 0.0
    %6016 = vmatprep.subr.mxu0 0.0
    %6017 = vmatpush1.msra.mxu0 0.0
    %6018 = vmatprep.subr.mxu0 0.0
    %6019 = vmatpush1.msra.mxu0 0.0
    %6020 = vmatprep.subr.mxu0 0.0
    %6021 = vmatpush1.msra.mxu0 0.0
    %6022 = vmatprep.subr.mxu0 0.0
    %6023 = vmatpush1.msra.mxu0 0.0
    %6024 = vmatprep.subr.mxu0 0.0
    %6025 = vmatpush1.msra.mxu0 0.0
    %6026 = vmatprep.subr.mxu0 0.0
    %6027 = vmatpush1.msra.mxu0 0.0
    %6028 = vmatprep.subr.mxu0 0.0
    %6029 = vmatpush1.msra.mxu0 0.0
    %6030 = vmatprep.subr.mxu0 0.0
    %6031 = vmatpush1.msra.mxu0 0.0
    %6032 = vmatprep.subr.mxu0 0.0
    %6033 = vmatpush1.msra.mxu0 0.0
    %6034 = vmatprep.subr.mxu0 0.0
    %6035 = vmatpush1.msra.mxu0 0.0
    %6036 = vmatprep.subr.mxu0 0.0
    %6037 = vmatpush1.msra.mxu0 0.0
    %6038 = vmatprep.subr.mxu0 0.0
    %6039 = vmatpush1.msra.mxu0 0.0
    %6040 = vmatprep.subr.mxu0 0.0
    %6041 = vmatpush1.msra.mxu0 0.0
    %6042 = vmatprep.subr.mxu0 0.0
    %6043 = vmatpush1.msra.mxu0 0.0
    %6044 = vmatprep.subr.mxu0 0.0
    %6045 = vmatpush1.msra.mxu0 0.0
    %6046 = vmatprep.subr.mxu0 0.0
    %6047 = vmatpush1.msra.mxu0 0.0
    %6048 = vmatprep.subr.mxu0 0.0
    %6049 = vmatpush1.msra.mxu0 0.0
    %6050 = vmatprep.subr.mxu0 0.0
    %6051 = vmatpush1.msra.mxu0 0.0
    %6052 = vmatprep.subr.mxu0 0.0
    %6053 = vmatpush1.msra.mxu0 0.0
    %6054 = vmatprep.subr.mxu0 0.0
    %6055 = vmatpush1.msra.mxu0 0.0
    %6056 = vmatprep.subr.mxu0 0.0
    %6057 = vmatpush1.msra.mxu0 0.0
    %6058 = vmatprep.subr.mxu0 0.0
    %6059 = vmatpush1.msra.mxu0 0.0
    %6060 = vmatprep.mubr.f32.mxu0 0.0
    %6061 = vmatmul.mubr.f32.gmra.mrb[0].mxu0 %v5710
    %v6062 = vpop.f32.mrb[0].mxu0
    %v6063 = vadd.f32 0.0, %v6062
    %v6064 = vpop.f32.mrb[0].mxu0
    %v6065 = vadd.f32 0.0, %v6064
    %6066 = vdwg.mxu0
    %v6067 = vlaneseq
    %v6068 = vshrl.u32 %v6067, 7
    %v6069 = vsub.s32 0, %v6068
    %v6070 = vrot.slane %v5421, %v6069
    %v6071 = vlaneseq
    %v6072 = vshrl.u32 %v6071, 7
    %v6073 = vsub.s32 0, %v6072
    %v6074 = vrot.slane %v5423, %v6073
    %v6075 = vlaneseq
    %v6076 = vshrl.u32 %v6075, 7
    %v6077 = vsub.s32 0, %v6076
    %v6078 = vrot.slane %v5492, %v6077
    %v6079 = vlaneseq
    %v6080 = vshrl.u32 %v6079, 7
    %v6081 = vsub.s32 0, %v6080
    %v6082 = vrot.slane %v5494, %v6081
    %v6083 = vlaneseq
    %v6084 = vshrl.u32 %v6083, 7
    %v6085 = vsub.s32 0, %v6084
    %v6086 = vrot.slane %v5563, %v6085
    %v6087 = vlaneseq
    %v6088 = vshrl.u32 %v6087, 7
    %v6089 = vsub.s32 0, %v6088
    %v6090 = vrot.slane %v5565, %v6089
    %v6091 = vlaneseq
    %v6092 = vshrl.u32 %v6091, 7
    %v6093 = vsub.s32 0, %v6092
    %v6094 = vrot.slane %v5634, %v6093
    %v6095 = vlaneseq
    %v6096 = vshrl.u32 %v6095, 7
    %v6097 = vsub.s32 0, %v6096
    %v6098 = vrot.slane %v5636, %v6097
    %v6099 = vlaneseq
    %v6100 = vshrl.u32 %v6099, 7
    %v6101 = vsub.s32 0, %v6100
    %v6102 = vrot.slane %v5705, %v6101
    %v6103 = vlaneseq
    %v6104 = vshrl.u32 %v6103, 7
    %v6105 = vsub.s32 0, %v6104
    %v6106 = vrot.slane %v5707, %v6105
    %v6107 = vsub.f32 %v4321, %v6070
    %v6108 = vsub.f32 %v4323, %v6074
    %v6109 = vsub.f32 %v4392, %v6078
    %v6110 = vsub.f32 %v4394, %v6082
    %v6111 = vsub.f32 %v4463, %v6086
    %v6112 = vsub.f32 %v4465, %v6090
    %v6113 = vsub.f32 %v4534, %v6094
    %v6114 = vsub.f32 %v4536, %v6098
    %v6115 = vsub.f32 %v4605, %v6102
    %v6116 = vsub.f32 %v4607, %v6106
    %v6117 = vlaneseq
    %v6118 = vshrl.u32 %v6117, 7
    %v6119 = vsub.s32 0, %v6118
    %v6120 = vrot.slane %v5779, %v6119
    %v6121 = vlaneseq
    %v6122 = vshrl.u32 %v6121, 7
    %v6123 = vsub.s32 0, %v6122
    %v6124 = vrot.slane %v5781, %v6123
    %v6125 = vlaneseq
    %v6126 = vshrl.u32 %v6125, 7
    %v6127 = vsub.s32 0, %v6126
    %v6128 = vrot.slane %v5850, %v6127
    %v6129 = vlaneseq
    %v6130 = vshrl.u32 %v6129, 7
    %v6131 = vsub.s32 0, %v6130
    %v6132 = vrot.slane %v5852, %v6131
    %v6133 = vlaneseq
    %v6134 = vshrl.u32 %v6133, 7
    %v6135 = vsub.s32 0, %v6134
    %v6136 = vrot.slane %v5921, %v6135
    %v6137 = vlaneseq
    %v6138 = vshrl.u32 %v6137, 7
    %v6139 = vsub.s32 0, %v6138
    %v6140 = vrot.slane %v5923, %v6139
    %v6141 = vlaneseq
    %v6142 = vshrl.u32 %v6141, 7
    %v6143 = vsub.s32 0, %v6142
    %v6144 = vrot.slane %v5992, %v6143
    %v6145 = vlaneseq
    %v6146 = vshrl.u32 %v6145, 7
    %v6147 = vsub.s32 0, %v6146
    %v6148 = vrot.slane %v5994, %v6147
    %v6149 = vlaneseq
    %v6150 = vshrl.u32 %v6149, 7
    %v6151 = vsub.s32 0, %v6150
    %v6152 = vrot.slane %v6063, %v6151
    %v6153 = vlaneseq
    %v6154 = vshrl.u32 %v6153, 7
    %v6155 = vsub.s32 0, %v6154
    %v6156 = vrot.slane %v6065, %v6155
    %v6157 = vmul.f32 %v6107, %v6120
    %v6158 = vmul.f32 %v6108, %v6124
    %v6159 = vmul.f32 %v6109, %v6128
    %v6160 = vmul.f32 %v6110, %v6132
    %v6161 = vmul.f32 %v6111, %v6136
    %v6162 = vmul.f32 %v6112, %v6140
    %v6163 = vmul.f32 %v6113, %v6144
    %v6164 = vmul.f32 %v6114, %v6148
    %v6165 = vmul.f32 %v6115, %v6152
    %v6166 = vmul.f32 %v6116, %v6156
    %v6167 = vld [vmem:[%s5] sm:$0xff]
    %6169 = vset.pattern.permute.xlu0 0
    %6170 = vperm.xlu0 %6169, %v6167
    %v6171 = vpop.permute.xlu0 %6170
    %v6173 = vmul.f32 %v6157, %v6171
    %v6174 = vmul.f32 %v6158, %v6171
    %v6175 = vmul.f32 %v6159, %v6171
    %v6176 = vmul.f32 %v6160, %v6171
    %v6177 = vmul.f32 %v6161, %v6171
    %v6178 = vmul.f32 %v6162, %v6171
    %v6179 = vmul.f32 %v6163, %v6171
    %v6180 = vmul.f32 %v6164, %v6171
    %v6181 = vmul.f32 %v6165, %v6171
    %v6182 = vmul.f32 %v6166, %v6171
    %v6183 = vld [vmem:[%s6] sm:$0xff]
    %6185 = vset.pattern.permute.xlu0 0
    %6186 = vperm.xlu0 %6185, %v6183
    %v6187 = vpop.permute.xlu0 %6186
    %v6189 = vadd.f32 %v6173, %v6187
    %v6190 = vadd.f32 %v6174, %v6187
    %v6191 = vadd.f32 %v6175, %v6187
    %v6192 = vadd.f32 %v6176, %v6187
    %v6193 = vadd.f32 %v6177, %v6187
    %v6194 = vadd.f32 %v6178, %v6187
    %v6195 = vadd.f32 %v6179, %v6187
    %v6196 = vadd.f32 %v6180, %v6187
    %v6197 = vadd.f32 %v6181, %v6187
    %v6198 = vadd.f32 %v6182, %v6187
    %v6203 = vcombine.low %v6189, %v6190
    %v6204 = vcombine.low %v6191, %v6192
    %6207 = vst [vmem:[#allocation10] sm:$0xff] %v6203
    %6208 = vst [vmem:[#allocation10 + $0x8] sm:$0xff] %v6204
    %6209 = vst [vmem:[#allocation10 + $0x10] sm:$0xf] %v6193
    %v6214 = vcombine.low %v6194, %v6195
    %v6215 = vcombine.low %v6196, %v6197
    %s6218 = scalar_lea.vmem [#allocation10], 20
    %6219 = vst [vmem:[%s6218] sm:$0xff] %v6214
    %6220 = vst [vmem:[%s6218 + $0x8] sm:$0xff] %v6215
    %6221 = vst [vmem:[%s6218 + $0x10] sm:$0xf] %v6198
    // Predicated region
    $region46: #{tpu_custom_call.1} parent=1 // pred_check
      _
    $region47: #{tpu_custom_call.1} parent=1 // pred_check_branch
      %6223 = sbr.rel (0) target = $region49
    $region48: #{tpu_custom_call.1} parent=1 // pred_region
      %s6225 = ssub.s32 640, 640
      %6226 = vsyncadd [#allocation7], %s6225
      %s6227 = sshll.u32 [#allocation10], 4
      %s6228 = int_to_ptr.vmem [resolvable:$true] %s6227
      %6233 = dma.vmem_to_hbm [thread:$0]  %s6228, 640, %s9, [#allocation7], 320, 320, 20
    $region49: #{tpu_custom_call.1} parent=1 // pred_fallthru
      _
    // Predicated region
    $region50: #{tpu_custom_call.1} parent=1 // pred_check
      _
    $region51: #{tpu_custom_call.1} parent=1 // pred_check_branch
      %6235 = sbr.rel (0) target = $region53
    $region52: #{tpu_custom_call.1} parent=1 // pred_region
      %6236 = dma.done [#allocation7], 640
    $region53: #{tpu_custom_call.1} parent=1 // pred_fallthru
      _
    %6237 = vsyncpa [#allocation6], 1
    %6238 = vsyncpa [#allocation9], 1
    %6239 = vsyncpa [#allocation7], 1

</llo_original>
